<compile_context>
chip_gen: v6e
topology: v6e:2x2x1
jax: 0.10.0
libtpu: 0.0.40
codegen_flags: <defaults>
</compile_context>

<pallas_src>
import jax
import jax.numpy as jnp
from jax.experimental import pallas as pl
from jax.experimental.pallas import tpu as pltpu

EPS = 1e-5


# ---------------- fused Pallas kernel ----------------

def fused_cnn_kernel(pt_ref, wc_ref, g_ref, b_ref, wl_ref, bl_ref, out_ref, h_ref):
    # pt_ref : [K=Cin*9, M=B*H*W]  bf16   im2col patches, transposed (lane-dense M, b-major)
    # wc_ref : [Cout, K]           bf16   conv weight, OIHW flattened
    # g_ref  : [Cout, 1]           f32    BN gamma
    # b_ref  : [Cout, 1]           f32    BN beta
    # wl_ref : [F=Cout*S, P]       bf16   linear weight, torch [P, F] transposed, UNPADDED
    # bl_ref : [1, P]              f32    linear bias
    # out_ref: [B, P]              f32
    # h_ref  : [Cout, M]           bf16   VMEM scratch: conv+BN+ReLU activations
    K, M = pt_ref.shape
    Cout = wc_ref.shape[0]
    F, P = wl_ref.shape
    S = F // Cout
    B = M // S

    # --- conv as a single MXU matmul, lane-dense [Cout, M] result (f32 accumulate) ---
    conv = jnp.dot(wc_ref[...], pt_ref[...], preferred_element_type=jnp.float32)

    # --- BatchNorm2d (training mode, biased batch stats over B*H*W), centered two-pass ---
    # Conv bias intentionally absent: cancelled exactly by the mean subtraction below.
    inv_n = 1.0 / M
    mean = jnp.sum(conv, axis=1, keepdims=True) * inv_n          # [Cout, 1]
    cent = conv - mean
    var = jnp.sum(cent * cent, axis=1, keepdims=True) * inv_n    # >= 0 by construction
    scale = g_ref[...] * jax.lax.rsqrt(var + EPS)                # [Cout, 1]  (EUP rsqrt)

    # --- normalize + ReLU; activations parked once in VMEM scratch (bf16) ---
    h_ref[...] = jnp.maximum(cent * scale + b_ref[...], 0.0).astype(h_ref.dtype)

    # --- Linear: torch's x.view(B, -1) on NCHW flattens (c, h, w) per batch.
    #     Build the flattened row as a 128-aligned lane concat of per-channel [1, S] slabs
    #     and do ONE [1, F] @ [F, P] contraction per batch. ---
    bias = bl_ref[...]                                           # [1, P]
    for b in range(B):                                           # B=2, static unroll
        row = jnp.concatenate(
            [h_ref[c:c + 1, b * S:(b + 1) * S] for c in range(Cout)], axis=1)  # [1, F] bf16
        out_ref[b:b + 1, :] = (
            jnp.dot(row, wl_ref[...], preferred_element_type=jnp.float32) + bias)


# ---------------- host-side helpers ----------------

def _full_spec(shape):
    nd = len(shape)
    return pl.BlockSpec(shape, lambda i, _n=nd: (0,) * _n)


def im2col_3x3(x):
    """x: [B, C, H, W] -> patches [B*H*W, C*9], column order (c, kh, kw) (torch OIHW flatten)."""
    B, C, H, W = x.shape
    xp = jnp.pad(x, ((0, 0), (0, 0), (1, 1), (1, 1)))
    cols = [xp[:, :, kh:kh + H, kw:kw + W] for kh in range(3) for kw in range(3)]
    p = jnp.stack(cols, axis=2)           # [B, C, 9, H, W]
    p = p.transpose(0, 3, 4, 1, 2)        # [B, H, W, C, 9]
    return p.reshape(B * H * W, C * 9)


def prepack_params(params):
    """One-time weight re-layout (hoisted off the per-call path)."""
    Cout, Cin, KH, KW = params["wc"].shape
    P, F = params["wl"].shape
    return {
        "wc": params["wc"].reshape(Cout, Cin * KH * KW).astype(jnp.bfloat16),   # [Cout, Cin*9]
        "gamma": params["gamma"].reshape(Cout, 1).astype(jnp.float32),
        "beta": params["beta"].reshape(Cout, 1).astype(jnp.float32),
        # params["bc"] (conv bias) deliberately omitted: cancelled by training-mode BN.
        "wl": params["wl"].T.astype(jnp.bfloat16),                               # [F, P] unpadded
        "bl": params["bl"].reshape(1, P).astype(jnp.float32),
    }


@jax.jit
def cnn_forward(x, packed):
    B, Cin, H, W = x.shape
    Cout = packed["wc"].shape[0]
    F, P = packed["wl"].shape
    M = B * H * W

    patches_t = im2col_3x3(x).T.astype(jnp.bfloat16)              # [Cin*9, M], ~36 KiB

    return pl.pallas_call(
        fused_cnn_kernel,
        out_shape=jax.ShapeDtypeStruct((B, P), jnp.float32),
        grid=(1,),
        in_specs=[_full_spec(patches_t.shape),
                  _full_spec(packed["wc"].shape),
                  _full_spec(packed["gamma"].shape),
                  _full_spec(packed["beta"].shape),
                  _full_spec(packed["wl"].shape),
                  _full_spec(packed["bl"].shape)],
        out_specs=_full_spec((B, P)),
        scratch_shapes=[pltpu.VMEM((Cout, M), jnp.bfloat16)],
        compiler_params=pltpu.CompilerParams(dimension_semantics=("arbitrary",)),
    )(patches_t, packed["wc"], packed["gamma"], packed["beta"], packed["wl"], packed["bl"])


# ---------------- pure-JAX reference for verification ----------------

def cnn_reference(x, params):
    conv = jax.lax.conv_general_dilated(
        x, params["wc"], window_strides=(1, 1), padding="SAME",
        dimension_numbers=("NCHW", "OIHW", "NCHW"),
        precision=jax.lax.Precision.HIGHEST)
    conv = conv + params["bc"][None, :, None, None]
    mean = conv.mean(axis=(0, 2, 3), keepdims=True)
    var = ((conv - mean) ** 2).mean(axis=(0, 2, 3), keepdims=True)
    y = (params["gamma"][None, :, None, None] * (conv - mean) * jax.lax.rsqrt(var + EPS)
         + params["beta"][None, :, None, None])
    y = jnp.maximum(y, 0.0).reshape(x.shape[0], -1)
    return jnp.dot(y, params["wl"].T, precision=jax.lax.Precision.HIGHEST) + params["bl"]


if __name__ == "__main__":
    # inputSize = (Cin, H, W) = (4, 16, 16), projectionDim = 10, hiddenDim = 32
    B, Cin, H, W = 2, 4, 16, 16
    hidden, proj = 32, 10
    F = hidden * H * W

    key = jax.random.PRNGKey(0)
    kx, kwc, kbc, kwl, kbl = jax.random.split(key, 5)
    params = {
        "wc": jax.random.normal(kwc, (hidden, Cin, 3, 3), jnp.float32) * 0.1,
        "bc": jax.random.normal(kbc, (hidden,), jnp.float32) * 0.1,
        "gamma": jnp.ones((hidden,), jnp.float32),
        "beta": jnp.zeros((hidden,), jnp.float32),
        "wl": jax.random.normal(kwl, (proj, F), jnp.float32) * (1.0 / jnp.sqrt(F)),
        "bl": jax.random.normal(kbl, (proj,), jnp.float32) * 0.1,
    }
    x = jax.random.normal(kx, (B, Cin, H, W), jnp.float32)

    packed = prepack_params(params)          # once, at parameter init
    out = jax.block_until_ready(cnn_forward(x, packed))
    ref = jax.block_until_ready(cnn_reference(x, params))

    assert out.shape == (B, proj), out.shape
    # bf16 matmul operands (patches / activations / weights) with f32 MXU accumulation.
    assert jnp.allclose(out, ref, atol=3e-2, rtol=3e-2), \
        f"max abs err {jnp.max(jnp.abs(out - ref))}"
    print("KERNEL_OK")
</pallas_src>

<mosaic_0001>
module attributes {stable_mosaic.version = 11 : i64} {
  func.func @fused_cnn_kernel(%arg0: i32, %arg1: memref<36x512xbf16, #tpu.memory_space<vmem>>, %arg2: memref<32x36xbf16, #tpu.memory_space<vmem>>, %arg3: memref<32x1xf32, #tpu.memory_space<vmem>>, %arg4: memref<32x1xf32, #tpu.memory_space<vmem>>, %arg5: memref<8192x10xbf16, #tpu.memory_space<vmem>>, %arg6: memref<1x10xf32, #tpu.memory_space<vmem>>, %arg7: memref<2x10xf32, #tpu.memory_space<vmem>>, %arg8: memref<32x512xbf16, #tpu.memory_space<vmem>>) attributes {dimension_semantics = [#tpu.dimension_semantics<arbitrary>], iteration_bounds = array<i64: 1>, scalar_prefetch = 0 : i64, scratch_operands = 1 : i64, tpu.core_type = #tpu.core_type<tc>, window_params = [{pipeline_mode = #tpu.pipeline_mode<synchronous>, transform_indices = @transform_0, window_bounds = array<i64: 36, 512>}, {pipeline_mode = #tpu.pipeline_mode<synchronous>, transform_indices = @transform_1, window_bounds = array<i64: 32, 36>}, {pipeline_mode = #tpu.pipeline_mode<synchronous>, transform_indices = @transform_2, window_bounds = array<i64: 32, 1>}, {pipeline_mode = #tpu.pipeline_mode<synchronous>, transform_indices = @transform_3, window_bounds = array<i64: 32, 1>}, {pipeline_mode = #tpu.pipeline_mode<synchronous>, transform_indices = @transform_4, window_bounds = array<i64: 8192, 10>}, {pipeline_mode = #tpu.pipeline_mode<synchronous>, transform_indices = @transform_5, window_bounds = array<i64: 1, 10>}, {pipeline_mode = #tpu.pipeline_mode<synchronous>, transform_indices = @transform_6, window_bounds = array<i64: 2, 10>}]} {
    %c0 = arith.constant 0 : index
    %c0_0 = arith.constant 0 : index
    %0 = vector.load %arg2[%c0, %c0_0] : memref<32x36xbf16, #tpu.memory_space<vmem>>, vector<32x36xbf16>
    %c0_1 = arith.constant 0 : index
    %c0_2 = arith.constant 0 : index
    %1 = vector.load %arg1[%c0_1, %c0_2] : memref<36x512xbf16, #tpu.memory_space<vmem>>, vector<36x512xbf16>
    %cst = arith.constant dense<0.000000e+00> : vector<32x512xf32>
    %2 = tpu.matmul %0, %1, %cst {dimension_numbers = #tpu.dot_dimension_numbers<[1], [0], [0], [1], [0, 0, 1, 1], [], []>} : vector<32x36xbf16>, vector<36x512xbf16>, vector<32x512xf32> -> vector<32x512xf32>
    %cst_3 = arith.constant dense<0.000000e+00> : vector<32xf32>
    %3 = vector.multi_reduction <add>, %2, %cst_3 [1] : vector<32x512xf32> to vector<32xf32>
    %4 = vector.shape_cast %3 : vector<32xf32> to vector<32x1xf32>
    %cst_4 = arith.constant 0.001953125 : f32
    %5 = vector.broadcast %cst_4 : f32 to vector<32x1xf32>
    %6 = arith.mulf %4, %5 : vector<32x1xf32>
    %7 = vector.broadcast %6 : vector<32x1xf32> to vector<32x512xf32>
    %8 = arith.subf %2, %7 : vector<32x512xf32>
    %9 = arith.mulf %8, %8 : vector<32x512xf32>
    %cst_5 = arith.constant dense<0.000000e+00> : vector<32xf32>
    %10 = vector.multi_reduction <add>, %9, %cst_5 [1] : vector<32x512xf32> to vector<32xf32>
    %11 = vector.shape_cast %10 : vector<32xf32> to vector<32x1xf32>
    %cst_6 = arith.constant 0.001953125 : f32
    %12 = vector.broadcast %cst_6 : f32 to vector<32x1xf32>
    %13 = arith.mulf %11, %12 : vector<32x1xf32>
    %c0_7 = arith.constant 0 : index
    %c0_8 = arith.constant 0 : index
    %14 = vector.load %arg3[%c0_7, %c0_8] : memref<32x1xf32, #tpu.memory_space<vmem>>, vector<32x1xf32>
    %cst_9 = arith.constant 9.99999974E-6 : f32
    %15 = vector.broadcast %cst_9 : f32 to vector<32x1xf32>
    %16 = arith.addf %13, %15 : vector<32x1xf32>
    %17 = math.rsqrt %16 : vector<32x1xf32>
    %18 = arith.mulf %14, %17 : vector<32x1xf32>
    %19 = vector.broadcast %18 : vector<32x1xf32> to vector<32x512xf32>
    %20 = arith.mulf %8, %19 : vector<32x512xf32>
    %c0_10 = arith.constant 0 : index
    %c0_11 = arith.constant 0 : index
    %21 = vector.load %arg4[%c0_10, %c0_11] : memref<32x1xf32, #tpu.memory_space<vmem>>, vector<32x1xf32>
    %22 = vector.broadcast %21 : vector<32x1xf32> to vector<32x512xf32>
    %23 = arith.addf %20, %22 : vector<32x512xf32>
    %cst_12 = arith.constant 0.000000e+00 : f32
    %24 = vector.broadcast %cst_12 : f32 to vector<32x512xf32>
    %25 = arith.maximumf %23, %24 : vector<32x512xf32>
    %26 = arith.truncf %25 : vector<32x512xf32> to vector<32x512xbf16>
    %c0_13 = arith.constant 0 : index
    %c0_14 = arith.constant 0 : index
    %27 = vector.load %arg8[%c0_13, %c0_14] : memref<32x512xbf16, #tpu.memory_space<vmem>>, vector<32x512xbf16>
    tpu.vector_store %arg8[%c0_13, %c0_14], %26 {strides = array<i32>} : memref<32x512xbf16, #tpu.memory_space<vmem>>, vector<32x512xbf16>,
    %c0_15 = arith.constant 0 : index
    %c0_16 = arith.constant 0 : index
    %28 = vector.load %arg6[%c0_15, %c0_16] : memref<1x10xf32, #tpu.memory_space<vmem>>, vector<1x10xf32>
    %c0_17 = arith.constant 0 : index
    %c0_18 = arith.constant 0 : index
    %29 = vector.load %arg8[%c0_17, %c0_18] : memref<32x512xbf16, #tpu.memory_space<vmem>>, vector<1x256xbf16>
    %c1 = arith.constant 1 : index
    %c0_19 = arith.constant 0 : index
    %30 = vector.load %arg8[%c1, %c0_19] : memref<32x512xbf16, #tpu.memory_space<vmem>>, vector<1x256xbf16>
    %c2 = arith.constant 2 : index
    %c0_20 = arith.constant 0 : index
    %31 = vector.load %arg8[%c2, %c0_20] : memref<32x512xbf16, #tpu.memory_space<vmem>>, vector<1x256xbf16>
    %c3 = arith.constant 3 : index
    %c0_21 = arith.constant 0 : index
    %32 = vector.load %arg8[%c3, %c0_21] : memref<32x512xbf16, #tpu.memory_space<vmem>>, vector<1x256xbf16>
    %c4 = arith.constant 4 : index
    %c0_22 = arith.constant 0 : index
    %33 = vector.load %arg8[%c4, %c0_22] : memref<32x512xbf16, #tpu.memory_space<vmem>>, vector<1x256xbf16>
    %c5 = arith.constant 5 : index
    %c0_23 = arith.constant 0 : index
    %34 = vector.load %arg8[%c5, %c0_23] : memref<32x512xbf16, #tpu.memory_space<vmem>>, vector<1x256xbf16>
    %c6 = arith.constant 6 : index
    %c0_24 = arith.constant 0 : index
    %35 = vector.load %arg8[%c6, %c0_24] : memref<32x512xbf16, #tpu.memory_space<vmem>>, vector<1x256xbf16>
    %c7 = arith.constant 7 : index
    %c0_25 = arith.constant 0 : index
    %36 = vector.load %arg8[%c7, %c0_25] : memref<32x512xbf16, #tpu.memory_space<vmem>>, vector<1x256xbf16>
    %c8 = arith.constant 8 : index
    %c0_26 = arith.constant 0 : index
    %37 = vector.load %arg8[%c8, %c0_26] : memref<32x512xbf16, #tpu.memory_space<vmem>>, vector<1x256xbf16>
    %c9 = arith.constant 9 : index
    %c0_27 = arith.constant 0 : index
    %38 = vector.load %arg8[%c9, %c0_27] : memref<32x512xbf16, #tpu.memory_space<vmem>>, vector<1x256xbf16>
    %c10 = arith.constant 10 : index
    %c0_28 = arith.constant 0 : index
    %39 = vector.load %arg8[%c10, %c0_28] : memref<32x512xbf16, #tpu.memory_space<vmem>>, vector<1x256xbf16>
    %c11 = arith.constant 11 : index
    %c0_29 = arith.constant 0 : index
    %40 = vector.load %arg8[%c11, %c0_29] : memref<32x512xbf16, #tpu.memory_space<vmem>>, vector<1x256xbf16>
    %c12 = arith.constant 12 : index
    %c0_30 = arith.constant 0 : index
    %41 = vector.load %arg8[%c12, %c0_30] : memref<32x512xbf16, #tpu.memory_space<vmem>>, vector<1x256xbf16>
    %c13 = arith.constant 13 : index
    %c0_31 = arith.constant 0 : index
    %42 = vector.load %arg8[%c13, %c0_31] : memref<32x512xbf16, #tpu.memory_space<vmem>>, vector<1x256xbf16>
    %c14 = arith.constant 14 : index
    %c0_32 = arith.constant 0 : index
    %43 = vector.load %arg8[%c14, %c0_32] : memref<32x512xbf16, #tpu.memory_space<vmem>>, vector<1x256xbf16>
    %c15 = arith.constant 15 : index
    %c0_33 = arith.constant 0 : index
    %44 = vector.load %arg8[%c15, %c0_33] : memref<32x512xbf16, #tpu.memory_space<vmem>>, vector<1x256xbf16>
    %c16 = arith.constant 16 : index
    %c0_34 = arith.constant 0 : index
    %45 = vector.load %arg8[%c16, %c0_34] : memref<32x512xbf16, #tpu.memory_space<vmem>>, vector<1x256xbf16>
    %c17 = arith.constant 17 : index
    %c0_35 = arith.constant 0 : index
    %46 = vector.load %arg8[%c17, %c0_35] : memref<32x512xbf16, #tpu.memory_space<vmem>>, vector<1x256xbf16>
    %c18 = arith.constant 18 : index
    %c0_36 = arith.constant 0 : index
    %47 = vector.load %arg8[%c18, %c0_36] : memref<32x512xbf16, #tpu.memory_space<vmem>>, vector<1x256xbf16>
    %c19 = arith.constant 19 : index
    %c0_37 = arith.constant 0 : index
    %48 = vector.load %arg8[%c19, %c0_37] : memref<32x512xbf16, #tpu.memory_space<vmem>>, vector<1x256xbf16>
    %c20 = arith.constant 20 : index
    %c0_38 = arith.constant 0 : index
    %49 = vector.load %arg8[%c20, %c0_38] : memref<32x512xbf16, #tpu.memory_space<vmem>>, vector<1x256xbf16>
    %c21 = arith.constant 21 : index
    %c0_39 = arith.constant 0 : index
    %50 = vector.load %arg8[%c21, %c0_39] : memref<32x512xbf16, #tpu.memory_space<vmem>>, vector<1x256xbf16>
    %c22 = arith.constant 22 : index
    %c0_40 = arith.constant 0 : index
    %51 = vector.load %arg8[%c22, %c0_40] : memref<32x512xbf16, #tpu.memory_space<vmem>>, vector<1x256xbf16>
    %c23 = arith.constant 23 : index
    %c0_41 = arith.constant 0 : index
    %52 = vector.load %arg8[%c23, %c0_41] : memref<32x512xbf16, #tpu.memory_space<vmem>>, vector<1x256xbf16>
    %c24 = arith.constant 24 : index
    %c0_42 = arith.constant 0 : index
    %53 = vector.load %arg8[%c24, %c0_42] : memref<32x512xbf16, #tpu.memory_space<vmem>>, vector<1x256xbf16>
    %c25 = arith.constant 25 : index
    %c0_43 = arith.constant 0 : index
    %54 = vector.load %arg8[%c25, %c0_43] : memref<32x512xbf16, #tpu.memory_space<vmem>>, vector<1x256xbf16>
    %c26 = arith.constant 26 : index
    %c0_44 = arith.constant 0 : index
    %55 = vector.load %arg8[%c26, %c0_44] : memref<32x512xbf16, #tpu.memory_space<vmem>>, vector<1x256xbf16>
    %c27 = arith.constant 27 : index
    %c0_45 = arith.constant 0 : index
    %56 = vector.load %arg8[%c27, %c0_45] : memref<32x512xbf16, #tpu.memory_space<vmem>>, vector<1x256xbf16>
    %c28 = arith.constant 28 : index
    %c0_46 = arith.constant 0 : index
    %57 = vector.load %arg8[%c28, %c0_46] : memref<32x512xbf16, #tpu.memory_space<vmem>>, vector<1x256xbf16>
    %c29 = arith.constant 29 : index
    %c0_47 = arith.constant 0 : index
    %58 = vector.load %arg8[%c29, %c0_47] : memref<32x512xbf16, #tpu.memory_space<vmem>>, vector<1x256xbf16>
    %c30 = arith.constant 30 : index
    %c0_48 = arith.constant 0 : index
    %59 = vector.load %arg8[%c30, %c0_48] : memref<32x512xbf16, #tpu.memory_space<vmem>>, vector<1x256xbf16>
    %c31 = arith.constant 31 : index
    %c0_49 = arith.constant 0 : index
    %60 = vector.load %arg8[%c31, %c0_49] : memref<32x512xbf16, #tpu.memory_space<vmem>>, vector<1x256xbf16>
    %61 = tpu.concatenate %29, %30, %31, %32, %33, %34, %35, %36, %37, %38, %39, %40, %41, %42, %43, %44 in 1 : vector<1x256xbf16>, vector<1x256xbf16>, vector<1x256xbf16>, vector<1x256xbf16>, vector<1x256xbf16>, vector<1x256xbf16>, vector<1x256xbf16>, vector<1x256xbf16>, vector<1x256xbf16>, vector<1x256xbf16>, vector<1x256xbf16>, vector<1x256xbf16>, vector<1x256xbf16>, vector<1x256xbf16>, vector<1x256xbf16>, vector<1x256xbf16> -> vector<1x4096xbf16>
    %62 = tpu.concatenate %45, %46, %47, %48, %49, %50, %51, %52, %53, %54, %55, %56, %57, %58, %59, %60 in 1 : vector<1x256xbf16>, vector<1x256xbf16>, vector<1x256xbf16>, vector<1x256xbf16>, vector<1x256xbf16>, vector<1x256xbf16>, vector<1x256xbf16>, vector<1x256xbf16>, vector<1x256xbf16>, vector<1x256xbf16>, vector<1x256xbf16>, vector<1x256xbf16>, vector<1x256xbf16>, vector<1x256xbf16>, vector<1x256xbf16>, vector<1x256xbf16> -> vector<1x4096xbf16>
    %63 = tpu.concatenate %61, %62 in 1 : vector<1x4096xbf16>, vector<1x4096xbf16> -> vector<1x8192xbf16>
    %c0_50 = arith.constant 0 : index
    %c0_51 = arith.constant 0 : index
    %64 = vector.load %arg5[%c0_50, %c0_51] : memref<8192x10xbf16, #tpu.memory_space<vmem>>, vector<8192x10xbf16>
    %cst_52 = arith.constant dense<0.000000e+00> : vector<1x10xf32>
    %65 = tpu.matmul %63, %64, %cst_52 {dimension_numbers = #tpu.dot_dimension_numbers<[1], [0], [0], [1], [0, 0, 1, 1], [], []>} : vector<1x8192xbf16>, vector<8192x10xbf16>, vector<1x10xf32> -> vector<1x10xf32>
    %66 = arith.addf %65, %28 : vector<1x10xf32>
    %c0_53 = arith.constant 0 : index
    %c0_54 = arith.constant 0 : index
    %67 = vector.load %arg7[%c0_53, %c0_54] : memref<2x10xf32, #tpu.memory_space<vmem>>, vector<1x10xf32>
    tpu.vector_store %arg7[%c0_53, %c0_54], %66 {strides = array<i32>} : memref<2x10xf32, #tpu.memory_space<vmem>>, vector<1x10xf32>,
    %c0_55 = arith.constant 0 : index
    %c256 = arith.constant 256 : index
    %68 = vector.load %arg8[%c0_55, %c256] : memref<32x512xbf16, #tpu.memory_space<vmem>>, vector<1x256xbf16>
    %c1_56 = arith.constant 1 : index
    %c256_57 = arith.constant 256 : index
    %69 = vector.load %arg8[%c1_56, %c256_57] : memref<32x512xbf16, #tpu.memory_space<vmem>>, vector<1x256xbf16>
    %c2_58 = arith.constant 2 : index
    %c256_59 = arith.constant 256 : index
    %70 = vector.load %arg8[%c2_58, %c256_59] : memref<32x512xbf16, #tpu.memory_space<vmem>>, vector<1x256xbf16>
    %c3_60 = arith.constant 3 : index
    %c256_61 = arith.constant 256 : index
    %71 = vector.load %arg8[%c3_60, %c256_61] : memref<32x512xbf16, #tpu.memory_space<vmem>>, vector<1x256xbf16>
    %c4_62 = arith.constant 4 : index
    %c256_63 = arith.constant 256 : index
    %72 = vector.load %arg8[%c4_62, %c256_63] : memref<32x512xbf16, #tpu.memory_space<vmem>>, vector<1x256xbf16>
    %c5_64 = arith.constant 5 : index
    %c256_65 = arith.constant 256 : index
    %73 = vector.load %arg8[%c5_64, %c256_65] : memref<32x512xbf16, #tpu.memory_space<vmem>>, vector<1x256xbf16>
    %c6_66 = arith.constant 6 : index
    %c256_67 = arith.constant 256 : index
    %74 = vector.load %arg8[%c6_66, %c256_67] : memref<32x512xbf16, #tpu.memory_space<vmem>>, vector<1x256xbf16>
    %c7_68 = arith.constant 7 : index
    %c256_69 = arith.constant 256 : index
    %75 = vector.load %arg8[%c7_68, %c256_69] : memref<32x512xbf16, #tpu.memory_space<vmem>>, vector<1x256xbf16>
    %c8_70 = arith.constant 8 : index
    %c256_71 = arith.constant 256 : index
    %76 = vector.load %arg8[%c8_70, %c256_71] : memref<32x512xbf16, #tpu.memory_space<vmem>>, vector<1x256xbf16>
    %c9_72 = arith.constant 9 : index
    %c256_73 = arith.constant 256 : index
    %77 = vector.load %arg8[%c9_72, %c256_73] : memref<32x512xbf16, #tpu.memory_space<vmem>>, vector<1x256xbf16>
    %c10_74 = arith.constant 10 : index
    %c256_75 = arith.constant 256 : index
    %78 = vector.load %arg8[%c10_74, %c256_75] : memref<32x512xbf16, #tpu.memory_space<vmem>>, vector<1x256xbf16>
    %c11_76 = arith.constant 11 : index
    %c256_77 = arith.constant 256 : index
    %79 = vector.load %arg8[%c11_76, %c256_77] : memref<32x512xbf16, #tpu.memory_space<vmem>>, vector<1x256xbf16>
    %c12_78 = arith.constant 12 : index
    %c256_79 = arith.constant 256 : index
    %80 = vector.load %arg8[%c12_78, %c256_79] : memref<32x512xbf16, #tpu.memory_space<vmem>>, vector<1x256xbf16>
    %c13_80 = arith.constant 13 : index
    %c256_81 = arith.constant 256 : index
    %81 = vector.load %arg8[%c13_80, %c256_81] : memref<32x512xbf16, #tpu.memory_space<vmem>>, vector<1x256xbf16>
    %c14_82 = arith.constant 14 : index
    %c256_83 = arith.constant 256 : index
    %82 = vector.load %arg8[%c14_82, %c256_83] : memref<32x512xbf16, #tpu.memory_space<vmem>>, vector<1x256xbf16>
    %c15_84 = arith.constant 15 : index
    %c256_85 = arith.constant 256 : index
    %83 = vector.load %arg8[%c15_84, %c256_85] : memref<32x512xbf16, #tpu.memory_space<vmem>>, vector<1x256xbf16>
    %c16_86 = arith.constant 16 : index
    %c256_87 = arith.constant 256 : index
    %84 = vector.load %arg8[%c16_86, %c256_87] : memref<32x512xbf16, #tpu.memory_space<vmem>>, vector<1x256xbf16>
    %c17_88 = arith.constant 17 : index
    %c256_89 = arith.constant 256 : index
    %85 = vector.load %arg8[%c17_88, %c256_89] : memref<32x512xbf16, #tpu.memory_space<vmem>>, vector<1x256xbf16>
    %c18_90 = arith.constant 18 : index
    %c256_91 = arith.constant 256 : index
    %86 = vector.load %arg8[%c18_90, %c256_91] : memref<32x512xbf16, #tpu.memory_space<vmem>>, vector<1x256xbf16>
    %c19_92 = arith.constant 19 : index
    %c256_93 = arith.constant 256 : index
    %87 = vector.load %arg8[%c19_92, %c256_93] : memref<32x512xbf16, #tpu.memory_space<vmem>>, vector<1x256xbf16>
    %c20_94 = arith.constant 20 : index
    %c256_95 = arith.constant 256 : index
    %88 = vector.load %arg8[%c20_94, %c256_95] : memref<32x512xbf16, #tpu.memory_space<vmem>>, vector<1x256xbf16>
    %c21_96 = arith.constant 21 : index
    %c256_97 = arith.constant 256 : index
    %89 = vector.load %arg8[%c21_96, %c256_97] : memref<32x512xbf16, #tpu.memory_space<vmem>>, vector<1x256xbf16>
    %c22_98 = arith.constant 22 : index
    %c256_99 = arith.constant 256 : index
    %90 = vector.load %arg8[%c22_98, %c256_99] : memref<32x512xbf16, #tpu.memory_space<vmem>>, vector<1x256xbf16>
    %c23_100 = arith.constant 23 : index
    %c256_101 = arith.constant 256 : index
    %91 = vector.load %arg8[%c23_100, %c256_101] : memref<32x512xbf16, #tpu.memory_space<vmem>>, vector<1x256xbf16>
    %c24_102 = arith.constant 24 : index
    %c256_103 = arith.constant 256 : index
    %92 = vector.load %arg8[%c24_102, %c256_103] : memref<32x512xbf16, #tpu.memory_space<vmem>>, vector<1x256xbf16>
    %c25_104 = arith.constant 25 : index
    %c256_105 = arith.constant 256 : index
    %93 = vector.load %arg8[%c25_104, %c256_105] : memref<32x512xbf16, #tpu.memory_space<vmem>>, vector<1x256xbf16>
    %c26_106 = arith.constant 26 : index
    %c256_107 = arith.constant 256 : index
    %94 = vector.load %arg8[%c26_106, %c256_107] : memref<32x512xbf16, #tpu.memory_space<vmem>>, vector<1x256xbf16>
    %c27_108 = arith.constant 27 : index
    %c256_109 = arith.constant 256 : index
    %95 = vector.load %arg8[%c27_108, %c256_109] : memref<32x512xbf16, #tpu.memory_space<vmem>>, vector<1x256xbf16>
    %c28_110 = arith.constant 28 : index
    %c256_111 = arith.constant 256 : index
    %96 = vector.load %arg8[%c28_110, %c256_111] : memref<32x512xbf16, #tpu.memory_space<vmem>>, vector<1x256xbf16>
    %c29_112 = arith.constant 29 : index
    %c256_113 = arith.constant 256 : index
    %97 = vector.load %arg8[%c29_112, %c256_113] : memref<32x512xbf16, #tpu.memory_space<vmem>>, vector<1x256xbf16>
    %c30_114 = arith.constant 30 : index
    %c256_115 = arith.constant 256 : index
    %98 = vector.load %arg8[%c30_114, %c256_115] : memref<32x512xbf16, #tpu.memory_space<vmem>>, vector<1x256xbf16>
    %c31_116 = arith.constant 31 : index
    %c256_117 = arith.constant 256 : index
    %99 = vector.load %arg8[%c31_116, %c256_117] : memref<32x512xbf16, #tpu.memory_space<vmem>>, vector<1x256xbf16>
    %100 = tpu.concatenate %68, %69, %70, %71, %72, %73, %74, %75, %76, %77, %78, %79, %80, %81, %82, %83 in 1 : vector<1x256xbf16>, vector<1x256xbf16>, vector<1x256xbf16>, vector<1x256xbf16>, vector<1x256xbf16>, vector<1x256xbf16>, vector<1x256xbf16>, vector<1x256xbf16>, vector<1x256xbf16>, vector<1x256xbf16>, vector<1x256xbf16>, vector<1x256xbf16>, vector<1x256xbf16>, vector<1x256xbf16>, vector<1x256xbf16>, vector<1x256xbf16> -> vector<1x4096xbf16>
    %101 = tpu.concatenate %84, %85, %86, %87, %88, %89, %90, %91, %92, %93, %94, %95, %96, %97, %98, %99 in 1 : vector<1x256xbf16>, vector<1x256xbf16>, vector<1x256xbf16>, vector<1x256xbf16>, vector<1x256xbf16>, vector<1x256xbf16>, vector<1x256xbf16>, vector<1x256xbf16>, vector<1x256xbf16>, vector<1x256xbf16>, vector<1x256xbf16>, vector<1x256xbf16>, vector<1x256xbf16>, vector<1x256xbf16>, vector<1x256xbf16>, vector<1x256xbf16> -> vector<1x4096xbf16>
    %102 = tpu.concatenate %100, %101 in 1 : vector<1x4096xbf16>, vector<1x4096xbf16> -> vector<1x8192xbf16>
    %c0_118 = arith.constant 0 : index
    %c0_119 = arith.constant 0 : index
    %103 = vector.load %arg5[%c0_118, %c0_119] : memref<8192x10xbf16, #tpu.memory_space<vmem>>, vector<8192x10xbf16>
    %cst_120 = arith.constant dense<0.000000e+00> : vector<1x10xf32>
    %104 = tpu.matmul %102, %103, %cst_120 {dimension_numbers = #tpu.dot_dimension_numbers<[1], [0], [0], [1], [0, 0, 1, 1], [], []>} : vector<1x8192xbf16>, vector<8192x10xbf16>, vector<1x10xf32> -> vector<1x10xf32>
    %105 = arith.addf %104, %28 : vector<1x10xf32>
    %c1_121 = arith.constant 1 : index
    %c0_122 = arith.constant 0 : index
    %106 = vector.load %arg7[%c1_121, %c0_122] : memref<2x10xf32, #tpu.memory_space<vmem>>, vector<1x10xf32>
    tpu.vector_store %arg7[%c1_121, %c0_122], %105 {strides = array<i32>} : memref<2x10xf32, #tpu.memory_space<vmem>>, vector<1x10xf32>,
    return
  }
  func.func @transform_0(%arg0: i32) -> (i32, i32) {
    %c0_i32 = arith.constant 0 : i32
    %c0_i32_0 = arith.constant 0 : i32
    %c0_i32_1 = arith.constant 0 : i32
    return %c0_i32, %c0_i32_0 : i32, i32
  }
  func.func @transform_1(%arg0: i32) -> (i32, i32) {
    %c0_i32 = arith.constant 0 : i32
    %c0_i32_0 = arith.constant 0 : i32
    %c0_i32_1 = arith.constant 0 : i32
    return %c0_i32, %c0_i32_0 : i32, i32
  }
  func.func @transform_2(%arg0: i32) -> (i32, i32) {
    %c0_i32 = arith.constant 0 : i32
    %c0_i32_0 = arith.constant 0 : i32
    %c0_i32_1 = arith.constant 0 : i32
    return %c0_i32, %c0_i32_0 : i32, i32
  }
  func.func @transform_3(%arg0: i32) -> (i32, i32) {
    %c0_i32 = arith.constant 0 : i32
    %c0_i32_0 = arith.constant 0 : i32
    %c0_i32_1 = arith.constant 0 : i32
    return %c0_i32, %c0_i32_0 : i32, i32
  }
  func.func @transform_4(%arg0: i32) -> (i32, i32) {
    %c0_i32 = arith.constant 0 : i32
    %c0_i32_0 = arith.constant 0 : i32
    %c0_i32_1 = arith.constant 0 : i32
    return %c0_i32, %c0_i32_0 : i32, i32
  }
  func.func @transform_5(%arg0: i32) -> (i32, i32) {
    %c0_i32 = arith.constant 0 : i32
    %c0_i32_0 = arith.constant 0 : i32
    %c0_i32_1 = arith.constant 0 : i32
    return %c0_i32, %c0_i32_0 : i32, i32
  }
  func.func @transform_6(%arg0: i32) -> (i32, i32) {
    %c0_i32 = arith.constant 0 : i32
    %c0_i32_0 = arith.constant 0 : i32
    %c0_i32_1 = arith.constant 0 : i32
    return %c0_i32, %c0_i32_0 : i32, i32
  }
}

</mosaic_0001>

<llo_original>
// kernel: cnn_forward.1
$region0: #{cnn_forward.1}
  #allocation0 [shape = 'u32[]', space=smem, size = 0x4, offset = 0x4, fixed_abs, tag = 'smem constant byte address 0x4 - core index']
  #allocation1 [shape = 'u32[144,128]{1,0:T(1,128)}', space=vmem, size = 0x12000, scoped, tag = 'internal scratch']
  #allocation2 [shape = 'bf16[32,512]{1,0:T(8,128)(2,1)}', space=vmem, size = 0x8000, scoped, tag = 'scratch operand']
  %s0 = inlined_call_operand.vmem [shape: bf16[36,512], index: 0, kind: input, shape index: {}]
  %s1 = inlined_call_operand.vmem [shape: bf16[32,36], index: 1, kind: input, shape index: {}]
  %s2 = inlined_call_operand.vmem [shape: f32[32,1], index: 2, kind: input, shape index: {}]
  %s3 = inlined_call_operand.vmem [shape: f32[32,1], index: 3, kind: input, shape index: {}]
  %s4 = inlined_call_operand.vmem [shape: bf16[8192,10], index: 4, kind: input, shape index: {}]
  %s5 = inlined_call_operand.vmem [shape: f32[1,10], index: 5, kind: input, shape index: {}]
  %s6 = inlined_call_operand.hbm [shape: f32[2,10], index: 6, kind: output, shape index: {}]
  %s7 = sld [smem:[#allocation0]]
  $region34: #{cnn_forward.1} parent=0
    _
  %s9 = ssub.s32 1, %s7
  %s10 = scalar_select 0, %s9, %s7
  $region1: #{cnn_forward.1} parent=0
    #allocation3 [shape = 'u8[1024]{0}', space=vmem, size = 0x400, scoped, tag = 'output window, operand 0, single buffered']
    #allocation4 [shape = 's32[1]{0}', space=sflag, size = 0x4, scoped, tag = 'scoped memory for cnn_forward.1']
    %11 = vsyncpa [#allocation4], 0
    // Predicated region
    $region2: #{cnn_forward.1} parent=1 // pred_check
      _
    $region3: #{cnn_forward.1} parent=1 // pred_check_branch
      %13 = sbr.rel (0) target = $region5
    $region4: #{cnn_forward.1} parent=1 // pred_region
      _
    $region5: #{cnn_forward.1} parent=1 // pred_fallthru
      _
    // Predicated region
    $region6: #{cnn_forward.1} parent=1 // pred_check
      _
    $region7: #{cnn_forward.1} parent=1 // pred_check_branch
      %15 = sbr.rel (0) target = $region9
    $region8: #{cnn_forward.1} parent=1 // pred_region
      _
    $region9: #{cnn_forward.1} parent=1 // pred_fallthru
      _
    // Predicated region
    $region10: #{cnn_forward.1} parent=1 // pred_check
      _
    $region11: #{cnn_forward.1} parent=1 // pred_check_branch
      %17 = sbr.rel (0) target = $region13
    $region12: #{cnn_forward.1} parent=1 // pred_region
      _
    $region13: #{cnn_forward.1} parent=1 // pred_fallthru
      _
    // Predicated region
    $region14: #{cnn_forward.1} parent=1 // pred_check
      _
    $region15: #{cnn_forward.1} parent=1 // pred_check_branch
      %19 = sbr.rel (0) target = $region17
    $region16: #{cnn_forward.1} parent=1 // pred_region
      _
    $region17: #{cnn_forward.1} parent=1 // pred_fallthru
      _
    // Predicated region
    $region18: #{cnn_forward.1} parent=1 // pred_check
      _
    $region19: #{cnn_forward.1} parent=1 // pred_check_branch
      %21 = sbr.rel (0) target = $region21
    $region20: #{cnn_forward.1} parent=1 // pred_region
      _
    $region21: #{cnn_forward.1} parent=1 // pred_fallthru
      _
    // Predicated region
    $region22: #{cnn_forward.1} parent=1 // pred_check
      _
    $region23: #{cnn_forward.1} parent=1 // pred_check_branch
      %23 = sbr.rel (0) target = $region25
    $region24: #{cnn_forward.1} parent=1 // pred_region
      _
    $region25: #{cnn_forward.1} parent=1 // pred_fallthru
      _
    %v25 = vld [vmem:[%s1] sm:$0xf]
    %v26 = vld [vmem:[%s1 + $0x4] sm:$0xf]
    %v27 = vld [vmem:[%s1 + $0x8] sm:$0xf]
    %v28 = vld [vmem:[%s1 + $0xc] sm:$0xf]
    %v29 = vld [vmem:[%s0] sm:$0xff]
    %v30 = vld [vmem:[%s0 + $0x8] sm:$0xff]
    %v31 = vld [vmem:[%s0 + $0x10] sm:$0xff]
    %v32 = vld [vmem:[%s0 + $0x18] sm:$0xff]
    %v33 = vld [vmem:[%s0 + $0x20] sm:$0xff]
    %v34 = vld [vmem:[%s0 + $0x28] sm:$0xff]
    %v35 = vld [vmem:[%s0 + $0x30] sm:$0xff]
    %v36 = vld [vmem:[%s0 + $0x38] sm:$0xff]
    %v37 = vld [vmem:[%s0 + $0x40] sm:$0x33]
    %v38 = vld [vmem:[%s0 + $0x48] sm:$0x33]
    %v43 = vunpack.c.l.b16 %v25
    %v44 = vunpack.c.l.b16 %v26
    %v45 = vunpack.c.l.b16 %v27
    %v46 = vunpack.c.l.b16 %v28
    %v47 = vpack.c.b16 %v44, %v43
    %v48 = vpack.c.b16 %v46, %v45
    %v59 = vunpack.c.l.b16 %v29
    %v60 = vunpack.c.h.b16 %v29
    %v61 = vunpack.c.l.b16 %v30
    %v62 = vunpack.c.h.b16 %v30
    %v63 = vunpack.c.l.b16 %v31
    %v64 = vunpack.c.h.b16 %v31
    %v65 = vunpack.c.l.b16 %v32
    %v66 = vunpack.c.h.b16 %v32
    %v67 = vunpack.c.l.b16 %v33
    %v68 = vunpack.c.h.b16 %v33
    %v69 = vunpack.c.l.b16 %v34
    %v70 = vunpack.c.h.b16 %v34
    %v71 = vunpack.c.l.b16 %v35
    %v72 = vunpack.c.h.b16 %v35
    %v73 = vunpack.c.l.b16 %v36
    %v74 = vunpack.c.h.b16 %v36
    %v75 = vunpack.c.l.b16 %v37
    %v76 = vunpack.c.h.b16 %v37
    %v77 = vunpack.c.l.b16 %v38
    %v78 = vunpack.c.h.b16 %v38
    %v79 = vpack.c.b16 %v63, %v59
    %v80 = vpack.c.b16 %v64, %v60
    %v81 = vpack.c.b16 %v65, %v61
    %v82 = vpack.c.b16 %v66, %v62
    %v83 = vpack.c.b16 %v71, %v67
    %v84 = vpack.c.b16 %v72, %v68
    %v85 = vpack.c.b16 %v73, %v69
    %v86 = vpack.c.b16 %v74, %v70
    %v87 = vpack.c.b16 %v75, %v75
    %v88 = vpack.c.b16 %v76, %v76
    %v89 = vpack.c.b16 %v77, %v77
    %v90 = vpack.c.b16 %v78, %v78
    %vm99 = vcmask 293888
    %v101 = vsel %vm99, %v47, 0
    %v104 = vsel %vm99, %v48, 0
    %vm106 = vcmask 1041408
    %v108 = vsel %vm106, %v87, 0
    %v111 = vsel %vm106, %v88, 0
    %v114 = vsel %vm106, %v89, 0
    %v117 = vsel %vm106, %v90, 0
    %119 = vmatprep.subr.bf16.mxu0 0
    %120 = vmatpush1.bf16.msra.mxu0 0
    %121 = vmatprep.subr.bf16.mxu0 0
    %122 = vmatpush1.bf16.msra.mxu0 0
    %123 = vmatprep.subr.bf16.mxu0 0
    %124 = vmatpush1.bf16.msra.mxu0 0
    %125 = vmatprep.subr.bf16.mxu0 0
    %126 = vmatpush1.bf16.msra.mxu0 0
    %127 = vmatprep.subr.bf16.mxu0 0
    %128 = vmatpush1.bf16.msra.mxu0 0
    %129 = vmatprep.subr.bf16.mxu0 %v111
    %130 = vmatpush1.bf16.msra.mxu0 %v108
    %131 = vmatprep.subr.bf16.mxu0 %v84
    %132 = vmatpush1.bf16.msra.mxu0 %v83
    %133 = vmatprep.subr.bf16.mxu0 %v80
    %134 = vmatpush1.bf16.msra.mxu0 %v79
    %135 = vmatprep.subr.bf16.mxu0 0
    %136 = vmatpush2.bf16.msra.mxu0 0
    %137 = vmatprep.subr.bf16.mxu0 0
    %138 = vmatpush2.bf16.msra.mxu0 0
    %139 = vmatprep.subr.bf16.mxu0 0
    %140 = vmatpush2.bf16.msra.mxu0 0
    %141 = vmatprep.subr.bf16.mxu0 0
    %142 = vmatpush2.bf16.msra.mxu0 0
    %143 = vmatprep.subr.bf16.mxu0 0
    %144 = vmatpush2.bf16.msra.mxu0 0
    %145 = vmatprep.subr.bf16.mxu0 0
    %146 = vmatpush2.bf16.msra.mxu0 0
    %147 = vmatprep.subr.bf16.mxu0 0
    %148 = vmatpush2.bf16.msra.mxu0 0
    %149 = vmatprep.subr.bf16.mxu0 0
    %150 = vmatpush2.bf16.msra.mxu0 0
    %151 = vmatprep.mubr.bf16.mxu0 0
    %152 = vmatmul.mubr.bf16.gmra.mxu0 %v101
    %v153 = vpop.f32.mrf.mxu0
    %v154 = vadd.f32 0.0, %v153
    %v155 = vpop.f32.mrf.mxu0
    %v156 = vadd.f32 0.0, %v155
    %v157 = vpop.f32.mrf.mxu0
    %v158 = vadd.f32 0.0, %v157
    %v159 = vpop.f32.mrf.mxu0
    %v160 = vadd.f32 0.0, %v159
    %161 = vmatprep.mubr.bf16.mxu0 0
    %162 = vmatmul.mubr.bf16.gmra.mxu0 %v104
    %v163 = vpop.f32.mrf.mxu0
    %v164 = vadd.f32 0.0, %v163
    %v165 = vpop.f32.mrf.mxu0
    %v166 = vadd.f32 0.0, %v165
    %v167 = vpop.f32.mrf.mxu0
    %v168 = vadd.f32 0.0, %v167
    %v169 = vpop.f32.mrf.mxu0
    %v170 = vadd.f32 0.0, %v169
    %171 = vdwg.mxu0
    %172 = vmatprep.subr.bf16.mxu0 0
    %173 = vmatpush1.bf16.msra.mxu0 0
    %174 = vmatprep.subr.bf16.mxu0 0
    %175 = vmatpush1.bf16.msra.mxu0 0
    %176 = vmatprep.subr.bf16.mxu0 0
    %177 = vmatpush1.bf16.msra.mxu0 0
    %178 = vmatprep.subr.bf16.mxu0 0
    %179 = vmatpush1.bf16.msra.mxu0 0
    %180 = vmatprep.subr.bf16.mxu0 0
    %181 = vmatpush1.bf16.msra.mxu0 0
    %182 = vmatprep.subr.bf16.mxu0 %v117
    %183 = vmatpush1.bf16.msra.mxu0 %v114
    %184 = vmatprep.subr.bf16.mxu0 %v86
    %185 = vmatpush1.bf16.msra.mxu0 %v85
    %186 = vmatprep.subr.bf16.mxu0 %v82
    %187 = vmatpush1.bf16.msra.mxu0 %v81
    %188 = vmatprep.subr.bf16.mxu0 0
    %189 = vmatpush2.bf16.msra.mxu0 0
    %190 = vmatprep.subr.bf16.mxu0 0
    %191 = vmatpush2.bf16.msra.mxu0 0
    %192 = vmatprep.subr.bf16.mxu0 0
    %193 = vmatpush2.bf16.msra.mxu0 0
    %194 = vmatprep.subr.bf16.mxu0 0
    %195 = vmatpush2.bf16.msra.mxu0 0
    %196 = vmatprep.subr.bf16.mxu0 0
    %197 = vmatpush2.bf16.msra.mxu0 0
    %198 = vmatprep.subr.bf16.mxu0 0
    %199 = vmatpush2.bf16.msra.mxu0 0
    %200 = vmatprep.subr.bf16.mxu0 0
    %201 = vmatpush2.bf16.msra.mxu0 0
    %202 = vmatprep.subr.bf16.mxu0 0
    %203 = vmatpush2.bf16.msra.mxu0 0
    %204 = vmatprep.mubr.bf16.mxu0 0
    %205 = vmatmul.mubr.bf16.gmra.mxu0 %v101
    %v206 = vpop.f32.mrf.mxu0
    %v207 = vadd.f32 0.0, %v206
    %v208 = vpop.f32.mrf.mxu0
    %v209 = vadd.f32 0.0, %v208
    %v210 = vpop.f32.mrf.mxu0
    %v211 = vadd.f32 0.0, %v210
    %v212 = vpop.f32.mrf.mxu0
    %v213 = vadd.f32 0.0, %v212
    %214 = vmatprep.mubr.bf16.mxu0 0
    %215 = vmatmul.mubr.bf16.gmra.mxu0 %v104
    %v216 = vpop.f32.mrf.mxu0
    %v217 = vadd.f32 0.0, %v216
    %v218 = vpop.f32.mrf.mxu0
    %v219 = vadd.f32 0.0, %v218
    %v220 = vpop.f32.mrf.mxu0
    %v221 = vadd.f32 0.0, %v220
    %v222 = vpop.f32.mrf.mxu0
    %v223 = vadd.f32 0.0, %v222
    %224 = vdwg.mxu0
    %v225 = vadd.f32 %v154, %v156
    %v226 = vadd.f32 %v225, %v207
    %v227 = vadd.f32 %v226, %v209
    %228 = vadd.xlane.f32.xlu0 %v227
    %v229 = vpop.xlane.xlu0 %228
    %v230 = vadd.f32 %v158, %v160
    %v231 = vadd.f32 %v230, %v211
    %v232 = vadd.f32 %v231, %v213
    %233 = vadd.xlane.f32.xlu0 %v232
    %v234 = vpop.xlane.xlu0 %233
    %v235 = vadd.f32 %v164, %v166
    %v236 = vadd.f32 %v235, %v217
    %v237 = vadd.f32 %v236, %v219
    %238 = vadd.xlane.f32.xlu0 %v237
    %v239 = vpop.xlane.xlu0 %238
    %v240 = vadd.f32 %v168, %v170
    %v241 = vadd.f32 %v240, %v221
    %v242 = vadd.f32 %v241, %v223
    %243 = vadd.xlane.f32.xlu0 %v242
    %v244 = vpop.xlane.xlu0 %243
    %v245 = vmul.f32 %v229, 0.001953125
    %v246 = vmul.f32 %v234, 0.001953125
    %v247 = vmul.f32 %v239, 0.001953125
    %v248 = vmul.f32 %v244, 0.001953125
    %v249 = vsub.f32 %v154, %v245
    %v250 = vsub.f32 %v156, %v245
    %v251 = vsub.f32 %v207, %v245
    %v252 = vsub.f32 %v209, %v245
    %v253 = vsub.f32 %v158, %v246
    %v254 = vsub.f32 %v160, %v246
    %v255 = vsub.f32 %v211, %v246
    %v256 = vsub.f32 %v213, %v246
    %v257 = vsub.f32 %v164, %v247
    %v258 = vsub.f32 %v166, %v247
    %v259 = vsub.f32 %v217, %v247
    %v260 = vsub.f32 %v219, %v247
    %v261 = vsub.f32 %v168, %v248
    %v262 = vsub.f32 %v170, %v248
    %v263 = vsub.f32 %v221, %v248
    %v264 = vsub.f32 %v223, %v248
    %v265 = vmul.f32 %v249, %v249
    %v266 = vmul.f32 %v250, %v250
    %v267 = vmul.f32 %v251, %v251
    %v268 = vmul.f32 %v252, %v252
    %v269 = vmul.f32 %v253, %v253
    %v270 = vmul.f32 %v254, %v254
    %v271 = vmul.f32 %v255, %v255
    %v272 = vmul.f32 %v256, %v256
    %v273 = vmul.f32 %v257, %v257
    %v274 = vmul.f32 %v258, %v258
    %v275 = vmul.f32 %v259, %v259
    %v276 = vmul.f32 %v260, %v260
    %v277 = vmul.f32 %v261, %v261
    %v278 = vmul.f32 %v262, %v262
    %v279 = vmul.f32 %v263, %v263
    %v280 = vmul.f32 %v264, %v264
    %v281 = vadd.f32 %v265, %v266
    %v282 = vadd.f32 %v281, %v267
    %v283 = vadd.f32 %v282, %v268
    %284 = vadd.xlane.f32.xlu0 %v283
    %v285 = vpop.xlane.xlu0 %284
    %v286 = vadd.f32 %v269, %v270
    %v287 = vadd.f32 %v286, %v271
    %v288 = vadd.f32 %v287, %v272
    %289 = vadd.xlane.f32.xlu0 %v288
    %v290 = vpop.xlane.xlu0 %289
    %v291 = vadd.f32 %v273, %v274
    %v292 = vadd.f32 %v291, %v275
    %v293 = vadd.f32 %v292, %v276
    %294 = vadd.xlane.f32.xlu0 %v293
    %v295 = vpop.xlane.xlu0 %294
    %v296 = vadd.f32 %v277, %v278
    %v297 = vadd.f32 %v296, %v279
    %v298 = vadd.f32 %v297, %v280
    %299 = vadd.xlane.f32.xlu0 %v298
    %v300 = vpop.xlane.xlu0 %299
    %v301 = vmul.f32 %v285, 0.001953125
    %v302 = vmul.f32 %v290, 0.001953125
    %v303 = vmul.f32 %v295, 0.001953125
    %v304 = vmul.f32 %v300, 0.001953125
    %v305 = vld [vmem:[%s2] sm:$0xff]
    %v306 = vld [vmem:[%s2 + $0x8] sm:$0xff]
    %v307 = vld [vmem:[%s2 + $0x10] sm:$0xff]
    %v308 = vld [vmem:[%s2 + $0x18] sm:$0xff]
    %v309 = vadd.f32 %v301, 1e-05
    %v310 = vadd.f32 %v302, 1e-05
    %v311 = vadd.f32 %v303, 1e-05
    %v312 = vadd.f32 %v304, 1e-05
    %v313 = vrsqrt.pop %v309
    %v314 = vrsqrt.pop %v310
    %v315 = vrsqrt.pop %v311
    %v316 = vrsqrt.pop %v312
    %v317 = vmul.f32 %v305, %v313
    %v318 = vmul.f32 %v306, %v314
    %v319 = vmul.f32 %v307, %v315
    %v320 = vmul.f32 %v308, %v316
    %322 = vset.pattern.permute.xlu0 0
    %323 = vperm.xlu0 %322, %v317
    %v324 = vpop.permute.xlu0 %323
    %327 = vset.pattern.permute.xlu0 0
    %328 = vperm.xlu0 %327, %v318
    %v329 = vpop.permute.xlu0 %328
    %332 = vset.pattern.permute.xlu0 0
    %333 = vperm.xlu0 %332, %v319
    %v334 = vpop.permute.xlu0 %333
    %337 = vset.pattern.permute.xlu0 0
    %338 = vperm.xlu0 %337, %v320
    %v339 = vpop.permute.xlu0 %338
    %v341 = vmul.f32 %v249, %v324
    %v342 = vmul.f32 %v250, %v324
    %v343 = vmul.f32 %v251, %v324
    %v344 = vmul.f32 %v252, %v324
    %v345 = vmul.f32 %v253, %v329
    %v346 = vmul.f32 %v254, %v329
    %v347 = vmul.f32 %v255, %v329
    %v348 = vmul.f32 %v256, %v329
    %v349 = vmul.f32 %v257, %v334
    %v350 = vmul.f32 %v258, %v334
    %v351 = vmul.f32 %v259, %v334
    %v352 = vmul.f32 %v260, %v334
    %v353 = vmul.f32 %v261, %v339
    %v354 = vmul.f32 %v262, %v339
    %v355 = vmul.f32 %v263, %v339
    %v356 = vmul.f32 %v264, %v339
    %v357 = vld [vmem:[%s3] sm:$0xff]
    %v358 = vld [vmem:[%s3 + $0x8] sm:$0xff]
    %v359 = vld [vmem:[%s3 + $0x10] sm:$0xff]
    %v360 = vld [vmem:[%s3 + $0x18] sm:$0xff]
    %362 = vset.pattern.permute.xlu0 0
    %363 = vperm.xlu0 %362, %v357
    %v364 = vpop.permute.xlu0 %363
    %367 = vset.pattern.permute.xlu0 0
    %368 = vperm.xlu0 %367, %v358
    %v369 = vpop.permute.xlu0 %368
    %372 = vset.pattern.permute.xlu0 0
    %373 = vperm.xlu0 %372, %v359
    %v374 = vpop.permute.xlu0 %373
    %377 = vset.pattern.permute.xlu0 0
    %378 = vperm.xlu0 %377, %v360
    %v379 = vpop.permute.xlu0 %378
    %v381 = vadd.f32 %v341, %v364
    %v382 = vadd.f32 %v342, %v364
    %v383 = vadd.f32 %v343, %v364
    %v384 = vadd.f32 %v344, %v364
    %v385 = vadd.f32 %v345, %v369
    %v386 = vadd.f32 %v346, %v369
    %v387 = vadd.f32 %v347, %v369
    %v388 = vadd.f32 %v348, %v369
    %v389 = vadd.f32 %v349, %v374
    %v390 = vadd.f32 %v350, %v374
    %v391 = vadd.f32 %v351, %v374
    %v392 = vadd.f32 %v352, %v374
    %v393 = vadd.f32 %v353, %v379
    %v394 = vadd.f32 %v354, %v379
    %v395 = vadd.f32 %v355, %v379
    %v396 = vadd.f32 %v356, %v379
    %v397 = vmax.f32 %v381, 0.0
    %v398 = vmax.f32 %v382, 0.0
    %v399 = vmax.f32 %v383, 0.0
    %v400 = vmax.f32 %v384, 0.0
    %v401 = vmax.f32 %v385, 0.0
    %v402 = vmax.f32 %v386, 0.0
    %v403 = vmax.f32 %v387, 0.0
    %v404 = vmax.f32 %v388, 0.0
    %v405 = vmax.f32 %v389, 0.0
    %v406 = vmax.f32 %v390, 0.0
    %v407 = vmax.f32 %v391, 0.0
    %v408 = vmax.f32 %v392, 0.0
    %v409 = vmax.f32 %v393, 0.0
    %v410 = vmax.f32 %v394, 0.0
    %v411 = vmax.f32 %v395, 0.0
    %v412 = vmax.f32 %v396, 0.0
    %v413 = vpack.c.bf16 %v401, %v397
    %v414 = vpack.c.bf16 %v402, %v398
    %v415 = vpack.c.bf16 %v403, %v399
    %v416 = vpack.c.bf16 %v404, %v400
    %v417 = vpack.c.bf16 %v409, %v405
    %v418 = vpack.c.bf16 %v410, %v406
    %v419 = vpack.c.bf16 %v411, %v407
    %v420 = vpack.c.bf16 %v412, %v408
    %v429 = vunpack.c.l.b16 %v413
    %v430 = vunpack.c.l.b16 %v414
    %v431 = vunpack.c.l.b16 %v415
    %v432 = vunpack.c.l.b16 %v416
    %v433 = vunpack.c.h.b16 %v413
    %v434 = vunpack.c.h.b16 %v414
    %v435 = vunpack.c.h.b16 %v415
    %v436 = vunpack.c.h.b16 %v416
    %v437 = vunpack.c.l.b16 %v417
    %v438 = vunpack.c.l.b16 %v418
    %v439 = vunpack.c.l.b16 %v419
    %v440 = vunpack.c.l.b16 %v420
    %v441 = vunpack.c.h.b16 %v417
    %v442 = vunpack.c.h.b16 %v418
    %v443 = vunpack.c.h.b16 %v419
    %v444 = vunpack.c.h.b16 %v420
    %v445 = vpack.c.b16 %v430, %v429
    %v446 = vpack.c.b16 %v432, %v431
    %v447 = vpack.c.b16 %v434, %v433
    %v448 = vpack.c.b16 %v436, %v435
    %v449 = vpack.c.b16 %v438, %v437
    %v450 = vpack.c.b16 %v440, %v439
    %v451 = vpack.c.b16 %v442, %v441
    %v452 = vpack.c.b16 %v444, %v443
    %461 = vst [vmem:[#allocation2] sm:$0xff] %v445
    %462 = vst [vmem:[#allocation2 + $0x8] sm:$0xff] %v446
    %463 = vst [vmem:[#allocation2 + $0x10] sm:$0xff] %v447
    %464 = vst [vmem:[#allocation2 + $0x18] sm:$0xff] %v448
    %465 = vst [vmem:[#allocation2 + $0x20] sm:$0xff] %v449
    %466 = vst [vmem:[#allocation2 + $0x28] sm:$0xff] %v450
    %467 = vst [vmem:[#allocation2 + $0x30] sm:$0xff] %v451
    %468 = vst [vmem:[#allocation2 + $0x38] sm:$0xff] %v452
    %v469 = vld [vmem:[%s5] sm:$0x1]
    %v470 = vld [vmem:[#allocation2] sm:$0x11]
    %v471 = vld [vmem:[#allocation2] sm:$0x22]
    %v472 = vld [vmem:[#allocation2] sm:$0x44]
    %v473 = vld [vmem:[#allocation2] sm:$0x88]
    %v474 = vld [vmem:[#allocation2 + $0x10] sm:$0x11]
    %v475 = vld [vmem:[#allocation2 + $0x10] sm:$0x22]
    %v476 = vld [vmem:[#allocation2 + $0x10] sm:$0x44]
    %v477 = vld [vmem:[#allocation2 + $0x10] sm:$0x88]
    %v478 = vld [vmem:[#allocation2 + $0x20] sm:$0x11]
    %v479 = vld [vmem:[#allocation2 + $0x20] sm:$0x22]
    %v480 = vld [vmem:[#allocation2 + $0x20] sm:$0x44]
    %v481 = vld [vmem:[#allocation2 + $0x20] sm:$0x88]
    %v482 = vld [vmem:[#allocation2 + $0x30] sm:$0x11]
    %v483 = vld [vmem:[#allocation2 + $0x30] sm:$0x22]
    %v484 = vld [vmem:[#allocation2 + $0x30] sm:$0x44]
    %v485 = vld [vmem:[#allocation2 + $0x30] sm:$0x88]
    %v487 = vunpack.c.l.b16 %v470
    %v488 = vunpack.c.h.b16 %v470
    %v489 = vpack.c.b16 %v487, %v487
    %v490 = vpack.c.b16 %v488, %v488
    %v494 = vshrl.u32 %v489, 16
    %v497 = vshrl.u32 %v490, 16
    %v502 = vunpack.c.l.b16 %v471
    %v503 = vunpack.c.h.b16 %v471
    %v504 = vpack.c.b16 %v502, %v502
    %v505 = vpack.c.b16 %v503, %v503
    %v506 = vrot.slane %v504, 1
    %v507 = vrot.slane %v505, 1
    %v511 = vshrl.u32 %v504, 16
    %v513 = vrot.slane %v511, 1
    %v515 = vshrl.u32 %v505, 16
    %v517 = vrot.slane %v515, 1
    %v521 = vunpack.c.l.b16 %v472
    %v522 = vunpack.c.h.b16 %v472
    %v523 = vpack.c.b16 %v521, %v521
    %v524 = vpack.c.b16 %v522, %v522
    %v525 = vrot.slane %v523, 2
    %v526 = vrot.slane %v524, 2
    %v530 = vshrl.u32 %v523, 16
    %v532 = vrot.slane %v530, 2
    %v534 = vshrl.u32 %v524, 16
    %v536 = vrot.slane %v534, 2
    %v540 = vunpack.c.l.b16 %v473
    %v541 = vunpack.c.h.b16 %v473
    %v542 = vpack.c.b16 %v540, %v540
    %v543 = vpack.c.b16 %v541, %v541
    %v544 = vrot.slane %v542, 3
    %v545 = vrot.slane %v543, 3
    %v549 = vshrl.u32 %v542, 16
    %v551 = vrot.slane %v549, 3
    %v553 = vshrl.u32 %v543, 16
    %v555 = vrot.slane %v553, 3
    %v559 = vunpack.c.l.b16 %v474
    %v560 = vunpack.c.h.b16 %v474
    %v561 = vpack.c.b16 %v559, %v559
    %v562 = vpack.c.b16 %v560, %v560
    %v566 = vshrl.u32 %v561, 16
    %v569 = vshrl.u32 %v562, 16
    %v574 = vunpack.c.l.b16 %v475
    %v575 = vunpack.c.h.b16 %v475
    %v576 = vpack.c.b16 %v574, %v574
    %v577 = vpack.c.b16 %v575, %v575
    %v578 = vrot.slane %v576, 1
    %v579 = vrot.slane %v577, 1
    %v583 = vshrl.u32 %v576, 16
    %v585 = vrot.slane %v583, 1
    %v587 = vshrl.u32 %v577, 16
    %v589 = vrot.slane %v587, 1
    %v593 = vunpack.c.l.b16 %v476
    %v594 = vunpack.c.h.b16 %v476
    %v595 = vpack.c.b16 %v593, %v593
    %v596 = vpack.c.b16 %v594, %v594
    %v597 = vrot.slane %v595, 2
    %v598 = vrot.slane %v596, 2
    %v602 = vshrl.u32 %v595, 16
    %v604 = vrot.slane %v602, 2
    %v606 = vshrl.u32 %v596, 16
    %v608 = vrot.slane %v606, 2
    %v612 = vunpack.c.l.b16 %v477
    %v613 = vunpack.c.h.b16 %v477
    %v614 = vpack.c.b16 %v612, %v612
    %v615 = vpack.c.b16 %v613, %v613
    %v616 = vrot.slane %v614, 3
    %v617 = vrot.slane %v615, 3
    %v621 = vshrl.u32 %v614, 16
    %v623 = vrot.slane %v621, 3
    %v625 = vshrl.u32 %v615, 16
    %v627 = vrot.slane %v625, 3
    %v631 = vunpack.c.l.b16 %v478
    %v632 = vunpack.c.h.b16 %v478
    %v633 = vpack.c.b16 %v631, %v631
    %v634 = vpack.c.b16 %v632, %v632
    %v638 = vshrl.u32 %v633, 16
    %v641 = vshrl.u32 %v634, 16
    %v646 = vunpack.c.l.b16 %v479
    %v647 = vunpack.c.h.b16 %v479
    %v648 = vpack.c.b16 %v646, %v646
    %v649 = vpack.c.b16 %v647, %v647
    %v650 = vrot.slane %v648, 1
    %v651 = vrot.slane %v649, 1
    %v655 = vshrl.u32 %v648, 16
    %v657 = vrot.slane %v655, 1
    %v659 = vshrl.u32 %v649, 16
    %v661 = vrot.slane %v659, 1
    %v665 = vunpack.c.l.b16 %v480
    %v666 = vunpack.c.h.b16 %v480
    %v667 = vpack.c.b16 %v665, %v665
    %v668 = vpack.c.b16 %v666, %v666
    %v669 = vrot.slane %v667, 2
    %v670 = vrot.slane %v668, 2
    %v674 = vshrl.u32 %v667, 16
    %v676 = vrot.slane %v674, 2
    %v678 = vshrl.u32 %v668, 16
    %v680 = vrot.slane %v678, 2
    %v684 = vunpack.c.l.b16 %v481
    %v685 = vunpack.c.h.b16 %v481
    %v686 = vpack.c.b16 %v684, %v684
    %v687 = vpack.c.b16 %v685, %v685
    %v688 = vrot.slane %v686, 3
    %v689 = vrot.slane %v687, 3
    %v693 = vshrl.u32 %v686, 16
    %v695 = vrot.slane %v693, 3
    %v697 = vshrl.u32 %v687, 16
    %v699 = vrot.slane %v697, 3
    %v703 = vunpack.c.l.b16 %v482
    %v704 = vunpack.c.h.b16 %v482
    %v705 = vpack.c.b16 %v703, %v703
    %v706 = vpack.c.b16 %v704, %v704
    %v710 = vshrl.u32 %v705, 16
    %v713 = vshrl.u32 %v706, 16
    %v718 = vunpack.c.l.b16 %v483
    %v719 = vunpack.c.h.b16 %v483
    %v720 = vpack.c.b16 %v718, %v718
    %v721 = vpack.c.b16 %v719, %v719
    %v722 = vrot.slane %v720, 1
    %v723 = vrot.slane %v721, 1
    %v727 = vshrl.u32 %v720, 16
    %v729 = vrot.slane %v727, 1
    %v731 = vshrl.u32 %v721, 16
    %v733 = vrot.slane %v731, 1
    %v737 = vunpack.c.l.b16 %v484
    %v738 = vunpack.c.h.b16 %v484
    %v739 = vpack.c.b16 %v737, %v737
    %v740 = vpack.c.b16 %v738, %v738
    %v741 = vrot.slane %v739, 2
    %v742 = vrot.slane %v740, 2
    %v746 = vshrl.u32 %v739, 16
    %v748 = vrot.slane %v746, 2
    %v750 = vshrl.u32 %v740, 16
    %v752 = vrot.slane %v750, 2
    %v756 = vunpack.c.l.b16 %v485
    %v757 = vunpack.c.h.b16 %v485
    %v758 = vpack.c.b16 %v756, %v756
    %v759 = vpack.c.b16 %v757, %v757
    %v760 = vrot.slane %v758, 3
    %v761 = vrot.slane %v759, 3
    %v765 = vshrl.u32 %v758, 16
    %v767 = vrot.slane %v765, 3
    %v769 = vshrl.u32 %v759, 16
    %v771 = vrot.slane %v769, 3
    %v774 = vld [vmem:[%s4] sm:$0xf]
    %v775 = vld [vmem:[%s4 + $0x4] sm:$0xf]
    %v776 = vld [vmem:[%s4 + $0x8] sm:$0xf]
    %v777 = vld [vmem:[%s4 + $0xc] sm:$0xf]
    %v778 = vld [vmem:[%s4 + $0x10] sm:$0xf]
    %v779 = vld [vmem:[%s4 + $0x14] sm:$0xf]
    %v780 = vld [vmem:[%s4 + $0x18] sm:$0xf]
    %v781 = vld [vmem:[%s4 + $0x1c] sm:$0xf]
    %v782 = vld [vmem:[%s4 + $0x20] sm:$0xf]
    %v783 = vld [vmem:[%s4 + $0x24] sm:$0xf]
    %v784 = vld [vmem:[%s4 + $0x28] sm:$0xf]
    %v785 = vld [vmem:[%s4 + $0x2c] sm:$0xf]
    %v786 = vld [vmem:[%s4 + $0x30] sm:$0xf]
    %v787 = vld [vmem:[%s4 + $0x34] sm:$0xf]
    %v788 = vld [vmem:[%s4 + $0x38] sm:$0xf]
    %v789 = vld [vmem:[%s4 + $0x3c] sm:$0xf]
    %v790 = vld [vmem:[%s4 + $0x40] sm:$0xf]
    %v791 = vld [vmem:[%s4 + $0x44] sm:$0xf]
    %v792 = vld [vmem:[%s4 + $0x48] sm:$0xf]
    %v793 = vld [vmem:[%s4 + $0x4c] sm:$0xf]
    %v794 = vld [vmem:[%s4 + $0x50] sm:$0xf]
    %v795 = vld [vmem:[%s4 + $0x54] sm:$0xf]
    %v796 = vld [vmem:[%s4 + $0x58] sm:$0xf]
    %v797 = vld [vmem:[%s4 + $0x5c] sm:$0xf]
    %v798 = vld [vmem:[%s4 + $0x60] sm:$0xf]
    %v799 = vld [vmem:[%s4 + $0x64] sm:$0xf]
    %v800 = vld [vmem:[%s4 + $0x68] sm:$0xf]
    %v801 = vld [vmem:[%s4 + $0x6c] sm:$0xf]
    %v802 = vld [vmem:[%s4 + $0x70] sm:$0xf]
    %v803 = vld [vmem:[%s4 + $0x74] sm:$0xf]
    %v804 = vld [vmem:[%s4 + $0x78] sm:$0xf]
    %v805 = vld [vmem:[%s4 + $0x7c] sm:$0xf]
    %v806 = vld [vmem:[%s4 + $0x80] sm:$0xf]
    %v807 = vld [vmem:[%s4 + $0x84] sm:$0xf]
    %v808 = vld [vmem:[%s4 + $0x88] sm:$0xf]
    %v809 = vld [vmem:[%s4 + $0x8c] sm:$0xf]
    %v810 = vld [vmem:[%s4 + $0x90] sm:$0xf]
    %v811 = vld [vmem:[%s4 + $0x94] sm:$0xf]
    %v812 = vld [vmem:[%s4 + $0x98] sm:$0xf]
    %v813 = vld [vmem:[%s4 + $0x9c] sm:$0xf]
    %v814 = vld [vmem:[%s4 + $0xa0] sm:$0xf]
    %v815 = vld [vmem:[%s4 + $0xa4] sm:$0xf]
    %v816 = vld [vmem:[%s4 + $0xa8] sm:$0xf]
    %v817 = vld [vmem:[%s4 + $0xac] sm:$0xf]
    %v818 = vld [vmem:[%s4 + $0xb0] sm:$0xf]
    %v819 = vld [vmem:[%s4 + $0xb4] sm:$0xf]
    %v820 = vld [vmem:[%s4 + $0xb8] sm:$0xf]
    %v821 = vld [vmem:[%s4 + $0xbc] sm:$0xf]
    %v822 = vld [vmem:[%s4 + $0xc0] sm:$0xf]
    %v823 = vld [vmem:[%s4 + $0xc4] sm:$0xf]
    %v824 = vld [vmem:[%s4 + $0xc8] sm:$0xf]
    %v825 = vld [vmem:[%s4 + $0xcc] sm:$0xf]
    %v826 = vld [vmem:[%s4 + $0xd0] sm:$0xf]
    %v827 = vld [vmem:[%s4 + $0xd4] sm:$0xf]
    %v828 = vld [vmem:[%s4 + $0xd8] sm:$0xf]
    %v829 = vld [vmem:[%s4 + $0xdc] sm:$0xf]
    %v830 = vld [vmem:[%s4 + $0xe0] sm:$0xf]
    %v831 = vld [vmem:[%s4 + $0xe4] sm:$0xf]
    %v832 = vld [vmem:[%s4 + $0xe8] sm:$0xf]
    %v833 = vld [vmem:[%s4 + $0xec] sm:$0xf]
    %v834 = vld [vmem:[%s4 + $0xf0] sm:$0xf]
    %v835 = vld [vmem:[%s4 + $0xf4] sm:$0xf]
    %v836 = vld [vmem:[%s4 + $0xf8] sm:$0xf]
    %v837 = vld [vmem:[%s4 + $0xfc] sm:$0xf]
    %v838 = vld [vmem:[%s4 + $0x100] sm:$0xf]
    %v839 = vld [vmem:[%s4 + $0x104] sm:$0xf]
    %v840 = vld [vmem:[%s4 + $0x108] sm:$0xf]
    %v841 = vld [vmem:[%s4 + $0x10c] sm:$0xf]
    %v842 = vld [vmem:[%s4 + $0x110] sm:$0xf]
    %v843 = vld [vmem:[%s4 + $0x114] sm:$0xf]
    %v844 = vld [vmem:[%s4 + $0x118] sm:$0xf]
    %v845 = vld [vmem:[%s4 + $0x11c] sm:$0xf]
    %v846 = vld [vmem:[%s4 + $0x120] sm:$0xf]
    %v847 = vld [vmem:[%s4 + $0x124] sm:$0xf]
    %v848 = vld [vmem:[%s4 + $0x128] sm:$0xf]
    %v849 = vld [vmem:[%s4 + $0x12c] sm:$0xf]
    %v850 = vld [vmem:[%s4 + $0x130] sm:$0xf]
    %v851 = vld [vmem:[%s4 + $0x134] sm:$0xf]
    %v852 = vld [vmem:[%s4 + $0x138] sm:$0xf]
    %v853 = vld [vmem:[%s4 + $0x13c] sm:$0xf]
    %v854 = vld [vmem:[%s4 + $0x140] sm:$0xf]
    %v855 = vld [vmem:[%s4 + $0x144] sm:$0xf]
    %v856 = vld [vmem:[%s4 + $0x148] sm:$0xf]
    %v857 = vld [vmem:[%s4 + $0x14c] sm:$0xf]
    %v858 = vld [vmem:[%s4 + $0x150] sm:$0xf]
    %v859 = vld [vmem:[%s4 + $0x154] sm:$0xf]
    %v860 = vld [vmem:[%s4 + $0x158] sm:$0xf]
    %v861 = vld [vmem:[%s4 + $0x15c] sm:$0xf]
    %v862 = vld [vmem:[%s4 + $0x160] sm:$0xf]
    %v863 = vld [vmem:[%s4 + $0x164] sm:$0xf]
    %v864 = vld [vmem:[%s4 + $0x168] sm:$0xf]
    %v865 = vld [vmem:[%s4 + $0x16c] sm:$0xf]
    %v866 = vld [vmem:[%s4 + $0x170] sm:$0xf]
    %v867 = vld [vmem:[%s4 + $0x174] sm:$0xf]
    %v868 = vld [vmem:[%s4 + $0x178] sm:$0xf]
    %v869 = vld [vmem:[%s4 + $0x17c] sm:$0xf]
    %v870 = vld [vmem:[%s4 + $0x180] sm:$0xf]
    %v871 = vld [vmem:[%s4 + $0x184] sm:$0xf]
    %v872 = vld [vmem:[%s4 + $0x188] sm:$0xf]
    %v873 = vld [vmem:[%s4 + $0x18c] sm:$0xf]
    %v874 = vld [vmem:[%s4 + $0x190] sm:$0xf]
    %v875 = vld [vmem:[%s4 + $0x194] sm:$0xf]
    %v876 = vld [vmem:[%s4 + $0x198] sm:$0xf]
    %v877 = vld [vmem:[%s4 + $0x19c] sm:$0xf]
    %v878 = vld [vmem:[%s4 + $0x1a0] sm:$0xf]
    %v879 = vld [vmem:[%s4 + $0x1a4] sm:$0xf]
    %v880 = vld [vmem:[%s4 + $0x1a8] sm:$0xf]
    %v881 = vld [vmem:[%s4 + $0x1ac] sm:$0xf]
    %v882 = vld [vmem:[%s4 + $0x1b0] sm:$0xf]
    %v883 = vld [vmem:[%s4 + $0x1b4] sm:$0xf]
    %v884 = vld [vmem:[%s4 + $0x1b8] sm:$0xf]
    %v885 = vld [vmem:[%s4 + $0x1bc] sm:$0xf]
    %v886 = vld [vmem:[%s4 + $0x1c0] sm:$0xf]
    %v887 = vld [vmem:[%s4 + $0x1c4] sm:$0xf]
    %v888 = vld [vmem:[%s4 + $0x1c8] sm:$0xf]
    %v889 = vld [vmem:[%s4 + $0x1cc] sm:$0xf]
    %v890 = vld [vmem:[%s4 + $0x1d0] sm:$0xf]
    %v891 = vld [vmem:[%s4 + $0x1d4] sm:$0xf]
    %v892 = vld [vmem:[%s4 + $0x1d8] sm:$0xf]
    %v893 = vld [vmem:[%s4 + $0x1dc] sm:$0xf]
    %v894 = vld [vmem:[%s4 + $0x1e0] sm:$0xf]
    %v895 = vld [vmem:[%s4 + $0x1e4] sm:$0xf]
    %v896 = vld [vmem:[%s4 + $0x1e8] sm:$0xf]
    %v897 = vld [vmem:[%s4 + $0x1ec] sm:$0xf]
    %v898 = vld [vmem:[%s4 + $0x1f0] sm:$0xf]
    %v899 = vld [vmem:[%s4 + $0x1f4] sm:$0xf]
    %v900 = vld [vmem:[%s4 + $0x1f8] sm:$0xf]
    %v901 = vld [vmem:[%s4 + $0x1fc] sm:$0xf]
    %v902 = vld [vmem:[%s4 + $0x200] sm:$0xf]
    %v903 = vld [vmem:[%s4 + $0x204] sm:$0xf]
    %v904 = vld [vmem:[%s4 + $0x208] sm:$0xf]
    %v905 = vld [vmem:[%s4 + $0x20c] sm:$0xf]
    %v906 = vld [vmem:[%s4 + $0x210] sm:$0xf]
    %v907 = vld [vmem:[%s4 + $0x214] sm:$0xf]
    %v908 = vld [vmem:[%s4 + $0x218] sm:$0xf]
    %v909 = vld [vmem:[%s4 + $0x21c] sm:$0xf]
    %v910 = vld [vmem:[%s4 + $0x220] sm:$0xf]
    %v911 = vld [vmem:[%s4 + $0x224] sm:$0xf]
    %v912 = vld [vmem:[%s4 + $0x228] sm:$0xf]
    %v913 = vld [vmem:[%s4 + $0x22c] sm:$0xf]
    %v914 = vld [vmem:[%s4 + $0x230] sm:$0xf]
    %v915 = vld [vmem:[%s4 + $0x234] sm:$0xf]
    %v916 = vld [vmem:[%s4 + $0x238] sm:$0xf]
    %v917 = vld [vmem:[%s4 + $0x23c] sm:$0xf]
    %v918 = vld [vmem:[%s4 + $0x240] sm:$0xf]
    %v919 = vld [vmem:[%s4 + $0x244] sm:$0xf]
    %v920 = vld [vmem:[%s4 + $0x248] sm:$0xf]
    %v921 = vld [vmem:[%s4 + $0x24c] sm:$0xf]
    %v922 = vld [vmem:[%s4 + $0x250] sm:$0xf]
    %v923 = vld [vmem:[%s4 + $0x254] sm:$0xf]
    %v924 = vld [vmem:[%s4 + $0x258] sm:$0xf]
    %v925 = vld [vmem:[%s4 + $0x25c] sm:$0xf]
    %v926 = vld [vmem:[%s4 + $0x260] sm:$0xf]
    %v927 = vld [vmem:[%s4 + $0x264] sm:$0xf]
    %v928 = vld [vmem:[%s4 + $0x268] sm:$0xf]
    %v929 = vld [vmem:[%s4 + $0x26c] sm:$0xf]
    %v930 = vld [vmem:[%s4 + $0x270] sm:$0xf]
    %v931 = vld [vmem:[%s4 + $0x274] sm:$0xf]
    %v932 = vld [vmem:[%s4 + $0x278] sm:$0xf]
    %v933 = vld [vmem:[%s4 + $0x27c] sm:$0xf]
    %v934 = vld [vmem:[%s4 + $0x280] sm:$0xf]
    %v935 = vld [vmem:[%s4 + $0x284] sm:$0xf]
    %v936 = vld [vmem:[%s4 + $0x288] sm:$0xf]
    %v937 = vld [vmem:[%s4 + $0x28c] sm:$0xf]
    %v938 = vld [vmem:[%s4 + $0x290] sm:$0xf]
    %v939 = vld [vmem:[%s4 + $0x294] sm:$0xf]
    %v940 = vld [vmem:[%s4 + $0x298] sm:$0xf]
    %v941 = vld [vmem:[%s4 + $0x29c] sm:$0xf]
    %v942 = vld [vmem:[%s4 + $0x2a0] sm:$0xf]
    %v943 = vld [vmem:[%s4 + $0x2a4] sm:$0xf]
    %v944 = vld [vmem:[%s4 + $0x2a8] sm:$0xf]
    %v945 = vld [vmem:[%s4 + $0x2ac] sm:$0xf]
    %v946 = vld [vmem:[%s4 + $0x2b0] sm:$0xf]
    %v947 = vld [vmem:[%s4 + $0x2b4] sm:$0xf]
    %v948 = vld [vmem:[%s4 + $0x2b8] sm:$0xf]
    %v949 = vld [vmem:[%s4 + $0x2bc] sm:$0xf]
    %v950 = vld [vmem:[%s4 + $0x2c0] sm:$0xf]
    %v951 = vld [vmem:[%s4 + $0x2c4] sm:$0xf]
    %v952 = vld [vmem:[%s4 + $0x2c8] sm:$0xf]
    %v953 = vld [vmem:[%s4 + $0x2cc] sm:$0xf]
    %v954 = vld [vmem:[%s4 + $0x2d0] sm:$0xf]
    %v955 = vld [vmem:[%s4 + $0x2d4] sm:$0xf]
    %v956 = vld [vmem:[%s4 + $0x2d8] sm:$0xf]
    %v957 = vld [vmem:[%s4 + $0x2dc] sm:$0xf]
    %v958 = vld [vmem:[%s4 + $0x2e0] sm:$0xf]
    %v959 = vld [vmem:[%s4 + $0x2e4] sm:$0xf]
    %v960 = vld [vmem:[%s4 + $0x2e8] sm:$0xf]
    %v961 = vld [vmem:[%s4 + $0x2ec] sm:$0xf]
    %v962 = vld [vmem:[%s4 + $0x2f0] sm:$0xf]
    %v963 = vld [vmem:[%s4 + $0x2f4] sm:$0xf]
    %v964 = vld [vmem:[%s4 + $0x2f8] sm:$0xf]
    %v965 = vld [vmem:[%s4 + $0x2fc] sm:$0xf]
    %v966 = vld [vmem:[%s4 + $0x300] sm:$0xf]
    %v967 = vld [vmem:[%s4 + $0x304] sm:$0xf]
    %v968 = vld [vmem:[%s4 + $0x308] sm:$0xf]
    %v969 = vld [vmem:[%s4 + $0x30c] sm:$0xf]
    %v970 = vld [vmem:[%s4 + $0x310] sm:$0xf]
    %v971 = vld [vmem:[%s4 + $0x314] sm:$0xf]
    %v972 = vld [vmem:[%s4 + $0x318] sm:$0xf]
    %v973 = vld [vmem:[%s4 + $0x31c] sm:$0xf]
    %v974 = vld [vmem:[%s4 + $0x320] sm:$0xf]
    %v975 = vld [vmem:[%s4 + $0x324] sm:$0xf]
    %v976 = vld [vmem:[%s4 + $0x328] sm:$0xf]
    %v977 = vld [vmem:[%s4 + $0x32c] sm:$0xf]
    %v978 = vld [vmem:[%s4 + $0x330] sm:$0xf]
    %v979 = vld [vmem:[%s4 + $0x334] sm:$0xf]
    %v980 = vld [vmem:[%s4 + $0x338] sm:$0xf]
    %v981 = vld [vmem:[%s4 + $0x33c] sm:$0xf]
    %v982 = vld [vmem:[%s4 + $0x340] sm:$0xf]
    %v983 = vld [vmem:[%s4 + $0x344] sm:$0xf]
    %v984 = vld [vmem:[%s4 + $0x348] sm:$0xf]
    %v985 = vld [vmem:[%s4 + $0x34c] sm:$0xf]
    %v986 = vld [vmem:[%s4 + $0x350] sm:$0xf]
    %v987 = vld [vmem:[%s4 + $0x354] sm:$0xf]
    %v988 = vld [vmem:[%s4 + $0x358] sm:$0xf]
    %v989 = vld [vmem:[%s4 + $0x35c] sm:$0xf]
    %v990 = vld [vmem:[%s4 + $0x360] sm:$0xf]
    %v991 = vld [vmem:[%s4 + $0x364] sm:$0xf]
    %v992 = vld [vmem:[%s4 + $0x368] sm:$0xf]
    %v993 = vld [vmem:[%s4 + $0x36c] sm:$0xf]
    %v994 = vld [vmem:[%s4 + $0x370] sm:$0xf]
    %v995 = vld [vmem:[%s4 + $0x374] sm:$0xf]
    %v996 = vld [vmem:[%s4 + $0x378] sm:$0xf]
    %v997 = vld [vmem:[%s4 + $0x37c] sm:$0xf]
    %v998 = vld [vmem:[%s4 + $0x380] sm:$0xf]
    %v999 = vld [vmem:[%s4 + $0x384] sm:$0xf]
    %v1000 = vld [vmem:[%s4 + $0x388] sm:$0xf]
    %v1001 = vld [vmem:[%s4 + $0x38c] sm:$0xf]
    %v1002 = vld [vmem:[%s4 + $0x390] sm:$0xf]
    %v1003 = vld [vmem:[%s4 + $0x394] sm:$0xf]
    %v1004 = vld [vmem:[%s4 + $0x398] sm:$0xf]
    %v1005 = vld [vmem:[%s4 + $0x39c] sm:$0xf]
    %v1006 = vld [vmem:[%s4 + $0x3a0] sm:$0xf]
    %v1007 = vld [vmem:[%s4 + $0x3a4] sm:$0xf]
    %v1008 = vld [vmem:[%s4 + $0x3a8] sm:$0xf]
    %v1009 = vld [vmem:[%s4 + $0x3ac] sm:$0xf]
    %v1010 = vld [vmem:[%s4 + $0x3b0] sm:$0xf]
    %v1011 = vld [vmem:[%s4 + $0x3b4] sm:$0xf]
    %v1012 = vld [vmem:[%s4 + $0x3b8] sm:$0xf]
    %v1013 = vld [vmem:[%s4 + $0x3bc] sm:$0xf]
    %v1014 = vld [vmem:[%s4 + $0x3c0] sm:$0xf]
    %v1015 = vld [vmem:[%s4 + $0x3c4] sm:$0xf]
    %v1016 = vld [vmem:[%s4 + $0x3c8] sm:$0xf]
    %v1017 = vld [vmem:[%s4 + $0x3cc] sm:$0xf]
    %v1018 = vld [vmem:[%s4 + $0x3d0] sm:$0xf]
    %v1019 = vld [vmem:[%s4 + $0x3d4] sm:$0xf]
    %v1020 = vld [vmem:[%s4 + $0x3d8] sm:$0xf]
    %v1021 = vld [vmem:[%s4 + $0x3dc] sm:$0xf]
    %v1022 = vld [vmem:[%s4 + $0x3e0] sm:$0xf]
    %v1023 = vld [vmem:[%s4 + $0x3e4] sm:$0xf]
    %v1024 = vld [vmem:[%s4 + $0x3e8] sm:$0xf]
    %v1025 = vld [vmem:[%s4 + $0x3ec] sm:$0xf]
    %v1026 = vld [vmem:[%s4 + $0x3f0] sm:$0xf]
    %v1027 = vld [vmem:[%s4 + $0x3f4] sm:$0xf]
    %v1028 = vld [vmem:[%s4 + $0x3f8] sm:$0xf]
    %v1029 = vld [vmem:[%s4 + $0x3fc] sm:$0xf]
    %v1030 = vld [vmem:[%s4 + $0x400] sm:$0xf]
    %v1031 = vld [vmem:[%s4 + $0x404] sm:$0xf]
    %v1032 = vld [vmem:[%s4 + $0x408] sm:$0xf]
    %v1033 = vld [vmem:[%s4 + $0x40c] sm:$0xf]
    %v1034 = vld [vmem:[%s4 + $0x410] sm:$0xf]
    %v1035 = vld [vmem:[%s4 + $0x414] sm:$0xf]
    %v1036 = vld [vmem:[%s4 + $0x418] sm:$0xf]
    %v1037 = vld [vmem:[%s4 + $0x41c] sm:$0xf]
    %v1038 = vld [vmem:[%s4 + $0x420] sm:$0xf]
    %v1039 = vld [vmem:[%s4 + $0x424] sm:$0xf]
    %v1040 = vld [vmem:[%s4 + $0x428] sm:$0xf]
    %v1041 = vld [vmem:[%s4 + $0x42c] sm:$0xf]
    %v1042 = vld [vmem:[%s4 + $0x430] sm:$0xf]
    %v1043 = vld [vmem:[%s4 + $0x434] sm:$0xf]
    %v1044 = vld [vmem:[%s4 + $0x438] sm:$0xf]
    %v1045 = vld [vmem:[%s4 + $0x43c] sm:$0xf]
    %v1046 = vld [vmem:[%s4 + $0x440] sm:$0xf]
    %v1047 = vld [vmem:[%s4 + $0x444] sm:$0xf]
    %v1048 = vld [vmem:[%s4 + $0x448] sm:$0xf]
    %v1049 = vld [vmem:[%s4 + $0x44c] sm:$0xf]
    %v1050 = vld [vmem:[%s4 + $0x450] sm:$0xf]
    %v1051 = vld [vmem:[%s4 + $0x454] sm:$0xf]
    %v1052 = vld [vmem:[%s4 + $0x458] sm:$0xf]
    %v1053 = vld [vmem:[%s4 + $0x45c] sm:$0xf]
    %v1054 = vld [vmem:[%s4 + $0x460] sm:$0xf]
    %v1055 = vld [vmem:[%s4 + $0x464] sm:$0xf]
    %v1056 = vld [vmem:[%s4 + $0x468] sm:$0xf]
    %v1057 = vld [vmem:[%s4 + $0x46c] sm:$0xf]
    %v1058 = vld [vmem:[%s4 + $0x470] sm:$0xf]
    %v1059 = vld [vmem:[%s4 + $0x474] sm:$0xf]
    %v1060 = vld [vmem:[%s4 + $0x478] sm:$0xf]
    %v1061 = vld [vmem:[%s4 + $0x47c] sm:$0xf]
    %v1062 = vld [vmem:[%s4 + $0x480] sm:$0xf]
    %v1063 = vld [vmem:[%s4 + $0x484] sm:$0xf]
    %v1064 = vld [vmem:[%s4 + $0x488] sm:$0xf]
    %v1065 = vld [vmem:[%s4 + $0x48c] sm:$0xf]
    %v1066 = vld [vmem:[%s4 + $0x490] sm:$0xf]
    %v1067 = vld [vmem:[%s4 + $0x494] sm:$0xf]
    %v1068 = vld [vmem:[%s4 + $0x498] sm:$0xf]
    %v1069 = vld [vmem:[%s4 + $0x49c] sm:$0xf]
    %v1070 = vld [vmem:[%s4 + $0x4a0] sm:$0xf]
    %v1071 = vld [vmem:[%s4 + $0x4a4] sm:$0xf]
    %v1072 = vld [vmem:[%s4 + $0x4a8] sm:$0xf]
    %v1073 = vld [vmem:[%s4 + $0x4ac] sm:$0xf]
    %v1074 = vld [vmem:[%s4 + $0x4b0] sm:$0xf]
    %v1075 = vld [vmem:[%s4 + $0x4b4] sm:$0xf]
    %v1076 = vld [vmem:[%s4 + $0x4b8] sm:$0xf]
    %v1077 = vld [vmem:[%s4 + $0x4bc] sm:$0xf]
    %v1078 = vld [vmem:[%s4 + $0x4c0] sm:$0xf]
    %v1079 = vld [vmem:[%s4 + $0x4c4] sm:$0xf]
    %v1080 = vld [vmem:[%s4 + $0x4c8] sm:$0xf]
    %v1081 = vld [vmem:[%s4 + $0x4cc] sm:$0xf]
    %v1082 = vld [vmem:[%s4 + $0x4d0] sm:$0xf]
    %v1083 = vld [vmem:[%s4 + $0x4d4] sm:$0xf]
    %v1084 = vld [vmem:[%s4 + $0x4d8] sm:$0xf]
    %v1085 = vld [vmem:[%s4 + $0x4dc] sm:$0xf]
    %v1086 = vld [vmem:[%s4 + $0x4e0] sm:$0xf]
    %v1087 = vld [vmem:[%s4 + $0x4e4] sm:$0xf]
    %v1088 = vld [vmem:[%s4 + $0x4e8] sm:$0xf]
    %v1089 = vld [vmem:[%s4 + $0x4ec] sm:$0xf]
    %v1090 = vld [vmem:[%s4 + $0x4f0] sm:$0xf]
    %v1091 = vld [vmem:[%s4 + $0x4f4] sm:$0xf]
    %v1092 = vld [vmem:[%s4 + $0x4f8] sm:$0xf]
    %v1093 = vld [vmem:[%s4 + $0x4fc] sm:$0xf]
    %v1094 = vld [vmem:[%s4 + $0x500] sm:$0xf]
    %v1095 = vld [vmem:[%s4 + $0x504] sm:$0xf]
    %v1096 = vld [vmem:[%s4 + $0x508] sm:$0xf]
    %v1097 = vld [vmem:[%s4 + $0x50c] sm:$0xf]
    %v1098 = vld [vmem:[%s4 + $0x510] sm:$0xf]
    %v1099 = vld [vmem:[%s4 + $0x514] sm:$0xf]
    %v1100 = vld [vmem:[%s4 + $0x518] sm:$0xf]
    %v1101 = vld [vmem:[%s4 + $0x51c] sm:$0xf]
    %v1102 = vld [vmem:[%s4 + $0x520] sm:$0xf]
    %v1103 = vld [vmem:[%s4 + $0x524] sm:$0xf]
    %v1104 = vld [vmem:[%s4 + $0x528] sm:$0xf]
    %v1105 = vld [vmem:[%s4 + $0x52c] sm:$0xf]
    %v1106 = vld [vmem:[%s4 + $0x530] sm:$0xf]
    %v1107 = vld [vmem:[%s4 + $0x534] sm:$0xf]
    %v1108 = vld [vmem:[%s4 + $0x538] sm:$0xf]
    %v1109 = vld [vmem:[%s4 + $0x53c] sm:$0xf]
    %v1110 = vld [vmem:[%s4 + $0x540] sm:$0xf]
    %v1111 = vld [vmem:[%s4 + $0x544] sm:$0xf]
    %v1112 = vld [vmem:[%s4 + $0x548] sm:$0xf]
    %v1113 = vld [vmem:[%s4 + $0x54c] sm:$0xf]
    %v1114 = vld [vmem:[%s4 + $0x550] sm:$0xf]
    %v1115 = vld [vmem:[%s4 + $0x554] sm:$0xf]
    %v1116 = vld [vmem:[%s4 + $0x558] sm:$0xf]
    %v1117 = vld [vmem:[%s4 + $0x55c] sm:$0xf]
    %v1118 = vld [vmem:[%s4 + $0x560] sm:$0xf]
    %v1119 = vld [vmem:[%s4 + $0x564] sm:$0xf]
    %v1120 = vld [vmem:[%s4 + $0x568] sm:$0xf]
    %v1121 = vld [vmem:[%s4 + $0x56c] sm:$0xf]
    %v1122 = vld [vmem:[%s4 + $0x570] sm:$0xf]
    %v1123 = vld [vmem:[%s4 + $0x574] sm:$0xf]
    %v1124 = vld [vmem:[%s4 + $0x578] sm:$0xf]
    %v1125 = vld [vmem:[%s4 + $0x57c] sm:$0xf]
    %v1126 = vld [vmem:[%s4 + $0x580] sm:$0xf]
    %v1127 = vld [vmem:[%s4 + $0x584] sm:$0xf]
    %v1128 = vld [vmem:[%s4 + $0x588] sm:$0xf]
    %v1129 = vld [vmem:[%s4 + $0x58c] sm:$0xf]
    %v1130 = vld [vmem:[%s4 + $0x590] sm:$0xf]
    %v1131 = vld [vmem:[%s4 + $0x594] sm:$0xf]
    %v1132 = vld [vmem:[%s4 + $0x598] sm:$0xf]
    %v1133 = vld [vmem:[%s4 + $0x59c] sm:$0xf]
    %v1134 = vld [vmem:[%s4 + $0x5a0] sm:$0xf]
    %v1135 = vld [vmem:[%s4 + $0x5a4] sm:$0xf]
    %v1136 = vld [vmem:[%s4 + $0x5a8] sm:$0xf]
    %v1137 = vld [vmem:[%s4 + $0x5ac] sm:$0xf]
    %v1138 = vld [vmem:[%s4 + $0x5b0] sm:$0xf]
    %v1139 = vld [vmem:[%s4 + $0x5b4] sm:$0xf]
    %v1140 = vld [vmem:[%s4 + $0x5b8] sm:$0xf]
    %v1141 = vld [vmem:[%s4 + $0x5bc] sm:$0xf]
    %v1142 = vld [vmem:[%s4 + $0x5c0] sm:$0xf]
    %v1143 = vld [vmem:[%s4 + $0x5c4] sm:$0xf]
    %v1144 = vld [vmem:[%s4 + $0x5c8] sm:$0xf]
    %v1145 = vld [vmem:[%s4 + $0x5cc] sm:$0xf]
    %v1146 = vld [vmem:[%s4 + $0x5d0] sm:$0xf]
    %v1147 = vld [vmem:[%s4 + $0x5d4] sm:$0xf]
    %v1148 = vld [vmem:[%s4 + $0x5d8] sm:$0xf]
    %v1149 = vld [vmem:[%s4 + $0x5dc] sm:$0xf]
    %v1150 = vld [vmem:[%s4 + $0x5e0] sm:$0xf]
    %v1151 = vld [vmem:[%s4 + $0x5e4] sm:$0xf]
    %v1152 = vld [vmem:[%s4 + $0x5e8] sm:$0xf]
    %v1153 = vld [vmem:[%s4 + $0x5ec] sm:$0xf]
    %v1154 = vld [vmem:[%s4 + $0x5f0] sm:$0xf]
    %v1155 = vld [vmem:[%s4 + $0x5f4] sm:$0xf]
    %v1156 = vld [vmem:[%s4 + $0x5f8] sm:$0xf]
    %v1157 = vld [vmem:[%s4 + $0x5fc] sm:$0xf]
    %v1158 = vld [vmem:[%s4 + $0x600] sm:$0xf]
    %v1159 = vld [vmem:[%s4 + $0x604] sm:$0xf]
    %v1160 = vld [vmem:[%s4 + $0x608] sm:$0xf]
    %v1161 = vld [vmem:[%s4 + $0x60c] sm:$0xf]
    %v1162 = vld [vmem:[%s4 + $0x610] sm:$0xf]
    %v1163 = vld [vmem:[%s4 + $0x614] sm:$0xf]
    %v1164 = vld [vmem:[%s4 + $0x618] sm:$0xf]
    %v1165 = vld [vmem:[%s4 + $0x61c] sm:$0xf]
    %v1166 = vld [vmem:[%s4 + $0x620] sm:$0xf]
    %v1167 = vld [vmem:[%s4 + $0x624] sm:$0xf]
    %v1168 = vld [vmem:[%s4 + $0x628] sm:$0xf]
    %v1169 = vld [vmem:[%s4 + $0x62c] sm:$0xf]
    %v1170 = vld [vmem:[%s4 + $0x630] sm:$0xf]
    %v1171 = vld [vmem:[%s4 + $0x634] sm:$0xf]
    %v1172 = vld [vmem:[%s4 + $0x638] sm:$0xf]
    %v1173 = vld [vmem:[%s4 + $0x63c] sm:$0xf]
    %v1174 = vld [vmem:[%s4 + $0x640] sm:$0xf]
    %v1175 = vld [vmem:[%s4 + $0x644] sm:$0xf]
    %v1176 = vld [vmem:[%s4 + $0x648] sm:$0xf]
    %v1177 = vld [vmem:[%s4 + $0x64c] sm:$0xf]
    %v1178 = vld [vmem:[%s4 + $0x650] sm:$0xf]
    %v1179 = vld [vmem:[%s4 + $0x654] sm:$0xf]
    %v1180 = vld [vmem:[%s4 + $0x658] sm:$0xf]
    %v1181 = vld [vmem:[%s4 + $0x65c] sm:$0xf]
    %v1182 = vld [vmem:[%s4 + $0x660] sm:$0xf]
    %v1183 = vld [vmem:[%s4 + $0x664] sm:$0xf]
    %v1184 = vld [vmem:[%s4 + $0x668] sm:$0xf]
    %v1185 = vld [vmem:[%s4 + $0x66c] sm:$0xf]
    %v1186 = vld [vmem:[%s4 + $0x670] sm:$0xf]
    %v1187 = vld [vmem:[%s4 + $0x674] sm:$0xf]
    %v1188 = vld [vmem:[%s4 + $0x678] sm:$0xf]
    %v1189 = vld [vmem:[%s4 + $0x67c] sm:$0xf]
    %v1190 = vld [vmem:[%s4 + $0x680] sm:$0xf]
    %v1191 = vld [vmem:[%s4 + $0x684] sm:$0xf]
    %v1192 = vld [vmem:[%s4 + $0x688] sm:$0xf]
    %v1193 = vld [vmem:[%s4 + $0x68c] sm:$0xf]
    %v1194 = vld [vmem:[%s4 + $0x690] sm:$0xf]
    %v1195 = vld [vmem:[%s4 + $0x694] sm:$0xf]
    %v1196 = vld [vmem:[%s4 + $0x698] sm:$0xf]
    %v1197 = vld [vmem:[%s4 + $0x69c] sm:$0xf]
    %v1198 = vld [vmem:[%s4 + $0x6a0] sm:$0xf]
    %v1199 = vld [vmem:[%s4 + $0x6a4] sm:$0xf]
    %v1200 = vld [vmem:[%s4 + $0x6a8] sm:$0xf]
    %v1201 = vld [vmem:[%s4 + $0x6ac] sm:$0xf]
    %v1202 = vld [vmem:[%s4 + $0x6b0] sm:$0xf]
    %v1203 = vld [vmem:[%s4 + $0x6b4] sm:$0xf]
    %v1204 = vld [vmem:[%s4 + $0x6b8] sm:$0xf]
    %v1205 = vld [vmem:[%s4 + $0x6bc] sm:$0xf]
    %v1206 = vld [vmem:[%s4 + $0x6c0] sm:$0xf]
    %v1207 = vld [vmem:[%s4 + $0x6c4] sm:$0xf]
    %v1208 = vld [vmem:[%s4 + $0x6c8] sm:$0xf]
    %v1209 = vld [vmem:[%s4 + $0x6cc] sm:$0xf]
    %v1210 = vld [vmem:[%s4 + $0x6d0] sm:$0xf]
    %v1211 = vld [vmem:[%s4 + $0x6d4] sm:$0xf]
    %v1212 = vld [vmem:[%s4 + $0x6d8] sm:$0xf]
    %v1213 = vld [vmem:[%s4 + $0x6dc] sm:$0xf]
    %v1214 = vld [vmem:[%s4 + $0x6e0] sm:$0xf]
    %v1215 = vld [vmem:[%s4 + $0x6e4] sm:$0xf]
    %v1216 = vld [vmem:[%s4 + $0x6e8] sm:$0xf]
    %v1217 = vld [vmem:[%s4 + $0x6ec] sm:$0xf]
    %v1218 = vld [vmem:[%s4 + $0x6f0] sm:$0xf]
    %v1219 = vld [vmem:[%s4 + $0x6f4] sm:$0xf]
    %v1220 = vld [vmem:[%s4 + $0x6f8] sm:$0xf]
    %v1221 = vld [vmem:[%s4 + $0x6fc] sm:$0xf]
    %v1222 = vld [vmem:[%s4 + $0x700] sm:$0xf]
    %v1223 = vld [vmem:[%s4 + $0x704] sm:$0xf]
    %v1224 = vld [vmem:[%s4 + $0x708] sm:$0xf]
    %v1225 = vld [vmem:[%s4 + $0x70c] sm:$0xf]
    %v1226 = vld [vmem:[%s4 + $0x710] sm:$0xf]
    %v1227 = vld [vmem:[%s4 + $0x714] sm:$0xf]
    %v1228 = vld [vmem:[%s4 + $0x718] sm:$0xf]
    %v1229 = vld [vmem:[%s4 + $0x71c] sm:$0xf]
    %v1230 = vld [vmem:[%s4 + $0x720] sm:$0xf]
    %v1231 = vld [vmem:[%s4 + $0x724] sm:$0xf]
    %v1232 = vld [vmem:[%s4 + $0x728] sm:$0xf]
    %v1233 = vld [vmem:[%s4 + $0x72c] sm:$0xf]
    %v1234 = vld [vmem:[%s4 + $0x730] sm:$0xf]
    %v1235 = vld [vmem:[%s4 + $0x734] sm:$0xf]
    %v1236 = vld [vmem:[%s4 + $0x738] sm:$0xf]
    %v1237 = vld [vmem:[%s4 + $0x73c] sm:$0xf]
    %v1238 = vld [vmem:[%s4 + $0x740] sm:$0xf]
    %v1239 = vld [vmem:[%s4 + $0x744] sm:$0xf]
    %v1240 = vld [vmem:[%s4 + $0x748] sm:$0xf]
    %v1241 = vld [vmem:[%s4 + $0x74c] sm:$0xf]
    %v1242 = vld [vmem:[%s4 + $0x750] sm:$0xf]
    %v1243 = vld [vmem:[%s4 + $0x754] sm:$0xf]
    %v1244 = vld [vmem:[%s4 + $0x758] sm:$0xf]
    %v1245 = vld [vmem:[%s4 + $0x75c] sm:$0xf]
    %v1246 = vld [vmem:[%s4 + $0x760] sm:$0xf]
    %v1247 = vld [vmem:[%s4 + $0x764] sm:$0xf]
    %v1248 = vld [vmem:[%s4 + $0x768] sm:$0xf]
    %v1249 = vld [vmem:[%s4 + $0x76c] sm:$0xf]
    %v1250 = vld [vmem:[%s4 + $0x770] sm:$0xf]
    %v1251 = vld [vmem:[%s4 + $0x774] sm:$0xf]
    %v1252 = vld [vmem:[%s4 + $0x778] sm:$0xf]
    %v1253 = vld [vmem:[%s4 + $0x77c] sm:$0xf]
    %v1254 = vld [vmem:[%s4 + $0x780] sm:$0xf]
    %v1255 = vld [vmem:[%s4 + $0x784] sm:$0xf]
    %v1256 = vld [vmem:[%s4 + $0x788] sm:$0xf]
    %v1257 = vld [vmem:[%s4 + $0x78c] sm:$0xf]
    %v1258 = vld [vmem:[%s4 + $0x790] sm:$0xf]
    %v1259 = vld [vmem:[%s4 + $0x794] sm:$0xf]
    %v1260 = vld [vmem:[%s4 + $0x798] sm:$0xf]
    %v1261 = vld [vmem:[%s4 + $0x79c] sm:$0xf]
    %v1262 = vld [vmem:[%s4 + $0x7a0] sm:$0xf]
    %v1263 = vld [vmem:[%s4 + $0x7a4] sm:$0xf]
    %v1264 = vld [vmem:[%s4 + $0x7a8] sm:$0xf]
    %v1265 = vld [vmem:[%s4 + $0x7ac] sm:$0xf]
    %v1266 = vld [vmem:[%s4 + $0x7b0] sm:$0xf]
    %v1267 = vld [vmem:[%s4 + $0x7b4] sm:$0xf]
    %v1268 = vld [vmem:[%s4 + $0x7b8] sm:$0xf]
    %v1269 = vld [vmem:[%s4 + $0x7bc] sm:$0xf]
    %v1270 = vld [vmem:[%s4 + $0x7c0] sm:$0xf]
    %v1271 = vld [vmem:[%s4 + $0x7c4] sm:$0xf]
    %v1272 = vld [vmem:[%s4 + $0x7c8] sm:$0xf]
    %v1273 = vld [vmem:[%s4 + $0x7cc] sm:$0xf]
    %v1274 = vld [vmem:[%s4 + $0x7d0] sm:$0xf]
    %v1275 = vld [vmem:[%s4 + $0x7d4] sm:$0xf]
    %v1276 = vld [vmem:[%s4 + $0x7d8] sm:$0xf]
    %v1277 = vld [vmem:[%s4 + $0x7dc] sm:$0xf]
    %v1278 = vld [vmem:[%s4 + $0x7e0] sm:$0xf]
    %v1279 = vld [vmem:[%s4 + $0x7e4] sm:$0xf]
    %v1280 = vld [vmem:[%s4 + $0x7e8] sm:$0xf]
    %v1281 = vld [vmem:[%s4 + $0x7ec] sm:$0xf]
    %v1282 = vld [vmem:[%s4 + $0x7f0] sm:$0xf]
    %v1283 = vld [vmem:[%s4 + $0x7f4] sm:$0xf]
    %v1284 = vld [vmem:[%s4 + $0x7f8] sm:$0xf]
    %v1285 = vld [vmem:[%s4 + $0x7fc] sm:$0xf]
    %v1286 = vld [vmem:[%s4 + $0x800] sm:$0xf]
    %v1287 = vld [vmem:[%s4 + $0x804] sm:$0xf]
    %v1288 = vld [vmem:[%s4 + $0x808] sm:$0xf]
    %v1289 = vld [vmem:[%s4 + $0x80c] sm:$0xf]
    %v1290 = vld [vmem:[%s4 + $0x810] sm:$0xf]
    %v1291 = vld [vmem:[%s4 + $0x814] sm:$0xf]
    %v1292 = vld [vmem:[%s4 + $0x818] sm:$0xf]
    %v1293 = vld [vmem:[%s4 + $0x81c] sm:$0xf]
    %v1294 = vld [vmem:[%s4 + $0x820] sm:$0xf]
    %v1295 = vld [vmem:[%s4 + $0x824] sm:$0xf]
    %v1296 = vld [vmem:[%s4 + $0x828] sm:$0xf]
    %v1297 = vld [vmem:[%s4 + $0x82c] sm:$0xf]
    %v1298 = vld [vmem:[%s4 + $0x830] sm:$0xf]
    %v1299 = vld [vmem:[%s4 + $0x834] sm:$0xf]
    %v1300 = vld [vmem:[%s4 + $0x838] sm:$0xf]
    %v1301 = vld [vmem:[%s4 + $0x83c] sm:$0xf]
    %v1302 = vld [vmem:[%s4 + $0x840] sm:$0xf]
    %v1303 = vld [vmem:[%s4 + $0x844] sm:$0xf]
    %v1304 = vld [vmem:[%s4 + $0x848] sm:$0xf]
    %v1305 = vld [vmem:[%s4 + $0x84c] sm:$0xf]
    %v1306 = vld [vmem:[%s4 + $0x850] sm:$0xf]
    %v1307 = vld [vmem:[%s4 + $0x854] sm:$0xf]
    %v1308 = vld [vmem:[%s4 + $0x858] sm:$0xf]
    %v1309 = vld [vmem:[%s4 + $0x85c] sm:$0xf]
    %v1310 = vld [vmem:[%s4 + $0x860] sm:$0xf]
    %v1311 = vld [vmem:[%s4 + $0x864] sm:$0xf]
    %v1312 = vld [vmem:[%s4 + $0x868] sm:$0xf]
    %v1313 = vld [vmem:[%s4 + $0x86c] sm:$0xf]
    %v1314 = vld [vmem:[%s4 + $0x870] sm:$0xf]
    %v1315 = vld [vmem:[%s4 + $0x874] sm:$0xf]
    %v1316 = vld [vmem:[%s4 + $0x878] sm:$0xf]
    %v1317 = vld [vmem:[%s4 + $0x87c] sm:$0xf]
    %v1318 = vld [vmem:[%s4 + $0x880] sm:$0xf]
    %v1319 = vld [vmem:[%s4 + $0x884] sm:$0xf]
    %v1320 = vld [vmem:[%s4 + $0x888] sm:$0xf]
    %v1321 = vld [vmem:[%s4 + $0x88c] sm:$0xf]
    %v1322 = vld [vmem:[%s4 + $0x890] sm:$0xf]
    %v1323 = vld [vmem:[%s4 + $0x894] sm:$0xf]
    %v1324 = vld [vmem:[%s4 + $0x898] sm:$0xf]
    %v1325 = vld [vmem:[%s4 + $0x89c] sm:$0xf]
    %v1326 = vld [vmem:[%s4 + $0x8a0] sm:$0xf]
    %v1327 = vld [vmem:[%s4 + $0x8a4] sm:$0xf]
    %v1328 = vld [vmem:[%s4 + $0x8a8] sm:$0xf]
    %v1329 = vld [vmem:[%s4 + $0x8ac] sm:$0xf]
    %v1330 = vld [vmem:[%s4 + $0x8b0] sm:$0xf]
    %v1331 = vld [vmem:[%s4 + $0x8b4] sm:$0xf]
    %v1332 = vld [vmem:[%s4 + $0x8b8] sm:$0xf]
    %v1333 = vld [vmem:[%s4 + $0x8bc] sm:$0xf]
    %v1334 = vld [vmem:[%s4 + $0x8c0] sm:$0xf]
    %v1335 = vld [vmem:[%s4 + $0x8c4] sm:$0xf]
    %v1336 = vld [vmem:[%s4 + $0x8c8] sm:$0xf]
    %v1337 = vld [vmem:[%s4 + $0x8cc] sm:$0xf]
    %v1338 = vld [vmem:[%s4 + $0x8d0] sm:$0xf]
    %v1339 = vld [vmem:[%s4 + $0x8d4] sm:$0xf]
    %v1340 = vld [vmem:[%s4 + $0x8d8] sm:$0xf]
    %v1341 = vld [vmem:[%s4 + $0x8dc] sm:$0xf]
    %v1342 = vld [vmem:[%s4 + $0x8e0] sm:$0xf]
    %v1343 = vld [vmem:[%s4 + $0x8e4] sm:$0xf]
    %v1344 = vld [vmem:[%s4 + $0x8e8] sm:$0xf]
    %v1345 = vld [vmem:[%s4 + $0x8ec] sm:$0xf]
    %v1346 = vld [vmem:[%s4 + $0x8f0] sm:$0xf]
    %v1347 = vld [vmem:[%s4 + $0x8f4] sm:$0xf]
    %v1348 = vld [vmem:[%s4 + $0x8f8] sm:$0xf]
    %v1349 = vld [vmem:[%s4 + $0x8fc] sm:$0xf]
    %v1350 = vld [vmem:[%s4 + $0x900] sm:$0xf]
    %v1351 = vld [vmem:[%s4 + $0x904] sm:$0xf]
    %v1352 = vld [vmem:[%s4 + $0x908] sm:$0xf]
    %v1353 = vld [vmem:[%s4 + $0x90c] sm:$0xf]
    %v1354 = vld [vmem:[%s4 + $0x910] sm:$0xf]
    %v1355 = vld [vmem:[%s4 + $0x914] sm:$0xf]
    %v1356 = vld [vmem:[%s4 + $0x918] sm:$0xf]
    %v1357 = vld [vmem:[%s4 + $0x91c] sm:$0xf]
    %v1358 = vld [vmem:[%s4 + $0x920] sm:$0xf]
    %v1359 = vld [vmem:[%s4 + $0x924] sm:$0xf]
    %v1360 = vld [vmem:[%s4 + $0x928] sm:$0xf]
    %v1361 = vld [vmem:[%s4 + $0x92c] sm:$0xf]
    %v1362 = vld [vmem:[%s4 + $0x930] sm:$0xf]
    %v1363 = vld [vmem:[%s4 + $0x934] sm:$0xf]
    %v1364 = vld [vmem:[%s4 + $0x938] sm:$0xf]
    %v1365 = vld [vmem:[%s4 + $0x93c] sm:$0xf]
    %v1366 = vld [vmem:[%s4 + $0x940] sm:$0xf]
    %v1367 = vld [vmem:[%s4 + $0x944] sm:$0xf]
    %v1368 = vld [vmem:[%s4 + $0x948] sm:$0xf]
    %v1369 = vld [vmem:[%s4 + $0x94c] sm:$0xf]
    %v1370 = vld [vmem:[%s4 + $0x950] sm:$0xf]
    %v1371 = vld [vmem:[%s4 + $0x954] sm:$0xf]
    %v1372 = vld [vmem:[%s4 + $0x958] sm:$0xf]
    %v1373 = vld [vmem:[%s4 + $0x95c] sm:$0xf]
    %v1374 = vld [vmem:[%s4 + $0x960] sm:$0xf]
    %v1375 = vld [vmem:[%s4 + $0x964] sm:$0xf]
    %v1376 = vld [vmem:[%s4 + $0x968] sm:$0xf]
    %v1377 = vld [vmem:[%s4 + $0x96c] sm:$0xf]
    %v1378 = vld [vmem:[%s4 + $0x970] sm:$0xf]
    %v1379 = vld [vmem:[%s4 + $0x974] sm:$0xf]
    %v1380 = vld [vmem:[%s4 + $0x978] sm:$0xf]
    %v1381 = vld [vmem:[%s4 + $0x97c] sm:$0xf]
    %v1382 = vld [vmem:[%s4 + $0x980] sm:$0xf]
    %v1383 = vld [vmem:[%s4 + $0x984] sm:$0xf]
    %v1384 = vld [vmem:[%s4 + $0x988] sm:$0xf]
    %v1385 = vld [vmem:[%s4 + $0x98c] sm:$0xf]
    %v1386 = vld [vmem:[%s4 + $0x990] sm:$0xf]
    %v1387 = vld [vmem:[%s4 + $0x994] sm:$0xf]
    %v1388 = vld [vmem:[%s4 + $0x998] sm:$0xf]
    %v1389 = vld [vmem:[%s4 + $0x99c] sm:$0xf]
    %v1390 = vld [vmem:[%s4 + $0x9a0] sm:$0xf]
    %v1391 = vld [vmem:[%s4 + $0x9a4] sm:$0xf]
    %v1392 = vld [vmem:[%s4 + $0x9a8] sm:$0xf]
    %v1393 = vld [vmem:[%s4 + $0x9ac] sm:$0xf]
    %v1394 = vld [vmem:[%s4 + $0x9b0] sm:$0xf]
    %v1395 = vld [vmem:[%s4 + $0x9b4] sm:$0xf]
    %v1396 = vld [vmem:[%s4 + $0x9b8] sm:$0xf]
    %v1397 = vld [vmem:[%s4 + $0x9bc] sm:$0xf]
    %v1398 = vld [vmem:[%s4 + $0x9c0] sm:$0xf]
    %v1399 = vld [vmem:[%s4 + $0x9c4] sm:$0xf]
    %v1400 = vld [vmem:[%s4 + $0x9c8] sm:$0xf]
    %v1401 = vld [vmem:[%s4 + $0x9cc] sm:$0xf]
    %v1402 = vld [vmem:[%s4 + $0x9d0] sm:$0xf]
    %v1403 = vld [vmem:[%s4 + $0x9d4] sm:$0xf]
    %v1404 = vld [vmem:[%s4 + $0x9d8] sm:$0xf]
    %v1405 = vld [vmem:[%s4 + $0x9dc] sm:$0xf]
    %v1406 = vld [vmem:[%s4 + $0x9e0] sm:$0xf]
    %v1407 = vld [vmem:[%s4 + $0x9e4] sm:$0xf]
    %v1408 = vld [vmem:[%s4 + $0x9e8] sm:$0xf]
    %v1409 = vld [vmem:[%s4 + $0x9ec] sm:$0xf]
    %v1410 = vld [vmem:[%s4 + $0x9f0] sm:$0xf]
    %v1411 = vld [vmem:[%s4 + $0x9f4] sm:$0xf]
    %v1412 = vld [vmem:[%s4 + $0x9f8] sm:$0xf]
    %v1413 = vld [vmem:[%s4 + $0x9fc] sm:$0xf]
    %v1414 = vld [vmem:[%s4 + $0xa00] sm:$0xf]
    %v1415 = vld [vmem:[%s4 + $0xa04] sm:$0xf]
    %v1416 = vld [vmem:[%s4 + $0xa08] sm:$0xf]
    %v1417 = vld [vmem:[%s4 + $0xa0c] sm:$0xf]
    %v1418 = vld [vmem:[%s4 + $0xa10] sm:$0xf]
    %v1419 = vld [vmem:[%s4 + $0xa14] sm:$0xf]
    %v1420 = vld [vmem:[%s4 + $0xa18] sm:$0xf]
    %v1421 = vld [vmem:[%s4 + $0xa1c] sm:$0xf]
    %v1422 = vld [vmem:[%s4 + $0xa20] sm:$0xf]
    %v1423 = vld [vmem:[%s4 + $0xa24] sm:$0xf]
    %v1424 = vld [vmem:[%s4 + $0xa28] sm:$0xf]
    %v1425 = vld [vmem:[%s4 + $0xa2c] sm:$0xf]
    %v1426 = vld [vmem:[%s4 + $0xa30] sm:$0xf]
    %v1427 = vld [vmem:[%s4 + $0xa34] sm:$0xf]
    %v1428 = vld [vmem:[%s4 + $0xa38] sm:$0xf]
    %v1429 = vld [vmem:[%s4 + $0xa3c] sm:$0xf]
    %v1430 = vld [vmem:[%s4 + $0xa40] sm:$0xf]
    %v1431 = vld [vmem:[%s4 + $0xa44] sm:$0xf]
    %v1432 = vld [vmem:[%s4 + $0xa48] sm:$0xf]
    %v1433 = vld [vmem:[%s4 + $0xa4c] sm:$0xf]
    %v1434 = vld [vmem:[%s4 + $0xa50] sm:$0xf]
    %v1435 = vld [vmem:[%s4 + $0xa54] sm:$0xf]
    %v1436 = vld [vmem:[%s4 + $0xa58] sm:$0xf]
    %v1437 = vld [vmem:[%s4 + $0xa5c] sm:$0xf]
    %v1438 = vld [vmem:[%s4 + $0xa60] sm:$0xf]
    %v1439 = vld [vmem:[%s4 + $0xa64] sm:$0xf]
    %v1440 = vld [vmem:[%s4 + $0xa68] sm:$0xf]
    %v1441 = vld [vmem:[%s4 + $0xa6c] sm:$0xf]
    %v1442 = vld [vmem:[%s4 + $0xa70] sm:$0xf]
    %v1443 = vld [vmem:[%s4 + $0xa74] sm:$0xf]
    %v1444 = vld [vmem:[%s4 + $0xa78] sm:$0xf]
    %v1445 = vld [vmem:[%s4 + $0xa7c] sm:$0xf]
    %v1446 = vld [vmem:[%s4 + $0xa80] sm:$0xf]
    %v1447 = vld [vmem:[%s4 + $0xa84] sm:$0xf]
    %v1448 = vld [vmem:[%s4 + $0xa88] sm:$0xf]
    %v1449 = vld [vmem:[%s4 + $0xa8c] sm:$0xf]
    %v1450 = vld [vmem:[%s4 + $0xa90] sm:$0xf]
    %v1451 = vld [vmem:[%s4 + $0xa94] sm:$0xf]
    %v1452 = vld [vmem:[%s4 + $0xa98] sm:$0xf]
    %v1453 = vld [vmem:[%s4 + $0xa9c] sm:$0xf]
    %v1454 = vld [vmem:[%s4 + $0xaa0] sm:$0xf]
    %v1455 = vld [vmem:[%s4 + $0xaa4] sm:$0xf]
    %v1456 = vld [vmem:[%s4 + $0xaa8] sm:$0xf]
    %v1457 = vld [vmem:[%s4 + $0xaac] sm:$0xf]
    %v1458 = vld [vmem:[%s4 + $0xab0] sm:$0xf]
    %v1459 = vld [vmem:[%s4 + $0xab4] sm:$0xf]
    %v1460 = vld [vmem:[%s4 + $0xab8] sm:$0xf]
    %v1461 = vld [vmem:[%s4 + $0xabc] sm:$0xf]
    %v1462 = vld [vmem:[%s4 + $0xac0] sm:$0xf]
    %v1463 = vld [vmem:[%s4 + $0xac4] sm:$0xf]
    %v1464 = vld [vmem:[%s4 + $0xac8] sm:$0xf]
    %v1465 = vld [vmem:[%s4 + $0xacc] sm:$0xf]
    %v1466 = vld [vmem:[%s4 + $0xad0] sm:$0xf]
    %v1467 = vld [vmem:[%s4 + $0xad4] sm:$0xf]
    %v1468 = vld [vmem:[%s4 + $0xad8] sm:$0xf]
    %v1469 = vld [vmem:[%s4 + $0xadc] sm:$0xf]
    %v1470 = vld [vmem:[%s4 + $0xae0] sm:$0xf]
    %v1471 = vld [vmem:[%s4 + $0xae4] sm:$0xf]
    %v1472 = vld [vmem:[%s4 + $0xae8] sm:$0xf]
    %v1473 = vld [vmem:[%s4 + $0xaec] sm:$0xf]
    %v1474 = vld [vmem:[%s4 + $0xaf0] sm:$0xf]
    %v1475 = vld [vmem:[%s4 + $0xaf4] sm:$0xf]
    %v1476 = vld [vmem:[%s4 + $0xaf8] sm:$0xf]
    %v1477 = vld [vmem:[%s4 + $0xafc] sm:$0xf]
    %v1478 = vld [vmem:[%s4 + $0xb00] sm:$0xf]
    %v1479 = vld [vmem:[%s4 + $0xb04] sm:$0xf]
    %v1480 = vld [vmem:[%s4 + $0xb08] sm:$0xf]
    %v1481 = vld [vmem:[%s4 + $0xb0c] sm:$0xf]
    %v1482 = vld [vmem:[%s4 + $0xb10] sm:$0xf]
    %v1483 = vld [vmem:[%s4 + $0xb14] sm:$0xf]
    %v1484 = vld [vmem:[%s4 + $0xb18] sm:$0xf]
    %v1485 = vld [vmem:[%s4 + $0xb1c] sm:$0xf]
    %v1486 = vld [vmem:[%s4 + $0xb20] sm:$0xf]
    %v1487 = vld [vmem:[%s4 + $0xb24] sm:$0xf]
    %v1488 = vld [vmem:[%s4 + $0xb28] sm:$0xf]
    %v1489 = vld [vmem:[%s4 + $0xb2c] sm:$0xf]
    %v1490 = vld [vmem:[%s4 + $0xb30] sm:$0xf]
    %v1491 = vld [vmem:[%s4 + $0xb34] sm:$0xf]
    %v1492 = vld [vmem:[%s4 + $0xb38] sm:$0xf]
    %v1493 = vld [vmem:[%s4 + $0xb3c] sm:$0xf]
    %v1494 = vld [vmem:[%s4 + $0xb40] sm:$0xf]
    %v1495 = vld [vmem:[%s4 + $0xb44] sm:$0xf]
    %v1496 = vld [vmem:[%s4 + $0xb48] sm:$0xf]
    %v1497 = vld [vmem:[%s4 + $0xb4c] sm:$0xf]
    %v1498 = vld [vmem:[%s4 + $0xb50] sm:$0xf]
    %v1499 = vld [vmem:[%s4 + $0xb54] sm:$0xf]
    %v1500 = vld [vmem:[%s4 + $0xb58] sm:$0xf]
    %v1501 = vld [vmem:[%s4 + $0xb5c] sm:$0xf]
    %v1502 = vld [vmem:[%s4 + $0xb60] sm:$0xf]
    %v1503 = vld [vmem:[%s4 + $0xb64] sm:$0xf]
    %v1504 = vld [vmem:[%s4 + $0xb68] sm:$0xf]
    %v1505 = vld [vmem:[%s4 + $0xb6c] sm:$0xf]
    %v1506 = vld [vmem:[%s4 + $0xb70] sm:$0xf]
    %v1507 = vld [vmem:[%s4 + $0xb74] sm:$0xf]
    %v1508 = vld [vmem:[%s4 + $0xb78] sm:$0xf]
    %v1509 = vld [vmem:[%s4 + $0xb7c] sm:$0xf]
    %v1510 = vld [vmem:[%s4 + $0xb80] sm:$0xf]
    %v1511 = vld [vmem:[%s4 + $0xb84] sm:$0xf]
    %v1512 = vld [vmem:[%s4 + $0xb88] sm:$0xf]
    %v1513 = vld [vmem:[%s4 + $0xb8c] sm:$0xf]
    %v1514 = vld [vmem:[%s4 + $0xb90] sm:$0xf]
    %v1515 = vld [vmem:[%s4 + $0xb94] sm:$0xf]
    %v1516 = vld [vmem:[%s4 + $0xb98] sm:$0xf]
    %v1517 = vld [vmem:[%s4 + $0xb9c] sm:$0xf]
    %v1518 = vld [vmem:[%s4 + $0xba0] sm:$0xf]
    %v1519 = vld [vmem:[%s4 + $0xba4] sm:$0xf]
    %v1520 = vld [vmem:[%s4 + $0xba8] sm:$0xf]
    %v1521 = vld [vmem:[%s4 + $0xbac] sm:$0xf]
    %v1522 = vld [vmem:[%s4 + $0xbb0] sm:$0xf]
    %v1523 = vld [vmem:[%s4 + $0xbb4] sm:$0xf]
    %v1524 = vld [vmem:[%s4 + $0xbb8] sm:$0xf]
    %v1525 = vld [vmem:[%s4 + $0xbbc] sm:$0xf]
    %v1526 = vld [vmem:[%s4 + $0xbc0] sm:$0xf]
    %v1527 = vld [vmem:[%s4 + $0xbc4] sm:$0xf]
    %v1528 = vld [vmem:[%s4 + $0xbc8] sm:$0xf]
    %v1529 = vld [vmem:[%s4 + $0xbcc] sm:$0xf]
    %v1530 = vld [vmem:[%s4 + $0xbd0] sm:$0xf]
    %v1531 = vld [vmem:[%s4 + $0xbd4] sm:$0xf]
    %v1532 = vld [vmem:[%s4 + $0xbd8] sm:$0xf]
    %v1533 = vld [vmem:[%s4 + $0xbdc] sm:$0xf]
    %v1534 = vld [vmem:[%s4 + $0xbe0] sm:$0xf]
    %v1535 = vld [vmem:[%s4 + $0xbe4] sm:$0xf]
    %v1536 = vld [vmem:[%s4 + $0xbe8] sm:$0xf]
    %v1537 = vld [vmem:[%s4 + $0xbec] sm:$0xf]
    %v1538 = vld [vmem:[%s4 + $0xbf0] sm:$0xf]
    %v1539 = vld [vmem:[%s4 + $0xbf4] sm:$0xf]
    %v1540 = vld [vmem:[%s4 + $0xbf8] sm:$0xf]
    %v1541 = vld [vmem:[%s4 + $0xbfc] sm:$0xf]
    %v1542 = vld [vmem:[%s4 + $0xc00] sm:$0xf]
    %v1543 = vld [vmem:[%s4 + $0xc04] sm:$0xf]
    %v1544 = vld [vmem:[%s4 + $0xc08] sm:$0xf]
    %v1545 = vld [vmem:[%s4 + $0xc0c] sm:$0xf]
    %v1546 = vld [vmem:[%s4 + $0xc10] sm:$0xf]
    %v1547 = vld [vmem:[%s4 + $0xc14] sm:$0xf]
    %v1548 = vld [vmem:[%s4 + $0xc18] sm:$0xf]
    %v1549 = vld [vmem:[%s4 + $0xc1c] sm:$0xf]
    %v1550 = vld [vmem:[%s4 + $0xc20] sm:$0xf]
    %v1551 = vld [vmem:[%s4 + $0xc24] sm:$0xf]
    %v1552 = vld [vmem:[%s4 + $0xc28] sm:$0xf]
    %v1553 = vld [vmem:[%s4 + $0xc2c] sm:$0xf]
    %v1554 = vld [vmem:[%s4 + $0xc30] sm:$0xf]
    %v1555 = vld [vmem:[%s4 + $0xc34] sm:$0xf]
    %v1556 = vld [vmem:[%s4 + $0xc38] sm:$0xf]
    %v1557 = vld [vmem:[%s4 + $0xc3c] sm:$0xf]
    %v1558 = vld [vmem:[%s4 + $0xc40] sm:$0xf]
    %v1559 = vld [vmem:[%s4 + $0xc44] sm:$0xf]
    %v1560 = vld [vmem:[%s4 + $0xc48] sm:$0xf]
    %v1561 = vld [vmem:[%s4 + $0xc4c] sm:$0xf]
    %v1562 = vld [vmem:[%s4 + $0xc50] sm:$0xf]
    %v1563 = vld [vmem:[%s4 + $0xc54] sm:$0xf]
    %v1564 = vld [vmem:[%s4 + $0xc58] sm:$0xf]
    %v1565 = vld [vmem:[%s4 + $0xc5c] sm:$0xf]
    %v1566 = vld [vmem:[%s4 + $0xc60] sm:$0xf]
    %v1567 = vld [vmem:[%s4 + $0xc64] sm:$0xf]
    %v1568 = vld [vmem:[%s4 + $0xc68] sm:$0xf]
    %v1569 = vld [vmem:[%s4 + $0xc6c] sm:$0xf]
    %v1570 = vld [vmem:[%s4 + $0xc70] sm:$0xf]
    %v1571 = vld [vmem:[%s4 + $0xc74] sm:$0xf]
    %v1572 = vld [vmem:[%s4 + $0xc78] sm:$0xf]
    %v1573 = vld [vmem:[%s4 + $0xc7c] sm:$0xf]
    %v1574 = vld [vmem:[%s4 + $0xc80] sm:$0xf]
    %v1575 = vld [vmem:[%s4 + $0xc84] sm:$0xf]
    %v1576 = vld [vmem:[%s4 + $0xc88] sm:$0xf]
    %v1577 = vld [vmem:[%s4 + $0xc8c] sm:$0xf]
    %v1578 = vld [vmem:[%s4 + $0xc90] sm:$0xf]
    %v1579 = vld [vmem:[%s4 + $0xc94] sm:$0xf]
    %v1580 = vld [vmem:[%s4 + $0xc98] sm:$0xf]
    %v1581 = vld [vmem:[%s4 + $0xc9c] sm:$0xf]
    %v1582 = vld [vmem:[%s4 + $0xca0] sm:$0xf]
    %v1583 = vld [vmem:[%s4 + $0xca4] sm:$0xf]
    %v1584 = vld [vmem:[%s4 + $0xca8] sm:$0xf]
    %v1585 = vld [vmem:[%s4 + $0xcac] sm:$0xf]
    %v1586 = vld [vmem:[%s4 + $0xcb0] sm:$0xf]
    %v1587 = vld [vmem:[%s4 + $0xcb4] sm:$0xf]
    %v1588 = vld [vmem:[%s4 + $0xcb8] sm:$0xf]
    %v1589 = vld [vmem:[%s4 + $0xcbc] sm:$0xf]
    %v1590 = vld [vmem:[%s4 + $0xcc0] sm:$0xf]
    %v1591 = vld [vmem:[%s4 + $0xcc4] sm:$0xf]
    %v1592 = vld [vmem:[%s4 + $0xcc8] sm:$0xf]
    %v1593 = vld [vmem:[%s4 + $0xccc] sm:$0xf]
    %v1594 = vld [vmem:[%s4 + $0xcd0] sm:$0xf]
    %v1595 = vld [vmem:[%s4 + $0xcd4] sm:$0xf]
    %v1596 = vld [vmem:[%s4 + $0xcd8] sm:$0xf]
    %v1597 = vld [vmem:[%s4 + $0xcdc] sm:$0xf]
    %v1598 = vld [vmem:[%s4 + $0xce0] sm:$0xf]
    %v1599 = vld [vmem:[%s4 + $0xce4] sm:$0xf]
    %v1600 = vld [vmem:[%s4 + $0xce8] sm:$0xf]
    %v1601 = vld [vmem:[%s4 + $0xcec] sm:$0xf]
    %v1602 = vld [vmem:[%s4 + $0xcf0] sm:$0xf]
    %v1603 = vld [vmem:[%s4 + $0xcf4] sm:$0xf]
    %v1604 = vld [vmem:[%s4 + $0xcf8] sm:$0xf]
    %v1605 = vld [vmem:[%s4 + $0xcfc] sm:$0xf]
    %v1606 = vld [vmem:[%s4 + $0xd00] sm:$0xf]
    %v1607 = vld [vmem:[%s4 + $0xd04] sm:$0xf]
    %v1608 = vld [vmem:[%s4 + $0xd08] sm:$0xf]
    %v1609 = vld [vmem:[%s4 + $0xd0c] sm:$0xf]
    %v1610 = vld [vmem:[%s4 + $0xd10] sm:$0xf]
    %v1611 = vld [vmem:[%s4 + $0xd14] sm:$0xf]
    %v1612 = vld [vmem:[%s4 + $0xd18] sm:$0xf]
    %v1613 = vld [vmem:[%s4 + $0xd1c] sm:$0xf]
    %v1614 = vld [vmem:[%s4 + $0xd20] sm:$0xf]
    %v1615 = vld [vmem:[%s4 + $0xd24] sm:$0xf]
    %v1616 = vld [vmem:[%s4 + $0xd28] sm:$0xf]
    %v1617 = vld [vmem:[%s4 + $0xd2c] sm:$0xf]
    %v1618 = vld [vmem:[%s4 + $0xd30] sm:$0xf]
    %v1619 = vld [vmem:[%s4 + $0xd34] sm:$0xf]
    %v1620 = vld [vmem:[%s4 + $0xd38] sm:$0xf]
    %v1621 = vld [vmem:[%s4 + $0xd3c] sm:$0xf]
    %v1622 = vld [vmem:[%s4 + $0xd40] sm:$0xf]
    %v1623 = vld [vmem:[%s4 + $0xd44] sm:$0xf]
    %v1624 = vld [vmem:[%s4 + $0xd48] sm:$0xf]
    %v1625 = vld [vmem:[%s4 + $0xd4c] sm:$0xf]
    %v1626 = vld [vmem:[%s4 + $0xd50] sm:$0xf]
    %v1627 = vld [vmem:[%s4 + $0xd54] sm:$0xf]
    %v1628 = vld [vmem:[%s4 + $0xd58] sm:$0xf]
    %v1629 = vld [vmem:[%s4 + $0xd5c] sm:$0xf]
    %v1630 = vld [vmem:[%s4 + $0xd60] sm:$0xf]
    %v1631 = vld [vmem:[%s4 + $0xd64] sm:$0xf]
    %v1632 = vld [vmem:[%s4 + $0xd68] sm:$0xf]
    %v1633 = vld [vmem:[%s4 + $0xd6c] sm:$0xf]
    %v1634 = vld [vmem:[%s4 + $0xd70] sm:$0xf]
    %v1635 = vld [vmem:[%s4 + $0xd74] sm:$0xf]
    %v1636 = vld [vmem:[%s4 + $0xd78] sm:$0xf]
    %v1637 = vld [vmem:[%s4 + $0xd7c] sm:$0xf]
    %v1638 = vld [vmem:[%s4 + $0xd80] sm:$0xf]
    %v1639 = vld [vmem:[%s4 + $0xd84] sm:$0xf]
    %v1640 = vld [vmem:[%s4 + $0xd88] sm:$0xf]
    %v1641 = vld [vmem:[%s4 + $0xd8c] sm:$0xf]
    %v1642 = vld [vmem:[%s4 + $0xd90] sm:$0xf]
    %v1643 = vld [vmem:[%s4 + $0xd94] sm:$0xf]
    %v1644 = vld [vmem:[%s4 + $0xd98] sm:$0xf]
    %v1645 = vld [vmem:[%s4 + $0xd9c] sm:$0xf]
    %v1646 = vld [vmem:[%s4 + $0xda0] sm:$0xf]
    %v1647 = vld [vmem:[%s4 + $0xda4] sm:$0xf]
    %v1648 = vld [vmem:[%s4 + $0xda8] sm:$0xf]
    %v1649 = vld [vmem:[%s4 + $0xdac] sm:$0xf]
    %v1650 = vld [vmem:[%s4 + $0xdb0] sm:$0xf]
    %v1651 = vld [vmem:[%s4 + $0xdb4] sm:$0xf]
    %v1652 = vld [vmem:[%s4 + $0xdb8] sm:$0xf]
    %v1653 = vld [vmem:[%s4 + $0xdbc] sm:$0xf]
    %v1654 = vld [vmem:[%s4 + $0xdc0] sm:$0xf]
    %v1655 = vld [vmem:[%s4 + $0xdc4] sm:$0xf]
    %v1656 = vld [vmem:[%s4 + $0xdc8] sm:$0xf]
    %v1657 = vld [vmem:[%s4 + $0xdcc] sm:$0xf]
    %v1658 = vld [vmem:[%s4 + $0xdd0] sm:$0xf]
    %v1659 = vld [vmem:[%s4 + $0xdd4] sm:$0xf]
    %v1660 = vld [vmem:[%s4 + $0xdd8] sm:$0xf]
    %v1661 = vld [vmem:[%s4 + $0xddc] sm:$0xf]
    %v1662 = vld [vmem:[%s4 + $0xde0] sm:$0xf]
    %v1663 = vld [vmem:[%s4 + $0xde4] sm:$0xf]
    %v1664 = vld [vmem:[%s4 + $0xde8] sm:$0xf]
    %v1665 = vld [vmem:[%s4 + $0xdec] sm:$0xf]
    %v1666 = vld [vmem:[%s4 + $0xdf0] sm:$0xf]
    %v1667 = vld [vmem:[%s4 + $0xdf4] sm:$0xf]
    %v1668 = vld [vmem:[%s4 + $0xdf8] sm:$0xf]
    %v1669 = vld [vmem:[%s4 + $0xdfc] sm:$0xf]
    %v1670 = vld [vmem:[%s4 + $0xe00] sm:$0xf]
    %v1671 = vld [vmem:[%s4 + $0xe04] sm:$0xf]
    %v1672 = vld [vmem:[%s4 + $0xe08] sm:$0xf]
    %v1673 = vld [vmem:[%s4 + $0xe0c] sm:$0xf]
    %v1674 = vld [vmem:[%s4 + $0xe10] sm:$0xf]
    %v1675 = vld [vmem:[%s4 + $0xe14] sm:$0xf]
    %v1676 = vld [vmem:[%s4 + $0xe18] sm:$0xf]
    %v1677 = vld [vmem:[%s4 + $0xe1c] sm:$0xf]
    %v1678 = vld [vmem:[%s4 + $0xe20] sm:$0xf]
    %v1679 = vld [vmem:[%s4 + $0xe24] sm:$0xf]
    %v1680 = vld [vmem:[%s4 + $0xe28] sm:$0xf]
    %v1681 = vld [vmem:[%s4 + $0xe2c] sm:$0xf]
    %v1682 = vld [vmem:[%s4 + $0xe30] sm:$0xf]
    %v1683 = vld [vmem:[%s4 + $0xe34] sm:$0xf]
    %v1684 = vld [vmem:[%s4 + $0xe38] sm:$0xf]
    %v1685 = vld [vmem:[%s4 + $0xe3c] sm:$0xf]
    %v1686 = vld [vmem:[%s4 + $0xe40] sm:$0xf]
    %v1687 = vld [vmem:[%s4 + $0xe44] sm:$0xf]
    %v1688 = vld [vmem:[%s4 + $0xe48] sm:$0xf]
    %v1689 = vld [vmem:[%s4 + $0xe4c] sm:$0xf]
    %v1690 = vld [vmem:[%s4 + $0xe50] sm:$0xf]
    %v1691 = vld [vmem:[%s4 + $0xe54] sm:$0xf]
    %v1692 = vld [vmem:[%s4 + $0xe58] sm:$0xf]
    %v1693 = vld [vmem:[%s4 + $0xe5c] sm:$0xf]
    %v1694 = vld [vmem:[%s4 + $0xe60] sm:$0xf]
    %v1695 = vld [vmem:[%s4 + $0xe64] sm:$0xf]
    %v1696 = vld [vmem:[%s4 + $0xe68] sm:$0xf]
    %v1697 = vld [vmem:[%s4 + $0xe6c] sm:$0xf]
    %v1698 = vld [vmem:[%s4 + $0xe70] sm:$0xf]
    %v1699 = vld [vmem:[%s4 + $0xe74] sm:$0xf]
    %v1700 = vld [vmem:[%s4 + $0xe78] sm:$0xf]
    %v1701 = vld [vmem:[%s4 + $0xe7c] sm:$0xf]
    %v1702 = vld [vmem:[%s4 + $0xe80] sm:$0xf]
    %v1703 = vld [vmem:[%s4 + $0xe84] sm:$0xf]
    %v1704 = vld [vmem:[%s4 + $0xe88] sm:$0xf]
    %v1705 = vld [vmem:[%s4 + $0xe8c] sm:$0xf]
    %v1706 = vld [vmem:[%s4 + $0xe90] sm:$0xf]
    %v1707 = vld [vmem:[%s4 + $0xe94] sm:$0xf]
    %v1708 = vld [vmem:[%s4 + $0xe98] sm:$0xf]
    %v1709 = vld [vmem:[%s4 + $0xe9c] sm:$0xf]
    %v1710 = vld [vmem:[%s4 + $0xea0] sm:$0xf]
    %v1711 = vld [vmem:[%s4 + $0xea4] sm:$0xf]
    %v1712 = vld [vmem:[%s4 + $0xea8] sm:$0xf]
    %v1713 = vld [vmem:[%s4 + $0xeac] sm:$0xf]
    %v1714 = vld [vmem:[%s4 + $0xeb0] sm:$0xf]
    %v1715 = vld [vmem:[%s4 + $0xeb4] sm:$0xf]
    %v1716 = vld [vmem:[%s4 + $0xeb8] sm:$0xf]
    %v1717 = vld [vmem:[%s4 + $0xebc] sm:$0xf]
    %v1718 = vld [vmem:[%s4 + $0xec0] sm:$0xf]
    %v1719 = vld [vmem:[%s4 + $0xec4] sm:$0xf]
    %v1720 = vld [vmem:[%s4 + $0xec8] sm:$0xf]
    %v1721 = vld [vmem:[%s4 + $0xecc] sm:$0xf]
    %v1722 = vld [vmem:[%s4 + $0xed0] sm:$0xf]
    %v1723 = vld [vmem:[%s4 + $0xed4] sm:$0xf]
    %v1724 = vld [vmem:[%s4 + $0xed8] sm:$0xf]
    %v1725 = vld [vmem:[%s4 + $0xedc] sm:$0xf]
    %v1726 = vld [vmem:[%s4 + $0xee0] sm:$0xf]
    %v1727 = vld [vmem:[%s4 + $0xee4] sm:$0xf]
    %v1728 = vld [vmem:[%s4 + $0xee8] sm:$0xf]
    %v1729 = vld [vmem:[%s4 + $0xeec] sm:$0xf]
    %v1730 = vld [vmem:[%s4 + $0xef0] sm:$0xf]
    %v1731 = vld [vmem:[%s4 + $0xef4] sm:$0xf]
    %v1732 = vld [vmem:[%s4 + $0xef8] sm:$0xf]
    %v1733 = vld [vmem:[%s4 + $0xefc] sm:$0xf]
    %v1734 = vld [vmem:[%s4 + $0xf00] sm:$0xf]
    %v1735 = vld [vmem:[%s4 + $0xf04] sm:$0xf]
    %v1736 = vld [vmem:[%s4 + $0xf08] sm:$0xf]
    %v1737 = vld [vmem:[%s4 + $0xf0c] sm:$0xf]
    %v1738 = vld [vmem:[%s4 + $0xf10] sm:$0xf]
    %v1739 = vld [vmem:[%s4 + $0xf14] sm:$0xf]
    %v1740 = vld [vmem:[%s4 + $0xf18] sm:$0xf]
    %v1741 = vld [vmem:[%s4 + $0xf1c] sm:$0xf]
    %v1742 = vld [vmem:[%s4 + $0xf20] sm:$0xf]
    %v1743 = vld [vmem:[%s4 + $0xf24] sm:$0xf]
    %v1744 = vld [vmem:[%s4 + $0xf28] sm:$0xf]
    %v1745 = vld [vmem:[%s4 + $0xf2c] sm:$0xf]
    %v1746 = vld [vmem:[%s4 + $0xf30] sm:$0xf]
    %v1747 = vld [vmem:[%s4 + $0xf34] sm:$0xf]
    %v1748 = vld [vmem:[%s4 + $0xf38] sm:$0xf]
    %v1749 = vld [vmem:[%s4 + $0xf3c] sm:$0xf]
    %v1750 = vld [vmem:[%s4 + $0xf40] sm:$0xf]
    %v1751 = vld [vmem:[%s4 + $0xf44] sm:$0xf]
    %v1752 = vld [vmem:[%s4 + $0xf48] sm:$0xf]
    %v1753 = vld [vmem:[%s4 + $0xf4c] sm:$0xf]
    %v1754 = vld [vmem:[%s4 + $0xf50] sm:$0xf]
    %v1755 = vld [vmem:[%s4 + $0xf54] sm:$0xf]
    %v1756 = vld [vmem:[%s4 + $0xf58] sm:$0xf]
    %v1757 = vld [vmem:[%s4 + $0xf5c] sm:$0xf]
    %v1758 = vld [vmem:[%s4 + $0xf60] sm:$0xf]
    %v1759 = vld [vmem:[%s4 + $0xf64] sm:$0xf]
    %v1760 = vld [vmem:[%s4 + $0xf68] sm:$0xf]
    %v1761 = vld [vmem:[%s4 + $0xf6c] sm:$0xf]
    %v1762 = vld [vmem:[%s4 + $0xf70] sm:$0xf]
    %v1763 = vld [vmem:[%s4 + $0xf74] sm:$0xf]
    %v1764 = vld [vmem:[%s4 + $0xf78] sm:$0xf]
    %v1765 = vld [vmem:[%s4 + $0xf7c] sm:$0xf]
    %v1766 = vld [vmem:[%s4 + $0xf80] sm:$0xf]
    %v1767 = vld [vmem:[%s4 + $0xf84] sm:$0xf]
    %v1768 = vld [vmem:[%s4 + $0xf88] sm:$0xf]
    %v1769 = vld [vmem:[%s4 + $0xf8c] sm:$0xf]
    %v1770 = vld [vmem:[%s4 + $0xf90] sm:$0xf]
    %v1771 = vld [vmem:[%s4 + $0xf94] sm:$0xf]
    %v1772 = vld [vmem:[%s4 + $0xf98] sm:$0xf]
    %v1773 = vld [vmem:[%s4 + $0xf9c] sm:$0xf]
    %v1774 = vld [vmem:[%s4 + $0xfa0] sm:$0xf]
    %v1775 = vld [vmem:[%s4 + $0xfa4] sm:$0xf]
    %v1776 = vld [vmem:[%s4 + $0xfa8] sm:$0xf]
    %v1777 = vld [vmem:[%s4 + $0xfac] sm:$0xf]
    %v1778 = vld [vmem:[%s4 + $0xfb0] sm:$0xf]
    %v1779 = vld [vmem:[%s4 + $0xfb4] sm:$0xf]
    %v1780 = vld [vmem:[%s4 + $0xfb8] sm:$0xf]
    %v1781 = vld [vmem:[%s4 + $0xfbc] sm:$0xf]
    %v1782 = vld [vmem:[%s4 + $0xfc0] sm:$0xf]
    %v1783 = vld [vmem:[%s4 + $0xfc4] sm:$0xf]
    %v1784 = vld [vmem:[%s4 + $0xfc8] sm:$0xf]
    %v1785 = vld [vmem:[%s4 + $0xfcc] sm:$0xf]
    %v1786 = vld [vmem:[%s4 + $0xfd0] sm:$0xf]
    %v1787 = vld [vmem:[%s4 + $0xfd4] sm:$0xf]
    %v1788 = vld [vmem:[%s4 + $0xfd8] sm:$0xf]
    %v1789 = vld [vmem:[%s4 + $0xfdc] sm:$0xf]
    %v1790 = vld [vmem:[%s4 + $0xfe0] sm:$0xf]
    %v1791 = vld [vmem:[%s4 + $0xfe4] sm:$0xf]
    %v1792 = vld [vmem:[%s4 + $0xfe8] sm:$0xf]
    %v1793 = vld [vmem:[%s4 + $0xfec] sm:$0xf]
    %v1794 = vld [vmem:[%s4 + $0xff0] sm:$0xf]
    %v1795 = vld [vmem:[%s4 + $0xff4] sm:$0xf]
    %v1796 = vld [vmem:[%s4 + $0xff8] sm:$0xf]
    %v1797 = vld [vmem:[%s4 + $0xffc] sm:$0xf]
    %v2822 = vunpack.c.l.b16 %v774
    %v2823 = vunpack.c.l.b16 %v775
    %v2824 = vunpack.c.l.b16 %v776
    %v2825 = vunpack.c.l.b16 %v777
    %v2826 = vunpack.c.l.b16 %v778
    %v2827 = vunpack.c.l.b16 %v779
    %v2828 = vunpack.c.l.b16 %v780
    %v2829 = vunpack.c.l.b16 %v781
    %v2830 = vunpack.c.l.b16 %v782
    %v2831 = vunpack.c.l.b16 %v783
    %v2832 = vunpack.c.l.b16 %v784
    %v2833 = vunpack.c.l.b16 %v785
    %v2834 = vunpack.c.l.b16 %v786
    %v2835 = vunpack.c.l.b16 %v787
    %v2836 = vunpack.c.l.b16 %v788
    %v2837 = vunpack.c.l.b16 %v789
    %v2838 = vunpack.c.l.b16 %v790
    %v2839 = vunpack.c.l.b16 %v791
    %v2840 = vunpack.c.l.b16 %v792
    %v2841 = vunpack.c.l.b16 %v793
    %v2842 = vunpack.c.l.b16 %v794
    %v2843 = vunpack.c.l.b16 %v795
    %v2844 = vunpack.c.l.b16 %v796
    %v2845 = vunpack.c.l.b16 %v797
    %v2846 = vunpack.c.l.b16 %v798
    %v2847 = vunpack.c.l.b16 %v799
    %v2848 = vunpack.c.l.b16 %v800
    %v2849 = vunpack.c.l.b16 %v801
    %v2850 = vunpack.c.l.b16 %v802
    %v2851 = vunpack.c.l.b16 %v803
    %v2852 = vunpack.c.l.b16 %v804
    %v2853 = vunpack.c.l.b16 %v805
    %v2854 = vunpack.c.l.b16 %v806
    %v2855 = vunpack.c.l.b16 %v807
    %v2856 = vunpack.c.l.b16 %v808
    %v2857 = vunpack.c.l.b16 %v809
    %v2858 = vunpack.c.l.b16 %v810
    %v2859 = vunpack.c.l.b16 %v811
    %v2860 = vunpack.c.l.b16 %v812
    %v2861 = vunpack.c.l.b16 %v813
    %v2862 = vunpack.c.l.b16 %v814
    %v2863 = vunpack.c.l.b16 %v815
    %v2864 = vunpack.c.l.b16 %v816
    %v2865 = vunpack.c.l.b16 %v817
    %v2866 = vunpack.c.l.b16 %v818
    %v2867 = vunpack.c.l.b16 %v819
    %v2868 = vunpack.c.l.b16 %v820
    %v2869 = vunpack.c.l.b16 %v821
    %v2870 = vunpack.c.l.b16 %v822
    %v2871 = vunpack.c.l.b16 %v823
    %v2872 = vunpack.c.l.b16 %v824
    %v2873 = vunpack.c.l.b16 %v825
    %v2874 = vunpack.c.l.b16 %v826
    %v2875 = vunpack.c.l.b16 %v827
    %v2876 = vunpack.c.l.b16 %v828
    %v2877 = vunpack.c.l.b16 %v829
    %v2878 = vunpack.c.l.b16 %v830
    %v2879 = vunpack.c.l.b16 %v831
    %v2880 = vunpack.c.l.b16 %v832
    %v2881 = vunpack.c.l.b16 %v833
    %v2882 = vunpack.c.l.b16 %v834
    %v2883 = vunpack.c.l.b16 %v835
    %v2884 = vunpack.c.l.b16 %v836
    %v2885 = vunpack.c.l.b16 %v837
    %v2886 = vunpack.c.l.b16 %v838
    %v2887 = vunpack.c.l.b16 %v839
    %v2888 = vunpack.c.l.b16 %v840
    %v2889 = vunpack.c.l.b16 %v841
    %v2890 = vunpack.c.l.b16 %v842
    %v2891 = vunpack.c.l.b16 %v843
    %v2892 = vunpack.c.l.b16 %v844
    %v2893 = vunpack.c.l.b16 %v845
    %v2894 = vunpack.c.l.b16 %v846
    %v2895 = vunpack.c.l.b16 %v847
    %v2896 = vunpack.c.l.b16 %v848
    %v2897 = vunpack.c.l.b16 %v849
    %v2898 = vunpack.c.l.b16 %v850
    %v2899 = vunpack.c.l.b16 %v851
    %v2900 = vunpack.c.l.b16 %v852
    %v2901 = vunpack.c.l.b16 %v853
    %v2902 = vunpack.c.l.b16 %v854
    %v2903 = vunpack.c.l.b16 %v855
    %v2904 = vunpack.c.l.b16 %v856
    %v2905 = vunpack.c.l.b16 %v857
    %v2906 = vunpack.c.l.b16 %v858
    %v2907 = vunpack.c.l.b16 %v859
    %v2908 = vunpack.c.l.b16 %v860
    %v2909 = vunpack.c.l.b16 %v861
    %v2910 = vunpack.c.l.b16 %v862
    %v2911 = vunpack.c.l.b16 %v863
    %v2912 = vunpack.c.l.b16 %v864
    %v2913 = vunpack.c.l.b16 %v865
    %v2914 = vunpack.c.l.b16 %v866
    %v2915 = vunpack.c.l.b16 %v867
    %v2916 = vunpack.c.l.b16 %v868
    %v2917 = vunpack.c.l.b16 %v869
    %v2918 = vunpack.c.l.b16 %v870
    %v2919 = vunpack.c.l.b16 %v871
    %v2920 = vunpack.c.l.b16 %v872
    %v2921 = vunpack.c.l.b16 %v873
    %v2922 = vunpack.c.l.b16 %v874
    %v2923 = vunpack.c.l.b16 %v875
    %v2924 = vunpack.c.l.b16 %v876
    %v2925 = vunpack.c.l.b16 %v877
    %v2926 = vunpack.c.l.b16 %v878
    %v2927 = vunpack.c.l.b16 %v879
    %v2928 = vunpack.c.l.b16 %v880
    %v2929 = vunpack.c.l.b16 %v881
    %v2930 = vunpack.c.l.b16 %v882
    %v2931 = vunpack.c.l.b16 %v883
    %v2932 = vunpack.c.l.b16 %v884
    %v2933 = vunpack.c.l.b16 %v885
    %v2934 = vunpack.c.l.b16 %v886
    %v2935 = vunpack.c.l.b16 %v887
    %v2936 = vunpack.c.l.b16 %v888
    %v2937 = vunpack.c.l.b16 %v889
    %v2938 = vunpack.c.l.b16 %v890
    %v2939 = vunpack.c.l.b16 %v891
    %v2940 = vunpack.c.l.b16 %v892
    %v2941 = vunpack.c.l.b16 %v893
    %v2942 = vunpack.c.l.b16 %v894
    %v2943 = vunpack.c.l.b16 %v895
    %v2944 = vunpack.c.l.b16 %v896
    %v2945 = vunpack.c.l.b16 %v897
    %v2946 = vunpack.c.l.b16 %v898
    %v2947 = vunpack.c.l.b16 %v899
    %v2948 = vunpack.c.l.b16 %v900
    %v2949 = vunpack.c.l.b16 %v901
    %v2950 = vunpack.c.l.b16 %v902
    %v2951 = vunpack.c.l.b16 %v903
    %v2952 = vunpack.c.l.b16 %v904
    %v2953 = vunpack.c.l.b16 %v905
    %v2954 = vunpack.c.l.b16 %v906
    %v2955 = vunpack.c.l.b16 %v907
    %v2956 = vunpack.c.l.b16 %v908
    %v2957 = vunpack.c.l.b16 %v909
    %v2958 = vunpack.c.l.b16 %v910
    %v2959 = vunpack.c.l.b16 %v911
    %v2960 = vunpack.c.l.b16 %v912
    %v2961 = vunpack.c.l.b16 %v913
    %v2962 = vunpack.c.l.b16 %v914
    %v2963 = vunpack.c.l.b16 %v915
    %v2964 = vunpack.c.l.b16 %v916
    %v2965 = vunpack.c.l.b16 %v917
    %v2966 = vunpack.c.l.b16 %v918
    %v2967 = vunpack.c.l.b16 %v919
    %v2968 = vunpack.c.l.b16 %v920
    %v2969 = vunpack.c.l.b16 %v921
    %v2970 = vunpack.c.l.b16 %v922
    %v2971 = vunpack.c.l.b16 %v923
    %v2972 = vunpack.c.l.b16 %v924
    %v2973 = vunpack.c.l.b16 %v925
    %v2974 = vunpack.c.l.b16 %v926
    %v2975 = vunpack.c.l.b16 %v927
    %v2976 = vunpack.c.l.b16 %v928
    %v2977 = vunpack.c.l.b16 %v929
    %v2978 = vunpack.c.l.b16 %v930
    %v2979 = vunpack.c.l.b16 %v931
    %v2980 = vunpack.c.l.b16 %v932
    %v2981 = vunpack.c.l.b16 %v933
    %v2982 = vunpack.c.l.b16 %v934
    %v2983 = vunpack.c.l.b16 %v935
    %v2984 = vunpack.c.l.b16 %v936
    %v2985 = vunpack.c.l.b16 %v937
    %v2986 = vunpack.c.l.b16 %v938
    %v2987 = vunpack.c.l.b16 %v939
    %v2988 = vunpack.c.l.b16 %v940
    %v2989 = vunpack.c.l.b16 %v941
    %v2990 = vunpack.c.l.b16 %v942
    %v2991 = vunpack.c.l.b16 %v943
    %v2992 = vunpack.c.l.b16 %v944
    %v2993 = vunpack.c.l.b16 %v945
    %v2994 = vunpack.c.l.b16 %v946
    %v2995 = vunpack.c.l.b16 %v947
    %v2996 = vunpack.c.l.b16 %v948
    %v2997 = vunpack.c.l.b16 %v949
    %v2998 = vunpack.c.l.b16 %v950
    %v2999 = vunpack.c.l.b16 %v951
    %v3000 = vunpack.c.l.b16 %v952
    %v3001 = vunpack.c.l.b16 %v953
    %v3002 = vunpack.c.l.b16 %v954
    %v3003 = vunpack.c.l.b16 %v955
    %v3004 = vunpack.c.l.b16 %v956
    %v3005 = vunpack.c.l.b16 %v957
    %v3006 = vunpack.c.l.b16 %v958
    %v3007 = vunpack.c.l.b16 %v959
    %v3008 = vunpack.c.l.b16 %v960
    %v3009 = vunpack.c.l.b16 %v961
    %v3010 = vunpack.c.l.b16 %v962
    %v3011 = vunpack.c.l.b16 %v963
    %v3012 = vunpack.c.l.b16 %v964
    %v3013 = vunpack.c.l.b16 %v965
    %v3014 = vunpack.c.l.b16 %v966
    %v3015 = vunpack.c.l.b16 %v967
    %v3016 = vunpack.c.l.b16 %v968
    %v3017 = vunpack.c.l.b16 %v969
    %v3018 = vunpack.c.l.b16 %v970
    %v3019 = vunpack.c.l.b16 %v971
    %v3020 = vunpack.c.l.b16 %v972
    %v3021 = vunpack.c.l.b16 %v973
    %v3022 = vunpack.c.l.b16 %v974
    %v3023 = vunpack.c.l.b16 %v975
    %v3024 = vunpack.c.l.b16 %v976
    %v3025 = vunpack.c.l.b16 %v977
    %v3026 = vunpack.c.l.b16 %v978
    %v3027 = vunpack.c.l.b16 %v979
    %v3028 = vunpack.c.l.b16 %v980
    %v3029 = vunpack.c.l.b16 %v981
    %v3030 = vunpack.c.l.b16 %v982
    %v3031 = vunpack.c.l.b16 %v983
    %v3032 = vunpack.c.l.b16 %v984
    %v3033 = vunpack.c.l.b16 %v985
    %v3034 = vunpack.c.l.b16 %v986
    %v3035 = vunpack.c.l.b16 %v987
    %v3036 = vunpack.c.l.b16 %v988
    %v3037 = vunpack.c.l.b16 %v989
    %v3038 = vunpack.c.l.b16 %v990
    %v3039 = vunpack.c.l.b16 %v991
    %v3040 = vunpack.c.l.b16 %v992
    %v3041 = vunpack.c.l.b16 %v993
    %v3042 = vunpack.c.l.b16 %v994
    %v3043 = vunpack.c.l.b16 %v995
    %v3044 = vunpack.c.l.b16 %v996
    %v3045 = vunpack.c.l.b16 %v997
    %v3046 = vunpack.c.l.b16 %v998
    %v3047 = vunpack.c.l.b16 %v999
    %v3048 = vunpack.c.l.b16 %v1000
    %v3049 = vunpack.c.l.b16 %v1001
    %v3050 = vunpack.c.l.b16 %v1002
    %v3051 = vunpack.c.l.b16 %v1003
    %v3052 = vunpack.c.l.b16 %v1004
    %v3053 = vunpack.c.l.b16 %v1005
    %v3054 = vunpack.c.l.b16 %v1006
    %v3055 = vunpack.c.l.b16 %v1007
    %v3056 = vunpack.c.l.b16 %v1008
    %v3057 = vunpack.c.l.b16 %v1009
    %v3058 = vunpack.c.l.b16 %v1010
    %v3059 = vunpack.c.l.b16 %v1011
    %v3060 = vunpack.c.l.b16 %v1012
    %v3061 = vunpack.c.l.b16 %v1013
    %v3062 = vunpack.c.l.b16 %v1014
    %v3063 = vunpack.c.l.b16 %v1015
    %v3064 = vunpack.c.l.b16 %v1016
    %v3065 = vunpack.c.l.b16 %v1017
    %v3066 = vunpack.c.l.b16 %v1018
    %v3067 = vunpack.c.l.b16 %v1019
    %v3068 = vunpack.c.l.b16 %v1020
    %v3069 = vunpack.c.l.b16 %v1021
    %v3070 = vunpack.c.l.b16 %v1022
    %v3071 = vunpack.c.l.b16 %v1023
    %v3072 = vunpack.c.l.b16 %v1024
    %v3073 = vunpack.c.l.b16 %v1025
    %v3074 = vunpack.c.l.b16 %v1026
    %v3075 = vunpack.c.l.b16 %v1027
    %v3076 = vunpack.c.l.b16 %v1028
    %v3077 = vunpack.c.l.b16 %v1029
    %v3078 = vunpack.c.l.b16 %v1030
    %v3079 = vunpack.c.l.b16 %v1031
    %v3080 = vunpack.c.l.b16 %v1032
    %v3081 = vunpack.c.l.b16 %v1033
    %v3082 = vunpack.c.l.b16 %v1034
    %v3083 = vunpack.c.l.b16 %v1035
    %v3084 = vunpack.c.l.b16 %v1036
    %v3085 = vunpack.c.l.b16 %v1037
    %v3086 = vunpack.c.l.b16 %v1038
    %v3087 = vunpack.c.l.b16 %v1039
    %v3088 = vunpack.c.l.b16 %v1040
    %v3089 = vunpack.c.l.b16 %v1041
    %v3090 = vunpack.c.l.b16 %v1042
    %v3091 = vunpack.c.l.b16 %v1043
    %v3092 = vunpack.c.l.b16 %v1044
    %v3093 = vunpack.c.l.b16 %v1045
    %v3094 = vunpack.c.l.b16 %v1046
    %v3095 = vunpack.c.l.b16 %v1047
    %v3096 = vunpack.c.l.b16 %v1048
    %v3097 = vunpack.c.l.b16 %v1049
    %v3098 = vunpack.c.l.b16 %v1050
    %v3099 = vunpack.c.l.b16 %v1051
    %v3100 = vunpack.c.l.b16 %v1052
    %v3101 = vunpack.c.l.b16 %v1053
    %v3102 = vunpack.c.l.b16 %v1054
    %v3103 = vunpack.c.l.b16 %v1055
    %v3104 = vunpack.c.l.b16 %v1056
    %v3105 = vunpack.c.l.b16 %v1057
    %v3106 = vunpack.c.l.b16 %v1058
    %v3107 = vunpack.c.l.b16 %v1059
    %v3108 = vunpack.c.l.b16 %v1060
    %v3109 = vunpack.c.l.b16 %v1061
    %v3110 = vunpack.c.l.b16 %v1062
    %v3111 = vunpack.c.l.b16 %v1063
    %v3112 = vunpack.c.l.b16 %v1064
    %v3113 = vunpack.c.l.b16 %v1065
    %v3114 = vunpack.c.l.b16 %v1066
    %v3115 = vunpack.c.l.b16 %v1067
    %v3116 = vunpack.c.l.b16 %v1068
    %v3117 = vunpack.c.l.b16 %v1069
    %v3118 = vunpack.c.l.b16 %v1070
    %v3119 = vunpack.c.l.b16 %v1071
    %v3120 = vunpack.c.l.b16 %v1072
    %v3121 = vunpack.c.l.b16 %v1073
    %v3122 = vunpack.c.l.b16 %v1074
    %v3123 = vunpack.c.l.b16 %v1075
    %v3124 = vunpack.c.l.b16 %v1076
    %v3125 = vunpack.c.l.b16 %v1077
    %v3126 = vunpack.c.l.b16 %v1078
    %v3127 = vunpack.c.l.b16 %v1079
    %v3128 = vunpack.c.l.b16 %v1080
    %v3129 = vunpack.c.l.b16 %v1081
    %v3130 = vunpack.c.l.b16 %v1082
    %v3131 = vunpack.c.l.b16 %v1083
    %v3132 = vunpack.c.l.b16 %v1084
    %v3133 = vunpack.c.l.b16 %v1085
    %v3134 = vunpack.c.l.b16 %v1086
    %v3135 = vunpack.c.l.b16 %v1087
    %v3136 = vunpack.c.l.b16 %v1088
    %v3137 = vunpack.c.l.b16 %v1089
    %v3138 = vunpack.c.l.b16 %v1090
    %v3139 = vunpack.c.l.b16 %v1091
    %v3140 = vunpack.c.l.b16 %v1092
    %v3141 = vunpack.c.l.b16 %v1093
    %v3142 = vunpack.c.l.b16 %v1094
    %v3143 = vunpack.c.l.b16 %v1095
    %v3144 = vunpack.c.l.b16 %v1096
    %v3145 = vunpack.c.l.b16 %v1097
    %v3146 = vunpack.c.l.b16 %v1098
    %v3147 = vunpack.c.l.b16 %v1099
    %v3148 = vunpack.c.l.b16 %v1100
    %v3149 = vunpack.c.l.b16 %v1101
    %v3150 = vunpack.c.l.b16 %v1102
    %v3151 = vunpack.c.l.b16 %v1103
    %v3152 = vunpack.c.l.b16 %v1104
    %v3153 = vunpack.c.l.b16 %v1105
    %v3154 = vunpack.c.l.b16 %v1106
    %v3155 = vunpack.c.l.b16 %v1107
    %v3156 = vunpack.c.l.b16 %v1108
    %v3157 = vunpack.c.l.b16 %v1109
    %v3158 = vunpack.c.l.b16 %v1110
    %v3159 = vunpack.c.l.b16 %v1111
    %v3160 = vunpack.c.l.b16 %v1112
    %v3161 = vunpack.c.l.b16 %v1113
    %v3162 = vunpack.c.l.b16 %v1114
    %v3163 = vunpack.c.l.b16 %v1115
    %v3164 = vunpack.c.l.b16 %v1116
    %v3165 = vunpack.c.l.b16 %v1117
    %v3166 = vunpack.c.l.b16 %v1118
    %v3167 = vunpack.c.l.b16 %v1119
    %v3168 = vunpack.c.l.b16 %v1120
    %v3169 = vunpack.c.l.b16 %v1121
    %v3170 = vunpack.c.l.b16 %v1122
    %v3171 = vunpack.c.l.b16 %v1123
    %v3172 = vunpack.c.l.b16 %v1124
    %v3173 = vunpack.c.l.b16 %v1125
    %v3174 = vunpack.c.l.b16 %v1126
    %v3175 = vunpack.c.l.b16 %v1127
    %v3176 = vunpack.c.l.b16 %v1128
    %v3177 = vunpack.c.l.b16 %v1129
    %v3178 = vunpack.c.l.b16 %v1130
    %v3179 = vunpack.c.l.b16 %v1131
    %v3180 = vunpack.c.l.b16 %v1132
    %v3181 = vunpack.c.l.b16 %v1133
    %v3182 = vunpack.c.l.b16 %v1134
    %v3183 = vunpack.c.l.b16 %v1135
    %v3184 = vunpack.c.l.b16 %v1136
    %v3185 = vunpack.c.l.b16 %v1137
    %v3186 = vunpack.c.l.b16 %v1138
    %v3187 = vunpack.c.l.b16 %v1139
    %v3188 = vunpack.c.l.b16 %v1140
    %v3189 = vunpack.c.l.b16 %v1141
    %v3190 = vunpack.c.l.b16 %v1142
    %v3191 = vunpack.c.l.b16 %v1143
    %v3192 = vunpack.c.l.b16 %v1144
    %v3193 = vunpack.c.l.b16 %v1145
    %v3194 = vunpack.c.l.b16 %v1146
    %v3195 = vunpack.c.l.b16 %v1147
    %v3196 = vunpack.c.l.b16 %v1148
    %v3197 = vunpack.c.l.b16 %v1149
    %v3198 = vunpack.c.l.b16 %v1150
    %v3199 = vunpack.c.l.b16 %v1151
    %v3200 = vunpack.c.l.b16 %v1152
    %v3201 = vunpack.c.l.b16 %v1153
    %v3202 = vunpack.c.l.b16 %v1154
    %v3203 = vunpack.c.l.b16 %v1155
    %v3204 = vunpack.c.l.b16 %v1156
    %v3205 = vunpack.c.l.b16 %v1157
    %v3206 = vunpack.c.l.b16 %v1158
    %v3207 = vunpack.c.l.b16 %v1159
    %v3208 = vunpack.c.l.b16 %v1160
    %v3209 = vunpack.c.l.b16 %v1161
    %v3210 = vunpack.c.l.b16 %v1162
    %v3211 = vunpack.c.l.b16 %v1163
    %v3212 = vunpack.c.l.b16 %v1164
    %v3213 = vunpack.c.l.b16 %v1165
    %v3214 = vunpack.c.l.b16 %v1166
    %v3215 = vunpack.c.l.b16 %v1167
    %v3216 = vunpack.c.l.b16 %v1168
    %v3217 = vunpack.c.l.b16 %v1169
    %v3218 = vunpack.c.l.b16 %v1170
    %v3219 = vunpack.c.l.b16 %v1171
    %v3220 = vunpack.c.l.b16 %v1172
    %v3221 = vunpack.c.l.b16 %v1173
    %v3222 = vunpack.c.l.b16 %v1174
    %v3223 = vunpack.c.l.b16 %v1175
    %v3224 = vunpack.c.l.b16 %v1176
    %v3225 = vunpack.c.l.b16 %v1177
    %v3226 = vunpack.c.l.b16 %v1178
    %v3227 = vunpack.c.l.b16 %v1179
    %v3228 = vunpack.c.l.b16 %v1180
    %v3229 = vunpack.c.l.b16 %v1181
    %v3230 = vunpack.c.l.b16 %v1182
    %v3231 = vunpack.c.l.b16 %v1183
    %v3232 = vunpack.c.l.b16 %v1184
    %v3233 = vunpack.c.l.b16 %v1185
    %v3234 = vunpack.c.l.b16 %v1186
    %v3235 = vunpack.c.l.b16 %v1187
    %v3236 = vunpack.c.l.b16 %v1188
    %v3237 = vunpack.c.l.b16 %v1189
    %v3238 = vunpack.c.l.b16 %v1190
    %v3239 = vunpack.c.l.b16 %v1191
    %v3240 = vunpack.c.l.b16 %v1192
    %v3241 = vunpack.c.l.b16 %v1193
    %v3242 = vunpack.c.l.b16 %v1194
    %v3243 = vunpack.c.l.b16 %v1195
    %v3244 = vunpack.c.l.b16 %v1196
    %v3245 = vunpack.c.l.b16 %v1197
    %v3246 = vunpack.c.l.b16 %v1198
    %v3247 = vunpack.c.l.b16 %v1199
    %v3248 = vunpack.c.l.b16 %v1200
    %v3249 = vunpack.c.l.b16 %v1201
    %v3250 = vunpack.c.l.b16 %v1202
    %v3251 = vunpack.c.l.b16 %v1203
    %v3252 = vunpack.c.l.b16 %v1204
    %v3253 = vunpack.c.l.b16 %v1205
    %v3254 = vunpack.c.l.b16 %v1206
    %v3255 = vunpack.c.l.b16 %v1207
    %v3256 = vunpack.c.l.b16 %v1208
    %v3257 = vunpack.c.l.b16 %v1209
    %v3258 = vunpack.c.l.b16 %v1210
    %v3259 = vunpack.c.l.b16 %v1211
    %v3260 = vunpack.c.l.b16 %v1212
    %v3261 = vunpack.c.l.b16 %v1213
    %v3262 = vunpack.c.l.b16 %v1214
    %v3263 = vunpack.c.l.b16 %v1215
    %v3264 = vunpack.c.l.b16 %v1216
    %v3265 = vunpack.c.l.b16 %v1217
    %v3266 = vunpack.c.l.b16 %v1218
    %v3267 = vunpack.c.l.b16 %v1219
    %v3268 = vunpack.c.l.b16 %v1220
    %v3269 = vunpack.c.l.b16 %v1221
    %v3270 = vunpack.c.l.b16 %v1222
    %v3271 = vunpack.c.l.b16 %v1223
    %v3272 = vunpack.c.l.b16 %v1224
    %v3273 = vunpack.c.l.b16 %v1225
    %v3274 = vunpack.c.l.b16 %v1226
    %v3275 = vunpack.c.l.b16 %v1227
    %v3276 = vunpack.c.l.b16 %v1228
    %v3277 = vunpack.c.l.b16 %v1229
    %v3278 = vunpack.c.l.b16 %v1230
    %v3279 = vunpack.c.l.b16 %v1231
    %v3280 = vunpack.c.l.b16 %v1232
    %v3281 = vunpack.c.l.b16 %v1233
    %v3282 = vunpack.c.l.b16 %v1234
    %v3283 = vunpack.c.l.b16 %v1235
    %v3284 = vunpack.c.l.b16 %v1236
    %v3285 = vunpack.c.l.b16 %v1237
    %v3286 = vunpack.c.l.b16 %v1238
    %v3287 = vunpack.c.l.b16 %v1239
    %v3288 = vunpack.c.l.b16 %v1240
    %v3289 = vunpack.c.l.b16 %v1241
    %v3290 = vunpack.c.l.b16 %v1242
    %v3291 = vunpack.c.l.b16 %v1243
    %v3292 = vunpack.c.l.b16 %v1244
    %v3293 = vunpack.c.l.b16 %v1245
    %v3294 = vunpack.c.l.b16 %v1246
    %v3295 = vunpack.c.l.b16 %v1247
    %v3296 = vunpack.c.l.b16 %v1248
    %v3297 = vunpack.c.l.b16 %v1249
    %v3298 = vunpack.c.l.b16 %v1250
    %v3299 = vunpack.c.l.b16 %v1251
    %v3300 = vunpack.c.l.b16 %v1252
    %v3301 = vunpack.c.l.b16 %v1253
    %v3302 = vunpack.c.l.b16 %v1254
    %v3303 = vunpack.c.l.b16 %v1255
    %v3304 = vunpack.c.l.b16 %v1256
    %v3305 = vunpack.c.l.b16 %v1257
    %v3306 = vunpack.c.l.b16 %v1258
    %v3307 = vunpack.c.l.b16 %v1259
    %v3308 = vunpack.c.l.b16 %v1260
    %v3309 = vunpack.c.l.b16 %v1261
    %v3310 = vunpack.c.l.b16 %v1262
    %v3311 = vunpack.c.l.b16 %v1263
    %v3312 = vunpack.c.l.b16 %v1264
    %v3313 = vunpack.c.l.b16 %v1265
    %v3314 = vunpack.c.l.b16 %v1266
    %v3315 = vunpack.c.l.b16 %v1267
    %v3316 = vunpack.c.l.b16 %v1268
    %v3317 = vunpack.c.l.b16 %v1269
    %v3318 = vunpack.c.l.b16 %v1270
    %v3319 = vunpack.c.l.b16 %v1271
    %v3320 = vunpack.c.l.b16 %v1272
    %v3321 = vunpack.c.l.b16 %v1273
    %v3322 = vunpack.c.l.b16 %v1274
    %v3323 = vunpack.c.l.b16 %v1275
    %v3324 = vunpack.c.l.b16 %v1276
    %v3325 = vunpack.c.l.b16 %v1277
    %v3326 = vunpack.c.l.b16 %v1278
    %v3327 = vunpack.c.l.b16 %v1279
    %v3328 = vunpack.c.l.b16 %v1280
    %v3329 = vunpack.c.l.b16 %v1281
    %v3330 = vunpack.c.l.b16 %v1282
    %v3331 = vunpack.c.l.b16 %v1283
    %v3332 = vunpack.c.l.b16 %v1284
    %v3333 = vunpack.c.l.b16 %v1285
    %v3334 = vunpack.c.l.b16 %v1286
    %v3335 = vunpack.c.l.b16 %v1287
    %v3336 = vunpack.c.l.b16 %v1288
    %v3337 = vunpack.c.l.b16 %v1289
    %v3338 = vunpack.c.l.b16 %v1290
    %v3339 = vunpack.c.l.b16 %v1291
    %v3340 = vunpack.c.l.b16 %v1292
    %v3341 = vunpack.c.l.b16 %v1293
    %v3342 = vunpack.c.l.b16 %v1294
    %v3343 = vunpack.c.l.b16 %v1295
    %v3344 = vunpack.c.l.b16 %v1296
    %v3345 = vunpack.c.l.b16 %v1297
    %v3346 = vunpack.c.l.b16 %v1298
    %v3347 = vunpack.c.l.b16 %v1299
    %v3348 = vunpack.c.l.b16 %v1300
    %v3349 = vunpack.c.l.b16 %v1301
    %v3350 = vunpack.c.l.b16 %v1302
    %v3351 = vunpack.c.l.b16 %v1303
    %v3352 = vunpack.c.l.b16 %v1304
    %v3353 = vunpack.c.l.b16 %v1305
    %v3354 = vunpack.c.l.b16 %v1306
    %v3355 = vunpack.c.l.b16 %v1307
    %v3356 = vunpack.c.l.b16 %v1308
    %v3357 = vunpack.c.l.b16 %v1309
    %v3358 = vunpack.c.l.b16 %v1310
    %v3359 = vunpack.c.l.b16 %v1311
    %v3360 = vunpack.c.l.b16 %v1312
    %v3361 = vunpack.c.l.b16 %v1313
    %v3362 = vunpack.c.l.b16 %v1314
    %v3363 = vunpack.c.l.b16 %v1315
    %v3364 = vunpack.c.l.b16 %v1316
    %v3365 = vunpack.c.l.b16 %v1317
    %v3366 = vunpack.c.l.b16 %v1318
    %v3367 = vunpack.c.l.b16 %v1319
    %v3368 = vunpack.c.l.b16 %v1320
    %v3369 = vunpack.c.l.b16 %v1321
    %v3370 = vunpack.c.l.b16 %v1322
    %v3371 = vunpack.c.l.b16 %v1323
    %v3372 = vunpack.c.l.b16 %v1324
    %v3373 = vunpack.c.l.b16 %v1325
    %v3374 = vunpack.c.l.b16 %v1326
    %v3375 = vunpack.c.l.b16 %v1327
    %v3376 = vunpack.c.l.b16 %v1328
    %v3377 = vunpack.c.l.b16 %v1329
    %v3378 = vunpack.c.l.b16 %v1330
    %v3379 = vunpack.c.l.b16 %v1331
    %v3380 = vunpack.c.l.b16 %v1332
    %v3381 = vunpack.c.l.b16 %v1333
    %v3382 = vunpack.c.l.b16 %v1334
    %v3383 = vunpack.c.l.b16 %v1335
    %v3384 = vunpack.c.l.b16 %v1336
    %v3385 = vunpack.c.l.b16 %v1337
    %v3386 = vunpack.c.l.b16 %v1338
    %v3387 = vunpack.c.l.b16 %v1339
    %v3388 = vunpack.c.l.b16 %v1340
    %v3389 = vunpack.c.l.b16 %v1341
    %v3390 = vunpack.c.l.b16 %v1342
    %v3391 = vunpack.c.l.b16 %v1343
    %v3392 = vunpack.c.l.b16 %v1344
    %v3393 = vunpack.c.l.b16 %v1345
    %v3394 = vunpack.c.l.b16 %v1346
    %v3395 = vunpack.c.l.b16 %v1347
    %v3396 = vunpack.c.l.b16 %v1348
    %v3397 = vunpack.c.l.b16 %v1349
    %v3398 = vunpack.c.l.b16 %v1350
    %v3399 = vunpack.c.l.b16 %v1351
    %v3400 = vunpack.c.l.b16 %v1352
    %v3401 = vunpack.c.l.b16 %v1353
    %v3402 = vunpack.c.l.b16 %v1354
    %v3403 = vunpack.c.l.b16 %v1355
    %v3404 = vunpack.c.l.b16 %v1356
    %v3405 = vunpack.c.l.b16 %v1357
    %v3406 = vunpack.c.l.b16 %v1358
    %v3407 = vunpack.c.l.b16 %v1359
    %v3408 = vunpack.c.l.b16 %v1360
    %v3409 = vunpack.c.l.b16 %v1361
    %v3410 = vunpack.c.l.b16 %v1362
    %v3411 = vunpack.c.l.b16 %v1363
    %v3412 = vunpack.c.l.b16 %v1364
    %v3413 = vunpack.c.l.b16 %v1365
    %v3414 = vunpack.c.l.b16 %v1366
    %v3415 = vunpack.c.l.b16 %v1367
    %v3416 = vunpack.c.l.b16 %v1368
    %v3417 = vunpack.c.l.b16 %v1369
    %v3418 = vunpack.c.l.b16 %v1370
    %v3419 = vunpack.c.l.b16 %v1371
    %v3420 = vunpack.c.l.b16 %v1372
    %v3421 = vunpack.c.l.b16 %v1373
    %v3422 = vunpack.c.l.b16 %v1374
    %v3423 = vunpack.c.l.b16 %v1375
    %v3424 = vunpack.c.l.b16 %v1376
    %v3425 = vunpack.c.l.b16 %v1377
    %v3426 = vunpack.c.l.b16 %v1378
    %v3427 = vunpack.c.l.b16 %v1379
    %v3428 = vunpack.c.l.b16 %v1380
    %v3429 = vunpack.c.l.b16 %v1381
    %v3430 = vunpack.c.l.b16 %v1382
    %v3431 = vunpack.c.l.b16 %v1383
    %v3432 = vunpack.c.l.b16 %v1384
    %v3433 = vunpack.c.l.b16 %v1385
    %v3434 = vunpack.c.l.b16 %v1386
    %v3435 = vunpack.c.l.b16 %v1387
    %v3436 = vunpack.c.l.b16 %v1388
    %v3437 = vunpack.c.l.b16 %v1389
    %v3438 = vunpack.c.l.b16 %v1390
    %v3439 = vunpack.c.l.b16 %v1391
    %v3440 = vunpack.c.l.b16 %v1392
    %v3441 = vunpack.c.l.b16 %v1393
    %v3442 = vunpack.c.l.b16 %v1394
    %v3443 = vunpack.c.l.b16 %v1395
    %v3444 = vunpack.c.l.b16 %v1396
    %v3445 = vunpack.c.l.b16 %v1397
    %v3446 = vunpack.c.l.b16 %v1398
    %v3447 = vunpack.c.l.b16 %v1399
    %v3448 = vunpack.c.l.b16 %v1400
    %v3449 = vunpack.c.l.b16 %v1401
    %v3450 = vunpack.c.l.b16 %v1402
    %v3451 = vunpack.c.l.b16 %v1403
    %v3452 = vunpack.c.l.b16 %v1404
    %v3453 = vunpack.c.l.b16 %v1405
    %v3454 = vunpack.c.l.b16 %v1406
    %v3455 = vunpack.c.l.b16 %v1407
    %v3456 = vunpack.c.l.b16 %v1408
    %v3457 = vunpack.c.l.b16 %v1409
    %v3458 = vunpack.c.l.b16 %v1410
    %v3459 = vunpack.c.l.b16 %v1411
    %v3460 = vunpack.c.l.b16 %v1412
    %v3461 = vunpack.c.l.b16 %v1413
    %v3462 = vunpack.c.l.b16 %v1414
    %v3463 = vunpack.c.l.b16 %v1415
    %v3464 = vunpack.c.l.b16 %v1416
    %v3465 = vunpack.c.l.b16 %v1417
    %v3466 = vunpack.c.l.b16 %v1418
    %v3467 = vunpack.c.l.b16 %v1419
    %v3468 = vunpack.c.l.b16 %v1420
    %v3469 = vunpack.c.l.b16 %v1421
    %v3470 = vunpack.c.l.b16 %v1422
    %v3471 = vunpack.c.l.b16 %v1423
    %v3472 = vunpack.c.l.b16 %v1424
    %v3473 = vunpack.c.l.b16 %v1425
    %v3474 = vunpack.c.l.b16 %v1426
    %v3475 = vunpack.c.l.b16 %v1427
    %v3476 = vunpack.c.l.b16 %v1428
    %v3477 = vunpack.c.l.b16 %v1429
    %v3478 = vunpack.c.l.b16 %v1430
    %v3479 = vunpack.c.l.b16 %v1431
    %v3480 = vunpack.c.l.b16 %v1432
    %v3481 = vunpack.c.l.b16 %v1433
    %v3482 = vunpack.c.l.b16 %v1434
    %v3483 = vunpack.c.l.b16 %v1435
    %v3484 = vunpack.c.l.b16 %v1436
    %v3485 = vunpack.c.l.b16 %v1437
    %v3486 = vunpack.c.l.b16 %v1438
    %v3487 = vunpack.c.l.b16 %v1439
    %v3488 = vunpack.c.l.b16 %v1440
    %v3489 = vunpack.c.l.b16 %v1441
    %v3490 = vunpack.c.l.b16 %v1442
    %v3491 = vunpack.c.l.b16 %v1443
    %v3492 = vunpack.c.l.b16 %v1444
    %v3493 = vunpack.c.l.b16 %v1445
    %v3494 = vunpack.c.l.b16 %v1446
    %v3495 = vunpack.c.l.b16 %v1447
    %v3496 = vunpack.c.l.b16 %v1448
    %v3497 = vunpack.c.l.b16 %v1449
    %v3498 = vunpack.c.l.b16 %v1450
    %v3499 = vunpack.c.l.b16 %v1451
    %v3500 = vunpack.c.l.b16 %v1452
    %v3501 = vunpack.c.l.b16 %v1453
    %v3502 = vunpack.c.l.b16 %v1454
    %v3503 = vunpack.c.l.b16 %v1455
    %v3504 = vunpack.c.l.b16 %v1456
    %v3505 = vunpack.c.l.b16 %v1457
    %v3506 = vunpack.c.l.b16 %v1458
    %v3507 = vunpack.c.l.b16 %v1459
    %v3508 = vunpack.c.l.b16 %v1460
    %v3509 = vunpack.c.l.b16 %v1461
    %v3510 = vunpack.c.l.b16 %v1462
    %v3511 = vunpack.c.l.b16 %v1463
    %v3512 = vunpack.c.l.b16 %v1464
    %v3513 = vunpack.c.l.b16 %v1465
    %v3514 = vunpack.c.l.b16 %v1466
    %v3515 = vunpack.c.l.b16 %v1467
    %v3516 = vunpack.c.l.b16 %v1468
    %v3517 = vunpack.c.l.b16 %v1469
    %v3518 = vunpack.c.l.b16 %v1470
    %v3519 = vunpack.c.l.b16 %v1471
    %v3520 = vunpack.c.l.b16 %v1472
    %v3521 = vunpack.c.l.b16 %v1473
    %v3522 = vunpack.c.l.b16 %v1474
    %v3523 = vunpack.c.l.b16 %v1475
    %v3524 = vunpack.c.l.b16 %v1476
    %v3525 = vunpack.c.l.b16 %v1477
    %v3526 = vunpack.c.l.b16 %v1478
    %v3527 = vunpack.c.l.b16 %v1479
    %v3528 = vunpack.c.l.b16 %v1480
    %v3529 = vunpack.c.l.b16 %v1481
    %v3530 = vunpack.c.l.b16 %v1482
    %v3531 = vunpack.c.l.b16 %v1483
    %v3532 = vunpack.c.l.b16 %v1484
    %v3533 = vunpack.c.l.b16 %v1485
    %v3534 = vunpack.c.l.b16 %v1486
    %v3535 = vunpack.c.l.b16 %v1487
    %v3536 = vunpack.c.l.b16 %v1488
    %v3537 = vunpack.c.l.b16 %v1489
    %v3538 = vunpack.c.l.b16 %v1490
    %v3539 = vunpack.c.l.b16 %v1491
    %v3540 = vunpack.c.l.b16 %v1492
    %v3541 = vunpack.c.l.b16 %v1493
    %v3542 = vunpack.c.l.b16 %v1494
    %v3543 = vunpack.c.l.b16 %v1495
    %v3544 = vunpack.c.l.b16 %v1496
    %v3545 = vunpack.c.l.b16 %v1497
    %v3546 = vunpack.c.l.b16 %v1498
    %v3547 = vunpack.c.l.b16 %v1499
    %v3548 = vunpack.c.l.b16 %v1500
    %v3549 = vunpack.c.l.b16 %v1501
    %v3550 = vunpack.c.l.b16 %v1502
    %v3551 = vunpack.c.l.b16 %v1503
    %v3552 = vunpack.c.l.b16 %v1504
    %v3553 = vunpack.c.l.b16 %v1505
    %v3554 = vunpack.c.l.b16 %v1506
    %v3555 = vunpack.c.l.b16 %v1507
    %v3556 = vunpack.c.l.b16 %v1508
    %v3557 = vunpack.c.l.b16 %v1509
    %v3558 = vunpack.c.l.b16 %v1510
    %v3559 = vunpack.c.l.b16 %v1511
    %v3560 = vunpack.c.l.b16 %v1512
    %v3561 = vunpack.c.l.b16 %v1513
    %v3562 = vunpack.c.l.b16 %v1514
    %v3563 = vunpack.c.l.b16 %v1515
    %v3564 = vunpack.c.l.b16 %v1516
    %v3565 = vunpack.c.l.b16 %v1517
    %v3566 = vunpack.c.l.b16 %v1518
    %v3567 = vunpack.c.l.b16 %v1519
    %v3568 = vunpack.c.l.b16 %v1520
    %v3569 = vunpack.c.l.b16 %v1521
    %v3570 = vunpack.c.l.b16 %v1522
    %v3571 = vunpack.c.l.b16 %v1523
    %v3572 = vunpack.c.l.b16 %v1524
    %v3573 = vunpack.c.l.b16 %v1525
    %v3574 = vunpack.c.l.b16 %v1526
    %v3575 = vunpack.c.l.b16 %v1527
    %v3576 = vunpack.c.l.b16 %v1528
    %v3577 = vunpack.c.l.b16 %v1529
    %v3578 = vunpack.c.l.b16 %v1530
    %v3579 = vunpack.c.l.b16 %v1531
    %v3580 = vunpack.c.l.b16 %v1532
    %v3581 = vunpack.c.l.b16 %v1533
    %v3582 = vunpack.c.l.b16 %v1534
    %v3583 = vunpack.c.l.b16 %v1535
    %v3584 = vunpack.c.l.b16 %v1536
    %v3585 = vunpack.c.l.b16 %v1537
    %v3586 = vunpack.c.l.b16 %v1538
    %v3587 = vunpack.c.l.b16 %v1539
    %v3588 = vunpack.c.l.b16 %v1540
    %v3589 = vunpack.c.l.b16 %v1541
    %v3590 = vunpack.c.l.b16 %v1542
    %v3591 = vunpack.c.l.b16 %v1543
    %v3592 = vunpack.c.l.b16 %v1544
    %v3593 = vunpack.c.l.b16 %v1545
    %v3594 = vunpack.c.l.b16 %v1546
    %v3595 = vunpack.c.l.b16 %v1547
    %v3596 = vunpack.c.l.b16 %v1548
    %v3597 = vunpack.c.l.b16 %v1549
    %v3598 = vunpack.c.l.b16 %v1550
    %v3599 = vunpack.c.l.b16 %v1551
    %v3600 = vunpack.c.l.b16 %v1552
    %v3601 = vunpack.c.l.b16 %v1553
    %v3602 = vunpack.c.l.b16 %v1554
    %v3603 = vunpack.c.l.b16 %v1555
    %v3604 = vunpack.c.l.b16 %v1556
    %v3605 = vunpack.c.l.b16 %v1557
    %v3606 = vunpack.c.l.b16 %v1558
    %v3607 = vunpack.c.l.b16 %v1559
    %v3608 = vunpack.c.l.b16 %v1560
    %v3609 = vunpack.c.l.b16 %v1561
    %v3610 = vunpack.c.l.b16 %v1562
    %v3611 = vunpack.c.l.b16 %v1563
    %v3612 = vunpack.c.l.b16 %v1564
    %v3613 = vunpack.c.l.b16 %v1565
    %v3614 = vunpack.c.l.b16 %v1566
    %v3615 = vunpack.c.l.b16 %v1567
    %v3616 = vunpack.c.l.b16 %v1568
    %v3617 = vunpack.c.l.b16 %v1569
    %v3618 = vunpack.c.l.b16 %v1570
    %v3619 = vunpack.c.l.b16 %v1571
    %v3620 = vunpack.c.l.b16 %v1572
    %v3621 = vunpack.c.l.b16 %v1573
    %v3622 = vunpack.c.l.b16 %v1574
    %v3623 = vunpack.c.l.b16 %v1575
    %v3624 = vunpack.c.l.b16 %v1576
    %v3625 = vunpack.c.l.b16 %v1577
    %v3626 = vunpack.c.l.b16 %v1578
    %v3627 = vunpack.c.l.b16 %v1579
    %v3628 = vunpack.c.l.b16 %v1580
    %v3629 = vunpack.c.l.b16 %v1581
    %v3630 = vunpack.c.l.b16 %v1582
    %v3631 = vunpack.c.l.b16 %v1583
    %v3632 = vunpack.c.l.b16 %v1584
    %v3633 = vunpack.c.l.b16 %v1585
    %v3634 = vunpack.c.l.b16 %v1586
    %v3635 = vunpack.c.l.b16 %v1587
    %v3636 = vunpack.c.l.b16 %v1588
    %v3637 = vunpack.c.l.b16 %v1589
    %v3638 = vunpack.c.l.b16 %v1590
    %v3639 = vunpack.c.l.b16 %v1591
    %v3640 = vunpack.c.l.b16 %v1592
    %v3641 = vunpack.c.l.b16 %v1593
    %v3642 = vunpack.c.l.b16 %v1594
    %v3643 = vunpack.c.l.b16 %v1595
    %v3644 = vunpack.c.l.b16 %v1596
    %v3645 = vunpack.c.l.b16 %v1597
    %v3646 = vunpack.c.l.b16 %v1598
    %v3647 = vunpack.c.l.b16 %v1599
    %v3648 = vunpack.c.l.b16 %v1600
    %v3649 = vunpack.c.l.b16 %v1601
    %v3650 = vunpack.c.l.b16 %v1602
    %v3651 = vunpack.c.l.b16 %v1603
    %v3652 = vunpack.c.l.b16 %v1604
    %v3653 = vunpack.c.l.b16 %v1605
    %v3654 = vunpack.c.l.b16 %v1606
    %v3655 = vunpack.c.l.b16 %v1607
    %v3656 = vunpack.c.l.b16 %v1608
    %v3657 = vunpack.c.l.b16 %v1609
    %v3658 = vunpack.c.l.b16 %v1610
    %v3659 = vunpack.c.l.b16 %v1611
    %v3660 = vunpack.c.l.b16 %v1612
    %v3661 = vunpack.c.l.b16 %v1613
    %v3662 = vunpack.c.l.b16 %v1614
    %v3663 = vunpack.c.l.b16 %v1615
    %v3664 = vunpack.c.l.b16 %v1616
    %v3665 = vunpack.c.l.b16 %v1617
    %v3666 = vunpack.c.l.b16 %v1618
    %v3667 = vunpack.c.l.b16 %v1619
    %v3668 = vunpack.c.l.b16 %v1620
    %v3669 = vunpack.c.l.b16 %v1621
    %v3670 = vunpack.c.l.b16 %v1622
    %v3671 = vunpack.c.l.b16 %v1623
    %v3672 = vunpack.c.l.b16 %v1624
    %v3673 = vunpack.c.l.b16 %v1625
    %v3674 = vunpack.c.l.b16 %v1626
    %v3675 = vunpack.c.l.b16 %v1627
    %v3676 = vunpack.c.l.b16 %v1628
    %v3677 = vunpack.c.l.b16 %v1629
    %v3678 = vunpack.c.l.b16 %v1630
    %v3679 = vunpack.c.l.b16 %v1631
    %v3680 = vunpack.c.l.b16 %v1632
    %v3681 = vunpack.c.l.b16 %v1633
    %v3682 = vunpack.c.l.b16 %v1634
    %v3683 = vunpack.c.l.b16 %v1635
    %v3684 = vunpack.c.l.b16 %v1636
    %v3685 = vunpack.c.l.b16 %v1637
    %v3686 = vunpack.c.l.b16 %v1638
    %v3687 = vunpack.c.l.b16 %v1639
    %v3688 = vunpack.c.l.b16 %v1640
    %v3689 = vunpack.c.l.b16 %v1641
    %v3690 = vunpack.c.l.b16 %v1642
    %v3691 = vunpack.c.l.b16 %v1643
    %v3692 = vunpack.c.l.b16 %v1644
    %v3693 = vunpack.c.l.b16 %v1645
    %v3694 = vunpack.c.l.b16 %v1646
    %v3695 = vunpack.c.l.b16 %v1647
    %v3696 = vunpack.c.l.b16 %v1648
    %v3697 = vunpack.c.l.b16 %v1649
    %v3698 = vunpack.c.l.b16 %v1650
    %v3699 = vunpack.c.l.b16 %v1651
    %v3700 = vunpack.c.l.b16 %v1652
    %v3701 = vunpack.c.l.b16 %v1653
    %v3702 = vunpack.c.l.b16 %v1654
    %v3703 = vunpack.c.l.b16 %v1655
    %v3704 = vunpack.c.l.b16 %v1656
    %v3705 = vunpack.c.l.b16 %v1657
    %v3706 = vunpack.c.l.b16 %v1658
    %v3707 = vunpack.c.l.b16 %v1659
    %v3708 = vunpack.c.l.b16 %v1660
    %v3709 = vunpack.c.l.b16 %v1661
    %v3710 = vunpack.c.l.b16 %v1662
    %v3711 = vunpack.c.l.b16 %v1663
    %v3712 = vunpack.c.l.b16 %v1664
    %v3713 = vunpack.c.l.b16 %v1665
    %v3714 = vunpack.c.l.b16 %v1666
    %v3715 = vunpack.c.l.b16 %v1667
    %v3716 = vunpack.c.l.b16 %v1668
    %v3717 = vunpack.c.l.b16 %v1669
    %v3718 = vunpack.c.l.b16 %v1670
    %v3719 = vunpack.c.l.b16 %v1671
    %v3720 = vunpack.c.l.b16 %v1672
    %v3721 = vunpack.c.l.b16 %v1673
    %v3722 = vunpack.c.l.b16 %v1674
    %v3723 = vunpack.c.l.b16 %v1675
    %v3724 = vunpack.c.l.b16 %v1676
    %v3725 = vunpack.c.l.b16 %v1677
    %v3726 = vunpack.c.l.b16 %v1678
    %v3727 = vunpack.c.l.b16 %v1679
    %v3728 = vunpack.c.l.b16 %v1680
    %v3729 = vunpack.c.l.b16 %v1681
    %v3730 = vunpack.c.l.b16 %v1682
    %v3731 = vunpack.c.l.b16 %v1683
    %v3732 = vunpack.c.l.b16 %v1684
    %v3733 = vunpack.c.l.b16 %v1685
    %v3734 = vunpack.c.l.b16 %v1686
    %v3735 = vunpack.c.l.b16 %v1687
    %v3736 = vunpack.c.l.b16 %v1688
    %v3737 = vunpack.c.l.b16 %v1689
    %v3738 = vunpack.c.l.b16 %v1690
    %v3739 = vunpack.c.l.b16 %v1691
    %v3740 = vunpack.c.l.b16 %v1692
    %v3741 = vunpack.c.l.b16 %v1693
    %v3742 = vunpack.c.l.b16 %v1694
    %v3743 = vunpack.c.l.b16 %v1695
    %v3744 = vunpack.c.l.b16 %v1696
    %v3745 = vunpack.c.l.b16 %v1697
    %v3746 = vunpack.c.l.b16 %v1698
    %v3747 = vunpack.c.l.b16 %v1699
    %v3748 = vunpack.c.l.b16 %v1700
    %v3749 = vunpack.c.l.b16 %v1701
    %v3750 = vunpack.c.l.b16 %v1702
    %v3751 = vunpack.c.l.b16 %v1703
    %v3752 = vunpack.c.l.b16 %v1704
    %v3753 = vunpack.c.l.b16 %v1705
    %v3754 = vunpack.c.l.b16 %v1706
    %v3755 = vunpack.c.l.b16 %v1707
    %v3756 = vunpack.c.l.b16 %v1708
    %v3757 = vunpack.c.l.b16 %v1709
    %v3758 = vunpack.c.l.b16 %v1710
    %v3759 = vunpack.c.l.b16 %v1711
    %v3760 = vunpack.c.l.b16 %v1712
    %v3761 = vunpack.c.l.b16 %v1713
    %v3762 = vunpack.c.l.b16 %v1714
    %v3763 = vunpack.c.l.b16 %v1715
    %v3764 = vunpack.c.l.b16 %v1716
    %v3765 = vunpack.c.l.b16 %v1717
    %v3766 = vunpack.c.l.b16 %v1718
    %v3767 = vunpack.c.l.b16 %v1719
    %v3768 = vunpack.c.l.b16 %v1720
    %v3769 = vunpack.c.l.b16 %v1721
    %v3770 = vunpack.c.l.b16 %v1722
    %v3771 = vunpack.c.l.b16 %v1723
    %v3772 = vunpack.c.l.b16 %v1724
    %v3773 = vunpack.c.l.b16 %v1725
    %v3774 = vunpack.c.l.b16 %v1726
    %v3775 = vunpack.c.l.b16 %v1727
    %v3776 = vunpack.c.l.b16 %v1728
    %v3777 = vunpack.c.l.b16 %v1729
    %v3778 = vunpack.c.l.b16 %v1730
    %v3779 = vunpack.c.l.b16 %v1731
    %v3780 = vunpack.c.l.b16 %v1732
    %v3781 = vunpack.c.l.b16 %v1733
    %v3782 = vunpack.c.l.b16 %v1734
    %v3783 = vunpack.c.l.b16 %v1735
    %v3784 = vunpack.c.l.b16 %v1736
    %v3785 = vunpack.c.l.b16 %v1737
    %v3786 = vunpack.c.l.b16 %v1738
    %v3787 = vunpack.c.l.b16 %v1739
    %v3788 = vunpack.c.l.b16 %v1740
    %v3789 = vunpack.c.l.b16 %v1741
    %v3790 = vunpack.c.l.b16 %v1742
    %v3791 = vunpack.c.l.b16 %v1743
    %v3792 = vunpack.c.l.b16 %v1744
    %v3793 = vunpack.c.l.b16 %v1745
    %v3794 = vunpack.c.l.b16 %v1746
    %v3795 = vunpack.c.l.b16 %v1747
    %v3796 = vunpack.c.l.b16 %v1748
    %v3797 = vunpack.c.l.b16 %v1749
    %v3798 = vunpack.c.l.b16 %v1750
    %v3799 = vunpack.c.l.b16 %v1751
    %v3800 = vunpack.c.l.b16 %v1752
    %v3801 = vunpack.c.l.b16 %v1753
    %v3802 = vunpack.c.l.b16 %v1754
    %v3803 = vunpack.c.l.b16 %v1755
    %v3804 = vunpack.c.l.b16 %v1756
    %v3805 = vunpack.c.l.b16 %v1757
    %v3806 = vunpack.c.l.b16 %v1758
    %v3807 = vunpack.c.l.b16 %v1759
    %v3808 = vunpack.c.l.b16 %v1760
    %v3809 = vunpack.c.l.b16 %v1761
    %v3810 = vunpack.c.l.b16 %v1762
    %v3811 = vunpack.c.l.b16 %v1763
    %v3812 = vunpack.c.l.b16 %v1764
    %v3813 = vunpack.c.l.b16 %v1765
    %v3814 = vunpack.c.l.b16 %v1766
    %v3815 = vunpack.c.l.b16 %v1767
    %v3816 = vunpack.c.l.b16 %v1768
    %v3817 = vunpack.c.l.b16 %v1769
    %v3818 = vunpack.c.l.b16 %v1770
    %v3819 = vunpack.c.l.b16 %v1771
    %v3820 = vunpack.c.l.b16 %v1772
    %v3821 = vunpack.c.l.b16 %v1773
    %v3822 = vunpack.c.l.b16 %v1774
    %v3823 = vunpack.c.l.b16 %v1775
    %v3824 = vunpack.c.l.b16 %v1776
    %v3825 = vunpack.c.l.b16 %v1777
    %v3826 = vunpack.c.l.b16 %v1778
    %v3827 = vunpack.c.l.b16 %v1779
    %v3828 = vunpack.c.l.b16 %v1780
    %v3829 = vunpack.c.l.b16 %v1781
    %v3830 = vunpack.c.l.b16 %v1782
    %v3831 = vunpack.c.l.b16 %v1783
    %v3832 = vunpack.c.l.b16 %v1784
    %v3833 = vunpack.c.l.b16 %v1785
    %v3834 = vunpack.c.l.b16 %v1786
    %v3835 = vunpack.c.l.b16 %v1787
    %v3836 = vunpack.c.l.b16 %v1788
    %v3837 = vunpack.c.l.b16 %v1789
    %v3838 = vunpack.c.l.b16 %v1790
    %v3839 = vunpack.c.l.b16 %v1791
    %v3840 = vunpack.c.l.b16 %v1792
    %v3841 = vunpack.c.l.b16 %v1793
    %v3842 = vunpack.c.l.b16 %v1794
    %v3843 = vunpack.c.l.b16 %v1795
    %v3844 = vunpack.c.l.b16 %v1796
    %v3845 = vunpack.c.l.b16 %v1797
    %v3846 = vpack.c.b16 %v2823, %v2822
    %v3847 = vpack.c.b16 %v2825, %v2824
    %v3848 = vpack.c.b16 %v2827, %v2826
    %v3849 = vpack.c.b16 %v2829, %v2828
    %v3850 = vpack.c.b16 %v2831, %v2830
    %v3851 = vpack.c.b16 %v2833, %v2832
    %v3852 = vpack.c.b16 %v2835, %v2834
    %v3853 = vpack.c.b16 %v2837, %v2836
    %v3854 = vpack.c.b16 %v2839, %v2838
    %v3855 = vpack.c.b16 %v2841, %v2840
    %v3856 = vpack.c.b16 %v2843, %v2842
    %v3857 = vpack.c.b16 %v2845, %v2844
    %v3858 = vpack.c.b16 %v2847, %v2846
    %v3859 = vpack.c.b16 %v2849, %v2848
    %v3860 = vpack.c.b16 %v2851, %v2850
    %v3861 = vpack.c.b16 %v2853, %v2852
    %v3862 = vpack.c.b16 %v2855, %v2854
    %v3863 = vpack.c.b16 %v2857, %v2856
    %v3864 = vpack.c.b16 %v2859, %v2858
    %v3865 = vpack.c.b16 %v2861, %v2860
    %v3866 = vpack.c.b16 %v2863, %v2862
    %v3867 = vpack.c.b16 %v2865, %v2864
    %v3868 = vpack.c.b16 %v2867, %v2866
    %v3869 = vpack.c.b16 %v2869, %v2868
    %v3870 = vpack.c.b16 %v2871, %v2870
    %v3871 = vpack.c.b16 %v2873, %v2872
    %v3872 = vpack.c.b16 %v2875, %v2874
    %v3873 = vpack.c.b16 %v2877, %v2876
    %v3874 = vpack.c.b16 %v2879, %v2878
    %v3875 = vpack.c.b16 %v2881, %v2880
    %v3876 = vpack.c.b16 %v2883, %v2882
    %v3877 = vpack.c.b16 %v2885, %v2884
    %v3878 = vpack.c.b16 %v2887, %v2886
    %v3879 = vpack.c.b16 %v2889, %v2888
    %v3880 = vpack.c.b16 %v2891, %v2890
    %v3881 = vpack.c.b16 %v2893, %v2892
    %v3882 = vpack.c.b16 %v2895, %v2894
    %v3883 = vpack.c.b16 %v2897, %v2896
    %v3884 = vpack.c.b16 %v2899, %v2898
    %v3885 = vpack.c.b16 %v2901, %v2900
    %v3886 = vpack.c.b16 %v2903, %v2902
    %v3887 = vpack.c.b16 %v2905, %v2904
    %v3888 = vpack.c.b16 %v2907, %v2906
    %v3889 = vpack.c.b16 %v2909, %v2908
    %v3890 = vpack.c.b16 %v2911, %v2910
    %v3891 = vpack.c.b16 %v2913, %v2912
    %v3892 = vpack.c.b16 %v2915, %v2914
    %v3893 = vpack.c.b16 %v2917, %v2916
    %v3894 = vpack.c.b16 %v2919, %v2918
    %v3895 = vpack.c.b16 %v2921, %v2920
    %v3896 = vpack.c.b16 %v2923, %v2922
    %v3897 = vpack.c.b16 %v2925, %v2924
    %v3898 = vpack.c.b16 %v2927, %v2926
    %v3899 = vpack.c.b16 %v2929, %v2928
    %v3900 = vpack.c.b16 %v2931, %v2930
    %v3901 = vpack.c.b16 %v2933, %v2932
    %v3902 = vpack.c.b16 %v2935, %v2934
    %v3903 = vpack.c.b16 %v2937, %v2936
    %v3904 = vpack.c.b16 %v2939, %v2938
    %v3905 = vpack.c.b16 %v2941, %v2940
    %v3906 = vpack.c.b16 %v2943, %v2942
    %v3907 = vpack.c.b16 %v2945, %v2944
    %v3908 = vpack.c.b16 %v2947, %v2946
    %v3909 = vpack.c.b16 %v2949, %v2948
    %v3910 = vpack.c.b16 %v2951, %v2950
    %v3911 = vpack.c.b16 %v2953, %v2952
    %v3912 = vpack.c.b16 %v2955, %v2954
    %v3913 = vpack.c.b16 %v2957, %v2956
    %v3914 = vpack.c.b16 %v2959, %v2958
    %v3915 = vpack.c.b16 %v2961, %v2960
    %v3916 = vpack.c.b16 %v2963, %v2962
    %v3917 = vpack.c.b16 %v2965, %v2964
    %v3918 = vpack.c.b16 %v2967, %v2966
    %v3919 = vpack.c.b16 %v2969, %v2968
    %v3920 = vpack.c.b16 %v2971, %v2970
    %v3921 = vpack.c.b16 %v2973, %v2972
    %v3922 = vpack.c.b16 %v2975, %v2974
    %v3923 = vpack.c.b16 %v2977, %v2976
    %v3924 = vpack.c.b16 %v2979, %v2978
    %v3925 = vpack.c.b16 %v2981, %v2980
    %v3926 = vpack.c.b16 %v2983, %v2982
    %v3927 = vpack.c.b16 %v2985, %v2984
    %v3928 = vpack.c.b16 %v2987, %v2986
    %v3929 = vpack.c.b16 %v2989, %v2988
    %v3930 = vpack.c.b16 %v2991, %v2990
    %v3931 = vpack.c.b16 %v2993, %v2992
    %v3932 = vpack.c.b16 %v2995, %v2994
    %v3933 = vpack.c.b16 %v2997, %v2996
    %v3934 = vpack.c.b16 %v2999, %v2998
    %v3935 = vpack.c.b16 %v3001, %v3000
    %v3936 = vpack.c.b16 %v3003, %v3002
    %v3937 = vpack.c.b16 %v3005, %v3004
    %v3938 = vpack.c.b16 %v3007, %v3006
    %v3939 = vpack.c.b16 %v3009, %v3008
    %v3940 = vpack.c.b16 %v3011, %v3010
    %v3941 = vpack.c.b16 %v3013, %v3012
    %v3942 = vpack.c.b16 %v3015, %v3014
    %v3943 = vpack.c.b16 %v3017, %v3016
    %v3944 = vpack.c.b16 %v3019, %v3018
    %v3945 = vpack.c.b16 %v3021, %v3020
    %v3946 = vpack.c.b16 %v3023, %v3022
    %v3947 = vpack.c.b16 %v3025, %v3024
    %v3948 = vpack.c.b16 %v3027, %v3026
    %v3949 = vpack.c.b16 %v3029, %v3028
    %v3950 = vpack.c.b16 %v3031, %v3030
    %v3951 = vpack.c.b16 %v3033, %v3032
    %v3952 = vpack.c.b16 %v3035, %v3034
    %v3953 = vpack.c.b16 %v3037, %v3036
    %v3954 = vpack.c.b16 %v3039, %v3038
    %v3955 = vpack.c.b16 %v3041, %v3040
    %v3956 = vpack.c.b16 %v3043, %v3042
    %v3957 = vpack.c.b16 %v3045, %v3044
    %v3958 = vpack.c.b16 %v3047, %v3046
    %v3959 = vpack.c.b16 %v3049, %v3048
    %v3960 = vpack.c.b16 %v3051, %v3050
    %v3961 = vpack.c.b16 %v3053, %v3052
    %v3962 = vpack.c.b16 %v3055, %v3054
    %v3963 = vpack.c.b16 %v3057, %v3056
    %v3964 = vpack.c.b16 %v3059, %v3058
    %v3965 = vpack.c.b16 %v3061, %v3060
    %v3966 = vpack.c.b16 %v3063, %v3062
    %v3967 = vpack.c.b16 %v3065, %v3064
    %v3968 = vpack.c.b16 %v3067, %v3066
    %v3969 = vpack.c.b16 %v3069, %v3068
    %v3970 = vpack.c.b16 %v3071, %v3070
    %v3971 = vpack.c.b16 %v3073, %v3072
    %v3972 = vpack.c.b16 %v3075, %v3074
    %v3973 = vpack.c.b16 %v3077, %v3076
    %v3974 = vpack.c.b16 %v3079, %v3078
    %v3975 = vpack.c.b16 %v3081, %v3080
    %v3976 = vpack.c.b16 %v3083, %v3082
    %v3977 = vpack.c.b16 %v3085, %v3084
    %v3978 = vpack.c.b16 %v3087, %v3086
    %v3979 = vpack.c.b16 %v3089, %v3088
    %v3980 = vpack.c.b16 %v3091, %v3090
    %v3981 = vpack.c.b16 %v3093, %v3092
    %v3982 = vpack.c.b16 %v3095, %v3094
    %v3983 = vpack.c.b16 %v3097, %v3096
    %v3984 = vpack.c.b16 %v3099, %v3098
    %v3985 = vpack.c.b16 %v3101, %v3100
    %v3986 = vpack.c.b16 %v3103, %v3102
    %v3987 = vpack.c.b16 %v3105, %v3104
    %v3988 = vpack.c.b16 %v3107, %v3106
    %v3989 = vpack.c.b16 %v3109, %v3108
    %v3990 = vpack.c.b16 %v3111, %v3110
    %v3991 = vpack.c.b16 %v3113, %v3112
    %v3992 = vpack.c.b16 %v3115, %v3114
    %v3993 = vpack.c.b16 %v3117, %v3116
    %v3994 = vpack.c.b16 %v3119, %v3118
    %v3995 = vpack.c.b16 %v3121, %v3120
    %v3996 = vpack.c.b16 %v3123, %v3122
    %v3997 = vpack.c.b16 %v3125, %v3124
    %v3998 = vpack.c.b16 %v3127, %v3126
    %v3999 = vpack.c.b16 %v3129, %v3128
    %v4000 = vpack.c.b16 %v3131, %v3130
    %v4001 = vpack.c.b16 %v3133, %v3132
    %v4002 = vpack.c.b16 %v3135, %v3134
    %v4003 = vpack.c.b16 %v3137, %v3136
    %v4004 = vpack.c.b16 %v3139, %v3138
    %v4005 = vpack.c.b16 %v3141, %v3140
    %v4006 = vpack.c.b16 %v3143, %v3142
    %v4007 = vpack.c.b16 %v3145, %v3144
    %v4008 = vpack.c.b16 %v3147, %v3146
    %v4009 = vpack.c.b16 %v3149, %v3148
    %v4010 = vpack.c.b16 %v3151, %v3150
    %v4011 = vpack.c.b16 %v3153, %v3152
    %v4012 = vpack.c.b16 %v3155, %v3154
    %v4013 = vpack.c.b16 %v3157, %v3156
    %v4014 = vpack.c.b16 %v3159, %v3158
    %v4015 = vpack.c.b16 %v3161, %v3160
    %v4016 = vpack.c.b16 %v3163, %v3162
    %v4017 = vpack.c.b16 %v3165, %v3164
    %v4018 = vpack.c.b16 %v3167, %v3166
    %v4019 = vpack.c.b16 %v3169, %v3168
    %v4020 = vpack.c.b16 %v3171, %v3170
    %v4021 = vpack.c.b16 %v3173, %v3172
    %v4022 = vpack.c.b16 %v3175, %v3174
    %v4023 = vpack.c.b16 %v3177, %v3176
    %v4024 = vpack.c.b16 %v3179, %v3178
    %v4025 = vpack.c.b16 %v3181, %v3180
    %v4026 = vpack.c.b16 %v3183, %v3182
    %v4027 = vpack.c.b16 %v3185, %v3184
    %v4028 = vpack.c.b16 %v3187, %v3186
    %v4029 = vpack.c.b16 %v3189, %v3188
    %v4030 = vpack.c.b16 %v3191, %v3190
    %v4031 = vpack.c.b16 %v3193, %v3192
    %v4032 = vpack.c.b16 %v3195, %v3194
    %v4033 = vpack.c.b16 %v3197, %v3196
    %v4034 = vpack.c.b16 %v3199, %v3198
    %v4035 = vpack.c.b16 %v3201, %v3200
    %v4036 = vpack.c.b16 %v3203, %v3202
    %v4037 = vpack.c.b16 %v3205, %v3204
    %v4038 = vpack.c.b16 %v3207, %v3206
    %v4039 = vpack.c.b16 %v3209, %v3208
    %v4040 = vpack.c.b16 %v3211, %v3210
    %v4041 = vpack.c.b16 %v3213, %v3212
    %v4042 = vpack.c.b16 %v3215, %v3214
    %v4043 = vpack.c.b16 %v3217, %v3216
    %v4044 = vpack.c.b16 %v3219, %v3218
    %v4045 = vpack.c.b16 %v3221, %v3220
    %v4046 = vpack.c.b16 %v3223, %v3222
    %v4047 = vpack.c.b16 %v3225, %v3224
    %v4048 = vpack.c.b16 %v3227, %v3226
    %v4049 = vpack.c.b16 %v3229, %v3228
    %v4050 = vpack.c.b16 %v3231, %v3230
    %v4051 = vpack.c.b16 %v3233, %v3232
    %v4052 = vpack.c.b16 %v3235, %v3234
    %v4053 = vpack.c.b16 %v3237, %v3236
    %v4054 = vpack.c.b16 %v3239, %v3238
    %v4055 = vpack.c.b16 %v3241, %v3240
    %v4056 = vpack.c.b16 %v3243, %v3242
    %v4057 = vpack.c.b16 %v3245, %v3244
    %v4058 = vpack.c.b16 %v3247, %v3246
    %v4059 = vpack.c.b16 %v3249, %v3248
    %v4060 = vpack.c.b16 %v3251, %v3250
    %v4061 = vpack.c.b16 %v3253, %v3252
    %v4062 = vpack.c.b16 %v3255, %v3254
    %v4063 = vpack.c.b16 %v3257, %v3256
    %v4064 = vpack.c.b16 %v3259, %v3258
    %v4065 = vpack.c.b16 %v3261, %v3260
    %v4066 = vpack.c.b16 %v3263, %v3262
    %v4067 = vpack.c.b16 %v3265, %v3264
    %v4068 = vpack.c.b16 %v3267, %v3266
    %v4069 = vpack.c.b16 %v3269, %v3268
    %v4070 = vpack.c.b16 %v3271, %v3270
    %v4071 = vpack.c.b16 %v3273, %v3272
    %v4072 = vpack.c.b16 %v3275, %v3274
    %v4073 = vpack.c.b16 %v3277, %v3276
    %v4074 = vpack.c.b16 %v3279, %v3278
    %v4075 = vpack.c.b16 %v3281, %v3280
    %v4076 = vpack.c.b16 %v3283, %v3282
    %v4077 = vpack.c.b16 %v3285, %v3284
    %v4078 = vpack.c.b16 %v3287, %v3286
    %v4079 = vpack.c.b16 %v3289, %v3288
    %v4080 = vpack.c.b16 %v3291, %v3290
    %v4081 = vpack.c.b16 %v3293, %v3292
    %v4082 = vpack.c.b16 %v3295, %v3294
    %v4083 = vpack.c.b16 %v3297, %v3296
    %v4084 = vpack.c.b16 %v3299, %v3298
    %v4085 = vpack.c.b16 %v3301, %v3300
    %v4086 = vpack.c.b16 %v3303, %v3302
    %v4087 = vpack.c.b16 %v3305, %v3304
    %v4088 = vpack.c.b16 %v3307, %v3306
    %v4089 = vpack.c.b16 %v3309, %v3308
    %v4090 = vpack.c.b16 %v3311, %v3310
    %v4091 = vpack.c.b16 %v3313, %v3312
    %v4092 = vpack.c.b16 %v3315, %v3314
    %v4093 = vpack.c.b16 %v3317, %v3316
    %v4094 = vpack.c.b16 %v3319, %v3318
    %v4095 = vpack.c.b16 %v3321, %v3320
    %v4096 = vpack.c.b16 %v3323, %v3322
    %v4097 = vpack.c.b16 %v3325, %v3324
    %v4098 = vpack.c.b16 %v3327, %v3326
    %v4099 = vpack.c.b16 %v3329, %v3328
    %v4100 = vpack.c.b16 %v3331, %v3330
    %v4101 = vpack.c.b16 %v3333, %v3332
    %v4102 = vpack.c.b16 %v3335, %v3334
    %v4103 = vpack.c.b16 %v3337, %v3336
    %v4104 = vpack.c.b16 %v3339, %v3338
    %v4105 = vpack.c.b16 %v3341, %v3340
    %v4106 = vpack.c.b16 %v3343, %v3342
    %v4107 = vpack.c.b16 %v3345, %v3344
    %v4108 = vpack.c.b16 %v3347, %v3346
    %v4109 = vpack.c.b16 %v3349, %v3348
    %v4110 = vpack.c.b16 %v3351, %v3350
    %v4111 = vpack.c.b16 %v3353, %v3352
    %v4112 = vpack.c.b16 %v3355, %v3354
    %v4113 = vpack.c.b16 %v3357, %v3356
    %v4114 = vpack.c.b16 %v3359, %v3358
    %v4115 = vpack.c.b16 %v3361, %v3360
    %v4116 = vpack.c.b16 %v3363, %v3362
    %v4117 = vpack.c.b16 %v3365, %v3364
    %v4118 = vpack.c.b16 %v3367, %v3366
    %v4119 = vpack.c.b16 %v3369, %v3368
    %v4120 = vpack.c.b16 %v3371, %v3370
    %v4121 = vpack.c.b16 %v3373, %v3372
    %v4122 = vpack.c.b16 %v3375, %v3374
    %v4123 = vpack.c.b16 %v3377, %v3376
    %v4124 = vpack.c.b16 %v3379, %v3378
    %v4125 = vpack.c.b16 %v3381, %v3380
    %v4126 = vpack.c.b16 %v3383, %v3382
    %v4127 = vpack.c.b16 %v3385, %v3384
    %v4128 = vpack.c.b16 %v3387, %v3386
    %v4129 = vpack.c.b16 %v3389, %v3388
    %v4130 = vpack.c.b16 %v3391, %v3390
    %v4131 = vpack.c.b16 %v3393, %v3392
    %v4132 = vpack.c.b16 %v3395, %v3394
    %v4133 = vpack.c.b16 %v3397, %v3396
    %v4134 = vpack.c.b16 %v3399, %v3398
    %v4135 = vpack.c.b16 %v3401, %v3400
    %v4136 = vpack.c.b16 %v3403, %v3402
    %v4137 = vpack.c.b16 %v3405, %v3404
    %v4138 = vpack.c.b16 %v3407, %v3406
    %v4139 = vpack.c.b16 %v3409, %v3408
    %v4140 = vpack.c.b16 %v3411, %v3410
    %v4141 = vpack.c.b16 %v3413, %v3412
    %v4142 = vpack.c.b16 %v3415, %v3414
    %v4143 = vpack.c.b16 %v3417, %v3416
    %v4144 = vpack.c.b16 %v3419, %v3418
    %v4145 = vpack.c.b16 %v3421, %v3420
    %v4146 = vpack.c.b16 %v3423, %v3422
    %v4147 = vpack.c.b16 %v3425, %v3424
    %v4148 = vpack.c.b16 %v3427, %v3426
    %v4149 = vpack.c.b16 %v3429, %v3428
    %v4150 = vpack.c.b16 %v3431, %v3430
    %v4151 = vpack.c.b16 %v3433, %v3432
    %v4152 = vpack.c.b16 %v3435, %v3434
    %v4153 = vpack.c.b16 %v3437, %v3436
    %v4154 = vpack.c.b16 %v3439, %v3438
    %v4155 = vpack.c.b16 %v3441, %v3440
    %v4156 = vpack.c.b16 %v3443, %v3442
    %v4157 = vpack.c.b16 %v3445, %v3444
    %v4158 = vpack.c.b16 %v3447, %v3446
    %v4159 = vpack.c.b16 %v3449, %v3448
    %v4160 = vpack.c.b16 %v3451, %v3450
    %v4161 = vpack.c.b16 %v3453, %v3452
    %v4162 = vpack.c.b16 %v3455, %v3454
    %v4163 = vpack.c.b16 %v3457, %v3456
    %v4164 = vpack.c.b16 %v3459, %v3458
    %v4165 = vpack.c.b16 %v3461, %v3460
    %v4166 = vpack.c.b16 %v3463, %v3462
    %v4167 = vpack.c.b16 %v3465, %v3464
    %v4168 = vpack.c.b16 %v3467, %v3466
    %v4169 = vpack.c.b16 %v3469, %v3468
    %v4170 = vpack.c.b16 %v3471, %v3470
    %v4171 = vpack.c.b16 %v3473, %v3472
    %v4172 = vpack.c.b16 %v3475, %v3474
    %v4173 = vpack.c.b16 %v3477, %v3476
    %v4174 = vpack.c.b16 %v3479, %v3478
    %v4175 = vpack.c.b16 %v3481, %v3480
    %v4176 = vpack.c.b16 %v3483, %v3482
    %v4177 = vpack.c.b16 %v3485, %v3484
    %v4178 = vpack.c.b16 %v3487, %v3486
    %v4179 = vpack.c.b16 %v3489, %v3488
    %v4180 = vpack.c.b16 %v3491, %v3490
    %v4181 = vpack.c.b16 %v3493, %v3492
    %v4182 = vpack.c.b16 %v3495, %v3494
    %v4183 = vpack.c.b16 %v3497, %v3496
    %v4184 = vpack.c.b16 %v3499, %v3498
    %v4185 = vpack.c.b16 %v3501, %v3500
    %v4186 = vpack.c.b16 %v3503, %v3502
    %v4187 = vpack.c.b16 %v3505, %v3504
    %v4188 = vpack.c.b16 %v3507, %v3506
    %v4189 = vpack.c.b16 %v3509, %v3508
    %v4190 = vpack.c.b16 %v3511, %v3510
    %v4191 = vpack.c.b16 %v3513, %v3512
    %v4192 = vpack.c.b16 %v3515, %v3514
    %v4193 = vpack.c.b16 %v3517, %v3516
    %v4194 = vpack.c.b16 %v3519, %v3518
    %v4195 = vpack.c.b16 %v3521, %v3520
    %v4196 = vpack.c.b16 %v3523, %v3522
    %v4197 = vpack.c.b16 %v3525, %v3524
    %v4198 = vpack.c.b16 %v3527, %v3526
    %v4199 = vpack.c.b16 %v3529, %v3528
    %v4200 = vpack.c.b16 %v3531, %v3530
    %v4201 = vpack.c.b16 %v3533, %v3532
    %v4202 = vpack.c.b16 %v3535, %v3534
    %v4203 = vpack.c.b16 %v3537, %v3536
    %v4204 = vpack.c.b16 %v3539, %v3538
    %v4205 = vpack.c.b16 %v3541, %v3540
    %v4206 = vpack.c.b16 %v3543, %v3542
    %v4207 = vpack.c.b16 %v3545, %v3544
    %v4208 = vpack.c.b16 %v3547, %v3546
    %v4209 = vpack.c.b16 %v3549, %v3548
    %v4210 = vpack.c.b16 %v3551, %v3550
    %v4211 = vpack.c.b16 %v3553, %v3552
    %v4212 = vpack.c.b16 %v3555, %v3554
    %v4213 = vpack.c.b16 %v3557, %v3556
    %v4214 = vpack.c.b16 %v3559, %v3558
    %v4215 = vpack.c.b16 %v3561, %v3560
    %v4216 = vpack.c.b16 %v3563, %v3562
    %v4217 = vpack.c.b16 %v3565, %v3564
    %v4218 = vpack.c.b16 %v3567, %v3566
    %v4219 = vpack.c.b16 %v3569, %v3568
    %v4220 = vpack.c.b16 %v3571, %v3570
    %v4221 = vpack.c.b16 %v3573, %v3572
    %v4222 = vpack.c.b16 %v3575, %v3574
    %v4223 = vpack.c.b16 %v3577, %v3576
    %v4224 = vpack.c.b16 %v3579, %v3578
    %v4225 = vpack.c.b16 %v3581, %v3580
    %v4226 = vpack.c.b16 %v3583, %v3582
    %v4227 = vpack.c.b16 %v3585, %v3584
    %v4228 = vpack.c.b16 %v3587, %v3586
    %v4229 = vpack.c.b16 %v3589, %v3588
    %v4230 = vpack.c.b16 %v3591, %v3590
    %v4231 = vpack.c.b16 %v3593, %v3592
    %v4232 = vpack.c.b16 %v3595, %v3594
    %v4233 = vpack.c.b16 %v3597, %v3596
    %v4234 = vpack.c.b16 %v3599, %v3598
    %v4235 = vpack.c.b16 %v3601, %v3600
    %v4236 = vpack.c.b16 %v3603, %v3602
    %v4237 = vpack.c.b16 %v3605, %v3604
    %v4238 = vpack.c.b16 %v3607, %v3606
    %v4239 = vpack.c.b16 %v3609, %v3608
    %v4240 = vpack.c.b16 %v3611, %v3610
    %v4241 = vpack.c.b16 %v3613, %v3612
    %v4242 = vpack.c.b16 %v3615, %v3614
    %v4243 = vpack.c.b16 %v3617, %v3616
    %v4244 = vpack.c.b16 %v3619, %v3618
    %v4245 = vpack.c.b16 %v3621, %v3620
    %v4246 = vpack.c.b16 %v3623, %v3622
    %v4247 = vpack.c.b16 %v3625, %v3624
    %v4248 = vpack.c.b16 %v3627, %v3626
    %v4249 = vpack.c.b16 %v3629, %v3628
    %v4250 = vpack.c.b16 %v3631, %v3630
    %v4251 = vpack.c.b16 %v3633, %v3632
    %v4252 = vpack.c.b16 %v3635, %v3634
    %v4253 = vpack.c.b16 %v3637, %v3636
    %v4254 = vpack.c.b16 %v3639, %v3638
    %v4255 = vpack.c.b16 %v3641, %v3640
    %v4256 = vpack.c.b16 %v3643, %v3642
    %v4257 = vpack.c.b16 %v3645, %v3644
    %v4258 = vpack.c.b16 %v3647, %v3646
    %v4259 = vpack.c.b16 %v3649, %v3648
    %v4260 = vpack.c.b16 %v3651, %v3650
    %v4261 = vpack.c.b16 %v3653, %v3652
    %v4262 = vpack.c.b16 %v3655, %v3654
    %v4263 = vpack.c.b16 %v3657, %v3656
    %v4264 = vpack.c.b16 %v3659, %v3658
    %v4265 = vpack.c.b16 %v3661, %v3660
    %v4266 = vpack.c.b16 %v3663, %v3662
    %v4267 = vpack.c.b16 %v3665, %v3664
    %v4268 = vpack.c.b16 %v3667, %v3666
    %v4269 = vpack.c.b16 %v3669, %v3668
    %v4270 = vpack.c.b16 %v3671, %v3670
    %v4271 = vpack.c.b16 %v3673, %v3672
    %v4272 = vpack.c.b16 %v3675, %v3674
    %v4273 = vpack.c.b16 %v3677, %v3676
    %v4274 = vpack.c.b16 %v3679, %v3678
    %v4275 = vpack.c.b16 %v3681, %v3680
    %v4276 = vpack.c.b16 %v3683, %v3682
    %v4277 = vpack.c.b16 %v3685, %v3684
    %v4278 = vpack.c.b16 %v3687, %v3686
    %v4279 = vpack.c.b16 %v3689, %v3688
    %v4280 = vpack.c.b16 %v3691, %v3690
    %v4281 = vpack.c.b16 %v3693, %v3692
    %v4282 = vpack.c.b16 %v3695, %v3694
    %v4283 = vpack.c.b16 %v3697, %v3696
    %v4284 = vpack.c.b16 %v3699, %v3698
    %v4285 = vpack.c.b16 %v3701, %v3700
    %v4286 = vpack.c.b16 %v3703, %v3702
    %v4287 = vpack.c.b16 %v3705, %v3704
    %v4288 = vpack.c.b16 %v3707, %v3706
    %v4289 = vpack.c.b16 %v3709, %v3708
    %v4290 = vpack.c.b16 %v3711, %v3710
    %v4291 = vpack.c.b16 %v3713, %v3712
    %v4292 = vpack.c.b16 %v3715, %v3714
    %v4293 = vpack.c.b16 %v3717, %v3716
    %v4294 = vpack.c.b16 %v3719, %v3718
    %v4295 = vpack.c.b16 %v3721, %v3720
    %v4296 = vpack.c.b16 %v3723, %v3722
    %v4297 = vpack.c.b16 %v3725, %v3724
    %v4298 = vpack.c.b16 %v3727, %v3726
    %v4299 = vpack.c.b16 %v3729, %v3728
    %v4300 = vpack.c.b16 %v3731, %v3730
    %v4301 = vpack.c.b16 %v3733, %v3732
    %v4302 = vpack.c.b16 %v3735, %v3734
    %v4303 = vpack.c.b16 %v3737, %v3736
    %v4304 = vpack.c.b16 %v3739, %v3738
    %v4305 = vpack.c.b16 %v3741, %v3740
    %v4306 = vpack.c.b16 %v3743, %v3742
    %v4307 = vpack.c.b16 %v3745, %v3744
    %v4308 = vpack.c.b16 %v3747, %v3746
    %v4309 = vpack.c.b16 %v3749, %v3748
    %v4310 = vpack.c.b16 %v3751, %v3750
    %v4311 = vpack.c.b16 %v3753, %v3752
    %v4312 = vpack.c.b16 %v3755, %v3754
    %v4313 = vpack.c.b16 %v3757, %v3756
    %v4314 = vpack.c.b16 %v3759, %v3758
    %v4315 = vpack.c.b16 %v3761, %v3760
    %v4316 = vpack.c.b16 %v3763, %v3762
    %v4317 = vpack.c.b16 %v3765, %v3764
    %v4318 = vpack.c.b16 %v3767, %v3766
    %v4319 = vpack.c.b16 %v3769, %v3768
    %v4320 = vpack.c.b16 %v3771, %v3770
    %v4321 = vpack.c.b16 %v3773, %v3772
    %v4322 = vpack.c.b16 %v3775, %v3774
    %v4323 = vpack.c.b16 %v3777, %v3776
    %v4324 = vpack.c.b16 %v3779, %v3778
    %v4325 = vpack.c.b16 %v3781, %v3780
    %v4326 = vpack.c.b16 %v3783, %v3782
    %v4327 = vpack.c.b16 %v3785, %v3784
    %v4328 = vpack.c.b16 %v3787, %v3786
    %v4329 = vpack.c.b16 %v3789, %v3788
    %v4330 = vpack.c.b16 %v3791, %v3790
    %v4331 = vpack.c.b16 %v3793, %v3792
    %v4332 = vpack.c.b16 %v3795, %v3794
    %v4333 = vpack.c.b16 %v3797, %v3796
    %v4334 = vpack.c.b16 %v3799, %v3798
    %v4335 = vpack.c.b16 %v3801, %v3800
    %v4336 = vpack.c.b16 %v3803, %v3802
    %v4337 = vpack.c.b16 %v3805, %v3804
    %v4338 = vpack.c.b16 %v3807, %v3806
    %v4339 = vpack.c.b16 %v3809, %v3808
    %v4340 = vpack.c.b16 %v3811, %v3810
    %v4341 = vpack.c.b16 %v3813, %v3812
    %v4342 = vpack.c.b16 %v3815, %v3814
    %v4343 = vpack.c.b16 %v3817, %v3816
    %v4344 = vpack.c.b16 %v3819, %v3818
    %v4345 = vpack.c.b16 %v3821, %v3820
    %v4346 = vpack.c.b16 %v3823, %v3822
    %v4347 = vpack.c.b16 %v3825, %v3824
    %v4348 = vpack.c.b16 %v3827, %v3826
    %v4349 = vpack.c.b16 %v3829, %v3828
    %v4350 = vpack.c.b16 %v3831, %v3830
    %v4351 = vpack.c.b16 %v3833, %v3832
    %v4352 = vpack.c.b16 %v3835, %v3834
    %v4353 = vpack.c.b16 %v3837, %v3836
    %v4354 = vpack.c.b16 %v3839, %v3838
    %v4355 = vpack.c.b16 %v3841, %v3840
    %v4356 = vpack.c.b16 %v3843, %v3842
    %v4357 = vpack.c.b16 %v3845, %v3844
    %4870 = vmatprep.subr.bf16.mxu0 0
    %4871 = vmatpush1.bf16.msra.mxu0 %v3853
    %4872 = vmatprep.subr.bf16.mxu0 0
    %4873 = vmatpush1.bf16.msra.mxu0 %v3852
    %4874 = vmatprep.subr.bf16.mxu0 0
    %4875 = vmatpush1.bf16.msra.mxu0 %v3851
    %4876 = vmatprep.subr.bf16.mxu0 0
    %4877 = vmatpush1.bf16.msra.mxu0 %v3850
    %4878 = vmatprep.subr.bf16.mxu0 0
    %4879 = vmatpush1.bf16.msra.mxu0 %v3849
    %4880 = vmatprep.subr.bf16.mxu0 0
    %4881 = vmatpush1.bf16.msra.mxu0 %v3848
    %4882 = vmatprep.subr.bf16.mxu0 0
    %4883 = vmatpush1.bf16.msra.mxu0 %v3847
    %4884 = vmatprep.subr.bf16.mxu0 0
    %4885 = vmatpush1.bf16.msra.mxu0 %v3846
    %4886 = vmatprep.subr.bf16.mxu0 0
    %4887 = vmatpush2.bf16.msra.mxu0 %v3861
    %4888 = vmatprep.subr.bf16.mxu0 0
    %4889 = vmatpush2.bf16.msra.mxu0 %v3860
    %4890 = vmatprep.subr.bf16.mxu0 0
    %4891 = vmatpush2.bf16.msra.mxu0 %v3859
    %4892 = vmatprep.subr.bf16.mxu0 0
    %4893 = vmatpush2.bf16.msra.mxu0 %v3858
    %4894 = vmatprep.subr.bf16.mxu0 0
    %4895 = vmatpush2.bf16.msra.mxu0 %v3857
    %4896 = vmatprep.subr.bf16.mxu0 0
    %4897 = vmatpush2.bf16.msra.mxu0 %v3856
    %4898 = vmatprep.subr.bf16.mxu0 0
    %4899 = vmatpush2.bf16.msra.mxu0 %v3855
    %4900 = vmatprep.subr.bf16.mxu0 0
    %4901 = vmatpush2.bf16.msra.mxu0 %v3854
    %4902 = vmatprep.mubr.bf16.mxu0 %v490
    %4903 = vmatmul.mubr.bf16.gmra.mxu0 %v489
    %v4904 = vpop.f32.mrf.mxu0
    %v4905 = vadd.f32 %v469, %v4904
    %v4906 = vpop.f32.mrf.mxu0
    %v4907 = vpop.f32.mrf.mxu0
    %v4908 = vpop.f32.mrf.mxu0
    %4909 = vdwg.mxu0
    %4910 = vmatprep.subr.bf16.mxu0 0
    %4911 = vmatpush1.bf16.msra.mxu0 %v3869
    %4912 = vmatprep.subr.bf16.mxu0 0
    %4913 = vmatpush1.bf16.msra.mxu0 %v3868
    %4914 = vmatprep.subr.bf16.mxu0 0
    %4915 = vmatpush1.bf16.msra.mxu0 %v3867
    %4916 = vmatprep.subr.bf16.mxu0 0
    %4917 = vmatpush1.bf16.msra.mxu0 %v3866
    %4918 = vmatprep.subr.bf16.mxu0 0
    %4919 = vmatpush1.bf16.msra.mxu0 %v3865
    %4920 = vmatprep.subr.bf16.mxu0 0
    %4921 = vmatpush1.bf16.msra.mxu0 %v3864
    %4922 = vmatprep.subr.bf16.mxu0 0
    %4923 = vmatpush1.bf16.msra.mxu0 %v3863
    %4924 = vmatprep.subr.bf16.mxu0 0
    %4925 = vmatpush1.bf16.msra.mxu0 %v3862
    %4926 = vmatprep.subr.bf16.mxu0 0
    %4927 = vmatpush2.bf16.msra.mxu0 %v3877
    %4928 = vmatprep.subr.bf16.mxu0 0
    %4929 = vmatpush2.bf16.msra.mxu0 %v3876
    %4930 = vmatprep.subr.bf16.mxu0 0
    %4931 = vmatpush2.bf16.msra.mxu0 %v3875
    %4932 = vmatprep.subr.bf16.mxu0 0
    %4933 = vmatpush2.bf16.msra.mxu0 %v3874
    %4934 = vmatprep.subr.bf16.mxu0 0
    %4935 = vmatpush2.bf16.msra.mxu0 %v3873
    %4936 = vmatprep.subr.bf16.mxu0 0
    %4937 = vmatpush2.bf16.msra.mxu0 %v3872
    %4938 = vmatprep.subr.bf16.mxu0 0
    %4939 = vmatpush2.bf16.msra.mxu0 %v3871
    %4940 = vmatprep.subr.bf16.mxu0 0
    %4941 = vmatpush2.bf16.msra.mxu0 %v3870
    %4942 = vmatprep.mubr.bf16.mxu0 %v497
    %4943 = vmatmul.mubr.bf16.gmra.mxu0 %v494
    %v4944 = vpop.f32.mrf.mxu0
    %v4945 = vadd.f32 %v4905, %v4944
    %v4946 = vpop.f32.mrf.mxu0
    %v4947 = vpop.f32.mrf.mxu0
    %v4948 = vpop.f32.mrf.mxu0
    %4949 = vdwg.mxu0
    %4950 = vmatprep.subr.bf16.mxu0 0
    %4951 = vmatpush1.bf16.msra.mxu0 %v3885
    %4952 = vmatprep.subr.bf16.mxu0 0
    %4953 = vmatpush1.bf16.msra.mxu0 %v3884
    %4954 = vmatprep.subr.bf16.mxu0 0
    %4955 = vmatpush1.bf16.msra.mxu0 %v3883
    %4956 = vmatprep.subr.bf16.mxu0 0
    %4957 = vmatpush1.bf16.msra.mxu0 %v3882
    %4958 = vmatprep.subr.bf16.mxu0 0
    %4959 = vmatpush1.bf16.msra.mxu0 %v3881
    %4960 = vmatprep.subr.bf16.mxu0 0
    %4961 = vmatpush1.bf16.msra.mxu0 %v3880
    %4962 = vmatprep.subr.bf16.mxu0 0
    %4963 = vmatpush1.bf16.msra.mxu0 %v3879
    %4964 = vmatprep.subr.bf16.mxu0 0
    %4965 = vmatpush1.bf16.msra.mxu0 %v3878
    %4966 = vmatprep.subr.bf16.mxu0 0
    %4967 = vmatpush2.bf16.msra.mxu0 %v3893
    %4968 = vmatprep.subr.bf16.mxu0 0
    %4969 = vmatpush2.bf16.msra.mxu0 %v3892
    %4970 = vmatprep.subr.bf16.mxu0 0
    %4971 = vmatpush2.bf16.msra.mxu0 %v3891
    %4972 = vmatprep.subr.bf16.mxu0 0
    %4973 = vmatpush2.bf16.msra.mxu0 %v3890
    %4974 = vmatprep.subr.bf16.mxu0 0
    %4975 = vmatpush2.bf16.msra.mxu0 %v3889
    %4976 = vmatprep.subr.bf16.mxu0 0
    %4977 = vmatpush2.bf16.msra.mxu0 %v3888
    %4978 = vmatprep.subr.bf16.mxu0 0
    %4979 = vmatpush2.bf16.msra.mxu0 %v3887
    %4980 = vmatprep.subr.bf16.mxu0 0
    %4981 = vmatpush2.bf16.msra.mxu0 %v3886
    %4982 = vmatprep.mubr.bf16.mxu0 %v507
    %4983 = vmatmul.mubr.bf16.gmra.mxu0 %v506
    %v4984 = vpop.f32.mrf.mxu0
    %v4985 = vadd.f32 %v4945, %v4984
    %v4986 = vpop.f32.mrf.mxu0
    %v4987 = vpop.f32.mrf.mxu0
    %v4988 = vpop.f32.mrf.mxu0
    %4989 = vdwg.mxu0
    %4990 = vmatprep.subr.bf16.mxu0 0
    %4991 = vmatpush1.bf16.msra.mxu0 %v3901
    %4992 = vmatprep.subr.bf16.mxu0 0
    %4993 = vmatpush1.bf16.msra.mxu0 %v3900
    %4994 = vmatprep.subr.bf16.mxu0 0
    %4995 = vmatpush1.bf16.msra.mxu0 %v3899
    %4996 = vmatprep.subr.bf16.mxu0 0
    %4997 = vmatpush1.bf16.msra.mxu0 %v3898
    %4998 = vmatprep.subr.bf16.mxu0 0
    %4999 = vmatpush1.bf16.msra.mxu0 %v3897
    %5000 = vmatprep.subr.bf16.mxu0 0
    %5001 = vmatpush1.bf16.msra.mxu0 %v3896
    %5002 = vmatprep.subr.bf16.mxu0 0
    %5003 = vmatpush1.bf16.msra.mxu0 %v3895
    %5004 = vmatprep.subr.bf16.mxu0 0
    %5005 = vmatpush1.bf16.msra.mxu0 %v3894
    %5006 = vmatprep.subr.bf16.mxu0 0
    %5007 = vmatpush2.bf16.msra.mxu0 %v3909
    %5008 = vmatprep.subr.bf16.mxu0 0
    %5009 = vmatpush2.bf16.msra.mxu0 %v3908
    %5010 = vmatprep.subr.bf16.mxu0 0
    %5011 = vmatpush2.bf16.msra.mxu0 %v3907
    %5012 = vmatprep.subr.bf16.mxu0 0
    %5013 = vmatpush2.bf16.msra.mxu0 %v3906
    %5014 = vmatprep.subr.bf16.mxu0 0
    %5015 = vmatpush2.bf16.msra.mxu0 %v3905
    %5016 = vmatprep.subr.bf16.mxu0 0
    %5017 = vmatpush2.bf16.msra.mxu0 %v3904
    %5018 = vmatprep.subr.bf16.mxu0 0
    %5019 = vmatpush2.bf16.msra.mxu0 %v3903
    %5020 = vmatprep.subr.bf16.mxu0 0
    %5021 = vmatpush2.bf16.msra.mxu0 %v3902
    %5022 = vmatprep.mubr.bf16.mxu0 %v517
    %5023 = vmatmul.mubr.bf16.gmra.mxu0 %v513
    %v5024 = vpop.f32.mrf.mxu0
    %v5025 = vadd.f32 %v4985, %v5024
    %v5026 = vpop.f32.mrf.mxu0
    %v5027 = vpop.f32.mrf.mxu0
    %v5028 = vpop.f32.mrf.mxu0
    %5029 = vdwg.mxu0
    %5030 = vmatprep.subr.bf16.mxu0 0
    %5031 = vmatpush1.bf16.msra.mxu0 %v3917
    %5032 = vmatprep.subr.bf16.mxu0 0
    %5033 = vmatpush1.bf16.msra.mxu0 %v3916
    %5034 = vmatprep.subr.bf16.mxu0 0
    %5035 = vmatpush1.bf16.msra.mxu0 %v3915
    %5036 = vmatprep.subr.bf16.mxu0 0
    %5037 = vmatpush1.bf16.msra.mxu0 %v3914
    %5038 = vmatprep.subr.bf16.mxu0 0
    %5039 = vmatpush1.bf16.msra.mxu0 %v3913
    %5040 = vmatprep.subr.bf16.mxu0 0
    %5041 = vmatpush1.bf16.msra.mxu0 %v3912
    %5042 = vmatprep.subr.bf16.mxu0 0
    %5043 = vmatpush1.bf16.msra.mxu0 %v3911
    %5044 = vmatprep.subr.bf16.mxu0 0
    %5045 = vmatpush1.bf16.msra.mxu0 %v3910
    %5046 = vmatprep.subr.bf16.mxu0 0
    %5047 = vmatpush2.bf16.msra.mxu0 %v3925
    %5048 = vmatprep.subr.bf16.mxu0 0
    %5049 = vmatpush2.bf16.msra.mxu0 %v3924
    %5050 = vmatprep.subr.bf16.mxu0 0
    %5051 = vmatpush2.bf16.msra.mxu0 %v3923
    %5052 = vmatprep.subr.bf16.mxu0 0
    %5053 = vmatpush2.bf16.msra.mxu0 %v3922
    %5054 = vmatprep.subr.bf16.mxu0 0
    %5055 = vmatpush2.bf16.msra.mxu0 %v3921
    %5056 = vmatprep.subr.bf16.mxu0 0
    %5057 = vmatpush2.bf16.msra.mxu0 %v3920
    %5058 = vmatprep.subr.bf16.mxu0 0
    %5059 = vmatpush2.bf16.msra.mxu0 %v3919
    %5060 = vmatprep.subr.bf16.mxu0 0
    %5061 = vmatpush2.bf16.msra.mxu0 %v3918
    %5062 = vmatprep.mubr.bf16.mxu0 %v526
    %5063 = vmatmul.mubr.bf16.gmra.mxu0 %v525
    %v5064 = vpop.f32.mrf.mxu0
    %v5065 = vadd.f32 %v5025, %v5064
    %v5066 = vpop.f32.mrf.mxu0
    %v5067 = vpop.f32.mrf.mxu0
    %v5068 = vpop.f32.mrf.mxu0
    %5069 = vdwg.mxu0
    %5070 = vmatprep.subr.bf16.mxu0 0
    %5071 = vmatpush1.bf16.msra.mxu0 %v3933
    %5072 = vmatprep.subr.bf16.mxu0 0
    %5073 = vmatpush1.bf16.msra.mxu0 %v3932
    %5074 = vmatprep.subr.bf16.mxu0 0
    %5075 = vmatpush1.bf16.msra.mxu0 %v3931
    %5076 = vmatprep.subr.bf16.mxu0 0
    %5077 = vmatpush1.bf16.msra.mxu0 %v3930
    %5078 = vmatprep.subr.bf16.mxu0 0
    %5079 = vmatpush1.bf16.msra.mxu0 %v3929
    %5080 = vmatprep.subr.bf16.mxu0 0
    %5081 = vmatpush1.bf16.msra.mxu0 %v3928
    %5082 = vmatprep.subr.bf16.mxu0 0
    %5083 = vmatpush1.bf16.msra.mxu0 %v3927
    %5084 = vmatprep.subr.bf16.mxu0 0
    %5085 = vmatpush1.bf16.msra.mxu0 %v3926
    %5086 = vmatprep.subr.bf16.mxu0 0
    %5087 = vmatpush2.bf16.msra.mxu0 %v3941
    %5088 = vmatprep.subr.bf16.mxu0 0
    %5089 = vmatpush2.bf16.msra.mxu0 %v3940
    %5090 = vmatprep.subr.bf16.mxu0 0
    %5091 = vmatpush2.bf16.msra.mxu0 %v3939
    %5092 = vmatprep.subr.bf16.mxu0 0
    %5093 = vmatpush2.bf16.msra.mxu0 %v3938
    %5094 = vmatprep.subr.bf16.mxu0 0
    %5095 = vmatpush2.bf16.msra.mxu0 %v3937
    %5096 = vmatprep.subr.bf16.mxu0 0
    %5097 = vmatpush2.bf16.msra.mxu0 %v3936
    %5098 = vmatprep.subr.bf16.mxu0 0
    %5099 = vmatpush2.bf16.msra.mxu0 %v3935
    %5100 = vmatprep.subr.bf16.mxu0 0
    %5101 = vmatpush2.bf16.msra.mxu0 %v3934
    %5102 = vmatprep.mubr.bf16.mxu0 %v536
    %5103 = vmatmul.mubr.bf16.gmra.mxu0 %v532
    %v5104 = vpop.f32.mrf.mxu0
    %v5105 = vadd.f32 %v5065, %v5104
    %v5106 = vpop.f32.mrf.mxu0
    %v5107 = vpop.f32.mrf.mxu0
    %v5108 = vpop.f32.mrf.mxu0
    %5109 = vdwg.mxu0
    %5110 = vmatprep.subr.bf16.mxu0 0
    %5111 = vmatpush1.bf16.msra.mxu0 %v3949
    %5112 = vmatprep.subr.bf16.mxu0 0
    %5113 = vmatpush1.bf16.msra.mxu0 %v3948
    %5114 = vmatprep.subr.bf16.mxu0 0
    %5115 = vmatpush1.bf16.msra.mxu0 %v3947
    %5116 = vmatprep.subr.bf16.mxu0 0
    %5117 = vmatpush1.bf16.msra.mxu0 %v3946
    %5118 = vmatprep.subr.bf16.mxu0 0
    %5119 = vmatpush1.bf16.msra.mxu0 %v3945
    %5120 = vmatprep.subr.bf16.mxu0 0
    %5121 = vmatpush1.bf16.msra.mxu0 %v3944
    %5122 = vmatprep.subr.bf16.mxu0 0
    %5123 = vmatpush1.bf16.msra.mxu0 %v3943
    %5124 = vmatprep.subr.bf16.mxu0 0
    %5125 = vmatpush1.bf16.msra.mxu0 %v3942
    %5126 = vmatprep.subr.bf16.mxu0 0
    %5127 = vmatpush2.bf16.msra.mxu0 %v3957
    %5128 = vmatprep.subr.bf16.mxu0 0
    %5129 = vmatpush2.bf16.msra.mxu0 %v3956
    %5130 = vmatprep.subr.bf16.mxu0 0
    %5131 = vmatpush2.bf16.msra.mxu0 %v3955
    %5132 = vmatprep.subr.bf16.mxu0 0
    %5133 = vmatpush2.bf16.msra.mxu0 %v3954
    %5134 = vmatprep.subr.bf16.mxu0 0
    %5135 = vmatpush2.bf16.msra.mxu0 %v3953
    %5136 = vmatprep.subr.bf16.mxu0 0
    %5137 = vmatpush2.bf16.msra.mxu0 %v3952
    %5138 = vmatprep.subr.bf16.mxu0 0
    %5139 = vmatpush2.bf16.msra.mxu0 %v3951
    %5140 = vmatprep.subr.bf16.mxu0 0
    %5141 = vmatpush2.bf16.msra.mxu0 %v3950
    %5142 = vmatprep.mubr.bf16.mxu0 %v545
    %5143 = vmatmul.mubr.bf16.gmra.mxu0 %v544
    %v5144 = vpop.f32.mrf.mxu0
    %v5145 = vadd.f32 %v5105, %v5144
    %v5146 = vpop.f32.mrf.mxu0
    %v5147 = vpop.f32.mrf.mxu0
    %v5148 = vpop.f32.mrf.mxu0
    %5149 = vdwg.mxu0
    %5150 = vmatprep.subr.bf16.mxu0 0
    %5151 = vmatpush1.bf16.msra.mxu0 %v3965
    %5152 = vmatprep.subr.bf16.mxu0 0
    %5153 = vmatpush1.bf16.msra.mxu0 %v3964
    %5154 = vmatprep.subr.bf16.mxu0 0
    %5155 = vmatpush1.bf16.msra.mxu0 %v3963
    %5156 = vmatprep.subr.bf16.mxu0 0
    %5157 = vmatpush1.bf16.msra.mxu0 %v3962
    %5158 = vmatprep.subr.bf16.mxu0 0
    %5159 = vmatpush1.bf16.msra.mxu0 %v3961
    %5160 = vmatprep.subr.bf16.mxu0 0
    %5161 = vmatpush1.bf16.msra.mxu0 %v3960
    %5162 = vmatprep.subr.bf16.mxu0 0
    %5163 = vmatpush1.bf16.msra.mxu0 %v3959
    %5164 = vmatprep.subr.bf16.mxu0 0
    %5165 = vmatpush1.bf16.msra.mxu0 %v3958
    %5166 = vmatprep.subr.bf16.mxu0 0
    %5167 = vmatpush2.bf16.msra.mxu0 %v3973
    %5168 = vmatprep.subr.bf16.mxu0 0
    %5169 = vmatpush2.bf16.msra.mxu0 %v3972
    %5170 = vmatprep.subr.bf16.mxu0 0
    %5171 = vmatpush2.bf16.msra.mxu0 %v3971
    %5172 = vmatprep.subr.bf16.mxu0 0
    %5173 = vmatpush2.bf16.msra.mxu0 %v3970
    %5174 = vmatprep.subr.bf16.mxu0 0
    %5175 = vmatpush2.bf16.msra.mxu0 %v3969
    %5176 = vmatprep.subr.bf16.mxu0 0
    %5177 = vmatpush2.bf16.msra.mxu0 %v3968
    %5178 = vmatprep.subr.bf16.mxu0 0
    %5179 = vmatpush2.bf16.msra.mxu0 %v3967
    %5180 = vmatprep.subr.bf16.mxu0 0
    %5181 = vmatpush2.bf16.msra.mxu0 %v3966
    %5182 = vmatprep.mubr.bf16.mxu0 %v555
    %5183 = vmatmul.mubr.bf16.gmra.mxu0 %v551
    %v5184 = vpop.f32.mrf.mxu0
    %v5185 = vadd.f32 %v5145, %v5184
    %v5186 = vpop.f32.mrf.mxu0
    %v5187 = vpop.f32.mrf.mxu0
    %v5188 = vpop.f32.mrf.mxu0
    %5189 = vdwg.mxu0
    %5190 = vmatprep.subr.bf16.mxu0 0
    %5191 = vmatpush1.bf16.msra.mxu0 %v3981
    %5192 = vmatprep.subr.bf16.mxu0 0
    %5193 = vmatpush1.bf16.msra.mxu0 %v3980
    %5194 = vmatprep.subr.bf16.mxu0 0
    %5195 = vmatpush1.bf16.msra.mxu0 %v3979
    %5196 = vmatprep.subr.bf16.mxu0 0
    %5197 = vmatpush1.bf16.msra.mxu0 %v3978
    %5198 = vmatprep.subr.bf16.mxu0 0
    %5199 = vmatpush1.bf16.msra.mxu0 %v3977
    %5200 = vmatprep.subr.bf16.mxu0 0
    %5201 = vmatpush1.bf16.msra.mxu0 %v3976
    %5202 = vmatprep.subr.bf16.mxu0 0
    %5203 = vmatpush1.bf16.msra.mxu0 %v3975
    %5204 = vmatprep.subr.bf16.mxu0 0
    %5205 = vmatpush1.bf16.msra.mxu0 %v3974
    %5206 = vmatprep.subr.bf16.mxu0 0
    %5207 = vmatpush2.bf16.msra.mxu0 %v3989
    %5208 = vmatprep.subr.bf16.mxu0 0
    %5209 = vmatpush2.bf16.msra.mxu0 %v3988
    %5210 = vmatprep.subr.bf16.mxu0 0
    %5211 = vmatpush2.bf16.msra.mxu0 %v3987
    %5212 = vmatprep.subr.bf16.mxu0 0
    %5213 = vmatpush2.bf16.msra.mxu0 %v3986
    %5214 = vmatprep.subr.bf16.mxu0 0
    %5215 = vmatpush2.bf16.msra.mxu0 %v3985
    %5216 = vmatprep.subr.bf16.mxu0 0
    %5217 = vmatpush2.bf16.msra.mxu0 %v3984
    %5218 = vmatprep.subr.bf16.mxu0 0
    %5219 = vmatpush2.bf16.msra.mxu0 %v3983
    %5220 = vmatprep.subr.bf16.mxu0 0
    %5221 = vmatpush2.bf16.msra.mxu0 %v3982
    %5222 = vmatprep.mubr.bf16.mxu0 %v562
    %5223 = vmatmul.mubr.bf16.gmra.mxu0 %v561
    %v5224 = vpop.f32.mrf.mxu0
    %v5225 = vadd.f32 %v5185, %v5224
    %v5226 = vpop.f32.mrf.mxu0
    %v5227 = vpop.f32.mrf.mxu0
    %v5228 = vpop.f32.mrf.mxu0
    %5229 = vdwg.mxu0
    %5230 = vmatprep.subr.bf16.mxu0 0
    %5231 = vmatpush1.bf16.msra.mxu0 %v3997
    %5232 = vmatprep.subr.bf16.mxu0 0
    %5233 = vmatpush1.bf16.msra.mxu0 %v3996
    %5234 = vmatprep.subr.bf16.mxu0 0
    %5235 = vmatpush1.bf16.msra.mxu0 %v3995
    %5236 = vmatprep.subr.bf16.mxu0 0
    %5237 = vmatpush1.bf16.msra.mxu0 %v3994
    %5238 = vmatprep.subr.bf16.mxu0 0
    %5239 = vmatpush1.bf16.msra.mxu0 %v3993
    %5240 = vmatprep.subr.bf16.mxu0 0
    %5241 = vmatpush1.bf16.msra.mxu0 %v3992
    %5242 = vmatprep.subr.bf16.mxu0 0
    %5243 = vmatpush1.bf16.msra.mxu0 %v3991
    %5244 = vmatprep.subr.bf16.mxu0 0
    %5245 = vmatpush1.bf16.msra.mxu0 %v3990
    %5246 = vmatprep.subr.bf16.mxu0 0
    %5247 = vmatpush2.bf16.msra.mxu0 %v4005
    %5248 = vmatprep.subr.bf16.mxu0 0
    %5249 = vmatpush2.bf16.msra.mxu0 %v4004
    %5250 = vmatprep.subr.bf16.mxu0 0
    %5251 = vmatpush2.bf16.msra.mxu0 %v4003
    %5252 = vmatprep.subr.bf16.mxu0 0
    %5253 = vmatpush2.bf16.msra.mxu0 %v4002
    %5254 = vmatprep.subr.bf16.mxu0 0
    %5255 = vmatpush2.bf16.msra.mxu0 %v4001
    %5256 = vmatprep.subr.bf16.mxu0 0
    %5257 = vmatpush2.bf16.msra.mxu0 %v4000
    %5258 = vmatprep.subr.bf16.mxu0 0
    %5259 = vmatpush2.bf16.msra.mxu0 %v3999
    %5260 = vmatprep.subr.bf16.mxu0 0
    %5261 = vmatpush2.bf16.msra.mxu0 %v3998
    %5262 = vmatprep.mubr.bf16.mxu0 %v569
    %5263 = vmatmul.mubr.bf16.gmra.mxu0 %v566
    %v5264 = vpop.f32.mrf.mxu0
    %v5265 = vadd.f32 %v5225, %v5264
    %v5266 = vpop.f32.mrf.mxu0
    %v5267 = vpop.f32.mrf.mxu0
    %v5268 = vpop.f32.mrf.mxu0
    %5269 = vdwg.mxu0
    %5270 = vmatprep.subr.bf16.mxu0 0
    %5271 = vmatpush1.bf16.msra.mxu0 %v4013
    %5272 = vmatprep.subr.bf16.mxu0 0
    %5273 = vmatpush1.bf16.msra.mxu0 %v4012
    %5274 = vmatprep.subr.bf16.mxu0 0
    %5275 = vmatpush1.bf16.msra.mxu0 %v4011
    %5276 = vmatprep.subr.bf16.mxu0 0
    %5277 = vmatpush1.bf16.msra.mxu0 %v4010
    %5278 = vmatprep.subr.bf16.mxu0 0
    %5279 = vmatpush1.bf16.msra.mxu0 %v4009
    %5280 = vmatprep.subr.bf16.mxu0 0
    %5281 = vmatpush1.bf16.msra.mxu0 %v4008
    %5282 = vmatprep.subr.bf16.mxu0 0
    %5283 = vmatpush1.bf16.msra.mxu0 %v4007
    %5284 = vmatprep.subr.bf16.mxu0 0
    %5285 = vmatpush1.bf16.msra.mxu0 %v4006
    %5286 = vmatprep.subr.bf16.mxu0 0
    %5287 = vmatpush2.bf16.msra.mxu0 %v4021
    %5288 = vmatprep.subr.bf16.mxu0 0
    %5289 = vmatpush2.bf16.msra.mxu0 %v4020
    %5290 = vmatprep.subr.bf16.mxu0 0
    %5291 = vmatpush2.bf16.msra.mxu0 %v4019
    %5292 = vmatprep.subr.bf16.mxu0 0
    %5293 = vmatpush2.bf16.msra.mxu0 %v4018
    %5294 = vmatprep.subr.bf16.mxu0 0
    %5295 = vmatpush2.bf16.msra.mxu0 %v4017
    %5296 = vmatprep.subr.bf16.mxu0 0
    %5297 = vmatpush2.bf16.msra.mxu0 %v4016
    %5298 = vmatprep.subr.bf16.mxu0 0
    %5299 = vmatpush2.bf16.msra.mxu0 %v4015
    %5300 = vmatprep.subr.bf16.mxu0 0
    %5301 = vmatpush2.bf16.msra.mxu0 %v4014
    %5302 = vmatprep.mubr.bf16.mxu0 %v579
    %5303 = vmatmul.mubr.bf16.gmra.mxu0 %v578
    %v5304 = vpop.f32.mrf.mxu0
    %v5305 = vadd.f32 %v5265, %v5304
    %v5306 = vpop.f32.mrf.mxu0
    %v5307 = vpop.f32.mrf.mxu0
    %v5308 = vpop.f32.mrf.mxu0
    %5309 = vdwg.mxu0
    %5310 = vmatprep.subr.bf16.mxu0 0
    %5311 = vmatpush1.bf16.msra.mxu0 %v4029
    %5312 = vmatprep.subr.bf16.mxu0 0
    %5313 = vmatpush1.bf16.msra.mxu0 %v4028
    %5314 = vmatprep.subr.bf16.mxu0 0
    %5315 = vmatpush1.bf16.msra.mxu0 %v4027
    %5316 = vmatprep.subr.bf16.mxu0 0
    %5317 = vmatpush1.bf16.msra.mxu0 %v4026
    %5318 = vmatprep.subr.bf16.mxu0 0
    %5319 = vmatpush1.bf16.msra.mxu0 %v4025
    %5320 = vmatprep.subr.bf16.mxu0 0
    %5321 = vmatpush1.bf16.msra.mxu0 %v4024
    %5322 = vmatprep.subr.bf16.mxu0 0
    %5323 = vmatpush1.bf16.msra.mxu0 %v4023
    %5324 = vmatprep.subr.bf16.mxu0 0
    %5325 = vmatpush1.bf16.msra.mxu0 %v4022
    %5326 = vmatprep.subr.bf16.mxu0 0
    %5327 = vmatpush2.bf16.msra.mxu0 %v4037
    %5328 = vmatprep.subr.bf16.mxu0 0
    %5329 = vmatpush2.bf16.msra.mxu0 %v4036
    %5330 = vmatprep.subr.bf16.mxu0 0
    %5331 = vmatpush2.bf16.msra.mxu0 %v4035
    %5332 = vmatprep.subr.bf16.mxu0 0
    %5333 = vmatpush2.bf16.msra.mxu0 %v4034
    %5334 = vmatprep.subr.bf16.mxu0 0
    %5335 = vmatpush2.bf16.msra.mxu0 %v4033
    %5336 = vmatprep.subr.bf16.mxu0 0
    %5337 = vmatpush2.bf16.msra.mxu0 %v4032
    %5338 = vmatprep.subr.bf16.mxu0 0
    %5339 = vmatpush2.bf16.msra.mxu0 %v4031
    %5340 = vmatprep.subr.bf16.mxu0 0
    %5341 = vmatpush2.bf16.msra.mxu0 %v4030
    %5342 = vmatprep.mubr.bf16.mxu0 %v589
    %5343 = vmatmul.mubr.bf16.gmra.mxu0 %v585
    %v5344 = vpop.f32.mrf.mxu0
    %v5345 = vadd.f32 %v5305, %v5344
    %v5346 = vpop.f32.mrf.mxu0
    %v5347 = vpop.f32.mrf.mxu0
    %v5348 = vpop.f32.mrf.mxu0
    %5349 = vdwg.mxu0
    %5350 = vmatprep.subr.bf16.mxu0 0
    %5351 = vmatpush1.bf16.msra.mxu0 %v4045
    %5352 = vmatprep.subr.bf16.mxu0 0
    %5353 = vmatpush1.bf16.msra.mxu0 %v4044
    %5354 = vmatprep.subr.bf16.mxu0 0
    %5355 = vmatpush1.bf16.msra.mxu0 %v4043
    %5356 = vmatprep.subr.bf16.mxu0 0
    %5357 = vmatpush1.bf16.msra.mxu0 %v4042
    %5358 = vmatprep.subr.bf16.mxu0 0
    %5359 = vmatpush1.bf16.msra.mxu0 %v4041
    %5360 = vmatprep.subr.bf16.mxu0 0
    %5361 = vmatpush1.bf16.msra.mxu0 %v4040
    %5362 = vmatprep.subr.bf16.mxu0 0
    %5363 = vmatpush1.bf16.msra.mxu0 %v4039
    %5364 = vmatprep.subr.bf16.mxu0 0
    %5365 = vmatpush1.bf16.msra.mxu0 %v4038
    %5366 = vmatprep.subr.bf16.mxu0 0
    %5367 = vmatpush2.bf16.msra.mxu0 %v4053
    %5368 = vmatprep.subr.bf16.mxu0 0
    %5369 = vmatpush2.bf16.msra.mxu0 %v4052
    %5370 = vmatprep.subr.bf16.mxu0 0
    %5371 = vmatpush2.bf16.msra.mxu0 %v4051
    %5372 = vmatprep.subr.bf16.mxu0 0
    %5373 = vmatpush2.bf16.msra.mxu0 %v4050
    %5374 = vmatprep.subr.bf16.mxu0 0
    %5375 = vmatpush2.bf16.msra.mxu0 %v4049
    %5376 = vmatprep.subr.bf16.mxu0 0
    %5377 = vmatpush2.bf16.msra.mxu0 %v4048
    %5378 = vmatprep.subr.bf16.mxu0 0
    %5379 = vmatpush2.bf16.msra.mxu0 %v4047
    %5380 = vmatprep.subr.bf16.mxu0 0
    %5381 = vmatpush2.bf16.msra.mxu0 %v4046
    %5382 = vmatprep.mubr.bf16.mxu0 %v598
    %5383 = vmatmul.mubr.bf16.gmra.mxu0 %v597
    %v5384 = vpop.f32.mrf.mxu0
    %v5385 = vadd.f32 %v5345, %v5384
    %v5386 = vpop.f32.mrf.mxu0
    %v5387 = vpop.f32.mrf.mxu0
    %v5388 = vpop.f32.mrf.mxu0
    %5389 = vdwg.mxu0
    %5390 = vmatprep.subr.bf16.mxu0 0
    %5391 = vmatpush1.bf16.msra.mxu0 %v4061
    %5392 = vmatprep.subr.bf16.mxu0 0
    %5393 = vmatpush1.bf16.msra.mxu0 %v4060
    %5394 = vmatprep.subr.bf16.mxu0 0
    %5395 = vmatpush1.bf16.msra.mxu0 %v4059
    %5396 = vmatprep.subr.bf16.mxu0 0
    %5397 = vmatpush1.bf16.msra.mxu0 %v4058
    %5398 = vmatprep.subr.bf16.mxu0 0
    %5399 = vmatpush1.bf16.msra.mxu0 %v4057
    %5400 = vmatprep.subr.bf16.mxu0 0
    %5401 = vmatpush1.bf16.msra.mxu0 %v4056
    %5402 = vmatprep.subr.bf16.mxu0 0
    %5403 = vmatpush1.bf16.msra.mxu0 %v4055
    %5404 = vmatprep.subr.bf16.mxu0 0
    %5405 = vmatpush1.bf16.msra.mxu0 %v4054
    %5406 = vmatprep.subr.bf16.mxu0 0
    %5407 = vmatpush2.bf16.msra.mxu0 %v4069
    %5408 = vmatprep.subr.bf16.mxu0 0
    %5409 = vmatpush2.bf16.msra.mxu0 %v4068
    %5410 = vmatprep.subr.bf16.mxu0 0
    %5411 = vmatpush2.bf16.msra.mxu0 %v4067
    %5412 = vmatprep.subr.bf16.mxu0 0
    %5413 = vmatpush2.bf16.msra.mxu0 %v4066
    %5414 = vmatprep.subr.bf16.mxu0 0
    %5415 = vmatpush2.bf16.msra.mxu0 %v4065
    %5416 = vmatprep.subr.bf16.mxu0 0
    %5417 = vmatpush2.bf16.msra.mxu0 %v4064
    %5418 = vmatprep.subr.bf16.mxu0 0
    %5419 = vmatpush2.bf16.msra.mxu0 %v4063
    %5420 = vmatprep.subr.bf16.mxu0 0
    %5421 = vmatpush2.bf16.msra.mxu0 %v4062
    %5422 = vmatprep.mubr.bf16.mxu0 %v608
    %5423 = vmatmul.mubr.bf16.gmra.mxu0 %v604
    %v5424 = vpop.f32.mrf.mxu0
    %v5425 = vadd.f32 %v5385, %v5424
    %v5426 = vpop.f32.mrf.mxu0
    %v5427 = vpop.f32.mrf.mxu0
    %v5428 = vpop.f32.mrf.mxu0
    %5429 = vdwg.mxu0
    %5430 = vmatprep.subr.bf16.mxu0 0
    %5431 = vmatpush1.bf16.msra.mxu0 %v4077
    %5432 = vmatprep.subr.bf16.mxu0 0
    %5433 = vmatpush1.bf16.msra.mxu0 %v4076
    %5434 = vmatprep.subr.bf16.mxu0 0
    %5435 = vmatpush1.bf16.msra.mxu0 %v4075
    %5436 = vmatprep.subr.bf16.mxu0 0
    %5437 = vmatpush1.bf16.msra.mxu0 %v4074
    %5438 = vmatprep.subr.bf16.mxu0 0
    %5439 = vmatpush1.bf16.msra.mxu0 %v4073
    %5440 = vmatprep.subr.bf16.mxu0 0
    %5441 = vmatpush1.bf16.msra.mxu0 %v4072
    %5442 = vmatprep.subr.bf16.mxu0 0
    %5443 = vmatpush1.bf16.msra.mxu0 %v4071
    %5444 = vmatprep.subr.bf16.mxu0 0
    %5445 = vmatpush1.bf16.msra.mxu0 %v4070
    %5446 = vmatprep.subr.bf16.mxu0 0
    %5447 = vmatpush2.bf16.msra.mxu0 %v4085
    %5448 = vmatprep.subr.bf16.mxu0 0
    %5449 = vmatpush2.bf16.msra.mxu0 %v4084
    %5450 = vmatprep.subr.bf16.mxu0 0
    %5451 = vmatpush2.bf16.msra.mxu0 %v4083
    %5452 = vmatprep.subr.bf16.mxu0 0
    %5453 = vmatpush2.bf16.msra.mxu0 %v4082
    %5454 = vmatprep.subr.bf16.mxu0 0
    %5455 = vmatpush2.bf16.msra.mxu0 %v4081
    %5456 = vmatprep.subr.bf16.mxu0 0
    %5457 = vmatpush2.bf16.msra.mxu0 %v4080
    %5458 = vmatprep.subr.bf16.mxu0 0
    %5459 = vmatpush2.bf16.msra.mxu0 %v4079
    %5460 = vmatprep.subr.bf16.mxu0 0
    %5461 = vmatpush2.bf16.msra.mxu0 %v4078
    %5462 = vmatprep.mubr.bf16.mxu0 %v617
    %5463 = vmatmul.mubr.bf16.gmra.mxu0 %v616
    %v5464 = vpop.f32.mrf.mxu0
    %v5465 = vadd.f32 %v5425, %v5464
    %v5466 = vpop.f32.mrf.mxu0
    %v5467 = vpop.f32.mrf.mxu0
    %v5468 = vpop.f32.mrf.mxu0
    %5469 = vdwg.mxu0
    %5470 = vmatprep.subr.bf16.mxu0 0
    %5471 = vmatpush1.bf16.msra.mxu0 %v4093
    %5472 = vmatprep.subr.bf16.mxu0 0
    %5473 = vmatpush1.bf16.msra.mxu0 %v4092
    %5474 = vmatprep.subr.bf16.mxu0 0
    %5475 = vmatpush1.bf16.msra.mxu0 %v4091
    %5476 = vmatprep.subr.bf16.mxu0 0
    %5477 = vmatpush1.bf16.msra.mxu0 %v4090
    %5478 = vmatprep.subr.bf16.mxu0 0
    %5479 = vmatpush1.bf16.msra.mxu0 %v4089
    %5480 = vmatprep.subr.bf16.mxu0 0
    %5481 = vmatpush1.bf16.msra.mxu0 %v4088
    %5482 = vmatprep.subr.bf16.mxu0 0
    %5483 = vmatpush1.bf16.msra.mxu0 %v4087
    %5484 = vmatprep.subr.bf16.mxu0 0
    %5485 = vmatpush1.bf16.msra.mxu0 %v4086
    %5486 = vmatprep.subr.bf16.mxu0 0
    %5487 = vmatpush2.bf16.msra.mxu0 %v4101
    %5488 = vmatprep.subr.bf16.mxu0 0
    %5489 = vmatpush2.bf16.msra.mxu0 %v4100
    %5490 = vmatprep.subr.bf16.mxu0 0
    %5491 = vmatpush2.bf16.msra.mxu0 %v4099
    %5492 = vmatprep.subr.bf16.mxu0 0
    %5493 = vmatpush2.bf16.msra.mxu0 %v4098
    %5494 = vmatprep.subr.bf16.mxu0 0
    %5495 = vmatpush2.bf16.msra.mxu0 %v4097
    %5496 = vmatprep.subr.bf16.mxu0 0
    %5497 = vmatpush2.bf16.msra.mxu0 %v4096
    %5498 = vmatprep.subr.bf16.mxu0 0
    %5499 = vmatpush2.bf16.msra.mxu0 %v4095
    %5500 = vmatprep.subr.bf16.mxu0 0
    %5501 = vmatpush2.bf16.msra.mxu0 %v4094
    %5502 = vmatprep.mubr.bf16.mxu0 %v627
    %5503 = vmatmul.mubr.bf16.gmra.mxu0 %v623
    %v5504 = vpop.f32.mrf.mxu0
    %v5505 = vadd.f32 %v5465, %v5504
    %v5506 = vpop.f32.mrf.mxu0
    %v5507 = vpop.f32.mrf.mxu0
    %v5508 = vpop.f32.mrf.mxu0
    %5509 = vdwg.mxu0
    %5510 = vmatprep.subr.bf16.mxu0 0
    %5511 = vmatpush1.bf16.msra.mxu0 %v4109
    %5512 = vmatprep.subr.bf16.mxu0 0
    %5513 = vmatpush1.bf16.msra.mxu0 %v4108
    %5514 = vmatprep.subr.bf16.mxu0 0
    %5515 = vmatpush1.bf16.msra.mxu0 %v4107
    %5516 = vmatprep.subr.bf16.mxu0 0
    %5517 = vmatpush1.bf16.msra.mxu0 %v4106
    %5518 = vmatprep.subr.bf16.mxu0 0
    %5519 = vmatpush1.bf16.msra.mxu0 %v4105
    %5520 = vmatprep.subr.bf16.mxu0 0
    %5521 = vmatpush1.bf16.msra.mxu0 %v4104
    %5522 = vmatprep.subr.bf16.mxu0 0
    %5523 = vmatpush1.bf16.msra.mxu0 %v4103
    %5524 = vmatprep.subr.bf16.mxu0 0
    %5525 = vmatpush1.bf16.msra.mxu0 %v4102
    %5526 = vmatprep.subr.bf16.mxu0 0
    %5527 = vmatpush2.bf16.msra.mxu0 %v4117
    %5528 = vmatprep.subr.bf16.mxu0 0
    %5529 = vmatpush2.bf16.msra.mxu0 %v4116
    %5530 = vmatprep.subr.bf16.mxu0 0
    %5531 = vmatpush2.bf16.msra.mxu0 %v4115
    %5532 = vmatprep.subr.bf16.mxu0 0
    %5533 = vmatpush2.bf16.msra.mxu0 %v4114
    %5534 = vmatprep.subr.bf16.mxu0 0
    %5535 = vmatpush2.bf16.msra.mxu0 %v4113
    %5536 = vmatprep.subr.bf16.mxu0 0
    %5537 = vmatpush2.bf16.msra.mxu0 %v4112
    %5538 = vmatprep.subr.bf16.mxu0 0
    %5539 = vmatpush2.bf16.msra.mxu0 %v4111
    %5540 = vmatprep.subr.bf16.mxu0 0
    %5541 = vmatpush2.bf16.msra.mxu0 %v4110
    %5542 = vmatprep.mubr.bf16.mxu0 %v634
    %5543 = vmatmul.mubr.bf16.gmra.mxu0 %v633
    %v5544 = vpop.f32.mrf.mxu0
    %v5545 = vadd.f32 %v5505, %v5544
    %v5546 = vpop.f32.mrf.mxu0
    %v5547 = vpop.f32.mrf.mxu0
    %v5548 = vpop.f32.mrf.mxu0
    %5549 = vdwg.mxu0
    %5550 = vmatprep.subr.bf16.mxu0 0
    %5551 = vmatpush1.bf16.msra.mxu0 %v4125
    %5552 = vmatprep.subr.bf16.mxu0 0
    %5553 = vmatpush1.bf16.msra.mxu0 %v4124
    %5554 = vmatprep.subr.bf16.mxu0 0
    %5555 = vmatpush1.bf16.msra.mxu0 %v4123
    %5556 = vmatprep.subr.bf16.mxu0 0
    %5557 = vmatpush1.bf16.msra.mxu0 %v4122
    %5558 = vmatprep.subr.bf16.mxu0 0
    %5559 = vmatpush1.bf16.msra.mxu0 %v4121
    %5560 = vmatprep.subr.bf16.mxu0 0
    %5561 = vmatpush1.bf16.msra.mxu0 %v4120
    %5562 = vmatprep.subr.bf16.mxu0 0
    %5563 = vmatpush1.bf16.msra.mxu0 %v4119
    %5564 = vmatprep.subr.bf16.mxu0 0
    %5565 = vmatpush1.bf16.msra.mxu0 %v4118
    %5566 = vmatprep.subr.bf16.mxu0 0
    %5567 = vmatpush2.bf16.msra.mxu0 %v4133
    %5568 = vmatprep.subr.bf16.mxu0 0
    %5569 = vmatpush2.bf16.msra.mxu0 %v4132
    %5570 = vmatprep.subr.bf16.mxu0 0
    %5571 = vmatpush2.bf16.msra.mxu0 %v4131
    %5572 = vmatprep.subr.bf16.mxu0 0
    %5573 = vmatpush2.bf16.msra.mxu0 %v4130
    %5574 = vmatprep.subr.bf16.mxu0 0
    %5575 = vmatpush2.bf16.msra.mxu0 %v4129
    %5576 = vmatprep.subr.bf16.mxu0 0
    %5577 = vmatpush2.bf16.msra.mxu0 %v4128
    %5578 = vmatprep.subr.bf16.mxu0 0
    %5579 = vmatpush2.bf16.msra.mxu0 %v4127
    %5580 = vmatprep.subr.bf16.mxu0 0
    %5581 = vmatpush2.bf16.msra.mxu0 %v4126
    %5582 = vmatprep.mubr.bf16.mxu0 %v641
    %5583 = vmatmul.mubr.bf16.gmra.mxu0 %v638
    %v5584 = vpop.f32.mrf.mxu0
    %v5585 = vadd.f32 %v5545, %v5584
    %v5586 = vpop.f32.mrf.mxu0
    %v5587 = vpop.f32.mrf.mxu0
    %v5588 = vpop.f32.mrf.mxu0
    %5589 = vdwg.mxu0
    %5590 = vmatprep.subr.bf16.mxu0 0
    %5591 = vmatpush1.bf16.msra.mxu0 %v4141
    %5592 = vmatprep.subr.bf16.mxu0 0
    %5593 = vmatpush1.bf16.msra.mxu0 %v4140
    %5594 = vmatprep.subr.bf16.mxu0 0
    %5595 = vmatpush1.bf16.msra.mxu0 %v4139
    %5596 = vmatprep.subr.bf16.mxu0 0
    %5597 = vmatpush1.bf16.msra.mxu0 %v4138
    %5598 = vmatprep.subr.bf16.mxu0 0
    %5599 = vmatpush1.bf16.msra.mxu0 %v4137
    %5600 = vmatprep.subr.bf16.mxu0 0
    %5601 = vmatpush1.bf16.msra.mxu0 %v4136
    %5602 = vmatprep.subr.bf16.mxu0 0
    %5603 = vmatpush1.bf16.msra.mxu0 %v4135
    %5604 = vmatprep.subr.bf16.mxu0 0
    %5605 = vmatpush1.bf16.msra.mxu0 %v4134
    %5606 = vmatprep.subr.bf16.mxu0 0
    %5607 = vmatpush2.bf16.msra.mxu0 %v4149
    %5608 = vmatprep.subr.bf16.mxu0 0
    %5609 = vmatpush2.bf16.msra.mxu0 %v4148
    %5610 = vmatprep.subr.bf16.mxu0 0
    %5611 = vmatpush2.bf16.msra.mxu0 %v4147
    %5612 = vmatprep.subr.bf16.mxu0 0
    %5613 = vmatpush2.bf16.msra.mxu0 %v4146
    %5614 = vmatprep.subr.bf16.mxu0 0
    %5615 = vmatpush2.bf16.msra.mxu0 %v4145
    %5616 = vmatprep.subr.bf16.mxu0 0
    %5617 = vmatpush2.bf16.msra.mxu0 %v4144
    %5618 = vmatprep.subr.bf16.mxu0 0
    %5619 = vmatpush2.bf16.msra.mxu0 %v4143
    %5620 = vmatprep.subr.bf16.mxu0 0
    %5621 = vmatpush2.bf16.msra.mxu0 %v4142
    %5622 = vmatprep.mubr.bf16.mxu0 %v651
    %5623 = vmatmul.mubr.bf16.gmra.mxu0 %v650
    %v5624 = vpop.f32.mrf.mxu0
    %v5625 = vadd.f32 %v5585, %v5624
    %v5626 = vpop.f32.mrf.mxu0
    %v5627 = vpop.f32.mrf.mxu0
    %v5628 = vpop.f32.mrf.mxu0
    %5629 = vdwg.mxu0
    %5630 = vmatprep.subr.bf16.mxu0 0
    %5631 = vmatpush1.bf16.msra.mxu0 %v4157
    %5632 = vmatprep.subr.bf16.mxu0 0
    %5633 = vmatpush1.bf16.msra.mxu0 %v4156
    %5634 = vmatprep.subr.bf16.mxu0 0
    %5635 = vmatpush1.bf16.msra.mxu0 %v4155
    %5636 = vmatprep.subr.bf16.mxu0 0
    %5637 = vmatpush1.bf16.msra.mxu0 %v4154
    %5638 = vmatprep.subr.bf16.mxu0 0
    %5639 = vmatpush1.bf16.msra.mxu0 %v4153
    %5640 = vmatprep.subr.bf16.mxu0 0
    %5641 = vmatpush1.bf16.msra.mxu0 %v4152
    %5642 = vmatprep.subr.bf16.mxu0 0
    %5643 = vmatpush1.bf16.msra.mxu0 %v4151
    %5644 = vmatprep.subr.bf16.mxu0 0
    %5645 = vmatpush1.bf16.msra.mxu0 %v4150
    %5646 = vmatprep.subr.bf16.mxu0 0
    %5647 = vmatpush2.bf16.msra.mxu0 %v4165
    %5648 = vmatprep.subr.bf16.mxu0 0
    %5649 = vmatpush2.bf16.msra.mxu0 %v4164
    %5650 = vmatprep.subr.bf16.mxu0 0
    %5651 = vmatpush2.bf16.msra.mxu0 %v4163
    %5652 = vmatprep.subr.bf16.mxu0 0
    %5653 = vmatpush2.bf16.msra.mxu0 %v4162
    %5654 = vmatprep.subr.bf16.mxu0 0
    %5655 = vmatpush2.bf16.msra.mxu0 %v4161
    %5656 = vmatprep.subr.bf16.mxu0 0
    %5657 = vmatpush2.bf16.msra.mxu0 %v4160
    %5658 = vmatprep.subr.bf16.mxu0 0
    %5659 = vmatpush2.bf16.msra.mxu0 %v4159
    %5660 = vmatprep.subr.bf16.mxu0 0
    %5661 = vmatpush2.bf16.msra.mxu0 %v4158
    %5662 = vmatprep.mubr.bf16.mxu0 %v661
    %5663 = vmatmul.mubr.bf16.gmra.mxu0 %v657
    %v5664 = vpop.f32.mrf.mxu0
    %v5665 = vadd.f32 %v5625, %v5664
    %v5666 = vpop.f32.mrf.mxu0
    %v5667 = vpop.f32.mrf.mxu0
    %v5668 = vpop.f32.mrf.mxu0
    %5669 = vdwg.mxu0
    %5670 = vmatprep.subr.bf16.mxu0 0
    %5671 = vmatpush1.bf16.msra.mxu0 %v4173
    %5672 = vmatprep.subr.bf16.mxu0 0
    %5673 = vmatpush1.bf16.msra.mxu0 %v4172
    %5674 = vmatprep.subr.bf16.mxu0 0
    %5675 = vmatpush1.bf16.msra.mxu0 %v4171
    %5676 = vmatprep.subr.bf16.mxu0 0
    %5677 = vmatpush1.bf16.msra.mxu0 %v4170
    %5678 = vmatprep.subr.bf16.mxu0 0
    %5679 = vmatpush1.bf16.msra.mxu0 %v4169
    %5680 = vmatprep.subr.bf16.mxu0 0
    %5681 = vmatpush1.bf16.msra.mxu0 %v4168
    %5682 = vmatprep.subr.bf16.mxu0 0
    %5683 = vmatpush1.bf16.msra.mxu0 %v4167
    %5684 = vmatprep.subr.bf16.mxu0 0
    %5685 = vmatpush1.bf16.msra.mxu0 %v4166
    %5686 = vmatprep.subr.bf16.mxu0 0
    %5687 = vmatpush2.bf16.msra.mxu0 %v4181
    %5688 = vmatprep.subr.bf16.mxu0 0
    %5689 = vmatpush2.bf16.msra.mxu0 %v4180
    %5690 = vmatprep.subr.bf16.mxu0 0
    %5691 = vmatpush2.bf16.msra.mxu0 %v4179
    %5692 = vmatprep.subr.bf16.mxu0 0
    %5693 = vmatpush2.bf16.msra.mxu0 %v4178
    %5694 = vmatprep.subr.bf16.mxu0 0
    %5695 = vmatpush2.bf16.msra.mxu0 %v4177
    %5696 = vmatprep.subr.bf16.mxu0 0
    %5697 = vmatpush2.bf16.msra.mxu0 %v4176
    %5698 = vmatprep.subr.bf16.mxu0 0
    %5699 = vmatpush2.bf16.msra.mxu0 %v4175
    %5700 = vmatprep.subr.bf16.mxu0 0
    %5701 = vmatpush2.bf16.msra.mxu0 %v4174
    %5702 = vmatprep.mubr.bf16.mxu0 %v670
    %5703 = vmatmul.mubr.bf16.gmra.mxu0 %v669
    %v5704 = vpop.f32.mrf.mxu0
    %v5705 = vadd.f32 %v5665, %v5704
    %v5706 = vpop.f32.mrf.mxu0
    %v5707 = vpop.f32.mrf.mxu0
    %v5708 = vpop.f32.mrf.mxu0
    %5709 = vdwg.mxu0
    %5710 = vmatprep.subr.bf16.mxu0 0
    %5711 = vmatpush1.bf16.msra.mxu0 %v4189
    %5712 = vmatprep.subr.bf16.mxu0 0
    %5713 = vmatpush1.bf16.msra.mxu0 %v4188
    %5714 = vmatprep.subr.bf16.mxu0 0
    %5715 = vmatpush1.bf16.msra.mxu0 %v4187
    %5716 = vmatprep.subr.bf16.mxu0 0
    %5717 = vmatpush1.bf16.msra.mxu0 %v4186
    %5718 = vmatprep.subr.bf16.mxu0 0
    %5719 = vmatpush1.bf16.msra.mxu0 %v4185
    %5720 = vmatprep.subr.bf16.mxu0 0
    %5721 = vmatpush1.bf16.msra.mxu0 %v4184
    %5722 = vmatprep.subr.bf16.mxu0 0
    %5723 = vmatpush1.bf16.msra.mxu0 %v4183
    %5724 = vmatprep.subr.bf16.mxu0 0
    %5725 = vmatpush1.bf16.msra.mxu0 %v4182
    %5726 = vmatprep.subr.bf16.mxu0 0
    %5727 = vmatpush2.bf16.msra.mxu0 %v4197
    %5728 = vmatprep.subr.bf16.mxu0 0
    %5729 = vmatpush2.bf16.msra.mxu0 %v4196
    %5730 = vmatprep.subr.bf16.mxu0 0
    %5731 = vmatpush2.bf16.msra.mxu0 %v4195
    %5732 = vmatprep.subr.bf16.mxu0 0
    %5733 = vmatpush2.bf16.msra.mxu0 %v4194
    %5734 = vmatprep.subr.bf16.mxu0 0
    %5735 = vmatpush2.bf16.msra.mxu0 %v4193
    %5736 = vmatprep.subr.bf16.mxu0 0
    %5737 = vmatpush2.bf16.msra.mxu0 %v4192
    %5738 = vmatprep.subr.bf16.mxu0 0
    %5739 = vmatpush2.bf16.msra.mxu0 %v4191
    %5740 = vmatprep.subr.bf16.mxu0 0
    %5741 = vmatpush2.bf16.msra.mxu0 %v4190
    %5742 = vmatprep.mubr.bf16.mxu0 %v680
    %5743 = vmatmul.mubr.bf16.gmra.mxu0 %v676
    %v5744 = vpop.f32.mrf.mxu0
    %v5745 = vadd.f32 %v5705, %v5744
    %v5746 = vpop.f32.mrf.mxu0
    %v5747 = vpop.f32.mrf.mxu0
    %v5748 = vpop.f32.mrf.mxu0
    %5749 = vdwg.mxu0
    %5750 = vmatprep.subr.bf16.mxu0 0
    %5751 = vmatpush1.bf16.msra.mxu0 %v4205
    %5752 = vmatprep.subr.bf16.mxu0 0
    %5753 = vmatpush1.bf16.msra.mxu0 %v4204
    %5754 = vmatprep.subr.bf16.mxu0 0
    %5755 = vmatpush1.bf16.msra.mxu0 %v4203
    %5756 = vmatprep.subr.bf16.mxu0 0
    %5757 = vmatpush1.bf16.msra.mxu0 %v4202
    %5758 = vmatprep.subr.bf16.mxu0 0
    %5759 = vmatpush1.bf16.msra.mxu0 %v4201
    %5760 = vmatprep.subr.bf16.mxu0 0
    %5761 = vmatpush1.bf16.msra.mxu0 %v4200
    %5762 = vmatprep.subr.bf16.mxu0 0
    %5763 = vmatpush1.bf16.msra.mxu0 %v4199
    %5764 = vmatprep.subr.bf16.mxu0 0
    %5765 = vmatpush1.bf16.msra.mxu0 %v4198
    %5766 = vmatprep.subr.bf16.mxu0 0
    %5767 = vmatpush2.bf16.msra.mxu0 %v4213
    %5768 = vmatprep.subr.bf16.mxu0 0
    %5769 = vmatpush2.bf16.msra.mxu0 %v4212
    %5770 = vmatprep.subr.bf16.mxu0 0
    %5771 = vmatpush2.bf16.msra.mxu0 %v4211
    %5772 = vmatprep.subr.bf16.mxu0 0
    %5773 = vmatpush2.bf16.msra.mxu0 %v4210
    %5774 = vmatprep.subr.bf16.mxu0 0
    %5775 = vmatpush2.bf16.msra.mxu0 %v4209
    %5776 = vmatprep.subr.bf16.mxu0 0
    %5777 = vmatpush2.bf16.msra.mxu0 %v4208
    %5778 = vmatprep.subr.bf16.mxu0 0
    %5779 = vmatpush2.bf16.msra.mxu0 %v4207
    %5780 = vmatprep.subr.bf16.mxu0 0
    %5781 = vmatpush2.bf16.msra.mxu0 %v4206
    %5782 = vmatprep.mubr.bf16.mxu0 %v689
    %5783 = vmatmul.mubr.bf16.gmra.mxu0 %v688
    %v5784 = vpop.f32.mrf.mxu0
    %v5785 = vadd.f32 %v5745, %v5784
    %v5786 = vpop.f32.mrf.mxu0
    %v5787 = vpop.f32.mrf.mxu0
    %v5788 = vpop.f32.mrf.mxu0
    %5789 = vdwg.mxu0
    %5790 = vmatprep.subr.bf16.mxu0 0
    %5791 = vmatpush1.bf16.msra.mxu0 %v4221
    %5792 = vmatprep.subr.bf16.mxu0 0
    %5793 = vmatpush1.bf16.msra.mxu0 %v4220
    %5794 = vmatprep.subr.bf16.mxu0 0
    %5795 = vmatpush1.bf16.msra.mxu0 %v4219
    %5796 = vmatprep.subr.bf16.mxu0 0
    %5797 = vmatpush1.bf16.msra.mxu0 %v4218
    %5798 = vmatprep.subr.bf16.mxu0 0
    %5799 = vmatpush1.bf16.msra.mxu0 %v4217
    %5800 = vmatprep.subr.bf16.mxu0 0
    %5801 = vmatpush1.bf16.msra.mxu0 %v4216
    %5802 = vmatprep.subr.bf16.mxu0 0
    %5803 = vmatpush1.bf16.msra.mxu0 %v4215
    %5804 = vmatprep.subr.bf16.mxu0 0
    %5805 = vmatpush1.bf16.msra.mxu0 %v4214
    %5806 = vmatprep.subr.bf16.mxu0 0
    %5807 = vmatpush2.bf16.msra.mxu0 %v4229
    %5808 = vmatprep.subr.bf16.mxu0 0
    %5809 = vmatpush2.bf16.msra.mxu0 %v4228
    %5810 = vmatprep.subr.bf16.mxu0 0
    %5811 = vmatpush2.bf16.msra.mxu0 %v4227
    %5812 = vmatprep.subr.bf16.mxu0 0
    %5813 = vmatpush2.bf16.msra.mxu0 %v4226
    %5814 = vmatprep.subr.bf16.mxu0 0
    %5815 = vmatpush2.bf16.msra.mxu0 %v4225
    %5816 = vmatprep.subr.bf16.mxu0 0
    %5817 = vmatpush2.bf16.msra.mxu0 %v4224
    %5818 = vmatprep.subr.bf16.mxu0 0
    %5819 = vmatpush2.bf16.msra.mxu0 %v4223
    %5820 = vmatprep.subr.bf16.mxu0 0
    %5821 = vmatpush2.bf16.msra.mxu0 %v4222
    %5822 = vmatprep.mubr.bf16.mxu0 %v699
    %5823 = vmatmul.mubr.bf16.gmra.mxu0 %v695
    %v5824 = vpop.f32.mrf.mxu0
    %v5825 = vadd.f32 %v5785, %v5824
    %v5826 = vpop.f32.mrf.mxu0
    %v5827 = vpop.f32.mrf.mxu0
    %v5828 = vpop.f32.mrf.mxu0
    %5829 = vdwg.mxu0
    %5830 = vmatprep.subr.bf16.mxu0 0
    %5831 = vmatpush1.bf16.msra.mxu0 %v4237
    %5832 = vmatprep.subr.bf16.mxu0 0
    %5833 = vmatpush1.bf16.msra.mxu0 %v4236
    %5834 = vmatprep.subr.bf16.mxu0 0
    %5835 = vmatpush1.bf16.msra.mxu0 %v4235
    %5836 = vmatprep.subr.bf16.mxu0 0
    %5837 = vmatpush1.bf16.msra.mxu0 %v4234
    %5838 = vmatprep.subr.bf16.mxu0 0
    %5839 = vmatpush1.bf16.msra.mxu0 %v4233
    %5840 = vmatprep.subr.bf16.mxu0 0
    %5841 = vmatpush1.bf16.msra.mxu0 %v4232
    %5842 = vmatprep.subr.bf16.mxu0 0
    %5843 = vmatpush1.bf16.msra.mxu0 %v4231
    %5844 = vmatprep.subr.bf16.mxu0 0
    %5845 = vmatpush1.bf16.msra.mxu0 %v4230
    %5846 = vmatprep.subr.bf16.mxu0 0
    %5847 = vmatpush2.bf16.msra.mxu0 %v4245
    %5848 = vmatprep.subr.bf16.mxu0 0
    %5849 = vmatpush2.bf16.msra.mxu0 %v4244
    %5850 = vmatprep.subr.bf16.mxu0 0
    %5851 = vmatpush2.bf16.msra.mxu0 %v4243
    %5852 = vmatprep.subr.bf16.mxu0 0
    %5853 = vmatpush2.bf16.msra.mxu0 %v4242
    %5854 = vmatprep.subr.bf16.mxu0 0
    %5855 = vmatpush2.bf16.msra.mxu0 %v4241
    %5856 = vmatprep.subr.bf16.mxu0 0
    %5857 = vmatpush2.bf16.msra.mxu0 %v4240
    %5858 = vmatprep.subr.bf16.mxu0 0
    %5859 = vmatpush2.bf16.msra.mxu0 %v4239
    %5860 = vmatprep.subr.bf16.mxu0 0
    %5861 = vmatpush2.bf16.msra.mxu0 %v4238
    %5862 = vmatprep.mubr.bf16.mxu0 %v706
    %5863 = vmatmul.mubr.bf16.gmra.mxu0 %v705
    %v5864 = vpop.f32.mrf.mxu0
    %v5865 = vadd.f32 %v5825, %v5864
    %v5866 = vpop.f32.mrf.mxu0
    %v5867 = vpop.f32.mrf.mxu0
    %v5868 = vpop.f32.mrf.mxu0
    %5869 = vdwg.mxu0
    %5870 = vmatprep.subr.bf16.mxu0 0
    %5871 = vmatpush1.bf16.msra.mxu0 %v4253
    %5872 = vmatprep.subr.bf16.mxu0 0
    %5873 = vmatpush1.bf16.msra.mxu0 %v4252
    %5874 = vmatprep.subr.bf16.mxu0 0
    %5875 = vmatpush1.bf16.msra.mxu0 %v4251
    %5876 = vmatprep.subr.bf16.mxu0 0
    %5877 = vmatpush1.bf16.msra.mxu0 %v4250
    %5878 = vmatprep.subr.bf16.mxu0 0
    %5879 = vmatpush1.bf16.msra.mxu0 %v4249
    %5880 = vmatprep.subr.bf16.mxu0 0
    %5881 = vmatpush1.bf16.msra.mxu0 %v4248
    %5882 = vmatprep.subr.bf16.mxu0 0
    %5883 = vmatpush1.bf16.msra.mxu0 %v4247
    %5884 = vmatprep.subr.bf16.mxu0 0
    %5885 = vmatpush1.bf16.msra.mxu0 %v4246
    %5886 = vmatprep.subr.bf16.mxu0 0
    %5887 = vmatpush2.bf16.msra.mxu0 %v4261
    %5888 = vmatprep.subr.bf16.mxu0 0
    %5889 = vmatpush2.bf16.msra.mxu0 %v4260
    %5890 = vmatprep.subr.bf16.mxu0 0
    %5891 = vmatpush2.bf16.msra.mxu0 %v4259
    %5892 = vmatprep.subr.bf16.mxu0 0
    %5893 = vmatpush2.bf16.msra.mxu0 %v4258
    %5894 = vmatprep.subr.bf16.mxu0 0
    %5895 = vmatpush2.bf16.msra.mxu0 %v4257
    %5896 = vmatprep.subr.bf16.mxu0 0
    %5897 = vmatpush2.bf16.msra.mxu0 %v4256
    %5898 = vmatprep.subr.bf16.mxu0 0
    %5899 = vmatpush2.bf16.msra.mxu0 %v4255
    %5900 = vmatprep.subr.bf16.mxu0 0
    %5901 = vmatpush2.bf16.msra.mxu0 %v4254
    %5902 = vmatprep.mubr.bf16.mxu0 %v713
    %5903 = vmatmul.mubr.bf16.gmra.mxu0 %v710
    %v5904 = vpop.f32.mrf.mxu0
    %v5905 = vadd.f32 %v5865, %v5904
    %v5906 = vpop.f32.mrf.mxu0
    %v5907 = vpop.f32.mrf.mxu0
    %v5908 = vpop.f32.mrf.mxu0
    %5909 = vdwg.mxu0
    %5910 = vmatprep.subr.bf16.mxu0 0
    %5911 = vmatpush1.bf16.msra.mxu0 %v4269
    %5912 = vmatprep.subr.bf16.mxu0 0
    %5913 = vmatpush1.bf16.msra.mxu0 %v4268
    %5914 = vmatprep.subr.bf16.mxu0 0
    %5915 = vmatpush1.bf16.msra.mxu0 %v4267
    %5916 = vmatprep.subr.bf16.mxu0 0
    %5917 = vmatpush1.bf16.msra.mxu0 %v4266
    %5918 = vmatprep.subr.bf16.mxu0 0
    %5919 = vmatpush1.bf16.msra.mxu0 %v4265
    %5920 = vmatprep.subr.bf16.mxu0 0
    %5921 = vmatpush1.bf16.msra.mxu0 %v4264
    %5922 = vmatprep.subr.bf16.mxu0 0
    %5923 = vmatpush1.bf16.msra.mxu0 %v4263
    %5924 = vmatprep.subr.bf16.mxu0 0
    %5925 = vmatpush1.bf16.msra.mxu0 %v4262
    %5926 = vmatprep.subr.bf16.mxu0 0
    %5927 = vmatpush2.bf16.msra.mxu0 %v4277
    %5928 = vmatprep.subr.bf16.mxu0 0
    %5929 = vmatpush2.bf16.msra.mxu0 %v4276
    %5930 = vmatprep.subr.bf16.mxu0 0
    %5931 = vmatpush2.bf16.msra.mxu0 %v4275
    %5932 = vmatprep.subr.bf16.mxu0 0
    %5933 = vmatpush2.bf16.msra.mxu0 %v4274
    %5934 = vmatprep.subr.bf16.mxu0 0
    %5935 = vmatpush2.bf16.msra.mxu0 %v4273
    %5936 = vmatprep.subr.bf16.mxu0 0
    %5937 = vmatpush2.bf16.msra.mxu0 %v4272
    %5938 = vmatprep.subr.bf16.mxu0 0
    %5939 = vmatpush2.bf16.msra.mxu0 %v4271
    %5940 = vmatprep.subr.bf16.mxu0 0
    %5941 = vmatpush2.bf16.msra.mxu0 %v4270
    %5942 = vmatprep.mubr.bf16.mxu0 %v723
    %5943 = vmatmul.mubr.bf16.gmra.mxu0 %v722
    %v5944 = vpop.f32.mrf.mxu0
    %v5945 = vadd.f32 %v5905, %v5944
    %v5946 = vpop.f32.mrf.mxu0
    %v5947 = vpop.f32.mrf.mxu0
    %v5948 = vpop.f32.mrf.mxu0
    %5949 = vdwg.mxu0
    %5950 = vmatprep.subr.bf16.mxu0 0
    %5951 = vmatpush1.bf16.msra.mxu0 %v4285
    %5952 = vmatprep.subr.bf16.mxu0 0
    %5953 = vmatpush1.bf16.msra.mxu0 %v4284
    %5954 = vmatprep.subr.bf16.mxu0 0
    %5955 = vmatpush1.bf16.msra.mxu0 %v4283
    %5956 = vmatprep.subr.bf16.mxu0 0
    %5957 = vmatpush1.bf16.msra.mxu0 %v4282
    %5958 = vmatprep.subr.bf16.mxu0 0
    %5959 = vmatpush1.bf16.msra.mxu0 %v4281
    %5960 = vmatprep.subr.bf16.mxu0 0
    %5961 = vmatpush1.bf16.msra.mxu0 %v4280
    %5962 = vmatprep.subr.bf16.mxu0 0
    %5963 = vmatpush1.bf16.msra.mxu0 %v4279
    %5964 = vmatprep.subr.bf16.mxu0 0
    %5965 = vmatpush1.bf16.msra.mxu0 %v4278
    %5966 = vmatprep.subr.bf16.mxu0 0
    %5967 = vmatpush2.bf16.msra.mxu0 %v4293
    %5968 = vmatprep.subr.bf16.mxu0 0
    %5969 = vmatpush2.bf16.msra.mxu0 %v4292
    %5970 = vmatprep.subr.bf16.mxu0 0
    %5971 = vmatpush2.bf16.msra.mxu0 %v4291
    %5972 = vmatprep.subr.bf16.mxu0 0
    %5973 = vmatpush2.bf16.msra.mxu0 %v4290
    %5974 = vmatprep.subr.bf16.mxu0 0
    %5975 = vmatpush2.bf16.msra.mxu0 %v4289
    %5976 = vmatprep.subr.bf16.mxu0 0
    %5977 = vmatpush2.bf16.msra.mxu0 %v4288
    %5978 = vmatprep.subr.bf16.mxu0 0
    %5979 = vmatpush2.bf16.msra.mxu0 %v4287
    %5980 = vmatprep.subr.bf16.mxu0 0
    %5981 = vmatpush2.bf16.msra.mxu0 %v4286
    %5982 = vmatprep.mubr.bf16.mxu0 %v733
    %5983 = vmatmul.mubr.bf16.gmra.mxu0 %v729
    %v5984 = vpop.f32.mrf.mxu0
    %v5985 = vadd.f32 %v5945, %v5984
    %v5986 = vpop.f32.mrf.mxu0
    %v5987 = vpop.f32.mrf.mxu0
    %v5988 = vpop.f32.mrf.mxu0
    %5989 = vdwg.mxu0
    %5990 = vmatprep.subr.bf16.mxu0 0
    %5991 = vmatpush1.bf16.msra.mxu0 %v4301
    %5992 = vmatprep.subr.bf16.mxu0 0
    %5993 = vmatpush1.bf16.msra.mxu0 %v4300
    %5994 = vmatprep.subr.bf16.mxu0 0
    %5995 = vmatpush1.bf16.msra.mxu0 %v4299
    %5996 = vmatprep.subr.bf16.mxu0 0
    %5997 = vmatpush1.bf16.msra.mxu0 %v4298
    %5998 = vmatprep.subr.bf16.mxu0 0
    %5999 = vmatpush1.bf16.msra.mxu0 %v4297
    %6000 = vmatprep.subr.bf16.mxu0 0
    %6001 = vmatpush1.bf16.msra.mxu0 %v4296
    %6002 = vmatprep.subr.bf16.mxu0 0
    %6003 = vmatpush1.bf16.msra.mxu0 %v4295
    %6004 = vmatprep.subr.bf16.mxu0 0
    %6005 = vmatpush1.bf16.msra.mxu0 %v4294
    %6006 = vmatprep.subr.bf16.mxu0 0
    %6007 = vmatpush2.bf16.msra.mxu0 %v4309
    %6008 = vmatprep.subr.bf16.mxu0 0
    %6009 = vmatpush2.bf16.msra.mxu0 %v4308
    %6010 = vmatprep.subr.bf16.mxu0 0
    %6011 = vmatpush2.bf16.msra.mxu0 %v4307
    %6012 = vmatprep.subr.bf16.mxu0 0
    %6013 = vmatpush2.bf16.msra.mxu0 %v4306
    %6014 = vmatprep.subr.bf16.mxu0 0
    %6015 = vmatpush2.bf16.msra.mxu0 %v4305
    %6016 = vmatprep.subr.bf16.mxu0 0
    %6017 = vmatpush2.bf16.msra.mxu0 %v4304
    %6018 = vmatprep.subr.bf16.mxu0 0
    %6019 = vmatpush2.bf16.msra.mxu0 %v4303
    %6020 = vmatprep.subr.bf16.mxu0 0
    %6021 = vmatpush2.bf16.msra.mxu0 %v4302
    %6022 = vmatprep.mubr.bf16.mxu0 %v742
    %6023 = vmatmul.mubr.bf16.gmra.mxu0 %v741
    %v6024 = vpop.f32.mrf.mxu0
    %v6025 = vadd.f32 %v5985, %v6024
    %v6026 = vpop.f32.mrf.mxu0
    %v6027 = vpop.f32.mrf.mxu0
    %v6028 = vpop.f32.mrf.mxu0
    %6029 = vdwg.mxu0
    %6030 = vmatprep.subr.bf16.mxu0 0
    %6031 = vmatpush1.bf16.msra.mxu0 %v4317
    %6032 = vmatprep.subr.bf16.mxu0 0
    %6033 = vmatpush1.bf16.msra.mxu0 %v4316
    %6034 = vmatprep.subr.bf16.mxu0 0
    %6035 = vmatpush1.bf16.msra.mxu0 %v4315
    %6036 = vmatprep.subr.bf16.mxu0 0
    %6037 = vmatpush1.bf16.msra.mxu0 %v4314
    %6038 = vmatprep.subr.bf16.mxu0 0
    %6039 = vmatpush1.bf16.msra.mxu0 %v4313
    %6040 = vmatprep.subr.bf16.mxu0 0
    %6041 = vmatpush1.bf16.msra.mxu0 %v4312
    %6042 = vmatprep.subr.bf16.mxu0 0
    %6043 = vmatpush1.bf16.msra.mxu0 %v4311
    %6044 = vmatprep.subr.bf16.mxu0 0
    %6045 = vmatpush1.bf16.msra.mxu0 %v4310
    %6046 = vmatprep.subr.bf16.mxu0 0
    %6047 = vmatpush2.bf16.msra.mxu0 %v4325
    %6048 = vmatprep.subr.bf16.mxu0 0
    %6049 = vmatpush2.bf16.msra.mxu0 %v4324
    %6050 = vmatprep.subr.bf16.mxu0 0
    %6051 = vmatpush2.bf16.msra.mxu0 %v4323
    %6052 = vmatprep.subr.bf16.mxu0 0
    %6053 = vmatpush2.bf16.msra.mxu0 %v4322
    %6054 = vmatprep.subr.bf16.mxu0 0
    %6055 = vmatpush2.bf16.msra.mxu0 %v4321
    %6056 = vmatprep.subr.bf16.mxu0 0
    %6057 = vmatpush2.bf16.msra.mxu0 %v4320
    %6058 = vmatprep.subr.bf16.mxu0 0
    %6059 = vmatpush2.bf16.msra.mxu0 %v4319
    %6060 = vmatprep.subr.bf16.mxu0 0
    %6061 = vmatpush2.bf16.msra.mxu0 %v4318
    %6062 = vmatprep.mubr.bf16.mxu0 %v752
    %6063 = vmatmul.mubr.bf16.gmra.mxu0 %v748
    %v6064 = vpop.f32.mrf.mxu0
    %v6065 = vadd.f32 %v6025, %v6064
    %v6066 = vpop.f32.mrf.mxu0
    %v6067 = vpop.f32.mrf.mxu0
    %v6068 = vpop.f32.mrf.mxu0
    %6069 = vdwg.mxu0
    %6070 = vmatprep.subr.bf16.mxu0 0
    %6071 = vmatpush1.bf16.msra.mxu0 %v4333
    %6072 = vmatprep.subr.bf16.mxu0 0
    %6073 = vmatpush1.bf16.msra.mxu0 %v4332
    %6074 = vmatprep.subr.bf16.mxu0 0
    %6075 = vmatpush1.bf16.msra.mxu0 %v4331
    %6076 = vmatprep.subr.bf16.mxu0 0
    %6077 = vmatpush1.bf16.msra.mxu0 %v4330
    %6078 = vmatprep.subr.bf16.mxu0 0
    %6079 = vmatpush1.bf16.msra.mxu0 %v4329
    %6080 = vmatprep.subr.bf16.mxu0 0
    %6081 = vmatpush1.bf16.msra.mxu0 %v4328
    %6082 = vmatprep.subr.bf16.mxu0 0
    %6083 = vmatpush1.bf16.msra.mxu0 %v4327
    %6084 = vmatprep.subr.bf16.mxu0 0
    %6085 = vmatpush1.bf16.msra.mxu0 %v4326
    %6086 = vmatprep.subr.bf16.mxu0 0
    %6087 = vmatpush2.bf16.msra.mxu0 %v4341
    %6088 = vmatprep.subr.bf16.mxu0 0
    %6089 = vmatpush2.bf16.msra.mxu0 %v4340
    %6090 = vmatprep.subr.bf16.mxu0 0
    %6091 = vmatpush2.bf16.msra.mxu0 %v4339
    %6092 = vmatprep.subr.bf16.mxu0 0
    %6093 = vmatpush2.bf16.msra.mxu0 %v4338
    %6094 = vmatprep.subr.bf16.mxu0 0
    %6095 = vmatpush2.bf16.msra.mxu0 %v4337
    %6096 = vmatprep.subr.bf16.mxu0 0
    %6097 = vmatpush2.bf16.msra.mxu0 %v4336
    %6098 = vmatprep.subr.bf16.mxu0 0
    %6099 = vmatpush2.bf16.msra.mxu0 %v4335
    %6100 = vmatprep.subr.bf16.mxu0 0
    %6101 = vmatpush2.bf16.msra.mxu0 %v4334
    %6102 = vmatprep.mubr.bf16.mxu0 %v761
    %6103 = vmatmul.mubr.bf16.gmra.mxu0 %v760
    %v6104 = vpop.f32.mrf.mxu0
    %v6105 = vadd.f32 %v6065, %v6104
    %v6106 = vpop.f32.mrf.mxu0
    %v6107 = vpop.f32.mrf.mxu0
    %v6108 = vpop.f32.mrf.mxu0
    %6109 = vdwg.mxu0
    %6110 = vmatprep.subr.bf16.mxu0 0
    %6111 = vmatpush1.bf16.msra.mxu0 %v4349
    %6112 = vmatprep.subr.bf16.mxu0 0
    %6113 = vmatpush1.bf16.msra.mxu0 %v4348
    %6114 = vmatprep.subr.bf16.mxu0 0
    %6115 = vmatpush1.bf16.msra.mxu0 %v4347
    %6116 = vmatprep.subr.bf16.mxu0 0
    %6117 = vmatpush1.bf16.msra.mxu0 %v4346
    %6118 = vmatprep.subr.bf16.mxu0 0
    %6119 = vmatpush1.bf16.msra.mxu0 %v4345
    %6120 = vmatprep.subr.bf16.mxu0 0
    %6121 = vmatpush1.bf16.msra.mxu0 %v4344
    %6122 = vmatprep.subr.bf16.mxu0 0
    %6123 = vmatpush1.bf16.msra.mxu0 %v4343
    %6124 = vmatprep.subr.bf16.mxu0 0
    %6125 = vmatpush1.bf16.msra.mxu0 %v4342
    %6126 = vmatprep.subr.bf16.mxu0 0
    %6127 = vmatpush2.bf16.msra.mxu0 %v4357
    %6128 = vmatprep.subr.bf16.mxu0 0
    %6129 = vmatpush2.bf16.msra.mxu0 %v4356
    %6130 = vmatprep.subr.bf16.mxu0 0
    %6131 = vmatpush2.bf16.msra.mxu0 %v4355
    %6132 = vmatprep.subr.bf16.mxu0 0
    %6133 = vmatpush2.bf16.msra.mxu0 %v4354
    %6134 = vmatprep.subr.bf16.mxu0 0
    %6135 = vmatpush2.bf16.msra.mxu0 %v4353
    %6136 = vmatprep.subr.bf16.mxu0 0
    %6137 = vmatpush2.bf16.msra.mxu0 %v4352
    %6138 = vmatprep.subr.bf16.mxu0 0
    %6139 = vmatpush2.bf16.msra.mxu0 %v4351
    %6140 = vmatprep.subr.bf16.mxu0 0
    %6141 = vmatpush2.bf16.msra.mxu0 %v4350
    %6142 = vmatprep.mubr.bf16.mxu0 %v771
    %6143 = vmatmul.mubr.bf16.gmra.mxu0 %v767
    %v6144 = vpop.f32.mrf.mxu0
    %v6145 = vadd.f32 %v6105, %v6144
    %v6146 = vpop.f32.mrf.mxu0
    %v6147 = vpop.f32.mrf.mxu0
    %v6148 = vpop.f32.mrf.mxu0
    %6149 = vdwg.mxu0
    %vm6150 = vcmask 73728
    %6151 = vst.msk [vmem:[#allocation3] sm:$0x1] %vm6150, %v6145
    %v6152 = vld [vmem:[#allocation2 + $0x8] sm:$0x11]
    %v6153 = vld [vmem:[#allocation2 + $0x8] sm:$0x22]
    %v6154 = vld [vmem:[#allocation2 + $0x8] sm:$0x44]
    %v6155 = vld [vmem:[#allocation2 + $0x8] sm:$0x88]
    %v6156 = vld [vmem:[#allocation2 + $0x18] sm:$0x11]
    %v6157 = vld [vmem:[#allocation2 + $0x18] sm:$0x22]
    %v6158 = vld [vmem:[#allocation2 + $0x18] sm:$0x44]
    %v6159 = vld [vmem:[#allocation2 + $0x18] sm:$0x88]
    %v6160 = vld [vmem:[#allocation2 + $0x28] sm:$0x11]
    %v6161 = vld [vmem:[#allocation2 + $0x28] sm:$0x22]
    %v6162 = vld [vmem:[#allocation2 + $0x28] sm:$0x44]
    %v6163 = vld [vmem:[#allocation2 + $0x28] sm:$0x88]
    %v6164 = vld [vmem:[#allocation2 + $0x38] sm:$0x11]
    %v6165 = vld [vmem:[#allocation2 + $0x38] sm:$0x22]
    %v6166 = vld [vmem:[#allocation2 + $0x38] sm:$0x44]
    %v6167 = vld [vmem:[#allocation2 + $0x38] sm:$0x88]
    %v6169 = vunpack.c.l.b16 %v6152
    %v6170 = vunpack.c.h.b16 %v6152
    %v6171 = vpack.c.b16 %v6169, %v6169
    %v6172 = vpack.c.b16 %v6170, %v6170
    %v6176 = vshrl.u32 %v6171, 16
    %v6179 = vshrl.u32 %v6172, 16
    %v6184 = vunpack.c.l.b16 %v6153
    %v6185 = vunpack.c.h.b16 %v6153
    %v6186 = vpack.c.b16 %v6184, %v6184
    %v6187 = vpack.c.b16 %v6185, %v6185
    %v6188 = vrot.slane %v6186, 1
    %v6189 = vrot.slane %v6187, 1
    %v6193 = vshrl.u32 %v6186, 16
    %v6195 = vrot.slane %v6193, 1
    %v6197 = vshrl.u32 %v6187, 16
    %v6199 = vrot.slane %v6197, 1
    %v6203 = vunpack.c.l.b16 %v6154
    %v6204 = vunpack.c.h.b16 %v6154
    %v6205 = vpack.c.b16 %v6203, %v6203
    %v6206 = vpack.c.b16 %v6204, %v6204
    %v6207 = vrot.slane %v6205, 2
    %v6208 = vrot.slane %v6206, 2
    %v6212 = vshrl.u32 %v6205, 16
    %v6214 = vrot.slane %v6212, 2
    %v6216 = vshrl.u32 %v6206, 16
    %v6218 = vrot.slane %v6216, 2
    %v6222 = vunpack.c.l.b16 %v6155
    %v6223 = vunpack.c.h.b16 %v6155
    %v6224 = vpack.c.b16 %v6222, %v6222
    %v6225 = vpack.c.b16 %v6223, %v6223
    %v6226 = vrot.slane %v6224, 3
    %v6227 = vrot.slane %v6225, 3
    %v6231 = vshrl.u32 %v6224, 16
    %v6233 = vrot.slane %v6231, 3
    %v6235 = vshrl.u32 %v6225, 16
    %v6237 = vrot.slane %v6235, 3
    %v6241 = vunpack.c.l.b16 %v6156
    %v6242 = vunpack.c.h.b16 %v6156
    %v6243 = vpack.c.b16 %v6241, %v6241
    %v6244 = vpack.c.b16 %v6242, %v6242
    %v6248 = vshrl.u32 %v6243, 16
    %v6251 = vshrl.u32 %v6244, 16
    %v6256 = vunpack.c.l.b16 %v6157
    %v6257 = vunpack.c.h.b16 %v6157
    %v6258 = vpack.c.b16 %v6256, %v6256
    %v6259 = vpack.c.b16 %v6257, %v6257
    %v6260 = vrot.slane %v6258, 1
    %v6261 = vrot.slane %v6259, 1
    %v6265 = vshrl.u32 %v6258, 16
    %v6267 = vrot.slane %v6265, 1
    %v6269 = vshrl.u32 %v6259, 16
    %v6271 = vrot.slane %v6269, 1
    %v6275 = vunpack.c.l.b16 %v6158
    %v6276 = vunpack.c.h.b16 %v6158
    %v6277 = vpack.c.b16 %v6275, %v6275
    %v6278 = vpack.c.b16 %v6276, %v6276
    %v6279 = vrot.slane %v6277, 2
    %v6280 = vrot.slane %v6278, 2
    %v6284 = vshrl.u32 %v6277, 16
    %v6286 = vrot.slane %v6284, 2
    %v6288 = vshrl.u32 %v6278, 16
    %v6290 = vrot.slane %v6288, 2
    %v6294 = vunpack.c.l.b16 %v6159
    %v6295 = vunpack.c.h.b16 %v6159
    %v6296 = vpack.c.b16 %v6294, %v6294
    %v6297 = vpack.c.b16 %v6295, %v6295
    %v6298 = vrot.slane %v6296, 3
    %v6299 = vrot.slane %v6297, 3
    %v6303 = vshrl.u32 %v6296, 16
    %v6305 = vrot.slane %v6303, 3
    %v6307 = vshrl.u32 %v6297, 16
    %v6309 = vrot.slane %v6307, 3
    %v6313 = vunpack.c.l.b16 %v6160
    %v6314 = vunpack.c.h.b16 %v6160
    %v6315 = vpack.c.b16 %v6313, %v6313
    %v6316 = vpack.c.b16 %v6314, %v6314
    %v6320 = vshrl.u32 %v6315, 16
    %v6323 = vshrl.u32 %v6316, 16
    %v6328 = vunpack.c.l.b16 %v6161
    %v6329 = vunpack.c.h.b16 %v6161
    %v6330 = vpack.c.b16 %v6328, %v6328
    %v6331 = vpack.c.b16 %v6329, %v6329
    %v6332 = vrot.slane %v6330, 1
    %v6333 = vrot.slane %v6331, 1
    %v6337 = vshrl.u32 %v6330, 16
    %v6339 = vrot.slane %v6337, 1
    %v6341 = vshrl.u32 %v6331, 16
    %v6343 = vrot.slane %v6341, 1
    %v6347 = vunpack.c.l.b16 %v6162
    %v6348 = vunpack.c.h.b16 %v6162
    %v6349 = vpack.c.b16 %v6347, %v6347
    %v6350 = vpack.c.b16 %v6348, %v6348
    %v6351 = vrot.slane %v6349, 2
    %v6352 = vrot.slane %v6350, 2
    %v6356 = vshrl.u32 %v6349, 16
    %v6358 = vrot.slane %v6356, 2
    %v6360 = vshrl.u32 %v6350, 16
    %v6362 = vrot.slane %v6360, 2
    %v6366 = vunpack.c.l.b16 %v6163
    %v6367 = vunpack.c.h.b16 %v6163
    %v6368 = vpack.c.b16 %v6366, %v6366
    %v6369 = vpack.c.b16 %v6367, %v6367
    %v6370 = vrot.slane %v6368, 3
    %v6371 = vrot.slane %v6369, 3
    %v6375 = vshrl.u32 %v6368, 16
    %v6377 = vrot.slane %v6375, 3
    %v6379 = vshrl.u32 %v6369, 16
    %v6381 = vrot.slane %v6379, 3
    %v6385 = vunpack.c.l.b16 %v6164
    %v6386 = vunpack.c.h.b16 %v6164
    %v6387 = vpack.c.b16 %v6385, %v6385
    %v6388 = vpack.c.b16 %v6386, %v6386
    %v6392 = vshrl.u32 %v6387, 16
    %v6395 = vshrl.u32 %v6388, 16
    %v6400 = vunpack.c.l.b16 %v6165
    %v6401 = vunpack.c.h.b16 %v6165
    %v6402 = vpack.c.b16 %v6400, %v6400
    %v6403 = vpack.c.b16 %v6401, %v6401
    %v6404 = vrot.slane %v6402, 1
    %v6405 = vrot.slane %v6403, 1
    %v6409 = vshrl.u32 %v6402, 16
    %v6411 = vrot.slane %v6409, 1
    %v6413 = vshrl.u32 %v6403, 16
    %v6415 = vrot.slane %v6413, 1
    %v6419 = vunpack.c.l.b16 %v6166
    %v6420 = vunpack.c.h.b16 %v6166
    %v6421 = vpack.c.b16 %v6419, %v6419
    %v6422 = vpack.c.b16 %v6420, %v6420
    %v6423 = vrot.slane %v6421, 2
    %v6424 = vrot.slane %v6422, 2
    %v6428 = vshrl.u32 %v6421, 16
    %v6430 = vrot.slane %v6428, 2
    %v6432 = vshrl.u32 %v6422, 16
    %v6434 = vrot.slane %v6432, 2
    %v6438 = vunpack.c.l.b16 %v6167
    %v6439 = vunpack.c.h.b16 %v6167
    %v6440 = vpack.c.b16 %v6438, %v6438
    %v6441 = vpack.c.b16 %v6439, %v6439
    %v6442 = vrot.slane %v6440, 3
    %v6443 = vrot.slane %v6441, 3
    %v6447 = vshrl.u32 %v6440, 16
    %v6449 = vrot.slane %v6447, 3
    %v6451 = vshrl.u32 %v6441, 16
    %v6453 = vrot.slane %v6451, 3
    %v6456 = vld [vmem:[%s4] sm:$0xf]
    %v6457 = vld [vmem:[%s4 + $0x4] sm:$0xf]
    %v6458 = vld [vmem:[%s4 + $0x8] sm:$0xf]
    %v6459 = vld [vmem:[%s4 + $0xc] sm:$0xf]
    %v6460 = vld [vmem:[%s4 + $0x10] sm:$0xf]
    %v6461 = vld [vmem:[%s4 + $0x14] sm:$0xf]
    %v6462 = vld [vmem:[%s4 + $0x18] sm:$0xf]
    %v6463 = vld [vmem:[%s4 + $0x1c] sm:$0xf]
    %v6464 = vld [vmem:[%s4 + $0x20] sm:$0xf]
    %v6465 = vld [vmem:[%s4 + $0x24] sm:$0xf]
    %v6466 = vld [vmem:[%s4 + $0x28] sm:$0xf]
    %v6467 = vld [vmem:[%s4 + $0x2c] sm:$0xf]
    %v6468 = vld [vmem:[%s4 + $0x30] sm:$0xf]
    %v6469 = vld [vmem:[%s4 + $0x34] sm:$0xf]
    %v6470 = vld [vmem:[%s4 + $0x38] sm:$0xf]
    %v6471 = vld [vmem:[%s4 + $0x3c] sm:$0xf]
    %v6472 = vld [vmem:[%s4 + $0x40] sm:$0xf]
    %v6473 = vld [vmem:[%s4 + $0x44] sm:$0xf]
    %v6474 = vld [vmem:[%s4 + $0x48] sm:$0xf]
    %v6475 = vld [vmem:[%s4 + $0x4c] sm:$0xf]
    %v6476 = vld [vmem:[%s4 + $0x50] sm:$0xf]
    %v6477 = vld [vmem:[%s4 + $0x54] sm:$0xf]
    %v6478 = vld [vmem:[%s4 + $0x58] sm:$0xf]
    %v6479 = vld [vmem:[%s4 + $0x5c] sm:$0xf]
    %v6480 = vld [vmem:[%s4 + $0x60] sm:$0xf]
    %v6481 = vld [vmem:[%s4 + $0x64] sm:$0xf]
    %v6482 = vld [vmem:[%s4 + $0x68] sm:$0xf]
    %v6483 = vld [vmem:[%s4 + $0x6c] sm:$0xf]
    %v6484 = vld [vmem:[%s4 + $0x70] sm:$0xf]
    %v6485 = vld [vmem:[%s4 + $0x74] sm:$0xf]
    %v6486 = vld [vmem:[%s4 + $0x78] sm:$0xf]
    %v6487 = vld [vmem:[%s4 + $0x7c] sm:$0xf]
    %v6488 = vld [vmem:[%s4 + $0x80] sm:$0xf]
    %v6489 = vld [vmem:[%s4 + $0x84] sm:$0xf]
    %v6490 = vld [vmem:[%s4 + $0x88] sm:$0xf]
    %v6491 = vld [vmem:[%s4 + $0x8c] sm:$0xf]
    %v6492 = vld [vmem:[%s4 + $0x90] sm:$0xf]
    %v6493 = vld [vmem:[%s4 + $0x94] sm:$0xf]
    %v6494 = vld [vmem:[%s4 + $0x98] sm:$0xf]
    %v6495 = vld [vmem:[%s4 + $0x9c] sm:$0xf]
    %v6496 = vld [vmem:[%s4 + $0xa0] sm:$0xf]
    %v6497 = vld [vmem:[%s4 + $0xa4] sm:$0xf]
    %v6498 = vld [vmem:[%s4 + $0xa8] sm:$0xf]
    %v6499 = vld [vmem:[%s4 + $0xac] sm:$0xf]
    %v6500 = vld [vmem:[%s4 + $0xb0] sm:$0xf]
    %v6501 = vld [vmem:[%s4 + $0xb4] sm:$0xf]
    %v6502 = vld [vmem:[%s4 + $0xb8] sm:$0xf]
    %v6503 = vld [vmem:[%s4 + $0xbc] sm:$0xf]
    %v6504 = vld [vmem:[%s4 + $0xc0] sm:$0xf]
    %v6505 = vld [vmem:[%s4 + $0xc4] sm:$0xf]
    %v6506 = vld [vmem:[%s4 + $0xc8] sm:$0xf]
    %v6507 = vld [vmem:[%s4 + $0xcc] sm:$0xf]
    %v6508 = vld [vmem:[%s4 + $0xd0] sm:$0xf]
    %v6509 = vld [vmem:[%s4 + $0xd4] sm:$0xf]
    %v6510 = vld [vmem:[%s4 + $0xd8] sm:$0xf]
    %v6511 = vld [vmem:[%s4 + $0xdc] sm:$0xf]
    %v6512 = vld [vmem:[%s4 + $0xe0] sm:$0xf]
    %v6513 = vld [vmem:[%s4 + $0xe4] sm:$0xf]
    %v6514 = vld [vmem:[%s4 + $0xe8] sm:$0xf]
    %v6515 = vld [vmem:[%s4 + $0xec] sm:$0xf]
    %v6516 = vld [vmem:[%s4 + $0xf0] sm:$0xf]
    %v6517 = vld [vmem:[%s4 + $0xf4] sm:$0xf]
    %v6518 = vld [vmem:[%s4 + $0xf8] sm:$0xf]
    %v6519 = vld [vmem:[%s4 + $0xfc] sm:$0xf]
    %v6520 = vld [vmem:[%s4 + $0x100] sm:$0xf]
    %v6521 = vld [vmem:[%s4 + $0x104] sm:$0xf]
    %v6522 = vld [vmem:[%s4 + $0x108] sm:$0xf]
    %v6523 = vld [vmem:[%s4 + $0x10c] sm:$0xf]
    %v6524 = vld [vmem:[%s4 + $0x110] sm:$0xf]
    %v6525 = vld [vmem:[%s4 + $0x114] sm:$0xf]
    %v6526 = vld [vmem:[%s4 + $0x118] sm:$0xf]
    %v6527 = vld [vmem:[%s4 + $0x11c] sm:$0xf]
    %v6528 = vld [vmem:[%s4 + $0x120] sm:$0xf]
    %v6529 = vld [vmem:[%s4 + $0x124] sm:$0xf]
    %v6530 = vld [vmem:[%s4 + $0x128] sm:$0xf]
    %v6531 = vld [vmem:[%s4 + $0x12c] sm:$0xf]
    %v6532 = vld [vmem:[%s4 + $0x130] sm:$0xf]
    %v6533 = vld [vmem:[%s4 + $0x134] sm:$0xf]
    %v6534 = vld [vmem:[%s4 + $0x138] sm:$0xf]
    %v6535 = vld [vmem:[%s4 + $0x13c] sm:$0xf]
    %v6536 = vld [vmem:[%s4 + $0x140] sm:$0xf]
    %v6537 = vld [vmem:[%s4 + $0x144] sm:$0xf]
    %v6538 = vld [vmem:[%s4 + $0x148] sm:$0xf]
    %v6539 = vld [vmem:[%s4 + $0x14c] sm:$0xf]
    %v6540 = vld [vmem:[%s4 + $0x150] sm:$0xf]
    %v6541 = vld [vmem:[%s4 + $0x154] sm:$0xf]
    %v6542 = vld [vmem:[%s4 + $0x158] sm:$0xf]
    %v6543 = vld [vmem:[%s4 + $0x15c] sm:$0xf]
    %v6544 = vld [vmem:[%s4 + $0x160] sm:$0xf]
    %v6545 = vld [vmem:[%s4 + $0x164] sm:$0xf]
    %v6546 = vld [vmem:[%s4 + $0x168] sm:$0xf]
    %v6547 = vld [vmem:[%s4 + $0x16c] sm:$0xf]
    %v6548 = vld [vmem:[%s4 + $0x170] sm:$0xf]
    %v6549 = vld [vmem:[%s4 + $0x174] sm:$0xf]
    %v6550 = vld [vmem:[%s4 + $0x178] sm:$0xf]
    %v6551 = vld [vmem:[%s4 + $0x17c] sm:$0xf]
    %v6552 = vld [vmem:[%s4 + $0x180] sm:$0xf]
    %v6553 = vld [vmem:[%s4 + $0x184] sm:$0xf]
    %v6554 = vld [vmem:[%s4 + $0x188] sm:$0xf]
    %v6555 = vld [vmem:[%s4 + $0x18c] sm:$0xf]
    %v6556 = vld [vmem:[%s4 + $0x190] sm:$0xf]
    %v6557 = vld [vmem:[%s4 + $0x194] sm:$0xf]
    %v6558 = vld [vmem:[%s4 + $0x198] sm:$0xf]
    %v6559 = vld [vmem:[%s4 + $0x19c] sm:$0xf]
    %v6560 = vld [vmem:[%s4 + $0x1a0] sm:$0xf]
    %v6561 = vld [vmem:[%s4 + $0x1a4] sm:$0xf]
    %v6562 = vld [vmem:[%s4 + $0x1a8] sm:$0xf]
    %v6563 = vld [vmem:[%s4 + $0x1ac] sm:$0xf]
    %v6564 = vld [vmem:[%s4 + $0x1b0] sm:$0xf]
    %v6565 = vld [vmem:[%s4 + $0x1b4] sm:$0xf]
    %v6566 = vld [vmem:[%s4 + $0x1b8] sm:$0xf]
    %v6567 = vld [vmem:[%s4 + $0x1bc] sm:$0xf]
    %v6568 = vld [vmem:[%s4 + $0x1c0] sm:$0xf]
    %v6569 = vld [vmem:[%s4 + $0x1c4] sm:$0xf]
    %v6570 = vld [vmem:[%s4 + $0x1c8] sm:$0xf]
    %v6571 = vld [vmem:[%s4 + $0x1cc] sm:$0xf]
    %v6572 = vld [vmem:[%s4 + $0x1d0] sm:$0xf]
    %v6573 = vld [vmem:[%s4 + $0x1d4] sm:$0xf]
    %v6574 = vld [vmem:[%s4 + $0x1d8] sm:$0xf]
    %v6575 = vld [vmem:[%s4 + $0x1dc] sm:$0xf]
    %v6576 = vld [vmem:[%s4 + $0x1e0] sm:$0xf]
    %v6577 = vld [vmem:[%s4 + $0x1e4] sm:$0xf]
    %v6578 = vld [vmem:[%s4 + $0x1e8] sm:$0xf]
    %v6579 = vld [vmem:[%s4 + $0x1ec] sm:$0xf]
    %v6580 = vld [vmem:[%s4 + $0x1f0] sm:$0xf]
    %v6581 = vld [vmem:[%s4 + $0x1f4] sm:$0xf]
    %v6582 = vld [vmem:[%s4 + $0x1f8] sm:$0xf]
    %v6583 = vld [vmem:[%s4 + $0x1fc] sm:$0xf]
    %v6584 = vld [vmem:[%s4 + $0x200] sm:$0xf]
    %v6585 = vld [vmem:[%s4 + $0x204] sm:$0xf]
    %v6586 = vld [vmem:[%s4 + $0x208] sm:$0xf]
    %v6587 = vld [vmem:[%s4 + $0x20c] sm:$0xf]
    %v6588 = vld [vmem:[%s4 + $0x210] sm:$0xf]
    %v6589 = vld [vmem:[%s4 + $0x214] sm:$0xf]
    %v6590 = vld [vmem:[%s4 + $0x218] sm:$0xf]
    %v6591 = vld [vmem:[%s4 + $0x21c] sm:$0xf]
    %v6592 = vld [vmem:[%s4 + $0x220] sm:$0xf]
    %v6593 = vld [vmem:[%s4 + $0x224] sm:$0xf]
    %v6594 = vld [vmem:[%s4 + $0x228] sm:$0xf]
    %v6595 = vld [vmem:[%s4 + $0x22c] sm:$0xf]
    %v6596 = vld [vmem:[%s4 + $0x230] sm:$0xf]
    %v6597 = vld [vmem:[%s4 + $0x234] sm:$0xf]
    %v6598 = vld [vmem:[%s4 + $0x238] sm:$0xf]
    %v6599 = vld [vmem:[%s4 + $0x23c] sm:$0xf]
    %v6600 = vld [vmem:[%s4 + $0x240] sm:$0xf]
    %v6601 = vld [vmem:[%s4 + $0x244] sm:$0xf]
    %v6602 = vld [vmem:[%s4 + $0x248] sm:$0xf]
    %v6603 = vld [vmem:[%s4 + $0x24c] sm:$0xf]
    %v6604 = vld [vmem:[%s4 + $0x250] sm:$0xf]
    %v6605 = vld [vmem:[%s4 + $0x254] sm:$0xf]
    %v6606 = vld [vmem:[%s4 + $0x258] sm:$0xf]
    %v6607 = vld [vmem:[%s4 + $0x25c] sm:$0xf]
    %v6608 = vld [vmem:[%s4 + $0x260] sm:$0xf]
    %v6609 = vld [vmem:[%s4 + $0x264] sm:$0xf]
    %v6610 = vld [vmem:[%s4 + $0x268] sm:$0xf]
    %v6611 = vld [vmem:[%s4 + $0x26c] sm:$0xf]
    %v6612 = vld [vmem:[%s4 + $0x270] sm:$0xf]
    %v6613 = vld [vmem:[%s4 + $0x274] sm:$0xf]
    %v6614 = vld [vmem:[%s4 + $0x278] sm:$0xf]
    %v6615 = vld [vmem:[%s4 + $0x27c] sm:$0xf]
    %v6616 = vld [vmem:[%s4 + $0x280] sm:$0xf]
    %v6617 = vld [vmem:[%s4 + $0x284] sm:$0xf]
    %v6618 = vld [vmem:[%s4 + $0x288] sm:$0xf]
    %v6619 = vld [vmem:[%s4 + $0x28c] sm:$0xf]
    %v6620 = vld [vmem:[%s4 + $0x290] sm:$0xf]
    %v6621 = vld [vmem:[%s4 + $0x294] sm:$0xf]
    %v6622 = vld [vmem:[%s4 + $0x298] sm:$0xf]
    %v6623 = vld [vmem:[%s4 + $0x29c] sm:$0xf]
    %v6624 = vld [vmem:[%s4 + $0x2a0] sm:$0xf]
    %v6625 = vld [vmem:[%s4 + $0x2a4] sm:$0xf]
    %v6626 = vld [vmem:[%s4 + $0x2a8] sm:$0xf]
    %v6627 = vld [vmem:[%s4 + $0x2ac] sm:$0xf]
    %v6628 = vld [vmem:[%s4 + $0x2b0] sm:$0xf]
    %v6629 = vld [vmem:[%s4 + $0x2b4] sm:$0xf]
    %v6630 = vld [vmem:[%s4 + $0x2b8] sm:$0xf]
    %v6631 = vld [vmem:[%s4 + $0x2bc] sm:$0xf]
    %v6632 = vld [vmem:[%s4 + $0x2c0] sm:$0xf]
    %v6633 = vld [vmem:[%s4 + $0x2c4] sm:$0xf]
    %v6634 = vld [vmem:[%s4 + $0x2c8] sm:$0xf]
    %v6635 = vld [vmem:[%s4 + $0x2cc] sm:$0xf]
    %v6636 = vld [vmem:[%s4 + $0x2d0] sm:$0xf]
    %v6637 = vld [vmem:[%s4 + $0x2d4] sm:$0xf]
    %v6638 = vld [vmem:[%s4 + $0x2d8] sm:$0xf]
    %v6639 = vld [vmem:[%s4 + $0x2dc] sm:$0xf]
    %v6640 = vld [vmem:[%s4 + $0x2e0] sm:$0xf]
    %v6641 = vld [vmem:[%s4 + $0x2e4] sm:$0xf]
    %v6642 = vld [vmem:[%s4 + $0x2e8] sm:$0xf]
    %v6643 = vld [vmem:[%s4 + $0x2ec] sm:$0xf]
    %v6644 = vld [vmem:[%s4 + $0x2f0] sm:$0xf]
    %v6645 = vld [vmem:[%s4 + $0x2f4] sm:$0xf]
    %v6646 = vld [vmem:[%s4 + $0x2f8] sm:$0xf]
    %v6647 = vld [vmem:[%s4 + $0x2fc] sm:$0xf]
    %v6648 = vld [vmem:[%s4 + $0x300] sm:$0xf]
    %v6649 = vld [vmem:[%s4 + $0x304] sm:$0xf]
    %v6650 = vld [vmem:[%s4 + $0x308] sm:$0xf]
    %v6651 = vld [vmem:[%s4 + $0x30c] sm:$0xf]
    %v6652 = vld [vmem:[%s4 + $0x310] sm:$0xf]
    %v6653 = vld [vmem:[%s4 + $0x314] sm:$0xf]
    %v6654 = vld [vmem:[%s4 + $0x318] sm:$0xf]
    %v6655 = vld [vmem:[%s4 + $0x31c] sm:$0xf]
    %v6656 = vld [vmem:[%s4 + $0x320] sm:$0xf]
    %v6657 = vld [vmem:[%s4 + $0x324] sm:$0xf]
    %v6658 = vld [vmem:[%s4 + $0x328] sm:$0xf]
    %v6659 = vld [vmem:[%s4 + $0x32c] sm:$0xf]
    %v6660 = vld [vmem:[%s4 + $0x330] sm:$0xf]
    %v6661 = vld [vmem:[%s4 + $0x334] sm:$0xf]
    %v6662 = vld [vmem:[%s4 + $0x338] sm:$0xf]
    %v6663 = vld [vmem:[%s4 + $0x33c] sm:$0xf]
    %v6664 = vld [vmem:[%s4 + $0x340] sm:$0xf]
    %v6665 = vld [vmem:[%s4 + $0x344] sm:$0xf]
    %v6666 = vld [vmem:[%s4 + $0x348] sm:$0xf]
    %v6667 = vld [vmem:[%s4 + $0x34c] sm:$0xf]
    %v6668 = vld [vmem:[%s4 + $0x350] sm:$0xf]
    %v6669 = vld [vmem:[%s4 + $0x354] sm:$0xf]
    %v6670 = vld [vmem:[%s4 + $0x358] sm:$0xf]
    %v6671 = vld [vmem:[%s4 + $0x35c] sm:$0xf]
    %v6672 = vld [vmem:[%s4 + $0x360] sm:$0xf]
    %v6673 = vld [vmem:[%s4 + $0x364] sm:$0xf]
    %v6674 = vld [vmem:[%s4 + $0x368] sm:$0xf]
    %v6675 = vld [vmem:[%s4 + $0x36c] sm:$0xf]
    %v6676 = vld [vmem:[%s4 + $0x370] sm:$0xf]
    %v6677 = vld [vmem:[%s4 + $0x374] sm:$0xf]
    %v6678 = vld [vmem:[%s4 + $0x378] sm:$0xf]
    %v6679 = vld [vmem:[%s4 + $0x37c] sm:$0xf]
    %v6680 = vld [vmem:[%s4 + $0x380] sm:$0xf]
    %v6681 = vld [vmem:[%s4 + $0x384] sm:$0xf]
    %v6682 = vld [vmem:[%s4 + $0x388] sm:$0xf]
    %v6683 = vld [vmem:[%s4 + $0x38c] sm:$0xf]
    %v6684 = vld [vmem:[%s4 + $0x390] sm:$0xf]
    %v6685 = vld [vmem:[%s4 + $0x394] sm:$0xf]
    %v6686 = vld [vmem:[%s4 + $0x398] sm:$0xf]
    %v6687 = vld [vmem:[%s4 + $0x39c] sm:$0xf]
    %v6688 = vld [vmem:[%s4 + $0x3a0] sm:$0xf]
    %v6689 = vld [vmem:[%s4 + $0x3a4] sm:$0xf]
    %v6690 = vld [vmem:[%s4 + $0x3a8] sm:$0xf]
    %v6691 = vld [vmem:[%s4 + $0x3ac] sm:$0xf]
    %v6692 = vld [vmem:[%s4 + $0x3b0] sm:$0xf]
    %v6693 = vld [vmem:[%s4 + $0x3b4] sm:$0xf]
    %v6694 = vld [vmem:[%s4 + $0x3b8] sm:$0xf]
    %v6695 = vld [vmem:[%s4 + $0x3bc] sm:$0xf]
    %v6696 = vld [vmem:[%s4 + $0x3c0] sm:$0xf]
    %v6697 = vld [vmem:[%s4 + $0x3c4] sm:$0xf]
    %v6698 = vld [vmem:[%s4 + $0x3c8] sm:$0xf]
    %v6699 = vld [vmem:[%s4 + $0x3cc] sm:$0xf]
    %v6700 = vld [vmem:[%s4 + $0x3d0] sm:$0xf]
    %v6701 = vld [vmem:[%s4 + $0x3d4] sm:$0xf]
    %v6702 = vld [vmem:[%s4 + $0x3d8] sm:$0xf]
    %v6703 = vld [vmem:[%s4 + $0x3dc] sm:$0xf]
    %v6704 = vld [vmem:[%s4 + $0x3e0] sm:$0xf]
    %v6705 = vld [vmem:[%s4 + $0x3e4] sm:$0xf]
    %v6706 = vld [vmem:[%s4 + $0x3e8] sm:$0xf]
    %v6707 = vld [vmem:[%s4 + $0x3ec] sm:$0xf]
    %v6708 = vld [vmem:[%s4 + $0x3f0] sm:$0xf]
    %v6709 = vld [vmem:[%s4 + $0x3f4] sm:$0xf]
    %v6710 = vld [vmem:[%s4 + $0x3f8] sm:$0xf]
    %v6711 = vld [vmem:[%s4 + $0x3fc] sm:$0xf]
    %v6712 = vld [vmem:[%s4 + $0x400] sm:$0xf]
    %v6713 = vld [vmem:[%s4 + $0x404] sm:$0xf]
    %v6714 = vld [vmem:[%s4 + $0x408] sm:$0xf]
    %v6715 = vld [vmem:[%s4 + $0x40c] sm:$0xf]
    %v6716 = vld [vmem:[%s4 + $0x410] sm:$0xf]
    %v6717 = vld [vmem:[%s4 + $0x414] sm:$0xf]
    %v6718 = vld [vmem:[%s4 + $0x418] sm:$0xf]
    %v6719 = vld [vmem:[%s4 + $0x41c] sm:$0xf]
    %v6720 = vld [vmem:[%s4 + $0x420] sm:$0xf]
    %v6721 = vld [vmem:[%s4 + $0x424] sm:$0xf]
    %v6722 = vld [vmem:[%s4 + $0x428] sm:$0xf]
    %v6723 = vld [vmem:[%s4 + $0x42c] sm:$0xf]
    %v6724 = vld [vmem:[%s4 + $0x430] sm:$0xf]
    %v6725 = vld [vmem:[%s4 + $0x434] sm:$0xf]
    %v6726 = vld [vmem:[%s4 + $0x438] sm:$0xf]
    %v6727 = vld [vmem:[%s4 + $0x43c] sm:$0xf]
    %v6728 = vld [vmem:[%s4 + $0x440] sm:$0xf]
    %v6729 = vld [vmem:[%s4 + $0x444] sm:$0xf]
    %v6730 = vld [vmem:[%s4 + $0x448] sm:$0xf]
    %v6731 = vld [vmem:[%s4 + $0x44c] sm:$0xf]
    %v6732 = vld [vmem:[%s4 + $0x450] sm:$0xf]
    %v6733 = vld [vmem:[%s4 + $0x454] sm:$0xf]
    %v6734 = vld [vmem:[%s4 + $0x458] sm:$0xf]
    %v6735 = vld [vmem:[%s4 + $0x45c] sm:$0xf]
    %v6736 = vld [vmem:[%s4 + $0x460] sm:$0xf]
    %v6737 = vld [vmem:[%s4 + $0x464] sm:$0xf]
    %v6738 = vld [vmem:[%s4 + $0x468] sm:$0xf]
    %v6739 = vld [vmem:[%s4 + $0x46c] sm:$0xf]
    %v6740 = vld [vmem:[%s4 + $0x470] sm:$0xf]
    %v6741 = vld [vmem:[%s4 + $0x474] sm:$0xf]
    %v6742 = vld [vmem:[%s4 + $0x478] sm:$0xf]
    %v6743 = vld [vmem:[%s4 + $0x47c] sm:$0xf]
    %v6744 = vld [vmem:[%s4 + $0x480] sm:$0xf]
    %v6745 = vld [vmem:[%s4 + $0x484] sm:$0xf]
    %v6746 = vld [vmem:[%s4 + $0x488] sm:$0xf]
    %v6747 = vld [vmem:[%s4 + $0x48c] sm:$0xf]
    %v6748 = vld [vmem:[%s4 + $0x490] sm:$0xf]
    %v6749 = vld [vmem:[%s4 + $0x494] sm:$0xf]
    %v6750 = vld [vmem:[%s4 + $0x498] sm:$0xf]
    %v6751 = vld [vmem:[%s4 + $0x49c] sm:$0xf]
    %v6752 = vld [vmem:[%s4 + $0x4a0] sm:$0xf]
    %v6753 = vld [vmem:[%s4 + $0x4a4] sm:$0xf]
    %v6754 = vld [vmem:[%s4 + $0x4a8] sm:$0xf]
    %v6755 = vld [vmem:[%s4 + $0x4ac] sm:$0xf]
    %v6756 = vld [vmem:[%s4 + $0x4b0] sm:$0xf]
    %v6757 = vld [vmem:[%s4 + $0x4b4] sm:$0xf]
    %v6758 = vld [vmem:[%s4 + $0x4b8] sm:$0xf]
    %v6759 = vld [vmem:[%s4 + $0x4bc] sm:$0xf]
    %v6760 = vld [vmem:[%s4 + $0x4c0] sm:$0xf]
    %v6761 = vld [vmem:[%s4 + $0x4c4] sm:$0xf]
    %v6762 = vld [vmem:[%s4 + $0x4c8] sm:$0xf]
    %v6763 = vld [vmem:[%s4 + $0x4cc] sm:$0xf]
    %v6764 = vld [vmem:[%s4 + $0x4d0] sm:$0xf]
    %v6765 = vld [vmem:[%s4 + $0x4d4] sm:$0xf]
    %v6766 = vld [vmem:[%s4 + $0x4d8] sm:$0xf]
    %v6767 = vld [vmem:[%s4 + $0x4dc] sm:$0xf]
    %v6768 = vld [vmem:[%s4 + $0x4e0] sm:$0xf]
    %v6769 = vld [vmem:[%s4 + $0x4e4] sm:$0xf]
    %v6770 = vld [vmem:[%s4 + $0x4e8] sm:$0xf]
    %v6771 = vld [vmem:[%s4 + $0x4ec] sm:$0xf]
    %v6772 = vld [vmem:[%s4 + $0x4f0] sm:$0xf]
    %v6773 = vld [vmem:[%s4 + $0x4f4] sm:$0xf]
    %v6774 = vld [vmem:[%s4 + $0x4f8] sm:$0xf]
    %v6775 = vld [vmem:[%s4 + $0x4fc] sm:$0xf]
    %v6776 = vld [vmem:[%s4 + $0x500] sm:$0xf]
    %v6777 = vld [vmem:[%s4 + $0x504] sm:$0xf]
    %v6778 = vld [vmem:[%s4 + $0x508] sm:$0xf]
    %v6779 = vld [vmem:[%s4 + $0x50c] sm:$0xf]
    %v6780 = vld [vmem:[%s4 + $0x510] sm:$0xf]
    %v6781 = vld [vmem:[%s4 + $0x514] sm:$0xf]
    %v6782 = vld [vmem:[%s4 + $0x518] sm:$0xf]
    %v6783 = vld [vmem:[%s4 + $0x51c] sm:$0xf]
    %v6784 = vld [vmem:[%s4 + $0x520] sm:$0xf]
    %v6785 = vld [vmem:[%s4 + $0x524] sm:$0xf]
    %v6786 = vld [vmem:[%s4 + $0x528] sm:$0xf]
    %v6787 = vld [vmem:[%s4 + $0x52c] sm:$0xf]
    %v6788 = vld [vmem:[%s4 + $0x530] sm:$0xf]
    %v6789 = vld [vmem:[%s4 + $0x534] sm:$0xf]
    %v6790 = vld [vmem:[%s4 + $0x538] sm:$0xf]
    %v6791 = vld [vmem:[%s4 + $0x53c] sm:$0xf]
    %v6792 = vld [vmem:[%s4 + $0x540] sm:$0xf]
    %v6793 = vld [vmem:[%s4 + $0x544] sm:$0xf]
    %v6794 = vld [vmem:[%s4 + $0x548] sm:$0xf]
    %v6795 = vld [vmem:[%s4 + $0x54c] sm:$0xf]
    %v6796 = vld [vmem:[%s4 + $0x550] sm:$0xf]
    %v6797 = vld [vmem:[%s4 + $0x554] sm:$0xf]
    %v6798 = vld [vmem:[%s4 + $0x558] sm:$0xf]
    %v6799 = vld [vmem:[%s4 + $0x55c] sm:$0xf]
    %v6800 = vld [vmem:[%s4 + $0x560] sm:$0xf]
    %v6801 = vld [vmem:[%s4 + $0x564] sm:$0xf]
    %v6802 = vld [vmem:[%s4 + $0x568] sm:$0xf]
    %v6803 = vld [vmem:[%s4 + $0x56c] sm:$0xf]
    %v6804 = vld [vmem:[%s4 + $0x570] sm:$0xf]
    %v6805 = vld [vmem:[%s4 + $0x574] sm:$0xf]
    %v6806 = vld [vmem:[%s4 + $0x578] sm:$0xf]
    %v6807 = vld [vmem:[%s4 + $0x57c] sm:$0xf]
    %v6808 = vld [vmem:[%s4 + $0x580] sm:$0xf]
    %v6809 = vld [vmem:[%s4 + $0x584] sm:$0xf]
    %v6810 = vld [vmem:[%s4 + $0x588] sm:$0xf]
    %v6811 = vld [vmem:[%s4 + $0x58c] sm:$0xf]
    %v6812 = vld [vmem:[%s4 + $0x590] sm:$0xf]
    %v6813 = vld [vmem:[%s4 + $0x594] sm:$0xf]
    %v6814 = vld [vmem:[%s4 + $0x598] sm:$0xf]
    %v6815 = vld [vmem:[%s4 + $0x59c] sm:$0xf]
    %v6816 = vld [vmem:[%s4 + $0x5a0] sm:$0xf]
    %v6817 = vld [vmem:[%s4 + $0x5a4] sm:$0xf]
    %v6818 = vld [vmem:[%s4 + $0x5a8] sm:$0xf]
    %v6819 = vld [vmem:[%s4 + $0x5ac] sm:$0xf]
    %v6820 = vld [vmem:[%s4 + $0x5b0] sm:$0xf]
    %v6821 = vld [vmem:[%s4 + $0x5b4] sm:$0xf]
    %v6822 = vld [vmem:[%s4 + $0x5b8] sm:$0xf]
    %v6823 = vld [vmem:[%s4 + $0x5bc] sm:$0xf]
    %v6824 = vld [vmem:[%s4 + $0x5c0] sm:$0xf]
    %v6825 = vld [vmem:[%s4 + $0x5c4] sm:$0xf]
    %v6826 = vld [vmem:[%s4 + $0x5c8] sm:$0xf]
    %v6827 = vld [vmem:[%s4 + $0x5cc] sm:$0xf]
    %v6828 = vld [vmem:[%s4 + $0x5d0] sm:$0xf]
    %v6829 = vld [vmem:[%s4 + $0x5d4] sm:$0xf]
    %v6830 = vld [vmem:[%s4 + $0x5d8] sm:$0xf]
    %v6831 = vld [vmem:[%s4 + $0x5dc] sm:$0xf]
    %v6832 = vld [vmem:[%s4 + $0x5e0] sm:$0xf]
    %v6833 = vld [vmem:[%s4 + $0x5e4] sm:$0xf]
    %v6834 = vld [vmem:[%s4 + $0x5e8] sm:$0xf]
    %v6835 = vld [vmem:[%s4 + $0x5ec] sm:$0xf]
    %v6836 = vld [vmem:[%s4 + $0x5f0] sm:$0xf]
    %v6837 = vld [vmem:[%s4 + $0x5f4] sm:$0xf]
    %v6838 = vld [vmem:[%s4 + $0x5f8] sm:$0xf]
    %v6839 = vld [vmem:[%s4 + $0x5fc] sm:$0xf]
    %v6840 = vld [vmem:[%s4 + $0x600] sm:$0xf]
    %v6841 = vld [vmem:[%s4 + $0x604] sm:$0xf]
    %v6842 = vld [vmem:[%s4 + $0x608] sm:$0xf]
    %v6843 = vld [vmem:[%s4 + $0x60c] sm:$0xf]
    %v6844 = vld [vmem:[%s4 + $0x610] sm:$0xf]
    %v6845 = vld [vmem:[%s4 + $0x614] sm:$0xf]
    %v6846 = vld [vmem:[%s4 + $0x618] sm:$0xf]
    %v6847 = vld [vmem:[%s4 + $0x61c] sm:$0xf]
    %v6848 = vld [vmem:[%s4 + $0x620] sm:$0xf]
    %v6849 = vld [vmem:[%s4 + $0x624] sm:$0xf]
    %v6850 = vld [vmem:[%s4 + $0x628] sm:$0xf]
    %v6851 = vld [vmem:[%s4 + $0x62c] sm:$0xf]
    %v6852 = vld [vmem:[%s4 + $0x630] sm:$0xf]
    %v6853 = vld [vmem:[%s4 + $0x634] sm:$0xf]
    %v6854 = vld [vmem:[%s4 + $0x638] sm:$0xf]
    %v6855 = vld [vmem:[%s4 + $0x63c] sm:$0xf]
    %v6856 = vld [vmem:[%s4 + $0x640] sm:$0xf]
    %v6857 = vld [vmem:[%s4 + $0x644] sm:$0xf]
    %v6858 = vld [vmem:[%s4 + $0x648] sm:$0xf]
    %v6859 = vld [vmem:[%s4 + $0x64c] sm:$0xf]
    %v6860 = vld [vmem:[%s4 + $0x650] sm:$0xf]
    %v6861 = vld [vmem:[%s4 + $0x654] sm:$0xf]
    %v6862 = vld [vmem:[%s4 + $0x658] sm:$0xf]
    %v6863 = vld [vmem:[%s4 + $0x65c] sm:$0xf]
    %v6864 = vld [vmem:[%s4 + $0x660] sm:$0xf]
    %v6865 = vld [vmem:[%s4 + $0x664] sm:$0xf]
    %v6866 = vld [vmem:[%s4 + $0x668] sm:$0xf]
    %v6867 = vld [vmem:[%s4 + $0x66c] sm:$0xf]
    %v6868 = vld [vmem:[%s4 + $0x670] sm:$0xf]
    %v6869 = vld [vmem:[%s4 + $0x674] sm:$0xf]
    %v6870 = vld [vmem:[%s4 + $0x678] sm:$0xf]
    %v6871 = vld [vmem:[%s4 + $0x67c] sm:$0xf]
    %v6872 = vld [vmem:[%s4 + $0x680] sm:$0xf]
    %v6873 = vld [vmem:[%s4 + $0x684] sm:$0xf]
    %v6874 = vld [vmem:[%s4 + $0x688] sm:$0xf]
    %v6875 = vld [vmem:[%s4 + $0x68c] sm:$0xf]
    %v6876 = vld [vmem:[%s4 + $0x690] sm:$0xf]
    %v6877 = vld [vmem:[%s4 + $0x694] sm:$0xf]
    %v6878 = vld [vmem:[%s4 + $0x698] sm:$0xf]
    %v6879 = vld [vmem:[%s4 + $0x69c] sm:$0xf]
    %v6880 = vld [vmem:[%s4 + $0x6a0] sm:$0xf]
    %v6881 = vld [vmem:[%s4 + $0x6a4] sm:$0xf]
    %v6882 = vld [vmem:[%s4 + $0x6a8] sm:$0xf]
    %v6883 = vld [vmem:[%s4 + $0x6ac] sm:$0xf]
    %v6884 = vld [vmem:[%s4 + $0x6b0] sm:$0xf]
    %v6885 = vld [vmem:[%s4 + $0x6b4] sm:$0xf]
    %v6886 = vld [vmem:[%s4 + $0x6b8] sm:$0xf]
    %v6887 = vld [vmem:[%s4 + $0x6bc] sm:$0xf]
    %v6888 = vld [vmem:[%s4 + $0x6c0] sm:$0xf]
    %v6889 = vld [vmem:[%s4 + $0x6c4] sm:$0xf]
    %v6890 = vld [vmem:[%s4 + $0x6c8] sm:$0xf]
    %v6891 = vld [vmem:[%s4 + $0x6cc] sm:$0xf]
    %v6892 = vld [vmem:[%s4 + $0x6d0] sm:$0xf]
    %v6893 = vld [vmem:[%s4 + $0x6d4] sm:$0xf]
    %v6894 = vld [vmem:[%s4 + $0x6d8] sm:$0xf]
    %v6895 = vld [vmem:[%s4 + $0x6dc] sm:$0xf]
    %v6896 = vld [vmem:[%s4 + $0x6e0] sm:$0xf]
    %v6897 = vld [vmem:[%s4 + $0x6e4] sm:$0xf]
    %v6898 = vld [vmem:[%s4 + $0x6e8] sm:$0xf]
    %v6899 = vld [vmem:[%s4 + $0x6ec] sm:$0xf]
    %v6900 = vld [vmem:[%s4 + $0x6f0] sm:$0xf]
    %v6901 = vld [vmem:[%s4 + $0x6f4] sm:$0xf]
    %v6902 = vld [vmem:[%s4 + $0x6f8] sm:$0xf]
    %v6903 = vld [vmem:[%s4 + $0x6fc] sm:$0xf]
    %v6904 = vld [vmem:[%s4 + $0x700] sm:$0xf]
    %v6905 = vld [vmem:[%s4 + $0x704] sm:$0xf]
    %v6906 = vld [vmem:[%s4 + $0x708] sm:$0xf]
    %v6907 = vld [vmem:[%s4 + $0x70c] sm:$0xf]
    %v6908 = vld [vmem:[%s4 + $0x710] sm:$0xf]
    %v6909 = vld [vmem:[%s4 + $0x714] sm:$0xf]
    %v6910 = vld [vmem:[%s4 + $0x718] sm:$0xf]
    %v6911 = vld [vmem:[%s4 + $0x71c] sm:$0xf]
    %v6912 = vld [vmem:[%s4 + $0x720] sm:$0xf]
    %v6913 = vld [vmem:[%s4 + $0x724] sm:$0xf]
    %v6914 = vld [vmem:[%s4 + $0x728] sm:$0xf]
    %v6915 = vld [vmem:[%s4 + $0x72c] sm:$0xf]
    %v6916 = vld [vmem:[%s4 + $0x730] sm:$0xf]
    %v6917 = vld [vmem:[%s4 + $0x734] sm:$0xf]
    %v6918 = vld [vmem:[%s4 + $0x738] sm:$0xf]
    %v6919 = vld [vmem:[%s4 + $0x73c] sm:$0xf]
    %v6920 = vld [vmem:[%s4 + $0x740] sm:$0xf]
    %v6921 = vld [vmem:[%s4 + $0x744] sm:$0xf]
    %v6922 = vld [vmem:[%s4 + $0x748] sm:$0xf]
    %v6923 = vld [vmem:[%s4 + $0x74c] sm:$0xf]
    %v6924 = vld [vmem:[%s4 + $0x750] sm:$0xf]
    %v6925 = vld [vmem:[%s4 + $0x754] sm:$0xf]
    %v6926 = vld [vmem:[%s4 + $0x758] sm:$0xf]
    %v6927 = vld [vmem:[%s4 + $0x75c] sm:$0xf]
    %v6928 = vld [vmem:[%s4 + $0x760] sm:$0xf]
    %v6929 = vld [vmem:[%s4 + $0x764] sm:$0xf]
    %v6930 = vld [vmem:[%s4 + $0x768] sm:$0xf]
    %v6931 = vld [vmem:[%s4 + $0x76c] sm:$0xf]
    %v6932 = vld [vmem:[%s4 + $0x770] sm:$0xf]
    %v6933 = vld [vmem:[%s4 + $0x774] sm:$0xf]
    %v6934 = vld [vmem:[%s4 + $0x778] sm:$0xf]
    %v6935 = vld [vmem:[%s4 + $0x77c] sm:$0xf]
    %v6936 = vld [vmem:[%s4 + $0x780] sm:$0xf]
    %v6937 = vld [vmem:[%s4 + $0x784] sm:$0xf]
    %v6938 = vld [vmem:[%s4 + $0x788] sm:$0xf]
    %v6939 = vld [vmem:[%s4 + $0x78c] sm:$0xf]
    %v6940 = vld [vmem:[%s4 + $0x790] sm:$0xf]
    %v6941 = vld [vmem:[%s4 + $0x794] sm:$0xf]
    %v6942 = vld [vmem:[%s4 + $0x798] sm:$0xf]
    %v6943 = vld [vmem:[%s4 + $0x79c] sm:$0xf]
    %v6944 = vld [vmem:[%s4 + $0x7a0] sm:$0xf]
    %v6945 = vld [vmem:[%s4 + $0x7a4] sm:$0xf]
    %v6946 = vld [vmem:[%s4 + $0x7a8] sm:$0xf]
    %v6947 = vld [vmem:[%s4 + $0x7ac] sm:$0xf]
    %v6948 = vld [vmem:[%s4 + $0x7b0] sm:$0xf]
    %v6949 = vld [vmem:[%s4 + $0x7b4] sm:$0xf]
    %v6950 = vld [vmem:[%s4 + $0x7b8] sm:$0xf]
    %v6951 = vld [vmem:[%s4 + $0x7bc] sm:$0xf]
    %v6952 = vld [vmem:[%s4 + $0x7c0] sm:$0xf]
    %v6953 = vld [vmem:[%s4 + $0x7c4] sm:$0xf]
    %v6954 = vld [vmem:[%s4 + $0x7c8] sm:$0xf]
    %v6955 = vld [vmem:[%s4 + $0x7cc] sm:$0xf]
    %v6956 = vld [vmem:[%s4 + $0x7d0] sm:$0xf]
    %v6957 = vld [vmem:[%s4 + $0x7d4] sm:$0xf]
    %v6958 = vld [vmem:[%s4 + $0x7d8] sm:$0xf]
    %v6959 = vld [vmem:[%s4 + $0x7dc] sm:$0xf]
    %v6960 = vld [vmem:[%s4 + $0x7e0] sm:$0xf]
    %v6961 = vld [vmem:[%s4 + $0x7e4] sm:$0xf]
    %v6962 = vld [vmem:[%s4 + $0x7e8] sm:$0xf]
    %v6963 = vld [vmem:[%s4 + $0x7ec] sm:$0xf]
    %v6964 = vld [vmem:[%s4 + $0x7f0] sm:$0xf]
    %v6965 = vld [vmem:[%s4 + $0x7f4] sm:$0xf]
    %v6966 = vld [vmem:[%s4 + $0x7f8] sm:$0xf]
    %v6967 = vld [vmem:[%s4 + $0x7fc] sm:$0xf]
    %v6968 = vld [vmem:[%s4 + $0x800] sm:$0xf]
    %v6969 = vld [vmem:[%s4 + $0x804] sm:$0xf]
    %v6970 = vld [vmem:[%s4 + $0x808] sm:$0xf]
    %v6971 = vld [vmem:[%s4 + $0x80c] sm:$0xf]
    %v6972 = vld [vmem:[%s4 + $0x810] sm:$0xf]
    %v6973 = vld [vmem:[%s4 + $0x814] sm:$0xf]
    %v6974 = vld [vmem:[%s4 + $0x818] sm:$0xf]
    %v6975 = vld [vmem:[%s4 + $0x81c] sm:$0xf]
    %v6976 = vld [vmem:[%s4 + $0x820] sm:$0xf]
    %v6977 = vld [vmem:[%s4 + $0x824] sm:$0xf]
    %v6978 = vld [vmem:[%s4 + $0x828] sm:$0xf]
    %v6979 = vld [vmem:[%s4 + $0x82c] sm:$0xf]
    %v6980 = vld [vmem:[%s4 + $0x830] sm:$0xf]
    %v6981 = vld [vmem:[%s4 + $0x834] sm:$0xf]
    %v6982 = vld [vmem:[%s4 + $0x838] sm:$0xf]
    %v6983 = vld [vmem:[%s4 + $0x83c] sm:$0xf]
    %v6984 = vld [vmem:[%s4 + $0x840] sm:$0xf]
    %v6985 = vld [vmem:[%s4 + $0x844] sm:$0xf]
    %v6986 = vld [vmem:[%s4 + $0x848] sm:$0xf]
    %v6987 = vld [vmem:[%s4 + $0x84c] sm:$0xf]
    %v6988 = vld [vmem:[%s4 + $0x850] sm:$0xf]
    %v6989 = vld [vmem:[%s4 + $0x854] sm:$0xf]
    %v6990 = vld [vmem:[%s4 + $0x858] sm:$0xf]
    %v6991 = vld [vmem:[%s4 + $0x85c] sm:$0xf]
    %v6992 = vld [vmem:[%s4 + $0x860] sm:$0xf]
    %v6993 = vld [vmem:[%s4 + $0x864] sm:$0xf]
    %v6994 = vld [vmem:[%s4 + $0x868] sm:$0xf]
    %v6995 = vld [vmem:[%s4 + $0x86c] sm:$0xf]
    %v6996 = vld [vmem:[%s4 + $0x870] sm:$0xf]
    %v6997 = vld [vmem:[%s4 + $0x874] sm:$0xf]
    %v6998 = vld [vmem:[%s4 + $0x878] sm:$0xf]
    %v6999 = vld [vmem:[%s4 + $0x87c] sm:$0xf]
    %v7000 = vld [vmem:[%s4 + $0x880] sm:$0xf]
    %v7001 = vld [vmem:[%s4 + $0x884] sm:$0xf]
    %v7002 = vld [vmem:[%s4 + $0x888] sm:$0xf]
    %v7003 = vld [vmem:[%s4 + $0x88c] sm:$0xf]
    %v7004 = vld [vmem:[%s4 + $0x890] sm:$0xf]
    %v7005 = vld [vmem:[%s4 + $0x894] sm:$0xf]
    %v7006 = vld [vmem:[%s4 + $0x898] sm:$0xf]
    %v7007 = vld [vmem:[%s4 + $0x89c] sm:$0xf]
    %v7008 = vld [vmem:[%s4 + $0x8a0] sm:$0xf]
    %v7009 = vld [vmem:[%s4 + $0x8a4] sm:$0xf]
    %v7010 = vld [vmem:[%s4 + $0x8a8] sm:$0xf]
    %v7011 = vld [vmem:[%s4 + $0x8ac] sm:$0xf]
    %v7012 = vld [vmem:[%s4 + $0x8b0] sm:$0xf]
    %v7013 = vld [vmem:[%s4 + $0x8b4] sm:$0xf]
    %v7014 = vld [vmem:[%s4 + $0x8b8] sm:$0xf]
    %v7015 = vld [vmem:[%s4 + $0x8bc] sm:$0xf]
    %v7016 = vld [vmem:[%s4 + $0x8c0] sm:$0xf]
    %v7017 = vld [vmem:[%s4 + $0x8c4] sm:$0xf]
    %v7018 = vld [vmem:[%s4 + $0x8c8] sm:$0xf]
    %v7019 = vld [vmem:[%s4 + $0x8cc] sm:$0xf]
    %v7020 = vld [vmem:[%s4 + $0x8d0] sm:$0xf]
    %v7021 = vld [vmem:[%s4 + $0x8d4] sm:$0xf]
    %v7022 = vld [vmem:[%s4 + $0x8d8] sm:$0xf]
    %v7023 = vld [vmem:[%s4 + $0x8dc] sm:$0xf]
    %v7024 = vld [vmem:[%s4 + $0x8e0] sm:$0xf]
    %v7025 = vld [vmem:[%s4 + $0x8e4] sm:$0xf]
    %v7026 = vld [vmem:[%s4 + $0x8e8] sm:$0xf]
    %v7027 = vld [vmem:[%s4 + $0x8ec] sm:$0xf]
    %v7028 = vld [vmem:[%s4 + $0x8f0] sm:$0xf]
    %v7029 = vld [vmem:[%s4 + $0x8f4] sm:$0xf]
    %v7030 = vld [vmem:[%s4 + $0x8f8] sm:$0xf]
    %v7031 = vld [vmem:[%s4 + $0x8fc] sm:$0xf]
    %v7032 = vld [vmem:[%s4 + $0x900] sm:$0xf]
    %v7033 = vld [vmem:[%s4 + $0x904] sm:$0xf]
    %v7034 = vld [vmem:[%s4 + $0x908] sm:$0xf]
    %v7035 = vld [vmem:[%s4 + $0x90c] sm:$0xf]
    %v7036 = vld [vmem:[%s4 + $0x910] sm:$0xf]
    %v7037 = vld [vmem:[%s4 + $0x914] sm:$0xf]
    %v7038 = vld [vmem:[%s4 + $0x918] sm:$0xf]
    %v7039 = vld [vmem:[%s4 + $0x91c] sm:$0xf]
    %v7040 = vld [vmem:[%s4 + $0x920] sm:$0xf]
    %v7041 = vld [vmem:[%s4 + $0x924] sm:$0xf]
    %v7042 = vld [vmem:[%s4 + $0x928] sm:$0xf]
    %v7043 = vld [vmem:[%s4 + $0x92c] sm:$0xf]
    %v7044 = vld [vmem:[%s4 + $0x930] sm:$0xf]
    %v7045 = vld [vmem:[%s4 + $0x934] sm:$0xf]
    %v7046 = vld [vmem:[%s4 + $0x938] sm:$0xf]
    %v7047 = vld [vmem:[%s4 + $0x93c] sm:$0xf]
    %v7048 = vld [vmem:[%s4 + $0x940] sm:$0xf]
    %v7049 = vld [vmem:[%s4 + $0x944] sm:$0xf]
    %v7050 = vld [vmem:[%s4 + $0x948] sm:$0xf]
    %v7051 = vld [vmem:[%s4 + $0x94c] sm:$0xf]
    %v7052 = vld [vmem:[%s4 + $0x950] sm:$0xf]
    %v7053 = vld [vmem:[%s4 + $0x954] sm:$0xf]
    %v7054 = vld [vmem:[%s4 + $0x958] sm:$0xf]
    %v7055 = vld [vmem:[%s4 + $0x95c] sm:$0xf]
    %v7056 = vld [vmem:[%s4 + $0x960] sm:$0xf]
    %v7057 = vld [vmem:[%s4 + $0x964] sm:$0xf]
    %v7058 = vld [vmem:[%s4 + $0x968] sm:$0xf]
    %v7059 = vld [vmem:[%s4 + $0x96c] sm:$0xf]
    %v7060 = vld [vmem:[%s4 + $0x970] sm:$0xf]
    %v7061 = vld [vmem:[%s4 + $0x974] sm:$0xf]
    %v7062 = vld [vmem:[%s4 + $0x978] sm:$0xf]
    %v7063 = vld [vmem:[%s4 + $0x97c] sm:$0xf]
    %v7064 = vld [vmem:[%s4 + $0x980] sm:$0xf]
    %v7065 = vld [vmem:[%s4 + $0x984] sm:$0xf]
    %v7066 = vld [vmem:[%s4 + $0x988] sm:$0xf]
    %v7067 = vld [vmem:[%s4 + $0x98c] sm:$0xf]
    %v7068 = vld [vmem:[%s4 + $0x990] sm:$0xf]
    %v7069 = vld [vmem:[%s4 + $0x994] sm:$0xf]
    %v7070 = vld [vmem:[%s4 + $0x998] sm:$0xf]
    %v7071 = vld [vmem:[%s4 + $0x99c] sm:$0xf]
    %v7072 = vld [vmem:[%s4 + $0x9a0] sm:$0xf]
    %v7073 = vld [vmem:[%s4 + $0x9a4] sm:$0xf]
    %v7074 = vld [vmem:[%s4 + $0x9a8] sm:$0xf]
    %v7075 = vld [vmem:[%s4 + $0x9ac] sm:$0xf]
    %v7076 = vld [vmem:[%s4 + $0x9b0] sm:$0xf]
    %v7077 = vld [vmem:[%s4 + $0x9b4] sm:$0xf]
    %v7078 = vld [vmem:[%s4 + $0x9b8] sm:$0xf]
    %v7079 = vld [vmem:[%s4 + $0x9bc] sm:$0xf]
    %v7080 = vld [vmem:[%s4 + $0x9c0] sm:$0xf]
    %v7081 = vld [vmem:[%s4 + $0x9c4] sm:$0xf]
    %v7082 = vld [vmem:[%s4 + $0x9c8] sm:$0xf]
    %v7083 = vld [vmem:[%s4 + $0x9cc] sm:$0xf]
    %v7084 = vld [vmem:[%s4 + $0x9d0] sm:$0xf]
    %v7085 = vld [vmem:[%s4 + $0x9d4] sm:$0xf]
    %v7086 = vld [vmem:[%s4 + $0x9d8] sm:$0xf]
    %v7087 = vld [vmem:[%s4 + $0x9dc] sm:$0xf]
    %v7088 = vld [vmem:[%s4 + $0x9e0] sm:$0xf]
    %v7089 = vld [vmem:[%s4 + $0x9e4] sm:$0xf]
    %v7090 = vld [vmem:[%s4 + $0x9e8] sm:$0xf]
    %v7091 = vld [vmem:[%s4 + $0x9ec] sm:$0xf]
    %v7092 = vld [vmem:[%s4 + $0x9f0] sm:$0xf]
    %v7093 = vld [vmem:[%s4 + $0x9f4] sm:$0xf]
    %v7094 = vld [vmem:[%s4 + $0x9f8] sm:$0xf]
    %v7095 = vld [vmem:[%s4 + $0x9fc] sm:$0xf]
    %v7096 = vld [vmem:[%s4 + $0xa00] sm:$0xf]
    %v7097 = vld [vmem:[%s4 + $0xa04] sm:$0xf]
    %v7098 = vld [vmem:[%s4 + $0xa08] sm:$0xf]
    %v7099 = vld [vmem:[%s4 + $0xa0c] sm:$0xf]
    %v7100 = vld [vmem:[%s4 + $0xa10] sm:$0xf]
    %v7101 = vld [vmem:[%s4 + $0xa14] sm:$0xf]
    %v7102 = vld [vmem:[%s4 + $0xa18] sm:$0xf]
    %v7103 = vld [vmem:[%s4 + $0xa1c] sm:$0xf]
    %v7104 = vld [vmem:[%s4 + $0xa20] sm:$0xf]
    %v7105 = vld [vmem:[%s4 + $0xa24] sm:$0xf]
    %v7106 = vld [vmem:[%s4 + $0xa28] sm:$0xf]
    %v7107 = vld [vmem:[%s4 + $0xa2c] sm:$0xf]
    %v7108 = vld [vmem:[%s4 + $0xa30] sm:$0xf]
    %v7109 = vld [vmem:[%s4 + $0xa34] sm:$0xf]
    %v7110 = vld [vmem:[%s4 + $0xa38] sm:$0xf]
    %v7111 = vld [vmem:[%s4 + $0xa3c] sm:$0xf]
    %v7112 = vld [vmem:[%s4 + $0xa40] sm:$0xf]
    %v7113 = vld [vmem:[%s4 + $0xa44] sm:$0xf]
    %v7114 = vld [vmem:[%s4 + $0xa48] sm:$0xf]
    %v7115 = vld [vmem:[%s4 + $0xa4c] sm:$0xf]
    %v7116 = vld [vmem:[%s4 + $0xa50] sm:$0xf]
    %v7117 = vld [vmem:[%s4 + $0xa54] sm:$0xf]
    %v7118 = vld [vmem:[%s4 + $0xa58] sm:$0xf]
    %v7119 = vld [vmem:[%s4 + $0xa5c] sm:$0xf]
    %v7120 = vld [vmem:[%s4 + $0xa60] sm:$0xf]
    %v7121 = vld [vmem:[%s4 + $0xa64] sm:$0xf]
    %v7122 = vld [vmem:[%s4 + $0xa68] sm:$0xf]
    %v7123 = vld [vmem:[%s4 + $0xa6c] sm:$0xf]
    %v7124 = vld [vmem:[%s4 + $0xa70] sm:$0xf]
    %v7125 = vld [vmem:[%s4 + $0xa74] sm:$0xf]
    %v7126 = vld [vmem:[%s4 + $0xa78] sm:$0xf]
    %v7127 = vld [vmem:[%s4 + $0xa7c] sm:$0xf]
    %v7128 = vld [vmem:[%s4 + $0xa80] sm:$0xf]
    %v7129 = vld [vmem:[%s4 + $0xa84] sm:$0xf]
    %v7130 = vld [vmem:[%s4 + $0xa88] sm:$0xf]
    %v7131 = vld [vmem:[%s4 + $0xa8c] sm:$0xf]
    %v7132 = vld [vmem:[%s4 + $0xa90] sm:$0xf]
    %v7133 = vld [vmem:[%s4 + $0xa94] sm:$0xf]
    %v7134 = vld [vmem:[%s4 + $0xa98] sm:$0xf]
    %v7135 = vld [vmem:[%s4 + $0xa9c] sm:$0xf]
    %v7136 = vld [vmem:[%s4 + $0xaa0] sm:$0xf]
    %v7137 = vld [vmem:[%s4 + $0xaa4] sm:$0xf]
    %v7138 = vld [vmem:[%s4 + $0xaa8] sm:$0xf]
    %v7139 = vld [vmem:[%s4 + $0xaac] sm:$0xf]
    %v7140 = vld [vmem:[%s4 + $0xab0] sm:$0xf]
    %v7141 = vld [vmem:[%s4 + $0xab4] sm:$0xf]
    %v7142 = vld [vmem:[%s4 + $0xab8] sm:$0xf]
    %v7143 = vld [vmem:[%s4 + $0xabc] sm:$0xf]
    %v7144 = vld [vmem:[%s4 + $0xac0] sm:$0xf]
    %v7145 = vld [vmem:[%s4 + $0xac4] sm:$0xf]
    %v7146 = vld [vmem:[%s4 + $0xac8] sm:$0xf]
    %v7147 = vld [vmem:[%s4 + $0xacc] sm:$0xf]
    %v7148 = vld [vmem:[%s4 + $0xad0] sm:$0xf]
    %v7149 = vld [vmem:[%s4 + $0xad4] sm:$0xf]
    %v7150 = vld [vmem:[%s4 + $0xad8] sm:$0xf]
    %v7151 = vld [vmem:[%s4 + $0xadc] sm:$0xf]
    %v7152 = vld [vmem:[%s4 + $0xae0] sm:$0xf]
    %v7153 = vld [vmem:[%s4 + $0xae4] sm:$0xf]
    %v7154 = vld [vmem:[%s4 + $0xae8] sm:$0xf]
    %v7155 = vld [vmem:[%s4 + $0xaec] sm:$0xf]
    %v7156 = vld [vmem:[%s4 + $0xaf0] sm:$0xf]
    %v7157 = vld [vmem:[%s4 + $0xaf4] sm:$0xf]
    %v7158 = vld [vmem:[%s4 + $0xaf8] sm:$0xf]
    %v7159 = vld [vmem:[%s4 + $0xafc] sm:$0xf]
    %v7160 = vld [vmem:[%s4 + $0xb00] sm:$0xf]
    %v7161 = vld [vmem:[%s4 + $0xb04] sm:$0xf]
    %v7162 = vld [vmem:[%s4 + $0xb08] sm:$0xf]
    %v7163 = vld [vmem:[%s4 + $0xb0c] sm:$0xf]
    %v7164 = vld [vmem:[%s4 + $0xb10] sm:$0xf]
    %v7165 = vld [vmem:[%s4 + $0xb14] sm:$0xf]
    %v7166 = vld [vmem:[%s4 + $0xb18] sm:$0xf]
    %v7167 = vld [vmem:[%s4 + $0xb1c] sm:$0xf]
    %v7168 = vld [vmem:[%s4 + $0xb20] sm:$0xf]
    %v7169 = vld [vmem:[%s4 + $0xb24] sm:$0xf]
    %v7170 = vld [vmem:[%s4 + $0xb28] sm:$0xf]
    %v7171 = vld [vmem:[%s4 + $0xb2c] sm:$0xf]
    %v7172 = vld [vmem:[%s4 + $0xb30] sm:$0xf]
    %v7173 = vld [vmem:[%s4 + $0xb34] sm:$0xf]
    %v7174 = vld [vmem:[%s4 + $0xb38] sm:$0xf]
    %v7175 = vld [vmem:[%s4 + $0xb3c] sm:$0xf]
    %v7176 = vld [vmem:[%s4 + $0xb40] sm:$0xf]
    %v7177 = vld [vmem:[%s4 + $0xb44] sm:$0xf]
    %v7178 = vld [vmem:[%s4 + $0xb48] sm:$0xf]
    %v7179 = vld [vmem:[%s4 + $0xb4c] sm:$0xf]
    %v7180 = vld [vmem:[%s4 + $0xb50] sm:$0xf]
    %v7181 = vld [vmem:[%s4 + $0xb54] sm:$0xf]
    %v7182 = vld [vmem:[%s4 + $0xb58] sm:$0xf]
    %v7183 = vld [vmem:[%s4 + $0xb5c] sm:$0xf]
    %v7184 = vld [vmem:[%s4 + $0xb60] sm:$0xf]
    %v7185 = vld [vmem:[%s4 + $0xb64] sm:$0xf]
    %v7186 = vld [vmem:[%s4 + $0xb68] sm:$0xf]
    %v7187 = vld [vmem:[%s4 + $0xb6c] sm:$0xf]
    %v7188 = vld [vmem:[%s4 + $0xb70] sm:$0xf]
    %v7189 = vld [vmem:[%s4 + $0xb74] sm:$0xf]
    %v7190 = vld [vmem:[%s4 + $0xb78] sm:$0xf]
    %v7191 = vld [vmem:[%s4 + $0xb7c] sm:$0xf]
    %v7192 = vld [vmem:[%s4 + $0xb80] sm:$0xf]
    %v7193 = vld [vmem:[%s4 + $0xb84] sm:$0xf]
    %v7194 = vld [vmem:[%s4 + $0xb88] sm:$0xf]
    %v7195 = vld [vmem:[%s4 + $0xb8c] sm:$0xf]
    %v7196 = vld [vmem:[%s4 + $0xb90] sm:$0xf]
    %v7197 = vld [vmem:[%s4 + $0xb94] sm:$0xf]
    %v7198 = vld [vmem:[%s4 + $0xb98] sm:$0xf]
    %v7199 = vld [vmem:[%s4 + $0xb9c] sm:$0xf]
    %v7200 = vld [vmem:[%s4 + $0xba0] sm:$0xf]
    %v7201 = vld [vmem:[%s4 + $0xba4] sm:$0xf]
    %v7202 = vld [vmem:[%s4 + $0xba8] sm:$0xf]
    %v7203 = vld [vmem:[%s4 + $0xbac] sm:$0xf]
    %v7204 = vld [vmem:[%s4 + $0xbb0] sm:$0xf]
    %v7205 = vld [vmem:[%s4 + $0xbb4] sm:$0xf]
    %v7206 = vld [vmem:[%s4 + $0xbb8] sm:$0xf]
    %v7207 = vld [vmem:[%s4 + $0xbbc] sm:$0xf]
    %v7208 = vld [vmem:[%s4 + $0xbc0] sm:$0xf]
    %v7209 = vld [vmem:[%s4 + $0xbc4] sm:$0xf]
    %v7210 = vld [vmem:[%s4 + $0xbc8] sm:$0xf]
    %v7211 = vld [vmem:[%s4 + $0xbcc] sm:$0xf]
    %v7212 = vld [vmem:[%s4 + $0xbd0] sm:$0xf]
    %v7213 = vld [vmem:[%s4 + $0xbd4] sm:$0xf]
    %v7214 = vld [vmem:[%s4 + $0xbd8] sm:$0xf]
    %v7215 = vld [vmem:[%s4 + $0xbdc] sm:$0xf]
    %v7216 = vld [vmem:[%s4 + $0xbe0] sm:$0xf]
    %v7217 = vld [vmem:[%s4 + $0xbe4] sm:$0xf]
    %v7218 = vld [vmem:[%s4 + $0xbe8] sm:$0xf]
    %v7219 = vld [vmem:[%s4 + $0xbec] sm:$0xf]
    %v7220 = vld [vmem:[%s4 + $0xbf0] sm:$0xf]
    %v7221 = vld [vmem:[%s4 + $0xbf4] sm:$0xf]
    %v7222 = vld [vmem:[%s4 + $0xbf8] sm:$0xf]
    %v7223 = vld [vmem:[%s4 + $0xbfc] sm:$0xf]
    %v7224 = vld [vmem:[%s4 + $0xc00] sm:$0xf]
    %v7225 = vld [vmem:[%s4 + $0xc04] sm:$0xf]
    %v7226 = vld [vmem:[%s4 + $0xc08] sm:$0xf]
    %v7227 = vld [vmem:[%s4 + $0xc0c] sm:$0xf]
    %v7228 = vld [vmem:[%s4 + $0xc10] sm:$0xf]
    %v7229 = vld [vmem:[%s4 + $0xc14] sm:$0xf]
    %v7230 = vld [vmem:[%s4 + $0xc18] sm:$0xf]
    %v7231 = vld [vmem:[%s4 + $0xc1c] sm:$0xf]
    %v7232 = vld [vmem:[%s4 + $0xc20] sm:$0xf]
    %v7233 = vld [vmem:[%s4 + $0xc24] sm:$0xf]
    %v7234 = vld [vmem:[%s4 + $0xc28] sm:$0xf]
    %v7235 = vld [vmem:[%s4 + $0xc2c] sm:$0xf]
    %v7236 = vld [vmem:[%s4 + $0xc30] sm:$0xf]
    %v7237 = vld [vmem:[%s4 + $0xc34] sm:$0xf]
    %v7238 = vld [vmem:[%s4 + $0xc38] sm:$0xf]
    %v7239 = vld [vmem:[%s4 + $0xc3c] sm:$0xf]
    %v7240 = vld [vmem:[%s4 + $0xc40] sm:$0xf]
    %v7241 = vld [vmem:[%s4 + $0xc44] sm:$0xf]
    %v7242 = vld [vmem:[%s4 + $0xc48] sm:$0xf]
    %v7243 = vld [vmem:[%s4 + $0xc4c] sm:$0xf]
    %v7244 = vld [vmem:[%s4 + $0xc50] sm:$0xf]
    %v7245 = vld [vmem:[%s4 + $0xc54] sm:$0xf]
    %v7246 = vld [vmem:[%s4 + $0xc58] sm:$0xf]
    %v7247 = vld [vmem:[%s4 + $0xc5c] sm:$0xf]
    %v7248 = vld [vmem:[%s4 + $0xc60] sm:$0xf]
    %v7249 = vld [vmem:[%s4 + $0xc64] sm:$0xf]
    %v7250 = vld [vmem:[%s4 + $0xc68] sm:$0xf]
    %v7251 = vld [vmem:[%s4 + $0xc6c] sm:$0xf]
    %v7252 = vld [vmem:[%s4 + $0xc70] sm:$0xf]
    %v7253 = vld [vmem:[%s4 + $0xc74] sm:$0xf]
    %v7254 = vld [vmem:[%s4 + $0xc78] sm:$0xf]
    %v7255 = vld [vmem:[%s4 + $0xc7c] sm:$0xf]
    %v7256 = vld [vmem:[%s4 + $0xc80] sm:$0xf]
    %v7257 = vld [vmem:[%s4 + $0xc84] sm:$0xf]
    %v7258 = vld [vmem:[%s4 + $0xc88] sm:$0xf]
    %v7259 = vld [vmem:[%s4 + $0xc8c] sm:$0xf]
    %v7260 = vld [vmem:[%s4 + $0xc90] sm:$0xf]
    %v7261 = vld [vmem:[%s4 + $0xc94] sm:$0xf]
    %v7262 = vld [vmem:[%s4 + $0xc98] sm:$0xf]
    %v7263 = vld [vmem:[%s4 + $0xc9c] sm:$0xf]
    %v7264 = vld [vmem:[%s4 + $0xca0] sm:$0xf]
    %v7265 = vld [vmem:[%s4 + $0xca4] sm:$0xf]
    %v7266 = vld [vmem:[%s4 + $0xca8] sm:$0xf]
    %v7267 = vld [vmem:[%s4 + $0xcac] sm:$0xf]
    %v7268 = vld [vmem:[%s4 + $0xcb0] sm:$0xf]
    %v7269 = vld [vmem:[%s4 + $0xcb4] sm:$0xf]
    %v7270 = vld [vmem:[%s4 + $0xcb8] sm:$0xf]
    %v7271 = vld [vmem:[%s4 + $0xcbc] sm:$0xf]
    %v7272 = vld [vmem:[%s4 + $0xcc0] sm:$0xf]
    %v7273 = vld [vmem:[%s4 + $0xcc4] sm:$0xf]
    %v7274 = vld [vmem:[%s4 + $0xcc8] sm:$0xf]
    %v7275 = vld [vmem:[%s4 + $0xccc] sm:$0xf]
    %v7276 = vld [vmem:[%s4 + $0xcd0] sm:$0xf]
    %v7277 = vld [vmem:[%s4 + $0xcd4] sm:$0xf]
    %v7278 = vld [vmem:[%s4 + $0xcd8] sm:$0xf]
    %v7279 = vld [vmem:[%s4 + $0xcdc] sm:$0xf]
    %v7280 = vld [vmem:[%s4 + $0xce0] sm:$0xf]
    %v7281 = vld [vmem:[%s4 + $0xce4] sm:$0xf]
    %v7282 = vld [vmem:[%s4 + $0xce8] sm:$0xf]
    %v7283 = vld [vmem:[%s4 + $0xcec] sm:$0xf]
    %v7284 = vld [vmem:[%s4 + $0xcf0] sm:$0xf]
    %v7285 = vld [vmem:[%s4 + $0xcf4] sm:$0xf]
    %v7286 = vld [vmem:[%s4 + $0xcf8] sm:$0xf]
    %v7287 = vld [vmem:[%s4 + $0xcfc] sm:$0xf]
    %v7288 = vld [vmem:[%s4 + $0xd00] sm:$0xf]
    %v7289 = vld [vmem:[%s4 + $0xd04] sm:$0xf]
    %v7290 = vld [vmem:[%s4 + $0xd08] sm:$0xf]
    %v7291 = vld [vmem:[%s4 + $0xd0c] sm:$0xf]
    %v7292 = vld [vmem:[%s4 + $0xd10] sm:$0xf]
    %v7293 = vld [vmem:[%s4 + $0xd14] sm:$0xf]
    %v7294 = vld [vmem:[%s4 + $0xd18] sm:$0xf]
    %v7295 = vld [vmem:[%s4 + $0xd1c] sm:$0xf]
    %v7296 = vld [vmem:[%s4 + $0xd20] sm:$0xf]
    %v7297 = vld [vmem:[%s4 + $0xd24] sm:$0xf]
    %v7298 = vld [vmem:[%s4 + $0xd28] sm:$0xf]
    %v7299 = vld [vmem:[%s4 + $0xd2c] sm:$0xf]
    %v7300 = vld [vmem:[%s4 + $0xd30] sm:$0xf]
    %v7301 = vld [vmem:[%s4 + $0xd34] sm:$0xf]
    %v7302 = vld [vmem:[%s4 + $0xd38] sm:$0xf]
    %v7303 = vld [vmem:[%s4 + $0xd3c] sm:$0xf]
    %v7304 = vld [vmem:[%s4 + $0xd40] sm:$0xf]
    %v7305 = vld [vmem:[%s4 + $0xd44] sm:$0xf]
    %v7306 = vld [vmem:[%s4 + $0xd48] sm:$0xf]
    %v7307 = vld [vmem:[%s4 + $0xd4c] sm:$0xf]
    %v7308 = vld [vmem:[%s4 + $0xd50] sm:$0xf]
    %v7309 = vld [vmem:[%s4 + $0xd54] sm:$0xf]
    %v7310 = vld [vmem:[%s4 + $0xd58] sm:$0xf]
    %v7311 = vld [vmem:[%s4 + $0xd5c] sm:$0xf]
    %v7312 = vld [vmem:[%s4 + $0xd60] sm:$0xf]
    %v7313 = vld [vmem:[%s4 + $0xd64] sm:$0xf]
    %v7314 = vld [vmem:[%s4 + $0xd68] sm:$0xf]
    %v7315 = vld [vmem:[%s4 + $0xd6c] sm:$0xf]
    %v7316 = vld [vmem:[%s4 + $0xd70] sm:$0xf]
    %v7317 = vld [vmem:[%s4 + $0xd74] sm:$0xf]
    %v7318 = vld [vmem:[%s4 + $0xd78] sm:$0xf]
    %v7319 = vld [vmem:[%s4 + $0xd7c] sm:$0xf]
    %v7320 = vld [vmem:[%s4 + $0xd80] sm:$0xf]
    %v7321 = vld [vmem:[%s4 + $0xd84] sm:$0xf]
    %v7322 = vld [vmem:[%s4 + $0xd88] sm:$0xf]
    %v7323 = vld [vmem:[%s4 + $0xd8c] sm:$0xf]
    %v7324 = vld [vmem:[%s4 + $0xd90] sm:$0xf]
    %v7325 = vld [vmem:[%s4 + $0xd94] sm:$0xf]
    %v7326 = vld [vmem:[%s4 + $0xd98] sm:$0xf]
    %v7327 = vld [vmem:[%s4 + $0xd9c] sm:$0xf]
    %v7328 = vld [vmem:[%s4 + $0xda0] sm:$0xf]
    %v7329 = vld [vmem:[%s4 + $0xda4] sm:$0xf]
    %v7330 = vld [vmem:[%s4 + $0xda8] sm:$0xf]
    %v7331 = vld [vmem:[%s4 + $0xdac] sm:$0xf]
    %v7332 = vld [vmem:[%s4 + $0xdb0] sm:$0xf]
    %v7333 = vld [vmem:[%s4 + $0xdb4] sm:$0xf]
    %v7334 = vld [vmem:[%s4 + $0xdb8] sm:$0xf]
    %v7335 = vld [vmem:[%s4 + $0xdbc] sm:$0xf]
    %v7336 = vld [vmem:[%s4 + $0xdc0] sm:$0xf]
    %v7337 = vld [vmem:[%s4 + $0xdc4] sm:$0xf]
    %v7338 = vld [vmem:[%s4 + $0xdc8] sm:$0xf]
    %v7339 = vld [vmem:[%s4 + $0xdcc] sm:$0xf]
    %v7340 = vld [vmem:[%s4 + $0xdd0] sm:$0xf]
    %v7341 = vld [vmem:[%s4 + $0xdd4] sm:$0xf]
    %v7342 = vld [vmem:[%s4 + $0xdd8] sm:$0xf]
    %v7343 = vld [vmem:[%s4 + $0xddc] sm:$0xf]
    %v7344 = vld [vmem:[%s4 + $0xde0] sm:$0xf]
    %v7345 = vld [vmem:[%s4 + $0xde4] sm:$0xf]
    %v7346 = vld [vmem:[%s4 + $0xde8] sm:$0xf]
    %v7347 = vld [vmem:[%s4 + $0xdec] sm:$0xf]
    %v7348 = vld [vmem:[%s4 + $0xdf0] sm:$0xf]
    %v7349 = vld [vmem:[%s4 + $0xdf4] sm:$0xf]
    %v7350 = vld [vmem:[%s4 + $0xdf8] sm:$0xf]
    %v7351 = vld [vmem:[%s4 + $0xdfc] sm:$0xf]
    %v7352 = vld [vmem:[%s4 + $0xe00] sm:$0xf]
    %v7353 = vld [vmem:[%s4 + $0xe04] sm:$0xf]
    %v7354 = vld [vmem:[%s4 + $0xe08] sm:$0xf]
    %v7355 = vld [vmem:[%s4 + $0xe0c] sm:$0xf]
    %v7356 = vld [vmem:[%s4 + $0xe10] sm:$0xf]
    %v7357 = vld [vmem:[%s4 + $0xe14] sm:$0xf]
    %v7358 = vld [vmem:[%s4 + $0xe18] sm:$0xf]
    %v7359 = vld [vmem:[%s4 + $0xe1c] sm:$0xf]
    %v7360 = vld [vmem:[%s4 + $0xe20] sm:$0xf]
    %v7361 = vld [vmem:[%s4 + $0xe24] sm:$0xf]
    %v7362 = vld [vmem:[%s4 + $0xe28] sm:$0xf]
    %v7363 = vld [vmem:[%s4 + $0xe2c] sm:$0xf]
    %v7364 = vld [vmem:[%s4 + $0xe30] sm:$0xf]
    %v7365 = vld [vmem:[%s4 + $0xe34] sm:$0xf]
    %v7366 = vld [vmem:[%s4 + $0xe38] sm:$0xf]
    %v7367 = vld [vmem:[%s4 + $0xe3c] sm:$0xf]
    %v7368 = vld [vmem:[%s4 + $0xe40] sm:$0xf]
    %v7369 = vld [vmem:[%s4 + $0xe44] sm:$0xf]
    %v7370 = vld [vmem:[%s4 + $0xe48] sm:$0xf]
    %v7371 = vld [vmem:[%s4 + $0xe4c] sm:$0xf]
    %v7372 = vld [vmem:[%s4 + $0xe50] sm:$0xf]
    %v7373 = vld [vmem:[%s4 + $0xe54] sm:$0xf]
    %v7374 = vld [vmem:[%s4 + $0xe58] sm:$0xf]
    %v7375 = vld [vmem:[%s4 + $0xe5c] sm:$0xf]
    %v7376 = vld [vmem:[%s4 + $0xe60] sm:$0xf]
    %v7377 = vld [vmem:[%s4 + $0xe64] sm:$0xf]
    %v7378 = vld [vmem:[%s4 + $0xe68] sm:$0xf]
    %v7379 = vld [vmem:[%s4 + $0xe6c] sm:$0xf]
    %v7380 = vld [vmem:[%s4 + $0xe70] sm:$0xf]
    %v7381 = vld [vmem:[%s4 + $0xe74] sm:$0xf]
    %v7382 = vld [vmem:[%s4 + $0xe78] sm:$0xf]
    %v7383 = vld [vmem:[%s4 + $0xe7c] sm:$0xf]
    %v7384 = vld [vmem:[%s4 + $0xe80] sm:$0xf]
    %v7385 = vld [vmem:[%s4 + $0xe84] sm:$0xf]
    %v7386 = vld [vmem:[%s4 + $0xe88] sm:$0xf]
    %v7387 = vld [vmem:[%s4 + $0xe8c] sm:$0xf]
    %v7388 = vld [vmem:[%s4 + $0xe90] sm:$0xf]
    %v7389 = vld [vmem:[%s4 + $0xe94] sm:$0xf]
    %v7390 = vld [vmem:[%s4 + $0xe98] sm:$0xf]
    %v7391 = vld [vmem:[%s4 + $0xe9c] sm:$0xf]
    %v7392 = vld [vmem:[%s4 + $0xea0] sm:$0xf]
    %v7393 = vld [vmem:[%s4 + $0xea4] sm:$0xf]
    %v7394 = vld [vmem:[%s4 + $0xea8] sm:$0xf]
    %v7395 = vld [vmem:[%s4 + $0xeac] sm:$0xf]
    %v7396 = vld [vmem:[%s4 + $0xeb0] sm:$0xf]
    %v7397 = vld [vmem:[%s4 + $0xeb4] sm:$0xf]
    %v7398 = vld [vmem:[%s4 + $0xeb8] sm:$0xf]
    %v7399 = vld [vmem:[%s4 + $0xebc] sm:$0xf]
    %v7400 = vld [vmem:[%s4 + $0xec0] sm:$0xf]
    %v7401 = vld [vmem:[%s4 + $0xec4] sm:$0xf]
    %v7402 = vld [vmem:[%s4 + $0xec8] sm:$0xf]
    %v7403 = vld [vmem:[%s4 + $0xecc] sm:$0xf]
    %v7404 = vld [vmem:[%s4 + $0xed0] sm:$0xf]
    %v7405 = vld [vmem:[%s4 + $0xed4] sm:$0xf]
    %v7406 = vld [vmem:[%s4 + $0xed8] sm:$0xf]
    %v7407 = vld [vmem:[%s4 + $0xedc] sm:$0xf]
    %v7408 = vld [vmem:[%s4 + $0xee0] sm:$0xf]
    %v7409 = vld [vmem:[%s4 + $0xee4] sm:$0xf]
    %v7410 = vld [vmem:[%s4 + $0xee8] sm:$0xf]
    %v7411 = vld [vmem:[%s4 + $0xeec] sm:$0xf]
    %v7412 = vld [vmem:[%s4 + $0xef0] sm:$0xf]
    %v7413 = vld [vmem:[%s4 + $0xef4] sm:$0xf]
    %v7414 = vld [vmem:[%s4 + $0xef8] sm:$0xf]
    %v7415 = vld [vmem:[%s4 + $0xefc] sm:$0xf]
    %v7416 = vld [vmem:[%s4 + $0xf00] sm:$0xf]
    %v7417 = vld [vmem:[%s4 + $0xf04] sm:$0xf]
    %v7418 = vld [vmem:[%s4 + $0xf08] sm:$0xf]
    %v7419 = vld [vmem:[%s4 + $0xf0c] sm:$0xf]
    %v7420 = vld [vmem:[%s4 + $0xf10] sm:$0xf]
    %v7421 = vld [vmem:[%s4 + $0xf14] sm:$0xf]
    %v7422 = vld [vmem:[%s4 + $0xf18] sm:$0xf]
    %v7423 = vld [vmem:[%s4 + $0xf1c] sm:$0xf]
    %v7424 = vld [vmem:[%s4 + $0xf20] sm:$0xf]
    %v7425 = vld [vmem:[%s4 + $0xf24] sm:$0xf]
    %v7426 = vld [vmem:[%s4 + $0xf28] sm:$0xf]
    %v7427 = vld [vmem:[%s4 + $0xf2c] sm:$0xf]
    %v7428 = vld [vmem:[%s4 + $0xf30] sm:$0xf]
    %v7429 = vld [vmem:[%s4 + $0xf34] sm:$0xf]
    %v7430 = vld [vmem:[%s4 + $0xf38] sm:$0xf]
    %v7431 = vld [vmem:[%s4 + $0xf3c] sm:$0xf]
    %v7432 = vld [vmem:[%s4 + $0xf40] sm:$0xf]
    %v7433 = vld [vmem:[%s4 + $0xf44] sm:$0xf]
    %v7434 = vld [vmem:[%s4 + $0xf48] sm:$0xf]
    %v7435 = vld [vmem:[%s4 + $0xf4c] sm:$0xf]
    %v7436 = vld [vmem:[%s4 + $0xf50] sm:$0xf]
    %v7437 = vld [vmem:[%s4 + $0xf54] sm:$0xf]
    %v7438 = vld [vmem:[%s4 + $0xf58] sm:$0xf]
    %v7439 = vld [vmem:[%s4 + $0xf5c] sm:$0xf]
    %v7440 = vld [vmem:[%s4 + $0xf60] sm:$0xf]
    %v7441 = vld [vmem:[%s4 + $0xf64] sm:$0xf]
    %v7442 = vld [vmem:[%s4 + $0xf68] sm:$0xf]
    %v7443 = vld [vmem:[%s4 + $0xf6c] sm:$0xf]
    %v7444 = vld [vmem:[%s4 + $0xf70] sm:$0xf]
    %v7445 = vld [vmem:[%s4 + $0xf74] sm:$0xf]
    %v7446 = vld [vmem:[%s4 + $0xf78] sm:$0xf]
    %v7447 = vld [vmem:[%s4 + $0xf7c] sm:$0xf]
    %v7448 = vld [vmem:[%s4 + $0xf80] sm:$0xf]
    %v7449 = vld [vmem:[%s4 + $0xf84] sm:$0xf]
    %v7450 = vld [vmem:[%s4 + $0xf88] sm:$0xf]
    %v7451 = vld [vmem:[%s4 + $0xf8c] sm:$0xf]
    %v7452 = vld [vmem:[%s4 + $0xf90] sm:$0xf]
    %v7453 = vld [vmem:[%s4 + $0xf94] sm:$0xf]
    %v7454 = vld [vmem:[%s4 + $0xf98] sm:$0xf]
    %v7455 = vld [vmem:[%s4 + $0xf9c] sm:$0xf]
    %v7456 = vld [vmem:[%s4 + $0xfa0] sm:$0xf]
    %v7457 = vld [vmem:[%s4 + $0xfa4] sm:$0xf]
    %v7458 = vld [vmem:[%s4 + $0xfa8] sm:$0xf]
    %v7459 = vld [vmem:[%s4 + $0xfac] sm:$0xf]
    %v7460 = vld [vmem:[%s4 + $0xfb0] sm:$0xf]
    %v7461 = vld [vmem:[%s4 + $0xfb4] sm:$0xf]
    %v7462 = vld [vmem:[%s4 + $0xfb8] sm:$0xf]
    %v7463 = vld [vmem:[%s4 + $0xfbc] sm:$0xf]
    %v7464 = vld [vmem:[%s4 + $0xfc0] sm:$0xf]
    %v7465 = vld [vmem:[%s4 + $0xfc4] sm:$0xf]
    %v7466 = vld [vmem:[%s4 + $0xfc8] sm:$0xf]
    %v7467 = vld [vmem:[%s4 + $0xfcc] sm:$0xf]
    %v7468 = vld [vmem:[%s4 + $0xfd0] sm:$0xf]
    %v7469 = vld [vmem:[%s4 + $0xfd4] sm:$0xf]
    %v7470 = vld [vmem:[%s4 + $0xfd8] sm:$0xf]
    %v7471 = vld [vmem:[%s4 + $0xfdc] sm:$0xf]
    %v7472 = vld [vmem:[%s4 + $0xfe0] sm:$0xf]
    %v7473 = vld [vmem:[%s4 + $0xfe4] sm:$0xf]
    %v7474 = vld [vmem:[%s4 + $0xfe8] sm:$0xf]
    %v7475 = vld [vmem:[%s4 + $0xfec] sm:$0xf]
    %v7476 = vld [vmem:[%s4 + $0xff0] sm:$0xf]
    %v7477 = vld [vmem:[%s4 + $0xff4] sm:$0xf]
    %v7478 = vld [vmem:[%s4 + $0xff8] sm:$0xf]
    %v7479 = vld [vmem:[%s4 + $0xffc] sm:$0xf]
    %v8504 = vunpack.c.l.b16 %v6456
    %v8505 = vunpack.c.l.b16 %v6457
    %v8506 = vunpack.c.l.b16 %v6458
    %v8507 = vunpack.c.l.b16 %v6459
    %v8508 = vunpack.c.l.b16 %v6460
    %v8509 = vunpack.c.l.b16 %v6461
    %v8510 = vunpack.c.l.b16 %v6462
    %v8511 = vunpack.c.l.b16 %v6463
    %v8512 = vunpack.c.l.b16 %v6464
    %v8513 = vunpack.c.l.b16 %v6465
    %v8514 = vunpack.c.l.b16 %v6466
    %v8515 = vunpack.c.l.b16 %v6467
    %v8516 = vunpack.c.l.b16 %v6468
    %v8517 = vunpack.c.l.b16 %v6469
    %v8518 = vunpack.c.l.b16 %v6470
    %v8519 = vunpack.c.l.b16 %v6471
    %v8520 = vunpack.c.l.b16 %v6472
    %v8521 = vunpack.c.l.b16 %v6473
    %v8522 = vunpack.c.l.b16 %v6474
    %v8523 = vunpack.c.l.b16 %v6475
    %v8524 = vunpack.c.l.b16 %v6476
    %v8525 = vunpack.c.l.b16 %v6477
    %v8526 = vunpack.c.l.b16 %v6478
    %v8527 = vunpack.c.l.b16 %v6479
    %v8528 = vunpack.c.l.b16 %v6480
    %v8529 = vunpack.c.l.b16 %v6481
    %v8530 = vunpack.c.l.b16 %v6482
    %v8531 = vunpack.c.l.b16 %v6483
    %v8532 = vunpack.c.l.b16 %v6484
    %v8533 = vunpack.c.l.b16 %v6485
    %v8534 = vunpack.c.l.b16 %v6486
    %v8535 = vunpack.c.l.b16 %v6487
    %v8536 = vunpack.c.l.b16 %v6488
    %v8537 = vunpack.c.l.b16 %v6489
    %v8538 = vunpack.c.l.b16 %v6490
    %v8539 = vunpack.c.l.b16 %v6491
    %v8540 = vunpack.c.l.b16 %v6492
    %v8541 = vunpack.c.l.b16 %v6493
    %v8542 = vunpack.c.l.b16 %v6494
    %v8543 = vunpack.c.l.b16 %v6495
    %v8544 = vunpack.c.l.b16 %v6496
    %v8545 = vunpack.c.l.b16 %v6497
    %v8546 = vunpack.c.l.b16 %v6498
    %v8547 = vunpack.c.l.b16 %v6499
    %v8548 = vunpack.c.l.b16 %v6500
    %v8549 = vunpack.c.l.b16 %v6501
    %v8550 = vunpack.c.l.b16 %v6502
    %v8551 = vunpack.c.l.b16 %v6503
    %v8552 = vunpack.c.l.b16 %v6504
    %v8553 = vunpack.c.l.b16 %v6505
    %v8554 = vunpack.c.l.b16 %v6506
    %v8555 = vunpack.c.l.b16 %v6507
    %v8556 = vunpack.c.l.b16 %v6508
    %v8557 = vunpack.c.l.b16 %v6509
    %v8558 = vunpack.c.l.b16 %v6510
    %v8559 = vunpack.c.l.b16 %v6511
    %v8560 = vunpack.c.l.b16 %v6512
    %v8561 = vunpack.c.l.b16 %v6513
    %v8562 = vunpack.c.l.b16 %v6514
    %v8563 = vunpack.c.l.b16 %v6515
    %v8564 = vunpack.c.l.b16 %v6516
    %v8565 = vunpack.c.l.b16 %v6517
    %v8566 = vunpack.c.l.b16 %v6518
    %v8567 = vunpack.c.l.b16 %v6519
    %v8568 = vunpack.c.l.b16 %v6520
    %v8569 = vunpack.c.l.b16 %v6521
    %v8570 = vunpack.c.l.b16 %v6522
    %v8571 = vunpack.c.l.b16 %v6523
    %v8572 = vunpack.c.l.b16 %v6524
    %v8573 = vunpack.c.l.b16 %v6525
    %v8574 = vunpack.c.l.b16 %v6526
    %v8575 = vunpack.c.l.b16 %v6527
    %v8576 = vunpack.c.l.b16 %v6528
    %v8577 = vunpack.c.l.b16 %v6529
    %v8578 = vunpack.c.l.b16 %v6530
    %v8579 = vunpack.c.l.b16 %v6531
    %v8580 = vunpack.c.l.b16 %v6532
    %v8581 = vunpack.c.l.b16 %v6533
    %v8582 = vunpack.c.l.b16 %v6534
    %v8583 = vunpack.c.l.b16 %v6535
    %v8584 = vunpack.c.l.b16 %v6536
    %v8585 = vunpack.c.l.b16 %v6537
    %v8586 = vunpack.c.l.b16 %v6538
    %v8587 = vunpack.c.l.b16 %v6539
    %v8588 = vunpack.c.l.b16 %v6540
    %v8589 = vunpack.c.l.b16 %v6541
    %v8590 = vunpack.c.l.b16 %v6542
    %v8591 = vunpack.c.l.b16 %v6543
    %v8592 = vunpack.c.l.b16 %v6544
    %v8593 = vunpack.c.l.b16 %v6545
    %v8594 = vunpack.c.l.b16 %v6546
    %v8595 = vunpack.c.l.b16 %v6547
    %v8596 = vunpack.c.l.b16 %v6548
    %v8597 = vunpack.c.l.b16 %v6549
    %v8598 = vunpack.c.l.b16 %v6550
    %v8599 = vunpack.c.l.b16 %v6551
    %v8600 = vunpack.c.l.b16 %v6552
    %v8601 = vunpack.c.l.b16 %v6553
    %v8602 = vunpack.c.l.b16 %v6554
    %v8603 = vunpack.c.l.b16 %v6555
    %v8604 = vunpack.c.l.b16 %v6556
    %v8605 = vunpack.c.l.b16 %v6557
    %v8606 = vunpack.c.l.b16 %v6558
    %v8607 = vunpack.c.l.b16 %v6559
    %v8608 = vunpack.c.l.b16 %v6560
    %v8609 = vunpack.c.l.b16 %v6561
    %v8610 = vunpack.c.l.b16 %v6562
    %v8611 = vunpack.c.l.b16 %v6563
    %v8612 = vunpack.c.l.b16 %v6564
    %v8613 = vunpack.c.l.b16 %v6565
    %v8614 = vunpack.c.l.b16 %v6566
    %v8615 = vunpack.c.l.b16 %v6567
    %v8616 = vunpack.c.l.b16 %v6568
    %v8617 = vunpack.c.l.b16 %v6569
    %v8618 = vunpack.c.l.b16 %v6570
    %v8619 = vunpack.c.l.b16 %v6571
    %v8620 = vunpack.c.l.b16 %v6572
    %v8621 = vunpack.c.l.b16 %v6573
    %v8622 = vunpack.c.l.b16 %v6574
    %v8623 = vunpack.c.l.b16 %v6575
    %v8624 = vunpack.c.l.b16 %v6576
    %v8625 = vunpack.c.l.b16 %v6577
    %v8626 = vunpack.c.l.b16 %v6578
    %v8627 = vunpack.c.l.b16 %v6579
    %v8628 = vunpack.c.l.b16 %v6580
    %v8629 = vunpack.c.l.b16 %v6581
    %v8630 = vunpack.c.l.b16 %v6582
    %v8631 = vunpack.c.l.b16 %v6583
    %v8632 = vunpack.c.l.b16 %v6584
    %v8633 = vunpack.c.l.b16 %v6585
    %v8634 = vunpack.c.l.b16 %v6586
    %v8635 = vunpack.c.l.b16 %v6587
    %v8636 = vunpack.c.l.b16 %v6588
    %v8637 = vunpack.c.l.b16 %v6589
    %v8638 = vunpack.c.l.b16 %v6590
    %v8639 = vunpack.c.l.b16 %v6591
    %v8640 = vunpack.c.l.b16 %v6592
    %v8641 = vunpack.c.l.b16 %v6593
    %v8642 = vunpack.c.l.b16 %v6594
    %v8643 = vunpack.c.l.b16 %v6595
    %v8644 = vunpack.c.l.b16 %v6596
    %v8645 = vunpack.c.l.b16 %v6597
    %v8646 = vunpack.c.l.b16 %v6598
    %v8647 = vunpack.c.l.b16 %v6599
    %v8648 = vunpack.c.l.b16 %v6600
    %v8649 = vunpack.c.l.b16 %v6601
    %v8650 = vunpack.c.l.b16 %v6602
    %v8651 = vunpack.c.l.b16 %v6603
    %v8652 = vunpack.c.l.b16 %v6604
    %v8653 = vunpack.c.l.b16 %v6605
    %v8654 = vunpack.c.l.b16 %v6606
    %v8655 = vunpack.c.l.b16 %v6607
    %v8656 = vunpack.c.l.b16 %v6608
    %v8657 = vunpack.c.l.b16 %v6609
    %v8658 = vunpack.c.l.b16 %v6610
    %v8659 = vunpack.c.l.b16 %v6611
    %v8660 = vunpack.c.l.b16 %v6612
    %v8661 = vunpack.c.l.b16 %v6613
    %v8662 = vunpack.c.l.b16 %v6614
    %v8663 = vunpack.c.l.b16 %v6615
    %v8664 = vunpack.c.l.b16 %v6616
    %v8665 = vunpack.c.l.b16 %v6617
    %v8666 = vunpack.c.l.b16 %v6618
    %v8667 = vunpack.c.l.b16 %v6619
    %v8668 = vunpack.c.l.b16 %v6620
    %v8669 = vunpack.c.l.b16 %v6621
    %v8670 = vunpack.c.l.b16 %v6622
    %v8671 = vunpack.c.l.b16 %v6623
    %v8672 = vunpack.c.l.b16 %v6624
    %v8673 = vunpack.c.l.b16 %v6625
    %v8674 = vunpack.c.l.b16 %v6626
    %v8675 = vunpack.c.l.b16 %v6627
    %v8676 = vunpack.c.l.b16 %v6628
    %v8677 = vunpack.c.l.b16 %v6629
    %v8678 = vunpack.c.l.b16 %v6630
    %v8679 = vunpack.c.l.b16 %v6631
    %v8680 = vunpack.c.l.b16 %v6632
    %v8681 = vunpack.c.l.b16 %v6633
    %v8682 = vunpack.c.l.b16 %v6634
    %v8683 = vunpack.c.l.b16 %v6635
    %v8684 = vunpack.c.l.b16 %v6636
    %v8685 = vunpack.c.l.b16 %v6637
    %v8686 = vunpack.c.l.b16 %v6638
    %v8687 = vunpack.c.l.b16 %v6639
    %v8688 = vunpack.c.l.b16 %v6640
    %v8689 = vunpack.c.l.b16 %v6641
    %v8690 = vunpack.c.l.b16 %v6642
    %v8691 = vunpack.c.l.b16 %v6643
    %v8692 = vunpack.c.l.b16 %v6644
    %v8693 = vunpack.c.l.b16 %v6645
    %v8694 = vunpack.c.l.b16 %v6646
    %v8695 = vunpack.c.l.b16 %v6647
    %v8696 = vunpack.c.l.b16 %v6648
    %v8697 = vunpack.c.l.b16 %v6649
    %v8698 = vunpack.c.l.b16 %v6650
    %v8699 = vunpack.c.l.b16 %v6651
    %v8700 = vunpack.c.l.b16 %v6652
    %v8701 = vunpack.c.l.b16 %v6653
    %v8702 = vunpack.c.l.b16 %v6654
    %v8703 = vunpack.c.l.b16 %v6655
    %v8704 = vunpack.c.l.b16 %v6656
    %v8705 = vunpack.c.l.b16 %v6657
    %v8706 = vunpack.c.l.b16 %v6658
    %v8707 = vunpack.c.l.b16 %v6659
    %v8708 = vunpack.c.l.b16 %v6660
    %v8709 = vunpack.c.l.b16 %v6661
    %v8710 = vunpack.c.l.b16 %v6662
    %v8711 = vunpack.c.l.b16 %v6663
    %v8712 = vunpack.c.l.b16 %v6664
    %v8713 = vunpack.c.l.b16 %v6665
    %v8714 = vunpack.c.l.b16 %v6666
    %v8715 = vunpack.c.l.b16 %v6667
    %v8716 = vunpack.c.l.b16 %v6668
    %v8717 = vunpack.c.l.b16 %v6669
    %v8718 = vunpack.c.l.b16 %v6670
    %v8719 = vunpack.c.l.b16 %v6671
    %v8720 = vunpack.c.l.b16 %v6672
    %v8721 = vunpack.c.l.b16 %v6673
    %v8722 = vunpack.c.l.b16 %v6674
    %v8723 = vunpack.c.l.b16 %v6675
    %v8724 = vunpack.c.l.b16 %v6676
    %v8725 = vunpack.c.l.b16 %v6677
    %v8726 = vunpack.c.l.b16 %v6678
    %v8727 = vunpack.c.l.b16 %v6679
    %v8728 = vunpack.c.l.b16 %v6680
    %v8729 = vunpack.c.l.b16 %v6681
    %v8730 = vunpack.c.l.b16 %v6682
    %v8731 = vunpack.c.l.b16 %v6683
    %v8732 = vunpack.c.l.b16 %v6684
    %v8733 = vunpack.c.l.b16 %v6685
    %v8734 = vunpack.c.l.b16 %v6686
    %v8735 = vunpack.c.l.b16 %v6687
    %v8736 = vunpack.c.l.b16 %v6688
    %v8737 = vunpack.c.l.b16 %v6689
    %v8738 = vunpack.c.l.b16 %v6690
    %v8739 = vunpack.c.l.b16 %v6691
    %v8740 = vunpack.c.l.b16 %v6692
    %v8741 = vunpack.c.l.b16 %v6693
    %v8742 = vunpack.c.l.b16 %v6694
    %v8743 = vunpack.c.l.b16 %v6695
    %v8744 = vunpack.c.l.b16 %v6696
    %v8745 = vunpack.c.l.b16 %v6697
    %v8746 = vunpack.c.l.b16 %v6698
    %v8747 = vunpack.c.l.b16 %v6699
    %v8748 = vunpack.c.l.b16 %v6700
    %v8749 = vunpack.c.l.b16 %v6701
    %v8750 = vunpack.c.l.b16 %v6702
    %v8751 = vunpack.c.l.b16 %v6703
    %v8752 = vunpack.c.l.b16 %v6704
    %v8753 = vunpack.c.l.b16 %v6705
    %v8754 = vunpack.c.l.b16 %v6706
    %v8755 = vunpack.c.l.b16 %v6707
    %v8756 = vunpack.c.l.b16 %v6708
    %v8757 = vunpack.c.l.b16 %v6709
    %v8758 = vunpack.c.l.b16 %v6710
    %v8759 = vunpack.c.l.b16 %v6711
    %v8760 = vunpack.c.l.b16 %v6712
    %v8761 = vunpack.c.l.b16 %v6713
    %v8762 = vunpack.c.l.b16 %v6714
    %v8763 = vunpack.c.l.b16 %v6715
    %v8764 = vunpack.c.l.b16 %v6716
    %v8765 = vunpack.c.l.b16 %v6717
    %v8766 = vunpack.c.l.b16 %v6718
    %v8767 = vunpack.c.l.b16 %v6719
    %v8768 = vunpack.c.l.b16 %v6720
    %v8769 = vunpack.c.l.b16 %v6721
    %v8770 = vunpack.c.l.b16 %v6722
    %v8771 = vunpack.c.l.b16 %v6723
    %v8772 = vunpack.c.l.b16 %v6724
    %v8773 = vunpack.c.l.b16 %v6725
    %v8774 = vunpack.c.l.b16 %v6726
    %v8775 = vunpack.c.l.b16 %v6727
    %v8776 = vunpack.c.l.b16 %v6728
    %v8777 = vunpack.c.l.b16 %v6729
    %v8778 = vunpack.c.l.b16 %v6730
    %v8779 = vunpack.c.l.b16 %v6731
    %v8780 = vunpack.c.l.b16 %v6732
    %v8781 = vunpack.c.l.b16 %v6733
    %v8782 = vunpack.c.l.b16 %v6734
    %v8783 = vunpack.c.l.b16 %v6735
    %v8784 = vunpack.c.l.b16 %v6736
    %v8785 = vunpack.c.l.b16 %v6737
    %v8786 = vunpack.c.l.b16 %v6738
    %v8787 = vunpack.c.l.b16 %v6739
    %v8788 = vunpack.c.l.b16 %v6740
    %v8789 = vunpack.c.l.b16 %v6741
    %v8790 = vunpack.c.l.b16 %v6742
    %v8791 = vunpack.c.l.b16 %v6743
    %v8792 = vunpack.c.l.b16 %v6744
    %v8793 = vunpack.c.l.b16 %v6745
    %v8794 = vunpack.c.l.b16 %v6746
    %v8795 = vunpack.c.l.b16 %v6747
    %v8796 = vunpack.c.l.b16 %v6748
    %v8797 = vunpack.c.l.b16 %v6749
    %v8798 = vunpack.c.l.b16 %v6750
    %v8799 = vunpack.c.l.b16 %v6751
    %v8800 = vunpack.c.l.b16 %v6752
    %v8801 = vunpack.c.l.b16 %v6753
    %v8802 = vunpack.c.l.b16 %v6754
    %v8803 = vunpack.c.l.b16 %v6755
    %v8804 = vunpack.c.l.b16 %v6756
    %v8805 = vunpack.c.l.b16 %v6757
    %v8806 = vunpack.c.l.b16 %v6758
    %v8807 = vunpack.c.l.b16 %v6759
    %v8808 = vunpack.c.l.b16 %v6760
    %v8809 = vunpack.c.l.b16 %v6761
    %v8810 = vunpack.c.l.b16 %v6762
    %v8811 = vunpack.c.l.b16 %v6763
    %v8812 = vunpack.c.l.b16 %v6764
    %v8813 = vunpack.c.l.b16 %v6765
    %v8814 = vunpack.c.l.b16 %v6766
    %v8815 = vunpack.c.l.b16 %v6767
    %v8816 = vunpack.c.l.b16 %v6768
    %v8817 = vunpack.c.l.b16 %v6769
    %v8818 = vunpack.c.l.b16 %v6770
    %v8819 = vunpack.c.l.b16 %v6771
    %v8820 = vunpack.c.l.b16 %v6772
    %v8821 = vunpack.c.l.b16 %v6773
    %v8822 = vunpack.c.l.b16 %v6774
    %v8823 = vunpack.c.l.b16 %v6775
    %v8824 = vunpack.c.l.b16 %v6776
    %v8825 = vunpack.c.l.b16 %v6777
    %v8826 = vunpack.c.l.b16 %v6778
    %v8827 = vunpack.c.l.b16 %v6779
    %v8828 = vunpack.c.l.b16 %v6780
    %v8829 = vunpack.c.l.b16 %v6781
    %v8830 = vunpack.c.l.b16 %v6782
    %v8831 = vunpack.c.l.b16 %v6783
    %v8832 = vunpack.c.l.b16 %v6784
    %v8833 = vunpack.c.l.b16 %v6785
    %v8834 = vunpack.c.l.b16 %v6786
    %v8835 = vunpack.c.l.b16 %v6787
    %v8836 = vunpack.c.l.b16 %v6788
    %v8837 = vunpack.c.l.b16 %v6789
    %v8838 = vunpack.c.l.b16 %v6790
    %v8839 = vunpack.c.l.b16 %v6791
    %v8840 = vunpack.c.l.b16 %v6792
    %v8841 = vunpack.c.l.b16 %v6793
    %v8842 = vunpack.c.l.b16 %v6794
    %v8843 = vunpack.c.l.b16 %v6795
    %v8844 = vunpack.c.l.b16 %v6796
    %v8845 = vunpack.c.l.b16 %v6797
    %v8846 = vunpack.c.l.b16 %v6798
    %v8847 = vunpack.c.l.b16 %v6799
    %v8848 = vunpack.c.l.b16 %v6800
    %v8849 = vunpack.c.l.b16 %v6801
    %v8850 = vunpack.c.l.b16 %v6802
    %v8851 = vunpack.c.l.b16 %v6803
    %v8852 = vunpack.c.l.b16 %v6804
    %v8853 = vunpack.c.l.b16 %v6805
    %v8854 = vunpack.c.l.b16 %v6806
    %v8855 = vunpack.c.l.b16 %v6807
    %v8856 = vunpack.c.l.b16 %v6808
    %v8857 = vunpack.c.l.b16 %v6809
    %v8858 = vunpack.c.l.b16 %v6810
    %v8859 = vunpack.c.l.b16 %v6811
    %v8860 = vunpack.c.l.b16 %v6812
    %v8861 = vunpack.c.l.b16 %v6813
    %v8862 = vunpack.c.l.b16 %v6814
    %v8863 = vunpack.c.l.b16 %v6815
    %v8864 = vunpack.c.l.b16 %v6816
    %v8865 = vunpack.c.l.b16 %v6817
    %v8866 = vunpack.c.l.b16 %v6818
    %v8867 = vunpack.c.l.b16 %v6819
    %v8868 = vunpack.c.l.b16 %v6820
    %v8869 = vunpack.c.l.b16 %v6821
    %v8870 = vunpack.c.l.b16 %v6822
    %v8871 = vunpack.c.l.b16 %v6823
    %v8872 = vunpack.c.l.b16 %v6824
    %v8873 = vunpack.c.l.b16 %v6825
    %v8874 = vunpack.c.l.b16 %v6826
    %v8875 = vunpack.c.l.b16 %v6827
    %v8876 = vunpack.c.l.b16 %v6828
    %v8877 = vunpack.c.l.b16 %v6829
    %v8878 = vunpack.c.l.b16 %v6830
    %v8879 = vunpack.c.l.b16 %v6831
    %v8880 = vunpack.c.l.b16 %v6832
    %v8881 = vunpack.c.l.b16 %v6833
    %v8882 = vunpack.c.l.b16 %v6834
    %v8883 = vunpack.c.l.b16 %v6835
    %v8884 = vunpack.c.l.b16 %v6836
    %v8885 = vunpack.c.l.b16 %v6837
    %v8886 = vunpack.c.l.b16 %v6838
    %v8887 = vunpack.c.l.b16 %v6839
    %v8888 = vunpack.c.l.b16 %v6840
    %v8889 = vunpack.c.l.b16 %v6841
    %v8890 = vunpack.c.l.b16 %v6842
    %v8891 = vunpack.c.l.b16 %v6843
    %v8892 = vunpack.c.l.b16 %v6844
    %v8893 = vunpack.c.l.b16 %v6845
    %v8894 = vunpack.c.l.b16 %v6846
    %v8895 = vunpack.c.l.b16 %v6847
    %v8896 = vunpack.c.l.b16 %v6848
    %v8897 = vunpack.c.l.b16 %v6849
    %v8898 = vunpack.c.l.b16 %v6850
    %v8899 = vunpack.c.l.b16 %v6851
    %v8900 = vunpack.c.l.b16 %v6852
    %v8901 = vunpack.c.l.b16 %v6853
    %v8902 = vunpack.c.l.b16 %v6854
    %v8903 = vunpack.c.l.b16 %v6855
    %v8904 = vunpack.c.l.b16 %v6856
    %v8905 = vunpack.c.l.b16 %v6857
    %v8906 = vunpack.c.l.b16 %v6858
    %v8907 = vunpack.c.l.b16 %v6859
    %v8908 = vunpack.c.l.b16 %v6860
    %v8909 = vunpack.c.l.b16 %v6861
    %v8910 = vunpack.c.l.b16 %v6862
    %v8911 = vunpack.c.l.b16 %v6863
    %v8912 = vunpack.c.l.b16 %v6864
    %v8913 = vunpack.c.l.b16 %v6865
    %v8914 = vunpack.c.l.b16 %v6866
    %v8915 = vunpack.c.l.b16 %v6867
    %v8916 = vunpack.c.l.b16 %v6868
    %v8917 = vunpack.c.l.b16 %v6869
    %v8918 = vunpack.c.l.b16 %v6870
    %v8919 = vunpack.c.l.b16 %v6871
    %v8920 = vunpack.c.l.b16 %v6872
    %v8921 = vunpack.c.l.b16 %v6873
    %v8922 = vunpack.c.l.b16 %v6874
    %v8923 = vunpack.c.l.b16 %v6875
    %v8924 = vunpack.c.l.b16 %v6876
    %v8925 = vunpack.c.l.b16 %v6877
    %v8926 = vunpack.c.l.b16 %v6878
    %v8927 = vunpack.c.l.b16 %v6879
    %v8928 = vunpack.c.l.b16 %v6880
    %v8929 = vunpack.c.l.b16 %v6881
    %v8930 = vunpack.c.l.b16 %v6882
    %v8931 = vunpack.c.l.b16 %v6883
    %v8932 = vunpack.c.l.b16 %v6884
    %v8933 = vunpack.c.l.b16 %v6885
    %v8934 = vunpack.c.l.b16 %v6886
    %v8935 = vunpack.c.l.b16 %v6887
    %v8936 = vunpack.c.l.b16 %v6888
    %v8937 = vunpack.c.l.b16 %v6889
    %v8938 = vunpack.c.l.b16 %v6890
    %v8939 = vunpack.c.l.b16 %v6891
    %v8940 = vunpack.c.l.b16 %v6892
    %v8941 = vunpack.c.l.b16 %v6893
    %v8942 = vunpack.c.l.b16 %v6894
    %v8943 = vunpack.c.l.b16 %v6895
    %v8944 = vunpack.c.l.b16 %v6896
    %v8945 = vunpack.c.l.b16 %v6897
    %v8946 = vunpack.c.l.b16 %v6898
    %v8947 = vunpack.c.l.b16 %v6899
    %v8948 = vunpack.c.l.b16 %v6900
    %v8949 = vunpack.c.l.b16 %v6901
    %v8950 = vunpack.c.l.b16 %v6902
    %v8951 = vunpack.c.l.b16 %v6903
    %v8952 = vunpack.c.l.b16 %v6904
    %v8953 = vunpack.c.l.b16 %v6905
    %v8954 = vunpack.c.l.b16 %v6906
    %v8955 = vunpack.c.l.b16 %v6907
    %v8956 = vunpack.c.l.b16 %v6908
    %v8957 = vunpack.c.l.b16 %v6909
    %v8958 = vunpack.c.l.b16 %v6910
    %v8959 = vunpack.c.l.b16 %v6911
    %v8960 = vunpack.c.l.b16 %v6912
    %v8961 = vunpack.c.l.b16 %v6913
    %v8962 = vunpack.c.l.b16 %v6914
    %v8963 = vunpack.c.l.b16 %v6915
    %v8964 = vunpack.c.l.b16 %v6916
    %v8965 = vunpack.c.l.b16 %v6917
    %v8966 = vunpack.c.l.b16 %v6918
    %v8967 = vunpack.c.l.b16 %v6919
    %v8968 = vunpack.c.l.b16 %v6920
    %v8969 = vunpack.c.l.b16 %v6921
    %v8970 = vunpack.c.l.b16 %v6922
    %v8971 = vunpack.c.l.b16 %v6923
    %v8972 = vunpack.c.l.b16 %v6924
    %v8973 = vunpack.c.l.b16 %v6925
    %v8974 = vunpack.c.l.b16 %v6926
    %v8975 = vunpack.c.l.b16 %v6927
    %v8976 = vunpack.c.l.b16 %v6928
    %v8977 = vunpack.c.l.b16 %v6929
    %v8978 = vunpack.c.l.b16 %v6930
    %v8979 = vunpack.c.l.b16 %v6931
    %v8980 = vunpack.c.l.b16 %v6932
    %v8981 = vunpack.c.l.b16 %v6933
    %v8982 = vunpack.c.l.b16 %v6934
    %v8983 = vunpack.c.l.b16 %v6935
    %v8984 = vunpack.c.l.b16 %v6936
    %v8985 = vunpack.c.l.b16 %v6937
    %v8986 = vunpack.c.l.b16 %v6938
    %v8987 = vunpack.c.l.b16 %v6939
    %v8988 = vunpack.c.l.b16 %v6940
    %v8989 = vunpack.c.l.b16 %v6941
    %v8990 = vunpack.c.l.b16 %v6942
    %v8991 = vunpack.c.l.b16 %v6943
    %v8992 = vunpack.c.l.b16 %v6944
    %v8993 = vunpack.c.l.b16 %v6945
    %v8994 = vunpack.c.l.b16 %v6946
    %v8995 = vunpack.c.l.b16 %v6947
    %v8996 = vunpack.c.l.b16 %v6948
    %v8997 = vunpack.c.l.b16 %v6949
    %v8998 = vunpack.c.l.b16 %v6950
    %v8999 = vunpack.c.l.b16 %v6951
    %v9000 = vunpack.c.l.b16 %v6952
    %v9001 = vunpack.c.l.b16 %v6953
    %v9002 = vunpack.c.l.b16 %v6954
    %v9003 = vunpack.c.l.b16 %v6955
    %v9004 = vunpack.c.l.b16 %v6956
    %v9005 = vunpack.c.l.b16 %v6957
    %v9006 = vunpack.c.l.b16 %v6958
    %v9007 = vunpack.c.l.b16 %v6959
    %v9008 = vunpack.c.l.b16 %v6960
    %v9009 = vunpack.c.l.b16 %v6961
    %v9010 = vunpack.c.l.b16 %v6962
    %v9011 = vunpack.c.l.b16 %v6963
    %v9012 = vunpack.c.l.b16 %v6964
    %v9013 = vunpack.c.l.b16 %v6965
    %v9014 = vunpack.c.l.b16 %v6966
    %v9015 = vunpack.c.l.b16 %v6967
    %v9016 = vunpack.c.l.b16 %v6968
    %v9017 = vunpack.c.l.b16 %v6969
    %v9018 = vunpack.c.l.b16 %v6970
    %v9019 = vunpack.c.l.b16 %v6971
    %v9020 = vunpack.c.l.b16 %v6972
    %v9021 = vunpack.c.l.b16 %v6973
    %v9022 = vunpack.c.l.b16 %v6974
    %v9023 = vunpack.c.l.b16 %v6975
    %v9024 = vunpack.c.l.b16 %v6976
    %v9025 = vunpack.c.l.b16 %v6977
    %v9026 = vunpack.c.l.b16 %v6978
    %v9027 = vunpack.c.l.b16 %v6979
    %v9028 = vunpack.c.l.b16 %v6980
    %v9029 = vunpack.c.l.b16 %v6981
    %v9030 = vunpack.c.l.b16 %v6982
    %v9031 = vunpack.c.l.b16 %v6983
    %v9032 = vunpack.c.l.b16 %v6984
    %v9033 = vunpack.c.l.b16 %v6985
    %v9034 = vunpack.c.l.b16 %v6986
    %v9035 = vunpack.c.l.b16 %v6987
    %v9036 = vunpack.c.l.b16 %v6988
    %v9037 = vunpack.c.l.b16 %v6989
    %v9038 = vunpack.c.l.b16 %v6990
    %v9039 = vunpack.c.l.b16 %v6991
    %v9040 = vunpack.c.l.b16 %v6992
    %v9041 = vunpack.c.l.b16 %v6993
    %v9042 = vunpack.c.l.b16 %v6994
    %v9043 = vunpack.c.l.b16 %v6995
    %v9044 = vunpack.c.l.b16 %v6996
    %v9045 = vunpack.c.l.b16 %v6997
    %v9046 = vunpack.c.l.b16 %v6998
    %v9047 = vunpack.c.l.b16 %v6999
    %v9048 = vunpack.c.l.b16 %v7000
    %v9049 = vunpack.c.l.b16 %v7001
    %v9050 = vunpack.c.l.b16 %v7002
    %v9051 = vunpack.c.l.b16 %v7003
    %v9052 = vunpack.c.l.b16 %v7004
    %v9053 = vunpack.c.l.b16 %v7005
    %v9054 = vunpack.c.l.b16 %v7006
    %v9055 = vunpack.c.l.b16 %v7007
    %v9056 = vunpack.c.l.b16 %v7008
    %v9057 = vunpack.c.l.b16 %v7009
    %v9058 = vunpack.c.l.b16 %v7010
    %v9059 = vunpack.c.l.b16 %v7011
    %v9060 = vunpack.c.l.b16 %v7012
    %v9061 = vunpack.c.l.b16 %v7013
    %v9062 = vunpack.c.l.b16 %v7014
    %v9063 = vunpack.c.l.b16 %v7015
    %v9064 = vunpack.c.l.b16 %v7016
    %v9065 = vunpack.c.l.b16 %v7017
    %v9066 = vunpack.c.l.b16 %v7018
    %v9067 = vunpack.c.l.b16 %v7019
    %v9068 = vunpack.c.l.b16 %v7020
    %v9069 = vunpack.c.l.b16 %v7021
    %v9070 = vunpack.c.l.b16 %v7022
    %v9071 = vunpack.c.l.b16 %v7023
    %v9072 = vunpack.c.l.b16 %v7024
    %v9073 = vunpack.c.l.b16 %v7025
    %v9074 = vunpack.c.l.b16 %v7026
    %v9075 = vunpack.c.l.b16 %v7027
    %v9076 = vunpack.c.l.b16 %v7028
    %v9077 = vunpack.c.l.b16 %v7029
    %v9078 = vunpack.c.l.b16 %v7030
    %v9079 = vunpack.c.l.b16 %v7031
    %v9080 = vunpack.c.l.b16 %v7032
    %v9081 = vunpack.c.l.b16 %v7033
    %v9082 = vunpack.c.l.b16 %v7034
    %v9083 = vunpack.c.l.b16 %v7035
    %v9084 = vunpack.c.l.b16 %v7036
    %v9085 = vunpack.c.l.b16 %v7037
    %v9086 = vunpack.c.l.b16 %v7038
    %v9087 = vunpack.c.l.b16 %v7039
    %v9088 = vunpack.c.l.b16 %v7040
    %v9089 = vunpack.c.l.b16 %v7041
    %v9090 = vunpack.c.l.b16 %v7042
    %v9091 = vunpack.c.l.b16 %v7043
    %v9092 = vunpack.c.l.b16 %v7044
    %v9093 = vunpack.c.l.b16 %v7045
    %v9094 = vunpack.c.l.b16 %v7046
    %v9095 = vunpack.c.l.b16 %v7047
    %v9096 = vunpack.c.l.b16 %v7048
    %v9097 = vunpack.c.l.b16 %v7049
    %v9098 = vunpack.c.l.b16 %v7050
    %v9099 = vunpack.c.l.b16 %v7051
    %v9100 = vunpack.c.l.b16 %v7052
    %v9101 = vunpack.c.l.b16 %v7053
    %v9102 = vunpack.c.l.b16 %v7054
    %v9103 = vunpack.c.l.b16 %v7055
    %v9104 = vunpack.c.l.b16 %v7056
    %v9105 = vunpack.c.l.b16 %v7057
    %v9106 = vunpack.c.l.b16 %v7058
    %v9107 = vunpack.c.l.b16 %v7059
    %v9108 = vunpack.c.l.b16 %v7060
    %v9109 = vunpack.c.l.b16 %v7061
    %v9110 = vunpack.c.l.b16 %v7062
    %v9111 = vunpack.c.l.b16 %v7063
    %v9112 = vunpack.c.l.b16 %v7064
    %v9113 = vunpack.c.l.b16 %v7065
    %v9114 = vunpack.c.l.b16 %v7066
    %v9115 = vunpack.c.l.b16 %v7067
    %v9116 = vunpack.c.l.b16 %v7068
    %v9117 = vunpack.c.l.b16 %v7069
    %v9118 = vunpack.c.l.b16 %v7070
    %v9119 = vunpack.c.l.b16 %v7071
    %v9120 = vunpack.c.l.b16 %v7072
    %v9121 = vunpack.c.l.b16 %v7073
    %v9122 = vunpack.c.l.b16 %v7074
    %v9123 = vunpack.c.l.b16 %v7075
    %v9124 = vunpack.c.l.b16 %v7076
    %v9125 = vunpack.c.l.b16 %v7077
    %v9126 = vunpack.c.l.b16 %v7078
    %v9127 = vunpack.c.l.b16 %v7079
    %v9128 = vunpack.c.l.b16 %v7080
    %v9129 = vunpack.c.l.b16 %v7081
    %v9130 = vunpack.c.l.b16 %v7082
    %v9131 = vunpack.c.l.b16 %v7083
    %v9132 = vunpack.c.l.b16 %v7084
    %v9133 = vunpack.c.l.b16 %v7085
    %v9134 = vunpack.c.l.b16 %v7086
    %v9135 = vunpack.c.l.b16 %v7087
    %v9136 = vunpack.c.l.b16 %v7088
    %v9137 = vunpack.c.l.b16 %v7089
    %v9138 = vunpack.c.l.b16 %v7090
    %v9139 = vunpack.c.l.b16 %v7091
    %v9140 = vunpack.c.l.b16 %v7092
    %v9141 = vunpack.c.l.b16 %v7093
    %v9142 = vunpack.c.l.b16 %v7094
    %v9143 = vunpack.c.l.b16 %v7095
    %v9144 = vunpack.c.l.b16 %v7096
    %v9145 = vunpack.c.l.b16 %v7097
    %v9146 = vunpack.c.l.b16 %v7098
    %v9147 = vunpack.c.l.b16 %v7099
    %v9148 = vunpack.c.l.b16 %v7100
    %v9149 = vunpack.c.l.b16 %v7101
    %v9150 = vunpack.c.l.b16 %v7102
    %v9151 = vunpack.c.l.b16 %v7103
    %v9152 = vunpack.c.l.b16 %v7104
    %v9153 = vunpack.c.l.b16 %v7105
    %v9154 = vunpack.c.l.b16 %v7106
    %v9155 = vunpack.c.l.b16 %v7107
    %v9156 = vunpack.c.l.b16 %v7108
    %v9157 = vunpack.c.l.b16 %v7109
    %v9158 = vunpack.c.l.b16 %v7110
    %v9159 = vunpack.c.l.b16 %v7111
    %v9160 = vunpack.c.l.b16 %v7112
    %v9161 = vunpack.c.l.b16 %v7113
    %v9162 = vunpack.c.l.b16 %v7114
    %v9163 = vunpack.c.l.b16 %v7115
    %v9164 = vunpack.c.l.b16 %v7116
    %v9165 = vunpack.c.l.b16 %v7117
    %v9166 = vunpack.c.l.b16 %v7118
    %v9167 = vunpack.c.l.b16 %v7119
    %v9168 = vunpack.c.l.b16 %v7120
    %v9169 = vunpack.c.l.b16 %v7121
    %v9170 = vunpack.c.l.b16 %v7122
    %v9171 = vunpack.c.l.b16 %v7123
    %v9172 = vunpack.c.l.b16 %v7124
    %v9173 = vunpack.c.l.b16 %v7125
    %v9174 = vunpack.c.l.b16 %v7126
    %v9175 = vunpack.c.l.b16 %v7127
    %v9176 = vunpack.c.l.b16 %v7128
    %v9177 = vunpack.c.l.b16 %v7129
    %v9178 = vunpack.c.l.b16 %v7130
    %v9179 = vunpack.c.l.b16 %v7131
    %v9180 = vunpack.c.l.b16 %v7132
    %v9181 = vunpack.c.l.b16 %v7133
    %v9182 = vunpack.c.l.b16 %v7134
    %v9183 = vunpack.c.l.b16 %v7135
    %v9184 = vunpack.c.l.b16 %v7136
    %v9185 = vunpack.c.l.b16 %v7137
    %v9186 = vunpack.c.l.b16 %v7138
    %v9187 = vunpack.c.l.b16 %v7139
    %v9188 = vunpack.c.l.b16 %v7140
    %v9189 = vunpack.c.l.b16 %v7141
    %v9190 = vunpack.c.l.b16 %v7142
    %v9191 = vunpack.c.l.b16 %v7143
    %v9192 = vunpack.c.l.b16 %v7144
    %v9193 = vunpack.c.l.b16 %v7145
    %v9194 = vunpack.c.l.b16 %v7146
    %v9195 = vunpack.c.l.b16 %v7147
    %v9196 = vunpack.c.l.b16 %v7148
    %v9197 = vunpack.c.l.b16 %v7149
    %v9198 = vunpack.c.l.b16 %v7150
    %v9199 = vunpack.c.l.b16 %v7151
    %v9200 = vunpack.c.l.b16 %v7152
    %v9201 = vunpack.c.l.b16 %v7153
    %v9202 = vunpack.c.l.b16 %v7154
    %v9203 = vunpack.c.l.b16 %v7155
    %v9204 = vunpack.c.l.b16 %v7156
    %v9205 = vunpack.c.l.b16 %v7157
    %v9206 = vunpack.c.l.b16 %v7158
    %v9207 = vunpack.c.l.b16 %v7159
    %v9208 = vunpack.c.l.b16 %v7160
    %v9209 = vunpack.c.l.b16 %v7161
    %v9210 = vunpack.c.l.b16 %v7162
    %v9211 = vunpack.c.l.b16 %v7163
    %v9212 = vunpack.c.l.b16 %v7164
    %v9213 = vunpack.c.l.b16 %v7165
    %v9214 = vunpack.c.l.b16 %v7166
    %v9215 = vunpack.c.l.b16 %v7167
    %v9216 = vunpack.c.l.b16 %v7168
    %v9217 = vunpack.c.l.b16 %v7169
    %v9218 = vunpack.c.l.b16 %v7170
    %v9219 = vunpack.c.l.b16 %v7171
    %v9220 = vunpack.c.l.b16 %v7172
    %v9221 = vunpack.c.l.b16 %v7173
    %v9222 = vunpack.c.l.b16 %v7174
    %v9223 = vunpack.c.l.b16 %v7175
    %v9224 = vunpack.c.l.b16 %v7176
    %v9225 = vunpack.c.l.b16 %v7177
    %v9226 = vunpack.c.l.b16 %v7178
    %v9227 = vunpack.c.l.b16 %v7179
    %v9228 = vunpack.c.l.b16 %v7180
    %v9229 = vunpack.c.l.b16 %v7181
    %v9230 = vunpack.c.l.b16 %v7182
    %v9231 = vunpack.c.l.b16 %v7183
    %v9232 = vunpack.c.l.b16 %v7184
    %v9233 = vunpack.c.l.b16 %v7185
    %v9234 = vunpack.c.l.b16 %v7186
    %v9235 = vunpack.c.l.b16 %v7187
    %v9236 = vunpack.c.l.b16 %v7188
    %v9237 = vunpack.c.l.b16 %v7189
    %v9238 = vunpack.c.l.b16 %v7190
    %v9239 = vunpack.c.l.b16 %v7191
    %v9240 = vunpack.c.l.b16 %v7192
    %v9241 = vunpack.c.l.b16 %v7193
    %v9242 = vunpack.c.l.b16 %v7194
    %v9243 = vunpack.c.l.b16 %v7195
    %v9244 = vunpack.c.l.b16 %v7196
    %v9245 = vunpack.c.l.b16 %v7197
    %v9246 = vunpack.c.l.b16 %v7198
    %v9247 = vunpack.c.l.b16 %v7199
    %v9248 = vunpack.c.l.b16 %v7200
    %v9249 = vunpack.c.l.b16 %v7201
    %v9250 = vunpack.c.l.b16 %v7202
    %v9251 = vunpack.c.l.b16 %v7203
    %v9252 = vunpack.c.l.b16 %v7204
    %v9253 = vunpack.c.l.b16 %v7205
    %v9254 = vunpack.c.l.b16 %v7206
    %v9255 = vunpack.c.l.b16 %v7207
    %v9256 = vunpack.c.l.b16 %v7208
    %v9257 = vunpack.c.l.b16 %v7209
    %v9258 = vunpack.c.l.b16 %v7210
    %v9259 = vunpack.c.l.b16 %v7211
    %v9260 = vunpack.c.l.b16 %v7212
    %v9261 = vunpack.c.l.b16 %v7213
    %v9262 = vunpack.c.l.b16 %v7214
    %v9263 = vunpack.c.l.b16 %v7215
    %v9264 = vunpack.c.l.b16 %v7216
    %v9265 = vunpack.c.l.b16 %v7217
    %v9266 = vunpack.c.l.b16 %v7218
    %v9267 = vunpack.c.l.b16 %v7219
    %v9268 = vunpack.c.l.b16 %v7220
    %v9269 = vunpack.c.l.b16 %v7221
    %v9270 = vunpack.c.l.b16 %v7222
    %v9271 = vunpack.c.l.b16 %v7223
    %v9272 = vunpack.c.l.b16 %v7224
    %v9273 = vunpack.c.l.b16 %v7225
    %v9274 = vunpack.c.l.b16 %v7226
    %v9275 = vunpack.c.l.b16 %v7227
    %v9276 = vunpack.c.l.b16 %v7228
    %v9277 = vunpack.c.l.b16 %v7229
    %v9278 = vunpack.c.l.b16 %v7230
    %v9279 = vunpack.c.l.b16 %v7231
    %v9280 = vunpack.c.l.b16 %v7232
    %v9281 = vunpack.c.l.b16 %v7233
    %v9282 = vunpack.c.l.b16 %v7234
    %v9283 = vunpack.c.l.b16 %v7235
    %v9284 = vunpack.c.l.b16 %v7236
    %v9285 = vunpack.c.l.b16 %v7237
    %v9286 = vunpack.c.l.b16 %v7238
    %v9287 = vunpack.c.l.b16 %v7239
    %v9288 = vunpack.c.l.b16 %v7240
    %v9289 = vunpack.c.l.b16 %v7241
    %v9290 = vunpack.c.l.b16 %v7242
    %v9291 = vunpack.c.l.b16 %v7243
    %v9292 = vunpack.c.l.b16 %v7244
    %v9293 = vunpack.c.l.b16 %v7245
    %v9294 = vunpack.c.l.b16 %v7246
    %v9295 = vunpack.c.l.b16 %v7247
    %v9296 = vunpack.c.l.b16 %v7248
    %v9297 = vunpack.c.l.b16 %v7249
    %v9298 = vunpack.c.l.b16 %v7250
    %v9299 = vunpack.c.l.b16 %v7251
    %v9300 = vunpack.c.l.b16 %v7252
    %v9301 = vunpack.c.l.b16 %v7253
    %v9302 = vunpack.c.l.b16 %v7254
    %v9303 = vunpack.c.l.b16 %v7255
    %v9304 = vunpack.c.l.b16 %v7256
    %v9305 = vunpack.c.l.b16 %v7257
    %v9306 = vunpack.c.l.b16 %v7258
    %v9307 = vunpack.c.l.b16 %v7259
    %v9308 = vunpack.c.l.b16 %v7260
    %v9309 = vunpack.c.l.b16 %v7261
    %v9310 = vunpack.c.l.b16 %v7262
    %v9311 = vunpack.c.l.b16 %v7263
    %v9312 = vunpack.c.l.b16 %v7264
    %v9313 = vunpack.c.l.b16 %v7265
    %v9314 = vunpack.c.l.b16 %v7266
    %v9315 = vunpack.c.l.b16 %v7267
    %v9316 = vunpack.c.l.b16 %v7268
    %v9317 = vunpack.c.l.b16 %v7269
    %v9318 = vunpack.c.l.b16 %v7270
    %v9319 = vunpack.c.l.b16 %v7271
    %v9320 = vunpack.c.l.b16 %v7272
    %v9321 = vunpack.c.l.b16 %v7273
    %v9322 = vunpack.c.l.b16 %v7274
    %v9323 = vunpack.c.l.b16 %v7275
    %v9324 = vunpack.c.l.b16 %v7276
    %v9325 = vunpack.c.l.b16 %v7277
    %v9326 = vunpack.c.l.b16 %v7278
    %v9327 = vunpack.c.l.b16 %v7279
    %v9328 = vunpack.c.l.b16 %v7280
    %v9329 = vunpack.c.l.b16 %v7281
    %v9330 = vunpack.c.l.b16 %v7282
    %v9331 = vunpack.c.l.b16 %v7283
    %v9332 = vunpack.c.l.b16 %v7284
    %v9333 = vunpack.c.l.b16 %v7285
    %v9334 = vunpack.c.l.b16 %v7286
    %v9335 = vunpack.c.l.b16 %v7287
    %v9336 = vunpack.c.l.b16 %v7288
    %v9337 = vunpack.c.l.b16 %v7289
    %v9338 = vunpack.c.l.b16 %v7290
    %v9339 = vunpack.c.l.b16 %v7291
    %v9340 = vunpack.c.l.b16 %v7292
    %v9341 = vunpack.c.l.b16 %v7293
    %v9342 = vunpack.c.l.b16 %v7294
    %v9343 = vunpack.c.l.b16 %v7295
    %v9344 = vunpack.c.l.b16 %v7296
    %v9345 = vunpack.c.l.b16 %v7297
    %v9346 = vunpack.c.l.b16 %v7298
    %v9347 = vunpack.c.l.b16 %v7299
    %v9348 = vunpack.c.l.b16 %v7300
    %v9349 = vunpack.c.l.b16 %v7301
    %v9350 = vunpack.c.l.b16 %v7302
    %v9351 = vunpack.c.l.b16 %v7303
    %v9352 = vunpack.c.l.b16 %v7304
    %v9353 = vunpack.c.l.b16 %v7305
    %v9354 = vunpack.c.l.b16 %v7306
    %v9355 = vunpack.c.l.b16 %v7307
    %v9356 = vunpack.c.l.b16 %v7308
    %v9357 = vunpack.c.l.b16 %v7309
    %v9358 = vunpack.c.l.b16 %v7310
    %v9359 = vunpack.c.l.b16 %v7311
    %v9360 = vunpack.c.l.b16 %v7312
    %v9361 = vunpack.c.l.b16 %v7313
    %v9362 = vunpack.c.l.b16 %v7314
    %v9363 = vunpack.c.l.b16 %v7315
    %v9364 = vunpack.c.l.b16 %v7316
    %v9365 = vunpack.c.l.b16 %v7317
    %v9366 = vunpack.c.l.b16 %v7318
    %v9367 = vunpack.c.l.b16 %v7319
    %v9368 = vunpack.c.l.b16 %v7320
    %v9369 = vunpack.c.l.b16 %v7321
    %v9370 = vunpack.c.l.b16 %v7322
    %v9371 = vunpack.c.l.b16 %v7323
    %v9372 = vunpack.c.l.b16 %v7324
    %v9373 = vunpack.c.l.b16 %v7325
    %v9374 = vunpack.c.l.b16 %v7326
    %v9375 = vunpack.c.l.b16 %v7327
    %v9376 = vunpack.c.l.b16 %v7328
    %v9377 = vunpack.c.l.b16 %v7329
    %v9378 = vunpack.c.l.b16 %v7330
    %v9379 = vunpack.c.l.b16 %v7331
    %v9380 = vunpack.c.l.b16 %v7332
    %v9381 = vunpack.c.l.b16 %v7333
    %v9382 = vunpack.c.l.b16 %v7334
    %v9383 = vunpack.c.l.b16 %v7335
    %v9384 = vunpack.c.l.b16 %v7336
    %v9385 = vunpack.c.l.b16 %v7337
    %v9386 = vunpack.c.l.b16 %v7338
    %v9387 = vunpack.c.l.b16 %v7339
    %v9388 = vunpack.c.l.b16 %v7340
    %v9389 = vunpack.c.l.b16 %v7341
    %v9390 = vunpack.c.l.b16 %v7342
    %v9391 = vunpack.c.l.b16 %v7343
    %v9392 = vunpack.c.l.b16 %v7344
    %v9393 = vunpack.c.l.b16 %v7345
    %v9394 = vunpack.c.l.b16 %v7346
    %v9395 = vunpack.c.l.b16 %v7347
    %v9396 = vunpack.c.l.b16 %v7348
    %v9397 = vunpack.c.l.b16 %v7349
    %v9398 = vunpack.c.l.b16 %v7350
    %v9399 = vunpack.c.l.b16 %v7351
    %v9400 = vunpack.c.l.b16 %v7352
    %v9401 = vunpack.c.l.b16 %v7353
    %v9402 = vunpack.c.l.b16 %v7354
    %v9403 = vunpack.c.l.b16 %v7355
    %v9404 = vunpack.c.l.b16 %v7356
    %v9405 = vunpack.c.l.b16 %v7357
    %v9406 = vunpack.c.l.b16 %v7358
    %v9407 = vunpack.c.l.b16 %v7359
    %v9408 = vunpack.c.l.b16 %v7360
    %v9409 = vunpack.c.l.b16 %v7361
    %v9410 = vunpack.c.l.b16 %v7362
    %v9411 = vunpack.c.l.b16 %v7363
    %v9412 = vunpack.c.l.b16 %v7364
    %v9413 = vunpack.c.l.b16 %v7365
    %v9414 = vunpack.c.l.b16 %v7366
    %v9415 = vunpack.c.l.b16 %v7367
    %v9416 = vunpack.c.l.b16 %v7368
    %v9417 = vunpack.c.l.b16 %v7369
    %v9418 = vunpack.c.l.b16 %v7370
    %v9419 = vunpack.c.l.b16 %v7371
    %v9420 = vunpack.c.l.b16 %v7372
    %v9421 = vunpack.c.l.b16 %v7373
    %v9422 = vunpack.c.l.b16 %v7374
    %v9423 = vunpack.c.l.b16 %v7375
    %v9424 = vunpack.c.l.b16 %v7376
    %v9425 = vunpack.c.l.b16 %v7377
    %v9426 = vunpack.c.l.b16 %v7378
    %v9427 = vunpack.c.l.b16 %v7379
    %v9428 = vunpack.c.l.b16 %v7380
    %v9429 = vunpack.c.l.b16 %v7381
    %v9430 = vunpack.c.l.b16 %v7382
    %v9431 = vunpack.c.l.b16 %v7383
    %v9432 = vunpack.c.l.b16 %v7384
    %v9433 = vunpack.c.l.b16 %v7385
    %v9434 = vunpack.c.l.b16 %v7386
    %v9435 = vunpack.c.l.b16 %v7387
    %v9436 = vunpack.c.l.b16 %v7388
    %v9437 = vunpack.c.l.b16 %v7389
    %v9438 = vunpack.c.l.b16 %v7390
    %v9439 = vunpack.c.l.b16 %v7391
    %v9440 = vunpack.c.l.b16 %v7392
    %v9441 = vunpack.c.l.b16 %v7393
    %v9442 = vunpack.c.l.b16 %v7394
    %v9443 = vunpack.c.l.b16 %v7395
    %v9444 = vunpack.c.l.b16 %v7396
    %v9445 = vunpack.c.l.b16 %v7397
    %v9446 = vunpack.c.l.b16 %v7398
    %v9447 = vunpack.c.l.b16 %v7399
    %v9448 = vunpack.c.l.b16 %v7400
    %v9449 = vunpack.c.l.b16 %v7401
    %v9450 = vunpack.c.l.b16 %v7402
    %v9451 = vunpack.c.l.b16 %v7403
    %v9452 = vunpack.c.l.b16 %v7404
    %v9453 = vunpack.c.l.b16 %v7405
    %v9454 = vunpack.c.l.b16 %v7406
    %v9455 = vunpack.c.l.b16 %v7407
    %v9456 = vunpack.c.l.b16 %v7408
    %v9457 = vunpack.c.l.b16 %v7409
    %v9458 = vunpack.c.l.b16 %v7410
    %v9459 = vunpack.c.l.b16 %v7411
    %v9460 = vunpack.c.l.b16 %v7412
    %v9461 = vunpack.c.l.b16 %v7413
    %v9462 = vunpack.c.l.b16 %v7414
    %v9463 = vunpack.c.l.b16 %v7415
    %v9464 = vunpack.c.l.b16 %v7416
    %v9465 = vunpack.c.l.b16 %v7417
    %v9466 = vunpack.c.l.b16 %v7418
    %v9467 = vunpack.c.l.b16 %v7419
    %v9468 = vunpack.c.l.b16 %v7420
    %v9469 = vunpack.c.l.b16 %v7421
    %v9470 = vunpack.c.l.b16 %v7422
    %v9471 = vunpack.c.l.b16 %v7423
    %v9472 = vunpack.c.l.b16 %v7424
    %v9473 = vunpack.c.l.b16 %v7425
    %v9474 = vunpack.c.l.b16 %v7426
    %v9475 = vunpack.c.l.b16 %v7427
    %v9476 = vunpack.c.l.b16 %v7428
    %v9477 = vunpack.c.l.b16 %v7429
    %v9478 = vunpack.c.l.b16 %v7430
    %v9479 = vunpack.c.l.b16 %v7431
    %v9480 = vunpack.c.l.b16 %v7432
    %v9481 = vunpack.c.l.b16 %v7433
    %v9482 = vunpack.c.l.b16 %v7434
    %v9483 = vunpack.c.l.b16 %v7435
    %v9484 = vunpack.c.l.b16 %v7436
    %v9485 = vunpack.c.l.b16 %v7437
    %v9486 = vunpack.c.l.b16 %v7438
    %v9487 = vunpack.c.l.b16 %v7439
    %v9488 = vunpack.c.l.b16 %v7440
    %v9489 = vunpack.c.l.b16 %v7441
    %v9490 = vunpack.c.l.b16 %v7442
    %v9491 = vunpack.c.l.b16 %v7443
    %v9492 = vunpack.c.l.b16 %v7444
    %v9493 = vunpack.c.l.b16 %v7445
    %v9494 = vunpack.c.l.b16 %v7446
    %v9495 = vunpack.c.l.b16 %v7447
    %v9496 = vunpack.c.l.b16 %v7448
    %v9497 = vunpack.c.l.b16 %v7449
    %v9498 = vunpack.c.l.b16 %v7450
    %v9499 = vunpack.c.l.b16 %v7451
    %v9500 = vunpack.c.l.b16 %v7452
    %v9501 = vunpack.c.l.b16 %v7453
    %v9502 = vunpack.c.l.b16 %v7454
    %v9503 = vunpack.c.l.b16 %v7455
    %v9504 = vunpack.c.l.b16 %v7456
    %v9505 = vunpack.c.l.b16 %v7457
    %v9506 = vunpack.c.l.b16 %v7458
    %v9507 = vunpack.c.l.b16 %v7459
    %v9508 = vunpack.c.l.b16 %v7460
    %v9509 = vunpack.c.l.b16 %v7461
    %v9510 = vunpack.c.l.b16 %v7462
    %v9511 = vunpack.c.l.b16 %v7463
    %v9512 = vunpack.c.l.b16 %v7464
    %v9513 = vunpack.c.l.b16 %v7465
    %v9514 = vunpack.c.l.b16 %v7466
    %v9515 = vunpack.c.l.b16 %v7467
    %v9516 = vunpack.c.l.b16 %v7468
    %v9517 = vunpack.c.l.b16 %v7469
    %v9518 = vunpack.c.l.b16 %v7470
    %v9519 = vunpack.c.l.b16 %v7471
    %v9520 = vunpack.c.l.b16 %v7472
    %v9521 = vunpack.c.l.b16 %v7473
    %v9522 = vunpack.c.l.b16 %v7474
    %v9523 = vunpack.c.l.b16 %v7475
    %v9524 = vunpack.c.l.b16 %v7476
    %v9525 = vunpack.c.l.b16 %v7477
    %v9526 = vunpack.c.l.b16 %v7478
    %v9527 = vunpack.c.l.b16 %v7479
    %v9528 = vpack.c.b16 %v8505, %v8504
    %v9529 = vpack.c.b16 %v8507, %v8506
    %v9530 = vpack.c.b16 %v8509, %v8508
    %v9531 = vpack.c.b16 %v8511, %v8510
    %v9532 = vpack.c.b16 %v8513, %v8512
    %v9533 = vpack.c.b16 %v8515, %v8514
    %v9534 = vpack.c.b16 %v8517, %v8516
    %v9535 = vpack.c.b16 %v8519, %v8518
    %v9536 = vpack.c.b16 %v8521, %v8520
    %v9537 = vpack.c.b16 %v8523, %v8522
    %v9538 = vpack.c.b16 %v8525, %v8524
    %v9539 = vpack.c.b16 %v8527, %v8526
    %v9540 = vpack.c.b16 %v8529, %v8528
    %v9541 = vpack.c.b16 %v8531, %v8530
    %v9542 = vpack.c.b16 %v8533, %v8532
    %v9543 = vpack.c.b16 %v8535, %v8534
    %v9544 = vpack.c.b16 %v8537, %v8536
    %v9545 = vpack.c.b16 %v8539, %v8538
    %v9546 = vpack.c.b16 %v8541, %v8540
    %v9547 = vpack.c.b16 %v8543, %v8542
    %v9548 = vpack.c.b16 %v8545, %v8544
    %v9549 = vpack.c.b16 %v8547, %v8546
    %v9550 = vpack.c.b16 %v8549, %v8548
    %v9551 = vpack.c.b16 %v8551, %v8550
    %v9552 = vpack.c.b16 %v8553, %v8552
    %v9553 = vpack.c.b16 %v8555, %v8554
    %v9554 = vpack.c.b16 %v8557, %v8556
    %v9555 = vpack.c.b16 %v8559, %v8558
    %v9556 = vpack.c.b16 %v8561, %v8560
    %v9557 = vpack.c.b16 %v8563, %v8562
    %v9558 = vpack.c.b16 %v8565, %v8564
    %v9559 = vpack.c.b16 %v8567, %v8566
    %v9560 = vpack.c.b16 %v8569, %v8568
    %v9561 = vpack.c.b16 %v8571, %v8570
    %v9562 = vpack.c.b16 %v8573, %v8572
    %v9563 = vpack.c.b16 %v8575, %v8574
    %v9564 = vpack.c.b16 %v8577, %v8576
    %v9565 = vpack.c.b16 %v8579, %v8578
    %v9566 = vpack.c.b16 %v8581, %v8580
    %v9567 = vpack.c.b16 %v8583, %v8582
    %v9568 = vpack.c.b16 %v8585, %v8584
    %v9569 = vpack.c.b16 %v8587, %v8586
    %v9570 = vpack.c.b16 %v8589, %v8588
    %v9571 = vpack.c.b16 %v8591, %v8590
    %v9572 = vpack.c.b16 %v8593, %v8592
    %v9573 = vpack.c.b16 %v8595, %v8594
    %v9574 = vpack.c.b16 %v8597, %v8596
    %v9575 = vpack.c.b16 %v8599, %v8598
    %v9576 = vpack.c.b16 %v8601, %v8600
    %v9577 = vpack.c.b16 %v8603, %v8602
    %v9578 = vpack.c.b16 %v8605, %v8604
    %v9579 = vpack.c.b16 %v8607, %v8606
    %v9580 = vpack.c.b16 %v8609, %v8608
    %v9581 = vpack.c.b16 %v8611, %v8610
    %v9582 = vpack.c.b16 %v8613, %v8612
    %v9583 = vpack.c.b16 %v8615, %v8614
    %v9584 = vpack.c.b16 %v8617, %v8616
    %v9585 = vpack.c.b16 %v8619, %v8618
    %v9586 = vpack.c.b16 %v8621, %v8620
    %v9587 = vpack.c.b16 %v8623, %v8622
    %v9588 = vpack.c.b16 %v8625, %v8624
    %v9589 = vpack.c.b16 %v8627, %v8626
    %v9590 = vpack.c.b16 %v8629, %v8628
    %v9591 = vpack.c.b16 %v8631, %v8630
    %v9592 = vpack.c.b16 %v8633, %v8632
    %v9593 = vpack.c.b16 %v8635, %v8634
    %v9594 = vpack.c.b16 %v8637, %v8636
    %v9595 = vpack.c.b16 %v8639, %v8638
    %v9596 = vpack.c.b16 %v8641, %v8640
    %v9597 = vpack.c.b16 %v8643, %v8642
    %v9598 = vpack.c.b16 %v8645, %v8644
    %v9599 = vpack.c.b16 %v8647, %v8646
    %v9600 = vpack.c.b16 %v8649, %v8648
    %v9601 = vpack.c.b16 %v8651, %v8650
    %v9602 = vpack.c.b16 %v8653, %v8652
    %v9603 = vpack.c.b16 %v8655, %v8654
    %v9604 = vpack.c.b16 %v8657, %v8656
    %v9605 = vpack.c.b16 %v8659, %v8658
    %v9606 = vpack.c.b16 %v8661, %v8660
    %v9607 = vpack.c.b16 %v8663, %v8662
    %v9608 = vpack.c.b16 %v8665, %v8664
    %v9609 = vpack.c.b16 %v8667, %v8666
    %v9610 = vpack.c.b16 %v8669, %v8668
    %v9611 = vpack.c.b16 %v8671, %v8670
    %v9612 = vpack.c.b16 %v8673, %v8672
    %v9613 = vpack.c.b16 %v8675, %v8674
    %v9614 = vpack.c.b16 %v8677, %v8676
    %v9615 = vpack.c.b16 %v8679, %v8678
    %v9616 = vpack.c.b16 %v8681, %v8680
    %v9617 = vpack.c.b16 %v8683, %v8682
    %v9618 = vpack.c.b16 %v8685, %v8684
    %v9619 = vpack.c.b16 %v8687, %v8686
    %v9620 = vpack.c.b16 %v8689, %v8688
    %v9621 = vpack.c.b16 %v8691, %v8690
    %v9622 = vpack.c.b16 %v8693, %v8692
    %v9623 = vpack.c.b16 %v8695, %v8694
    %v9624 = vpack.c.b16 %v8697, %v8696
    %v9625 = vpack.c.b16 %v8699, %v8698
    %v9626 = vpack.c.b16 %v8701, %v8700
    %v9627 = vpack.c.b16 %v8703, %v8702
    %v9628 = vpack.c.b16 %v8705, %v8704
    %v9629 = vpack.c.b16 %v8707, %v8706
    %v9630 = vpack.c.b16 %v8709, %v8708
    %v9631 = vpack.c.b16 %v8711, %v8710
    %v9632 = vpack.c.b16 %v8713, %v8712
    %v9633 = vpack.c.b16 %v8715, %v8714
    %v9634 = vpack.c.b16 %v8717, %v8716
    %v9635 = vpack.c.b16 %v8719, %v8718
    %v9636 = vpack.c.b16 %v8721, %v8720
    %v9637 = vpack.c.b16 %v8723, %v8722
    %v9638 = vpack.c.b16 %v8725, %v8724
    %v9639 = vpack.c.b16 %v8727, %v8726
    %v9640 = vpack.c.b16 %v8729, %v8728
    %v9641 = vpack.c.b16 %v8731, %v8730
    %v9642 = vpack.c.b16 %v8733, %v8732
    %v9643 = vpack.c.b16 %v8735, %v8734
    %v9644 = vpack.c.b16 %v8737, %v8736
    %v9645 = vpack.c.b16 %v8739, %v8738
    %v9646 = vpack.c.b16 %v8741, %v8740
    %v9647 = vpack.c.b16 %v8743, %v8742
    %v9648 = vpack.c.b16 %v8745, %v8744
    %v9649 = vpack.c.b16 %v8747, %v8746
    %v9650 = vpack.c.b16 %v8749, %v8748
    %v9651 = vpack.c.b16 %v8751, %v8750
    %v9652 = vpack.c.b16 %v8753, %v8752
    %v9653 = vpack.c.b16 %v8755, %v8754
    %v9654 = vpack.c.b16 %v8757, %v8756
    %v9655 = vpack.c.b16 %v8759, %v8758
    %v9656 = vpack.c.b16 %v8761, %v8760
    %v9657 = vpack.c.b16 %v8763, %v8762
    %v9658 = vpack.c.b16 %v8765, %v8764
    %v9659 = vpack.c.b16 %v8767, %v8766
    %v9660 = vpack.c.b16 %v8769, %v8768
    %v9661 = vpack.c.b16 %v8771, %v8770
    %v9662 = vpack.c.b16 %v8773, %v8772
    %v9663 = vpack.c.b16 %v8775, %v8774
    %v9664 = vpack.c.b16 %v8777, %v8776
    %v9665 = vpack.c.b16 %v8779, %v8778
    %v9666 = vpack.c.b16 %v8781, %v8780
    %v9667 = vpack.c.b16 %v8783, %v8782
    %v9668 = vpack.c.b16 %v8785, %v8784
    %v9669 = vpack.c.b16 %v8787, %v8786
    %v9670 = vpack.c.b16 %v8789, %v8788
    %v9671 = vpack.c.b16 %v8791, %v8790
    %v9672 = vpack.c.b16 %v8793, %v8792
    %v9673 = vpack.c.b16 %v8795, %v8794
    %v9674 = vpack.c.b16 %v8797, %v8796
    %v9675 = vpack.c.b16 %v8799, %v8798
    %v9676 = vpack.c.b16 %v8801, %v8800
    %v9677 = vpack.c.b16 %v8803, %v8802
    %v9678 = vpack.c.b16 %v8805, %v8804
    %v9679 = vpack.c.b16 %v8807, %v8806
    %v9680 = vpack.c.b16 %v8809, %v8808
    %v9681 = vpack.c.b16 %v8811, %v8810
    %v9682 = vpack.c.b16 %v8813, %v8812
    %v9683 = vpack.c.b16 %v8815, %v8814
    %v9684 = vpack.c.b16 %v8817, %v8816
    %v9685 = vpack.c.b16 %v8819, %v8818
    %v9686 = vpack.c.b16 %v8821, %v8820
    %v9687 = vpack.c.b16 %v8823, %v8822
    %v9688 = vpack.c.b16 %v8825, %v8824
    %v9689 = vpack.c.b16 %v8827, %v8826
    %v9690 = vpack.c.b16 %v8829, %v8828
    %v9691 = vpack.c.b16 %v8831, %v8830
    %v9692 = vpack.c.b16 %v8833, %v8832
    %v9693 = vpack.c.b16 %v8835, %v8834
    %v9694 = vpack.c.b16 %v8837, %v8836
    %v9695 = vpack.c.b16 %v8839, %v8838
    %v9696 = vpack.c.b16 %v8841, %v8840
    %v9697 = vpack.c.b16 %v8843, %v8842
    %v9698 = vpack.c.b16 %v8845, %v8844
    %v9699 = vpack.c.b16 %v8847, %v8846
    %v9700 = vpack.c.b16 %v8849, %v8848
    %v9701 = vpack.c.b16 %v8851, %v8850
    %v9702 = vpack.c.b16 %v8853, %v8852
    %v9703 = vpack.c.b16 %v8855, %v8854
    %v9704 = vpack.c.b16 %v8857, %v8856
    %v9705 = vpack.c.b16 %v8859, %v8858
    %v9706 = vpack.c.b16 %v8861, %v8860
    %v9707 = vpack.c.b16 %v8863, %v8862
    %v9708 = vpack.c.b16 %v8865, %v8864
    %v9709 = vpack.c.b16 %v8867, %v8866
    %v9710 = vpack.c.b16 %v8869, %v8868
    %v9711 = vpack.c.b16 %v8871, %v8870
    %v9712 = vpack.c.b16 %v8873, %v8872
    %v9713 = vpack.c.b16 %v8875, %v8874
    %v9714 = vpack.c.b16 %v8877, %v8876
    %v9715 = vpack.c.b16 %v8879, %v8878
    %v9716 = vpack.c.b16 %v8881, %v8880
    %v9717 = vpack.c.b16 %v8883, %v8882
    %v9718 = vpack.c.b16 %v8885, %v8884
    %v9719 = vpack.c.b16 %v8887, %v8886
    %v9720 = vpack.c.b16 %v8889, %v8888
    %v9721 = vpack.c.b16 %v8891, %v8890
    %v9722 = vpack.c.b16 %v8893, %v8892
    %v9723 = vpack.c.b16 %v8895, %v8894
    %v9724 = vpack.c.b16 %v8897, %v8896
    %v9725 = vpack.c.b16 %v8899, %v8898
    %v9726 = vpack.c.b16 %v8901, %v8900
    %v9727 = vpack.c.b16 %v8903, %v8902
    %v9728 = vpack.c.b16 %v8905, %v8904
    %v9729 = vpack.c.b16 %v8907, %v8906
    %v9730 = vpack.c.b16 %v8909, %v8908
    %v9731 = vpack.c.b16 %v8911, %v8910
    %v9732 = vpack.c.b16 %v8913, %v8912
    %v9733 = vpack.c.b16 %v8915, %v8914
    %v9734 = vpack.c.b16 %v8917, %v8916
    %v9735 = vpack.c.b16 %v8919, %v8918
    %v9736 = vpack.c.b16 %v8921, %v8920
    %v9737 = vpack.c.b16 %v8923, %v8922
    %v9738 = vpack.c.b16 %v8925, %v8924
    %v9739 = vpack.c.b16 %v8927, %v8926
    %v9740 = vpack.c.b16 %v8929, %v8928
    %v9741 = vpack.c.b16 %v8931, %v8930
    %v9742 = vpack.c.b16 %v8933, %v8932
    %v9743 = vpack.c.b16 %v8935, %v8934
    %v9744 = vpack.c.b16 %v8937, %v8936
    %v9745 = vpack.c.b16 %v8939, %v8938
    %v9746 = vpack.c.b16 %v8941, %v8940
    %v9747 = vpack.c.b16 %v8943, %v8942
    %v9748 = vpack.c.b16 %v8945, %v8944
    %v9749 = vpack.c.b16 %v8947, %v8946
    %v9750 = vpack.c.b16 %v8949, %v8948
    %v9751 = vpack.c.b16 %v8951, %v8950
    %v9752 = vpack.c.b16 %v8953, %v8952
    %v9753 = vpack.c.b16 %v8955, %v8954
    %v9754 = vpack.c.b16 %v8957, %v8956
    %v9755 = vpack.c.b16 %v8959, %v8958
    %v9756 = vpack.c.b16 %v8961, %v8960
    %v9757 = vpack.c.b16 %v8963, %v8962
    %v9758 = vpack.c.b16 %v8965, %v8964
    %v9759 = vpack.c.b16 %v8967, %v8966
    %v9760 = vpack.c.b16 %v8969, %v8968
    %v9761 = vpack.c.b16 %v8971, %v8970
    %v9762 = vpack.c.b16 %v8973, %v8972
    %v9763 = vpack.c.b16 %v8975, %v8974
    %v9764 = vpack.c.b16 %v8977, %v8976
    %v9765 = vpack.c.b16 %v8979, %v8978
    %v9766 = vpack.c.b16 %v8981, %v8980
    %v9767 = vpack.c.b16 %v8983, %v8982
    %v9768 = vpack.c.b16 %v8985, %v8984
    %v9769 = vpack.c.b16 %v8987, %v8986
    %v9770 = vpack.c.b16 %v8989, %v8988
    %v9771 = vpack.c.b16 %v8991, %v8990
    %v9772 = vpack.c.b16 %v8993, %v8992
    %v9773 = vpack.c.b16 %v8995, %v8994
    %v9774 = vpack.c.b16 %v8997, %v8996
    %v9775 = vpack.c.b16 %v8999, %v8998
    %v9776 = vpack.c.b16 %v9001, %v9000
    %v9777 = vpack.c.b16 %v9003, %v9002
    %v9778 = vpack.c.b16 %v9005, %v9004
    %v9779 = vpack.c.b16 %v9007, %v9006
    %v9780 = vpack.c.b16 %v9009, %v9008
    %v9781 = vpack.c.b16 %v9011, %v9010
    %v9782 = vpack.c.b16 %v9013, %v9012
    %v9783 = vpack.c.b16 %v9015, %v9014
    %v9784 = vpack.c.b16 %v9017, %v9016
    %v9785 = vpack.c.b16 %v9019, %v9018
    %v9786 = vpack.c.b16 %v9021, %v9020
    %v9787 = vpack.c.b16 %v9023, %v9022
    %v9788 = vpack.c.b16 %v9025, %v9024
    %v9789 = vpack.c.b16 %v9027, %v9026
    %v9790 = vpack.c.b16 %v9029, %v9028
    %v9791 = vpack.c.b16 %v9031, %v9030
    %v9792 = vpack.c.b16 %v9033, %v9032
    %v9793 = vpack.c.b16 %v9035, %v9034
    %v9794 = vpack.c.b16 %v9037, %v9036
    %v9795 = vpack.c.b16 %v9039, %v9038
    %v9796 = vpack.c.b16 %v9041, %v9040
    %v9797 = vpack.c.b16 %v9043, %v9042
    %v9798 = vpack.c.b16 %v9045, %v9044
    %v9799 = vpack.c.b16 %v9047, %v9046
    %v9800 = vpack.c.b16 %v9049, %v9048
    %v9801 = vpack.c.b16 %v9051, %v9050
    %v9802 = vpack.c.b16 %v9053, %v9052
    %v9803 = vpack.c.b16 %v9055, %v9054
    %v9804 = vpack.c.b16 %v9057, %v9056
    %v9805 = vpack.c.b16 %v9059, %v9058
    %v9806 = vpack.c.b16 %v9061, %v9060
    %v9807 = vpack.c.b16 %v9063, %v9062
    %v9808 = vpack.c.b16 %v9065, %v9064
    %v9809 = vpack.c.b16 %v9067, %v9066
    %v9810 = vpack.c.b16 %v9069, %v9068
    %v9811 = vpack.c.b16 %v9071, %v9070
    %v9812 = vpack.c.b16 %v9073, %v9072
    %v9813 = vpack.c.b16 %v9075, %v9074
    %v9814 = vpack.c.b16 %v9077, %v9076
    %v9815 = vpack.c.b16 %v9079, %v9078
    %v9816 = vpack.c.b16 %v9081, %v9080
    %v9817 = vpack.c.b16 %v9083, %v9082
    %v9818 = vpack.c.b16 %v9085, %v9084
    %v9819 = vpack.c.b16 %v9087, %v9086
    %v9820 = vpack.c.b16 %v9089, %v9088
    %v9821 = vpack.c.b16 %v9091, %v9090
    %v9822 = vpack.c.b16 %v9093, %v9092
    %v9823 = vpack.c.b16 %v9095, %v9094
    %v9824 = vpack.c.b16 %v9097, %v9096
    %v9825 = vpack.c.b16 %v9099, %v9098
    %v9826 = vpack.c.b16 %v9101, %v9100
    %v9827 = vpack.c.b16 %v9103, %v9102
    %v9828 = vpack.c.b16 %v9105, %v9104
    %v9829 = vpack.c.b16 %v9107, %v9106
    %v9830 = vpack.c.b16 %v9109, %v9108
    %v9831 = vpack.c.b16 %v9111, %v9110
    %v9832 = vpack.c.b16 %v9113, %v9112
    %v9833 = vpack.c.b16 %v9115, %v9114
    %v9834 = vpack.c.b16 %v9117, %v9116
    %v9835 = vpack.c.b16 %v9119, %v9118
    %v9836 = vpack.c.b16 %v9121, %v9120
    %v9837 = vpack.c.b16 %v9123, %v9122
    %v9838 = vpack.c.b16 %v9125, %v9124
    %v9839 = vpack.c.b16 %v9127, %v9126
    %v9840 = vpack.c.b16 %v9129, %v9128
    %v9841 = vpack.c.b16 %v9131, %v9130
    %v9842 = vpack.c.b16 %v9133, %v9132
    %v9843 = vpack.c.b16 %v9135, %v9134
    %v9844 = vpack.c.b16 %v9137, %v9136
    %v9845 = vpack.c.b16 %v9139, %v9138
    %v9846 = vpack.c.b16 %v9141, %v9140
    %v9847 = vpack.c.b16 %v9143, %v9142
    %v9848 = vpack.c.b16 %v9145, %v9144
    %v9849 = vpack.c.b16 %v9147, %v9146
    %v9850 = vpack.c.b16 %v9149, %v9148
    %v9851 = vpack.c.b16 %v9151, %v9150
    %v9852 = vpack.c.b16 %v9153, %v9152
    %v9853 = vpack.c.b16 %v9155, %v9154
    %v9854 = vpack.c.b16 %v9157, %v9156
    %v9855 = vpack.c.b16 %v9159, %v9158
    %v9856 = vpack.c.b16 %v9161, %v9160
    %v9857 = vpack.c.b16 %v9163, %v9162
    %v9858 = vpack.c.b16 %v9165, %v9164
    %v9859 = vpack.c.b16 %v9167, %v9166
    %v9860 = vpack.c.b16 %v9169, %v9168
    %v9861 = vpack.c.b16 %v9171, %v9170
    %v9862 = vpack.c.b16 %v9173, %v9172
    %v9863 = vpack.c.b16 %v9175, %v9174
    %v9864 = vpack.c.b16 %v9177, %v9176
    %v9865 = vpack.c.b16 %v9179, %v9178
    %v9866 = vpack.c.b16 %v9181, %v9180
    %v9867 = vpack.c.b16 %v9183, %v9182
    %v9868 = vpack.c.b16 %v9185, %v9184
    %v9869 = vpack.c.b16 %v9187, %v9186
    %v9870 = vpack.c.b16 %v9189, %v9188
    %v9871 = vpack.c.b16 %v9191, %v9190
    %v9872 = vpack.c.b16 %v9193, %v9192
    %v9873 = vpack.c.b16 %v9195, %v9194
    %v9874 = vpack.c.b16 %v9197, %v9196
    %v9875 = vpack.c.b16 %v9199, %v9198
    %v9876 = vpack.c.b16 %v9201, %v9200
    %v9877 = vpack.c.b16 %v9203, %v9202
    %v9878 = vpack.c.b16 %v9205, %v9204
    %v9879 = vpack.c.b16 %v9207, %v9206
    %v9880 = vpack.c.b16 %v9209, %v9208
    %v9881 = vpack.c.b16 %v9211, %v9210
    %v9882 = vpack.c.b16 %v9213, %v9212
    %v9883 = vpack.c.b16 %v9215, %v9214
    %v9884 = vpack.c.b16 %v9217, %v9216
    %v9885 = vpack.c.b16 %v9219, %v9218
    %v9886 = vpack.c.b16 %v9221, %v9220
    %v9887 = vpack.c.b16 %v9223, %v9222
    %v9888 = vpack.c.b16 %v9225, %v9224
    %v9889 = vpack.c.b16 %v9227, %v9226
    %v9890 = vpack.c.b16 %v9229, %v9228
    %v9891 = vpack.c.b16 %v9231, %v9230
    %v9892 = vpack.c.b16 %v9233, %v9232
    %v9893 = vpack.c.b16 %v9235, %v9234
    %v9894 = vpack.c.b16 %v9237, %v9236
    %v9895 = vpack.c.b16 %v9239, %v9238
    %v9896 = vpack.c.b16 %v9241, %v9240
    %v9897 = vpack.c.b16 %v9243, %v9242
    %v9898 = vpack.c.b16 %v9245, %v9244
    %v9899 = vpack.c.b16 %v9247, %v9246
    %v9900 = vpack.c.b16 %v9249, %v9248
    %v9901 = vpack.c.b16 %v9251, %v9250
    %v9902 = vpack.c.b16 %v9253, %v9252
    %v9903 = vpack.c.b16 %v9255, %v9254
    %v9904 = vpack.c.b16 %v9257, %v9256
    %v9905 = vpack.c.b16 %v9259, %v9258
    %v9906 = vpack.c.b16 %v9261, %v9260
    %v9907 = vpack.c.b16 %v9263, %v9262
    %v9908 = vpack.c.b16 %v9265, %v9264
    %v9909 = vpack.c.b16 %v9267, %v9266
    %v9910 = vpack.c.b16 %v9269, %v9268
    %v9911 = vpack.c.b16 %v9271, %v9270
    %v9912 = vpack.c.b16 %v9273, %v9272
    %v9913 = vpack.c.b16 %v9275, %v9274
    %v9914 = vpack.c.b16 %v9277, %v9276
    %v9915 = vpack.c.b16 %v9279, %v9278
    %v9916 = vpack.c.b16 %v9281, %v9280
    %v9917 = vpack.c.b16 %v9283, %v9282
    %v9918 = vpack.c.b16 %v9285, %v9284
    %v9919 = vpack.c.b16 %v9287, %v9286
    %v9920 = vpack.c.b16 %v9289, %v9288
    %v9921 = vpack.c.b16 %v9291, %v9290
    %v9922 = vpack.c.b16 %v9293, %v9292
    %v9923 = vpack.c.b16 %v9295, %v9294
    %v9924 = vpack.c.b16 %v9297, %v9296
    %v9925 = vpack.c.b16 %v9299, %v9298
    %v9926 = vpack.c.b16 %v9301, %v9300
    %v9927 = vpack.c.b16 %v9303, %v9302
    %v9928 = vpack.c.b16 %v9305, %v9304
    %v9929 = vpack.c.b16 %v9307, %v9306
    %v9930 = vpack.c.b16 %v9309, %v9308
    %v9931 = vpack.c.b16 %v9311, %v9310
    %v9932 = vpack.c.b16 %v9313, %v9312
    %v9933 = vpack.c.b16 %v9315, %v9314
    %v9934 = vpack.c.b16 %v9317, %v9316
    %v9935 = vpack.c.b16 %v9319, %v9318
    %v9936 = vpack.c.b16 %v9321, %v9320
    %v9937 = vpack.c.b16 %v9323, %v9322
    %v9938 = vpack.c.b16 %v9325, %v9324
    %v9939 = vpack.c.b16 %v9327, %v9326
    %v9940 = vpack.c.b16 %v9329, %v9328
    %v9941 = vpack.c.b16 %v9331, %v9330
    %v9942 = vpack.c.b16 %v9333, %v9332
    %v9943 = vpack.c.b16 %v9335, %v9334
    %v9944 = vpack.c.b16 %v9337, %v9336
    %v9945 = vpack.c.b16 %v9339, %v9338
    %v9946 = vpack.c.b16 %v9341, %v9340
    %v9947 = vpack.c.b16 %v9343, %v9342
    %v9948 = vpack.c.b16 %v9345, %v9344
    %v9949 = vpack.c.b16 %v9347, %v9346
    %v9950 = vpack.c.b16 %v9349, %v9348
    %v9951 = vpack.c.b16 %v9351, %v9350
    %v9952 = vpack.c.b16 %v9353, %v9352
    %v9953 = vpack.c.b16 %v9355, %v9354
    %v9954 = vpack.c.b16 %v9357, %v9356
    %v9955 = vpack.c.b16 %v9359, %v9358
    %v9956 = vpack.c.b16 %v9361, %v9360
    %v9957 = vpack.c.b16 %v9363, %v9362
    %v9958 = vpack.c.b16 %v9365, %v9364
    %v9959 = vpack.c.b16 %v9367, %v9366
    %v9960 = vpack.c.b16 %v9369, %v9368
    %v9961 = vpack.c.b16 %v9371, %v9370
    %v9962 = vpack.c.b16 %v9373, %v9372
    %v9963 = vpack.c.b16 %v9375, %v9374
    %v9964 = vpack.c.b16 %v9377, %v9376
    %v9965 = vpack.c.b16 %v9379, %v9378
    %v9966 = vpack.c.b16 %v9381, %v9380
    %v9967 = vpack.c.b16 %v9383, %v9382
    %v9968 = vpack.c.b16 %v9385, %v9384
    %v9969 = vpack.c.b16 %v9387, %v9386
    %v9970 = vpack.c.b16 %v9389, %v9388
    %v9971 = vpack.c.b16 %v9391, %v9390
    %v9972 = vpack.c.b16 %v9393, %v9392
    %v9973 = vpack.c.b16 %v9395, %v9394
    %v9974 = vpack.c.b16 %v9397, %v9396
    %v9975 = vpack.c.b16 %v9399, %v9398
    %v9976 = vpack.c.b16 %v9401, %v9400
    %v9977 = vpack.c.b16 %v9403, %v9402
    %v9978 = vpack.c.b16 %v9405, %v9404
    %v9979 = vpack.c.b16 %v9407, %v9406
    %v9980 = vpack.c.b16 %v9409, %v9408
    %v9981 = vpack.c.b16 %v9411, %v9410
    %v9982 = vpack.c.b16 %v9413, %v9412
    %v9983 = vpack.c.b16 %v9415, %v9414
    %v9984 = vpack.c.b16 %v9417, %v9416
    %v9985 = vpack.c.b16 %v9419, %v9418
    %v9986 = vpack.c.b16 %v9421, %v9420
    %v9987 = vpack.c.b16 %v9423, %v9422
    %v9988 = vpack.c.b16 %v9425, %v9424
    %v9989 = vpack.c.b16 %v9427, %v9426
    %v9990 = vpack.c.b16 %v9429, %v9428
    %v9991 = vpack.c.b16 %v9431, %v9430
    %v9992 = vpack.c.b16 %v9433, %v9432
    %v9993 = vpack.c.b16 %v9435, %v9434
    %v9994 = vpack.c.b16 %v9437, %v9436
    %v9995 = vpack.c.b16 %v9439, %v9438
    %v9996 = vpack.c.b16 %v9441, %v9440
    %v9997 = vpack.c.b16 %v9443, %v9442
    %v9998 = vpack.c.b16 %v9445, %v9444
    %v9999 = vpack.c.b16 %v9447, %v9446
    %v10000 = vpack.c.b16 %v9449, %v9448
    %v10001 = vpack.c.b16 %v9451, %v9450
    %v10002 = vpack.c.b16 %v9453, %v9452
    %v10003 = vpack.c.b16 %v9455, %v9454
    %v10004 = vpack.c.b16 %v9457, %v9456
    %v10005 = vpack.c.b16 %v9459, %v9458
    %v10006 = vpack.c.b16 %v9461, %v9460
    %v10007 = vpack.c.b16 %v9463, %v9462
    %v10008 = vpack.c.b16 %v9465, %v9464
    %v10009 = vpack.c.b16 %v9467, %v9466
    %v10010 = vpack.c.b16 %v9469, %v9468
    %v10011 = vpack.c.b16 %v9471, %v9470
    %v10012 = vpack.c.b16 %v9473, %v9472
    %v10013 = vpack.c.b16 %v9475, %v9474
    %v10014 = vpack.c.b16 %v9477, %v9476
    %v10015 = vpack.c.b16 %v9479, %v9478
    %v10016 = vpack.c.b16 %v9481, %v9480
    %v10017 = vpack.c.b16 %v9483, %v9482
    %v10018 = vpack.c.b16 %v9485, %v9484
    %v10019 = vpack.c.b16 %v9487, %v9486
    %v10020 = vpack.c.b16 %v9489, %v9488
    %v10021 = vpack.c.b16 %v9491, %v9490
    %v10022 = vpack.c.b16 %v9493, %v9492
    %v10023 = vpack.c.b16 %v9495, %v9494
    %v10024 = vpack.c.b16 %v9497, %v9496
    %v10025 = vpack.c.b16 %v9499, %v9498
    %v10026 = vpack.c.b16 %v9501, %v9500
    %v10027 = vpack.c.b16 %v9503, %v9502
    %v10028 = vpack.c.b16 %v9505, %v9504
    %v10029 = vpack.c.b16 %v9507, %v9506
    %v10030 = vpack.c.b16 %v9509, %v9508
    %v10031 = vpack.c.b16 %v9511, %v9510
    %v10032 = vpack.c.b16 %v9513, %v9512
    %v10033 = vpack.c.b16 %v9515, %v9514
    %v10034 = vpack.c.b16 %v9517, %v9516
    %v10035 = vpack.c.b16 %v9519, %v9518
    %v10036 = vpack.c.b16 %v9521, %v9520
    %v10037 = vpack.c.b16 %v9523, %v9522
    %v10038 = vpack.c.b16 %v9525, %v9524
    %v10039 = vpack.c.b16 %v9527, %v9526
    %10552 = vmatprep.subr.bf16.mxu0 0
    %10553 = vmatpush1.bf16.msra.mxu0 %v9535
    %10554 = vmatprep.subr.bf16.mxu0 0
    %10555 = vmatpush1.bf16.msra.mxu0 %v9534
    %10556 = vmatprep.subr.bf16.mxu0 0
    %10557 = vmatpush1.bf16.msra.mxu0 %v9533
    %10558 = vmatprep.subr.bf16.mxu0 0
    %10559 = vmatpush1.bf16.msra.mxu0 %v9532
    %10560 = vmatprep.subr.bf16.mxu0 0
    %10561 = vmatpush1.bf16.msra.mxu0 %v9531
    %10562 = vmatprep.subr.bf16.mxu0 0
    %10563 = vmatpush1.bf16.msra.mxu0 %v9530
    %10564 = vmatprep.subr.bf16.mxu0 0
    %10565 = vmatpush1.bf16.msra.mxu0 %v9529
    %10566 = vmatprep.subr.bf16.mxu0 0
    %10567 = vmatpush1.bf16.msra.mxu0 %v9528
    %10568 = vmatprep.subr.bf16.mxu0 0
    %10569 = vmatpush2.bf16.msra.mxu0 %v9543
    %10570 = vmatprep.subr.bf16.mxu0 0
    %10571 = vmatpush2.bf16.msra.mxu0 %v9542
    %10572 = vmatprep.subr.bf16.mxu0 0
    %10573 = vmatpush2.bf16.msra.mxu0 %v9541
    %10574 = vmatprep.subr.bf16.mxu0 0
    %10575 = vmatpush2.bf16.msra.mxu0 %v9540
    %10576 = vmatprep.subr.bf16.mxu0 0
    %10577 = vmatpush2.bf16.msra.mxu0 %v9539
    %10578 = vmatprep.subr.bf16.mxu0 0
    %10579 = vmatpush2.bf16.msra.mxu0 %v9538
    %10580 = vmatprep.subr.bf16.mxu0 0
    %10581 = vmatpush2.bf16.msra.mxu0 %v9537
    %10582 = vmatprep.subr.bf16.mxu0 0
    %10583 = vmatpush2.bf16.msra.mxu0 %v9536
    %10584 = vmatprep.mubr.bf16.mxu0 %v6172
    %10585 = vmatmul.mubr.bf16.gmra.mxu0 %v6171
    %v10586 = vpop.f32.mrf.mxu0
    %v10587 = vadd.f32 %v469, %v10586
    %v10588 = vpop.f32.mrf.mxu0
    %v10589 = vpop.f32.mrf.mxu0
    %v10590 = vpop.f32.mrf.mxu0
    %10591 = vdwg.mxu0
    %10592 = vmatprep.subr.bf16.mxu0 0
    %10593 = vmatpush1.bf16.msra.mxu0 %v9551
    %10594 = vmatprep.subr.bf16.mxu0 0
    %10595 = vmatpush1.bf16.msra.mxu0 %v9550
    %10596 = vmatprep.subr.bf16.mxu0 0
    %10597 = vmatpush1.bf16.msra.mxu0 %v9549
    %10598 = vmatprep.subr.bf16.mxu0 0
    %10599 = vmatpush1.bf16.msra.mxu0 %v9548
    %10600 = vmatprep.subr.bf16.mxu0 0
    %10601 = vmatpush1.bf16.msra.mxu0 %v9547
    %10602 = vmatprep.subr.bf16.mxu0 0
    %10603 = vmatpush1.bf16.msra.mxu0 %v9546
    %10604 = vmatprep.subr.bf16.mxu0 0
    %10605 = vmatpush1.bf16.msra.mxu0 %v9545
    %10606 = vmatprep.subr.bf16.mxu0 0
    %10607 = vmatpush1.bf16.msra.mxu0 %v9544
    %10608 = vmatprep.subr.bf16.mxu0 0
    %10609 = vmatpush2.bf16.msra.mxu0 %v9559
    %10610 = vmatprep.subr.bf16.mxu0 0
    %10611 = vmatpush2.bf16.msra.mxu0 %v9558
    %10612 = vmatprep.subr.bf16.mxu0 0
    %10613 = vmatpush2.bf16.msra.mxu0 %v9557
    %10614 = vmatprep.subr.bf16.mxu0 0
    %10615 = vmatpush2.bf16.msra.mxu0 %v9556
    %10616 = vmatprep.subr.bf16.mxu0 0
    %10617 = vmatpush2.bf16.msra.mxu0 %v9555
    %10618 = vmatprep.subr.bf16.mxu0 0
    %10619 = vmatpush2.bf16.msra.mxu0 %v9554
    %10620 = vmatprep.subr.bf16.mxu0 0
    %10621 = vmatpush2.bf16.msra.mxu0 %v9553
    %10622 = vmatprep.subr.bf16.mxu0 0
    %10623 = vmatpush2.bf16.msra.mxu0 %v9552
    %10624 = vmatprep.mubr.bf16.mxu0 %v6179
    %10625 = vmatmul.mubr.bf16.gmra.mxu0 %v6176
    %v10626 = vpop.f32.mrf.mxu0
    %v10627 = vadd.f32 %v10587, %v10626
    %v10628 = vpop.f32.mrf.mxu0
    %v10629 = vpop.f32.mrf.mxu0
    %v10630 = vpop.f32.mrf.mxu0
    %10631 = vdwg.mxu0
    %10632 = vmatprep.subr.bf16.mxu0 0
    %10633 = vmatpush1.bf16.msra.mxu0 %v9567
    %10634 = vmatprep.subr.bf16.mxu0 0
    %10635 = vmatpush1.bf16.msra.mxu0 %v9566
    %10636 = vmatprep.subr.bf16.mxu0 0
    %10637 = vmatpush1.bf16.msra.mxu0 %v9565
    %10638 = vmatprep.subr.bf16.mxu0 0
    %10639 = vmatpush1.bf16.msra.mxu0 %v9564
    %10640 = vmatprep.subr.bf16.mxu0 0
    %10641 = vmatpush1.bf16.msra.mxu0 %v9563
    %10642 = vmatprep.subr.bf16.mxu0 0
    %10643 = vmatpush1.bf16.msra.mxu0 %v9562
    %10644 = vmatprep.subr.bf16.mxu0 0
    %10645 = vmatpush1.bf16.msra.mxu0 %v9561
    %10646 = vmatprep.subr.bf16.mxu0 0
    %10647 = vmatpush1.bf16.msra.mxu0 %v9560
    %10648 = vmatprep.subr.bf16.mxu0 0
    %10649 = vmatpush2.bf16.msra.mxu0 %v9575
    %10650 = vmatprep.subr.bf16.mxu0 0
    %10651 = vmatpush2.bf16.msra.mxu0 %v9574
    %10652 = vmatprep.subr.bf16.mxu0 0
    %10653 = vmatpush2.bf16.msra.mxu0 %v9573
    %10654 = vmatprep.subr.bf16.mxu0 0
    %10655 = vmatpush2.bf16.msra.mxu0 %v9572
    %10656 = vmatprep.subr.bf16.mxu0 0
    %10657 = vmatpush2.bf16.msra.mxu0 %v9571
    %10658 = vmatprep.subr.bf16.mxu0 0
    %10659 = vmatpush2.bf16.msra.mxu0 %v9570
    %10660 = vmatprep.subr.bf16.mxu0 0
    %10661 = vmatpush2.bf16.msra.mxu0 %v9569
    %10662 = vmatprep.subr.bf16.mxu0 0
    %10663 = vmatpush2.bf16.msra.mxu0 %v9568
    %10664 = vmatprep.mubr.bf16.mxu0 %v6189
    %10665 = vmatmul.mubr.bf16.gmra.mxu0 %v6188
    %v10666 = vpop.f32.mrf.mxu0
    %v10667 = vadd.f32 %v10627, %v10666
    %v10668 = vpop.f32.mrf.mxu0
    %v10669 = vpop.f32.mrf.mxu0
    %v10670 = vpop.f32.mrf.mxu0
    %10671 = vdwg.mxu0
    %10672 = vmatprep.subr.bf16.mxu0 0
    %10673 = vmatpush1.bf16.msra.mxu0 %v9583
    %10674 = vmatprep.subr.bf16.mxu0 0
    %10675 = vmatpush1.bf16.msra.mxu0 %v9582
    %10676 = vmatprep.subr.bf16.mxu0 0
    %10677 = vmatpush1.bf16.msra.mxu0 %v9581
    %10678 = vmatprep.subr.bf16.mxu0 0
    %10679 = vmatpush1.bf16.msra.mxu0 %v9580
    %10680 = vmatprep.subr.bf16.mxu0 0
    %10681 = vmatpush1.bf16.msra.mxu0 %v9579
    %10682 = vmatprep.subr.bf16.mxu0 0
    %10683 = vmatpush1.bf16.msra.mxu0 %v9578
    %10684 = vmatprep.subr.bf16.mxu0 0
    %10685 = vmatpush1.bf16.msra.mxu0 %v9577
    %10686 = vmatprep.subr.bf16.mxu0 0
    %10687 = vmatpush1.bf16.msra.mxu0 %v9576
    %10688 = vmatprep.subr.bf16.mxu0 0
    %10689 = vmatpush2.bf16.msra.mxu0 %v9591
    %10690 = vmatprep.subr.bf16.mxu0 0
    %10691 = vmatpush2.bf16.msra.mxu0 %v9590
    %10692 = vmatprep.subr.bf16.mxu0 0
    %10693 = vmatpush2.bf16.msra.mxu0 %v9589
    %10694 = vmatprep.subr.bf16.mxu0 0
    %10695 = vmatpush2.bf16.msra.mxu0 %v9588
    %10696 = vmatprep.subr.bf16.mxu0 0
    %10697 = vmatpush2.bf16.msra.mxu0 %v9587
    %10698 = vmatprep.subr.bf16.mxu0 0
    %10699 = vmatpush2.bf16.msra.mxu0 %v9586
    %10700 = vmatprep.subr.bf16.mxu0 0
    %10701 = vmatpush2.bf16.msra.mxu0 %v9585
    %10702 = vmatprep.subr.bf16.mxu0 0
    %10703 = vmatpush2.bf16.msra.mxu0 %v9584
    %10704 = vmatprep.mubr.bf16.mxu0 %v6199
    %10705 = vmatmul.mubr.bf16.gmra.mxu0 %v6195
    %v10706 = vpop.f32.mrf.mxu0
    %v10707 = vadd.f32 %v10667, %v10706
    %v10708 = vpop.f32.mrf.mxu0
    %v10709 = vpop.f32.mrf.mxu0
    %v10710 = vpop.f32.mrf.mxu0
    %10711 = vdwg.mxu0
    %10712 = vmatprep.subr.bf16.mxu0 0
    %10713 = vmatpush1.bf16.msra.mxu0 %v9599
    %10714 = vmatprep.subr.bf16.mxu0 0
    %10715 = vmatpush1.bf16.msra.mxu0 %v9598
    %10716 = vmatprep.subr.bf16.mxu0 0
    %10717 = vmatpush1.bf16.msra.mxu0 %v9597
    %10718 = vmatprep.subr.bf16.mxu0 0
    %10719 = vmatpush1.bf16.msra.mxu0 %v9596
    %10720 = vmatprep.subr.bf16.mxu0 0
    %10721 = vmatpush1.bf16.msra.mxu0 %v9595
    %10722 = vmatprep.subr.bf16.mxu0 0
    %10723 = vmatpush1.bf16.msra.mxu0 %v9594
    %10724 = vmatprep.subr.bf16.mxu0 0
    %10725 = vmatpush1.bf16.msra.mxu0 %v9593
    %10726 = vmatprep.subr.bf16.mxu0 0
    %10727 = vmatpush1.bf16.msra.mxu0 %v9592
    %10728 = vmatprep.subr.bf16.mxu0 0
    %10729 = vmatpush2.bf16.msra.mxu0 %v9607
    %10730 = vmatprep.subr.bf16.mxu0 0
    %10731 = vmatpush2.bf16.msra.mxu0 %v9606
    %10732 = vmatprep.subr.bf16.mxu0 0
    %10733 = vmatpush2.bf16.msra.mxu0 %v9605
    %10734 = vmatprep.subr.bf16.mxu0 0
    %10735 = vmatpush2.bf16.msra.mxu0 %v9604
    %10736 = vmatprep.subr.bf16.mxu0 0
    %10737 = vmatpush2.bf16.msra.mxu0 %v9603
    %10738 = vmatprep.subr.bf16.mxu0 0
    %10739 = vmatpush2.bf16.msra.mxu0 %v9602
    %10740 = vmatprep.subr.bf16.mxu0 0
    %10741 = vmatpush2.bf16.msra.mxu0 %v9601
    %10742 = vmatprep.subr.bf16.mxu0 0
    %10743 = vmatpush2.bf16.msra.mxu0 %v9600
    %10744 = vmatprep.mubr.bf16.mxu0 %v6208
    %10745 = vmatmul.mubr.bf16.gmra.mxu0 %v6207
    %v10746 = vpop.f32.mrf.mxu0
    %v10747 = vadd.f32 %v10707, %v10746
    %v10748 = vpop.f32.mrf.mxu0
    %v10749 = vpop.f32.mrf.mxu0
    %v10750 = vpop.f32.mrf.mxu0
    %10751 = vdwg.mxu0
    %10752 = vmatprep.subr.bf16.mxu0 0
    %10753 = vmatpush1.bf16.msra.mxu0 %v9615
    %10754 = vmatprep.subr.bf16.mxu0 0
    %10755 = vmatpush1.bf16.msra.mxu0 %v9614
    %10756 = vmatprep.subr.bf16.mxu0 0
    %10757 = vmatpush1.bf16.msra.mxu0 %v9613
    %10758 = vmatprep.subr.bf16.mxu0 0
    %10759 = vmatpush1.bf16.msra.mxu0 %v9612
    %10760 = vmatprep.subr.bf16.mxu0 0
    %10761 = vmatpush1.bf16.msra.mxu0 %v9611
    %10762 = vmatprep.subr.bf16.mxu0 0
    %10763 = vmatpush1.bf16.msra.mxu0 %v9610
    %10764 = vmatprep.subr.bf16.mxu0 0
    %10765 = vmatpush1.bf16.msra.mxu0 %v9609
    %10766 = vmatprep.subr.bf16.mxu0 0
    %10767 = vmatpush1.bf16.msra.mxu0 %v9608
    %10768 = vmatprep.subr.bf16.mxu0 0
    %10769 = vmatpush2.bf16.msra.mxu0 %v9623
    %10770 = vmatprep.subr.bf16.mxu0 0
    %10771 = vmatpush2.bf16.msra.mxu0 %v9622
    %10772 = vmatprep.subr.bf16.mxu0 0
    %10773 = vmatpush2.bf16.msra.mxu0 %v9621
    %10774 = vmatprep.subr.bf16.mxu0 0
    %10775 = vmatpush2.bf16.msra.mxu0 %v9620
    %10776 = vmatprep.subr.bf16.mxu0 0
    %10777 = vmatpush2.bf16.msra.mxu0 %v9619
    %10778 = vmatprep.subr.bf16.mxu0 0
    %10779 = vmatpush2.bf16.msra.mxu0 %v9618
    %10780 = vmatprep.subr.bf16.mxu0 0
    %10781 = vmatpush2.bf16.msra.mxu0 %v9617
    %10782 = vmatprep.subr.bf16.mxu0 0
    %10783 = vmatpush2.bf16.msra.mxu0 %v9616
    %10784 = vmatprep.mubr.bf16.mxu0 %v6218
    %10785 = vmatmul.mubr.bf16.gmra.mxu0 %v6214
    %v10786 = vpop.f32.mrf.mxu0
    %v10787 = vadd.f32 %v10747, %v10786
    %v10788 = vpop.f32.mrf.mxu0
    %v10789 = vpop.f32.mrf.mxu0
    %v10790 = vpop.f32.mrf.mxu0
    %10791 = vdwg.mxu0
    %10792 = vmatprep.subr.bf16.mxu0 0
    %10793 = vmatpush1.bf16.msra.mxu0 %v9631
    %10794 = vmatprep.subr.bf16.mxu0 0
    %10795 = vmatpush1.bf16.msra.mxu0 %v9630
    %10796 = vmatprep.subr.bf16.mxu0 0
    %10797 = vmatpush1.bf16.msra.mxu0 %v9629
    %10798 = vmatprep.subr.bf16.mxu0 0
    %10799 = vmatpush1.bf16.msra.mxu0 %v9628
    %10800 = vmatprep.subr.bf16.mxu0 0
    %10801 = vmatpush1.bf16.msra.mxu0 %v9627
    %10802 = vmatprep.subr.bf16.mxu0 0
    %10803 = vmatpush1.bf16.msra.mxu0 %v9626
    %10804 = vmatprep.subr.bf16.mxu0 0
    %10805 = vmatpush1.bf16.msra.mxu0 %v9625
    %10806 = vmatprep.subr.bf16.mxu0 0
    %10807 = vmatpush1.bf16.msra.mxu0 %v9624
    %10808 = vmatprep.subr.bf16.mxu0 0
    %10809 = vmatpush2.bf16.msra.mxu0 %v9639
    %10810 = vmatprep.subr.bf16.mxu0 0
    %10811 = vmatpush2.bf16.msra.mxu0 %v9638
    %10812 = vmatprep.subr.bf16.mxu0 0
    %10813 = vmatpush2.bf16.msra.mxu0 %v9637
    %10814 = vmatprep.subr.bf16.mxu0 0
    %10815 = vmatpush2.bf16.msra.mxu0 %v9636
    %10816 = vmatprep.subr.bf16.mxu0 0
    %10817 = vmatpush2.bf16.msra.mxu0 %v9635
    %10818 = vmatprep.subr.bf16.mxu0 0
    %10819 = vmatpush2.bf16.msra.mxu0 %v9634
    %10820 = vmatprep.subr.bf16.mxu0 0
    %10821 = vmatpush2.bf16.msra.mxu0 %v9633
    %10822 = vmatprep.subr.bf16.mxu0 0
    %10823 = vmatpush2.bf16.msra.mxu0 %v9632
    %10824 = vmatprep.mubr.bf16.mxu0 %v6227
    %10825 = vmatmul.mubr.bf16.gmra.mxu0 %v6226
    %v10826 = vpop.f32.mrf.mxu0
    %v10827 = vadd.f32 %v10787, %v10826
    %v10828 = vpop.f32.mrf.mxu0
    %v10829 = vpop.f32.mrf.mxu0
    %v10830 = vpop.f32.mrf.mxu0
    %10831 = vdwg.mxu0
    %10832 = vmatprep.subr.bf16.mxu0 0
    %10833 = vmatpush1.bf16.msra.mxu0 %v9647
    %10834 = vmatprep.subr.bf16.mxu0 0
    %10835 = vmatpush1.bf16.msra.mxu0 %v9646
    %10836 = vmatprep.subr.bf16.mxu0 0
    %10837 = vmatpush1.bf16.msra.mxu0 %v9645
    %10838 = vmatprep.subr.bf16.mxu0 0
    %10839 = vmatpush1.bf16.msra.mxu0 %v9644
    %10840 = vmatprep.subr.bf16.mxu0 0
    %10841 = vmatpush1.bf16.msra.mxu0 %v9643
    %10842 = vmatprep.subr.bf16.mxu0 0
    %10843 = vmatpush1.bf16.msra.mxu0 %v9642
    %10844 = vmatprep.subr.bf16.mxu0 0
    %10845 = vmatpush1.bf16.msra.mxu0 %v9641
    %10846 = vmatprep.subr.bf16.mxu0 0
    %10847 = vmatpush1.bf16.msra.mxu0 %v9640
    %10848 = vmatprep.subr.bf16.mxu0 0
    %10849 = vmatpush2.bf16.msra.mxu0 %v9655
    %10850 = vmatprep.subr.bf16.mxu0 0
    %10851 = vmatpush2.bf16.msra.mxu0 %v9654
    %10852 = vmatprep.subr.bf16.mxu0 0
    %10853 = vmatpush2.bf16.msra.mxu0 %v9653
    %10854 = vmatprep.subr.bf16.mxu0 0
    %10855 = vmatpush2.bf16.msra.mxu0 %v9652
    %10856 = vmatprep.subr.bf16.mxu0 0
    %10857 = vmatpush2.bf16.msra.mxu0 %v9651
    %10858 = vmatprep.subr.bf16.mxu0 0
    %10859 = vmatpush2.bf16.msra.mxu0 %v9650
    %10860 = vmatprep.subr.bf16.mxu0 0
    %10861 = vmatpush2.bf16.msra.mxu0 %v9649
    %10862 = vmatprep.subr.bf16.mxu0 0
    %10863 = vmatpush2.bf16.msra.mxu0 %v9648
    %10864 = vmatprep.mubr.bf16.mxu0 %v6237
    %10865 = vmatmul.mubr.bf16.gmra.mxu0 %v6233
    %v10866 = vpop.f32.mrf.mxu0
    %v10867 = vadd.f32 %v10827, %v10866
    %v10868 = vpop.f32.mrf.mxu0
    %v10869 = vpop.f32.mrf.mxu0
    %v10870 = vpop.f32.mrf.mxu0
    %10871 = vdwg.mxu0
    %10872 = vmatprep.subr.bf16.mxu0 0
    %10873 = vmatpush1.bf16.msra.mxu0 %v9663
    %10874 = vmatprep.subr.bf16.mxu0 0
    %10875 = vmatpush1.bf16.msra.mxu0 %v9662
    %10876 = vmatprep.subr.bf16.mxu0 0
    %10877 = vmatpush1.bf16.msra.mxu0 %v9661
    %10878 = vmatprep.subr.bf16.mxu0 0
    %10879 = vmatpush1.bf16.msra.mxu0 %v9660
    %10880 = vmatprep.subr.bf16.mxu0 0
    %10881 = vmatpush1.bf16.msra.mxu0 %v9659
    %10882 = vmatprep.subr.bf16.mxu0 0
    %10883 = vmatpush1.bf16.msra.mxu0 %v9658
    %10884 = vmatprep.subr.bf16.mxu0 0
    %10885 = vmatpush1.bf16.msra.mxu0 %v9657
    %10886 = vmatprep.subr.bf16.mxu0 0
    %10887 = vmatpush1.bf16.msra.mxu0 %v9656
    %10888 = vmatprep.subr.bf16.mxu0 0
    %10889 = vmatpush2.bf16.msra.mxu0 %v9671
    %10890 = vmatprep.subr.bf16.mxu0 0
    %10891 = vmatpush2.bf16.msra.mxu0 %v9670
    %10892 = vmatprep.subr.bf16.mxu0 0
    %10893 = vmatpush2.bf16.msra.mxu0 %v9669
    %10894 = vmatprep.subr.bf16.mxu0 0
    %10895 = vmatpush2.bf16.msra.mxu0 %v9668
    %10896 = vmatprep.subr.bf16.mxu0 0
    %10897 = vmatpush2.bf16.msra.mxu0 %v9667
    %10898 = vmatprep.subr.bf16.mxu0 0
    %10899 = vmatpush2.bf16.msra.mxu0 %v9666
    %10900 = vmatprep.subr.bf16.mxu0 0
    %10901 = vmatpush2.bf16.msra.mxu0 %v9665
    %10902 = vmatprep.subr.bf16.mxu0 0
    %10903 = vmatpush2.bf16.msra.mxu0 %v9664
    %10904 = vmatprep.mubr.bf16.mxu0 %v6244
    %10905 = vmatmul.mubr.bf16.gmra.mxu0 %v6243
    %v10906 = vpop.f32.mrf.mxu0
    %v10907 = vadd.f32 %v10867, %v10906
    %v10908 = vpop.f32.mrf.mxu0
    %v10909 = vpop.f32.mrf.mxu0
    %v10910 = vpop.f32.mrf.mxu0
    %10911 = vdwg.mxu0
    %10912 = vmatprep.subr.bf16.mxu0 0
    %10913 = vmatpush1.bf16.msra.mxu0 %v9679
    %10914 = vmatprep.subr.bf16.mxu0 0
    %10915 = vmatpush1.bf16.msra.mxu0 %v9678
    %10916 = vmatprep.subr.bf16.mxu0 0
    %10917 = vmatpush1.bf16.msra.mxu0 %v9677
    %10918 = vmatprep.subr.bf16.mxu0 0
    %10919 = vmatpush1.bf16.msra.mxu0 %v9676
    %10920 = vmatprep.subr.bf16.mxu0 0
    %10921 = vmatpush1.bf16.msra.mxu0 %v9675
    %10922 = vmatprep.subr.bf16.mxu0 0
    %10923 = vmatpush1.bf16.msra.mxu0 %v9674
    %10924 = vmatprep.subr.bf16.mxu0 0
    %10925 = vmatpush1.bf16.msra.mxu0 %v9673
    %10926 = vmatprep.subr.bf16.mxu0 0
    %10927 = vmatpush1.bf16.msra.mxu0 %v9672
    %10928 = vmatprep.subr.bf16.mxu0 0
    %10929 = vmatpush2.bf16.msra.mxu0 %v9687
    %10930 = vmatprep.subr.bf16.mxu0 0
    %10931 = vmatpush2.bf16.msra.mxu0 %v9686
    %10932 = vmatprep.subr.bf16.mxu0 0
    %10933 = vmatpush2.bf16.msra.mxu0 %v9685
    %10934 = vmatprep.subr.bf16.mxu0 0
    %10935 = vmatpush2.bf16.msra.mxu0 %v9684
    %10936 = vmatprep.subr.bf16.mxu0 0
    %10937 = vmatpush2.bf16.msra.mxu0 %v9683
    %10938 = vmatprep.subr.bf16.mxu0 0
    %10939 = vmatpush2.bf16.msra.mxu0 %v9682
    %10940 = vmatprep.subr.bf16.mxu0 0
    %10941 = vmatpush2.bf16.msra.mxu0 %v9681
    %10942 = vmatprep.subr.bf16.mxu0 0
    %10943 = vmatpush2.bf16.msra.mxu0 %v9680
    %10944 = vmatprep.mubr.bf16.mxu0 %v6251
    %10945 = vmatmul.mubr.bf16.gmra.mxu0 %v6248
    %v10946 = vpop.f32.mrf.mxu0
    %v10947 = vadd.f32 %v10907, %v10946
    %v10948 = vpop.f32.mrf.mxu0
    %v10949 = vpop.f32.mrf.mxu0
    %v10950 = vpop.f32.mrf.mxu0
    %10951 = vdwg.mxu0
    %10952 = vmatprep.subr.bf16.mxu0 0
    %10953 = vmatpush1.bf16.msra.mxu0 %v9695
    %10954 = vmatprep.subr.bf16.mxu0 0
    %10955 = vmatpush1.bf16.msra.mxu0 %v9694
    %10956 = vmatprep.subr.bf16.mxu0 0
    %10957 = vmatpush1.bf16.msra.mxu0 %v9693
    %10958 = vmatprep.subr.bf16.mxu0 0
    %10959 = vmatpush1.bf16.msra.mxu0 %v9692
    %10960 = vmatprep.subr.bf16.mxu0 0
    %10961 = vmatpush1.bf16.msra.mxu0 %v9691
    %10962 = vmatprep.subr.bf16.mxu0 0
    %10963 = vmatpush1.bf16.msra.mxu0 %v9690
    %10964 = vmatprep.subr.bf16.mxu0 0
    %10965 = vmatpush1.bf16.msra.mxu0 %v9689
    %10966 = vmatprep.subr.bf16.mxu0 0
    %10967 = vmatpush1.bf16.msra.mxu0 %v9688
    %10968 = vmatprep.subr.bf16.mxu0 0
    %10969 = vmatpush2.bf16.msra.mxu0 %v9703
    %10970 = vmatprep.subr.bf16.mxu0 0
    %10971 = vmatpush2.bf16.msra.mxu0 %v9702
    %10972 = vmatprep.subr.bf16.mxu0 0
    %10973 = vmatpush2.bf16.msra.mxu0 %v9701
    %10974 = vmatprep.subr.bf16.mxu0 0
    %10975 = vmatpush2.bf16.msra.mxu0 %v9700
    %10976 = vmatprep.subr.bf16.mxu0 0
    %10977 = vmatpush2.bf16.msra.mxu0 %v9699
    %10978 = vmatprep.subr.bf16.mxu0 0
    %10979 = vmatpush2.bf16.msra.mxu0 %v9698
    %10980 = vmatprep.subr.bf16.mxu0 0
    %10981 = vmatpush2.bf16.msra.mxu0 %v9697
    %10982 = vmatprep.subr.bf16.mxu0 0
    %10983 = vmatpush2.bf16.msra.mxu0 %v9696
    %10984 = vmatprep.mubr.bf16.mxu0 %v6261
    %10985 = vmatmul.mubr.bf16.gmra.mxu0 %v6260
    %v10986 = vpop.f32.mrf.mxu0
    %v10987 = vadd.f32 %v10947, %v10986
    %v10988 = vpop.f32.mrf.mxu0
    %v10989 = vpop.f32.mrf.mxu0
    %v10990 = vpop.f32.mrf.mxu0
    %10991 = vdwg.mxu0
    %10992 = vmatprep.subr.bf16.mxu0 0
    %10993 = vmatpush1.bf16.msra.mxu0 %v9711
    %10994 = vmatprep.subr.bf16.mxu0 0
    %10995 = vmatpush1.bf16.msra.mxu0 %v9710
    %10996 = vmatprep.subr.bf16.mxu0 0
    %10997 = vmatpush1.bf16.msra.mxu0 %v9709
    %10998 = vmatprep.subr.bf16.mxu0 0
    %10999 = vmatpush1.bf16.msra.mxu0 %v9708
    %11000 = vmatprep.subr.bf16.mxu0 0
    %11001 = vmatpush1.bf16.msra.mxu0 %v9707
    %11002 = vmatprep.subr.bf16.mxu0 0
    %11003 = vmatpush1.bf16.msra.mxu0 %v9706
    %11004 = vmatprep.subr.bf16.mxu0 0
    %11005 = vmatpush1.bf16.msra.mxu0 %v9705
    %11006 = vmatprep.subr.bf16.mxu0 0
    %11007 = vmatpush1.bf16.msra.mxu0 %v9704
    %11008 = vmatprep.subr.bf16.mxu0 0
    %11009 = vmatpush2.bf16.msra.mxu0 %v9719
    %11010 = vmatprep.subr.bf16.mxu0 0
    %11011 = vmatpush2.bf16.msra.mxu0 %v9718
    %11012 = vmatprep.subr.bf16.mxu0 0
    %11013 = vmatpush2.bf16.msra.mxu0 %v9717
    %11014 = vmatprep.subr.bf16.mxu0 0
    %11015 = vmatpush2.bf16.msra.mxu0 %v9716
    %11016 = vmatprep.subr.bf16.mxu0 0
    %11017 = vmatpush2.bf16.msra.mxu0 %v9715
    %11018 = vmatprep.subr.bf16.mxu0 0
    %11019 = vmatpush2.bf16.msra.mxu0 %v9714
    %11020 = vmatprep.subr.bf16.mxu0 0
    %11021 = vmatpush2.bf16.msra.mxu0 %v9713
    %11022 = vmatprep.subr.bf16.mxu0 0
    %11023 = vmatpush2.bf16.msra.mxu0 %v9712
    %11024 = vmatprep.mubr.bf16.mxu0 %v6271
    %11025 = vmatmul.mubr.bf16.gmra.mxu0 %v6267
    %v11026 = vpop.f32.mrf.mxu0
    %v11027 = vadd.f32 %v10987, %v11026
    %v11028 = vpop.f32.mrf.mxu0
    %v11029 = vpop.f32.mrf.mxu0
    %v11030 = vpop.f32.mrf.mxu0
    %11031 = vdwg.mxu0
    %11032 = vmatprep.subr.bf16.mxu0 0
    %11033 = vmatpush1.bf16.msra.mxu0 %v9727
    %11034 = vmatprep.subr.bf16.mxu0 0
    %11035 = vmatpush1.bf16.msra.mxu0 %v9726
    %11036 = vmatprep.subr.bf16.mxu0 0
    %11037 = vmatpush1.bf16.msra.mxu0 %v9725
    %11038 = vmatprep.subr.bf16.mxu0 0
    %11039 = vmatpush1.bf16.msra.mxu0 %v9724
    %11040 = vmatprep.subr.bf16.mxu0 0
    %11041 = vmatpush1.bf16.msra.mxu0 %v9723
    %11042 = vmatprep.subr.bf16.mxu0 0
    %11043 = vmatpush1.bf16.msra.mxu0 %v9722
    %11044 = vmatprep.subr.bf16.mxu0 0
    %11045 = vmatpush1.bf16.msra.mxu0 %v9721
    %11046 = vmatprep.subr.bf16.mxu0 0
    %11047 = vmatpush1.bf16.msra.mxu0 %v9720
    %11048 = vmatprep.subr.bf16.mxu0 0
    %11049 = vmatpush2.bf16.msra.mxu0 %v9735
    %11050 = vmatprep.subr.bf16.mxu0 0
    %11051 = vmatpush2.bf16.msra.mxu0 %v9734
    %11052 = vmatprep.subr.bf16.mxu0 0
    %11053 = vmatpush2.bf16.msra.mxu0 %v9733
    %11054 = vmatprep.subr.bf16.mxu0 0
    %11055 = vmatpush2.bf16.msra.mxu0 %v9732
    %11056 = vmatprep.subr.bf16.mxu0 0
    %11057 = vmatpush2.bf16.msra.mxu0 %v9731
    %11058 = vmatprep.subr.bf16.mxu0 0
    %11059 = vmatpush2.bf16.msra.mxu0 %v9730
    %11060 = vmatprep.subr.bf16.mxu0 0
    %11061 = vmatpush2.bf16.msra.mxu0 %v9729
    %11062 = vmatprep.subr.bf16.mxu0 0
    %11063 = vmatpush2.bf16.msra.mxu0 %v9728
    %11064 = vmatprep.mubr.bf16.mxu0 %v6280
    %11065 = vmatmul.mubr.bf16.gmra.mxu0 %v6279
    %v11066 = vpop.f32.mrf.mxu0
    %v11067 = vadd.f32 %v11027, %v11066
    %v11068 = vpop.f32.mrf.mxu0
    %v11069 = vpop.f32.mrf.mxu0
    %v11070 = vpop.f32.mrf.mxu0
    %11071 = vdwg.mxu0
    %11072 = vmatprep.subr.bf16.mxu0 0
    %11073 = vmatpush1.bf16.msra.mxu0 %v9743
    %11074 = vmatprep.subr.bf16.mxu0 0
    %11075 = vmatpush1.bf16.msra.mxu0 %v9742
    %11076 = vmatprep.subr.bf16.mxu0 0
    %11077 = vmatpush1.bf16.msra.mxu0 %v9741
    %11078 = vmatprep.subr.bf16.mxu0 0
    %11079 = vmatpush1.bf16.msra.mxu0 %v9740
    %11080 = vmatprep.subr.bf16.mxu0 0
    %11081 = vmatpush1.bf16.msra.mxu0 %v9739
    %11082 = vmatprep.subr.bf16.mxu0 0
    %11083 = vmatpush1.bf16.msra.mxu0 %v9738
    %11084 = vmatprep.subr.bf16.mxu0 0
    %11085 = vmatpush1.bf16.msra.mxu0 %v9737
    %11086 = vmatprep.subr.bf16.mxu0 0
    %11087 = vmatpush1.bf16.msra.mxu0 %v9736
    %11088 = vmatprep.subr.bf16.mxu0 0
    %11089 = vmatpush2.bf16.msra.mxu0 %v9751
    %11090 = vmatprep.subr.bf16.mxu0 0
    %11091 = vmatpush2.bf16.msra.mxu0 %v9750
    %11092 = vmatprep.subr.bf16.mxu0 0
    %11093 = vmatpush2.bf16.msra.mxu0 %v9749
    %11094 = vmatprep.subr.bf16.mxu0 0
    %11095 = vmatpush2.bf16.msra.mxu0 %v9748
    %11096 = vmatprep.subr.bf16.mxu0 0
    %11097 = vmatpush2.bf16.msra.mxu0 %v9747
    %11098 = vmatprep.subr.bf16.mxu0 0
    %11099 = vmatpush2.bf16.msra.mxu0 %v9746
    %11100 = vmatprep.subr.bf16.mxu0 0
    %11101 = vmatpush2.bf16.msra.mxu0 %v9745
    %11102 = vmatprep.subr.bf16.mxu0 0
    %11103 = vmatpush2.bf16.msra.mxu0 %v9744
    %11104 = vmatprep.mubr.bf16.mxu0 %v6290
    %11105 = vmatmul.mubr.bf16.gmra.mxu0 %v6286
    %v11106 = vpop.f32.mrf.mxu0
    %v11107 = vadd.f32 %v11067, %v11106
    %v11108 = vpop.f32.mrf.mxu0
    %v11109 = vpop.f32.mrf.mxu0
    %v11110 = vpop.f32.mrf.mxu0
    %11111 = vdwg.mxu0
    %11112 = vmatprep.subr.bf16.mxu0 0
    %11113 = vmatpush1.bf16.msra.mxu0 %v9759
    %11114 = vmatprep.subr.bf16.mxu0 0
    %11115 = vmatpush1.bf16.msra.mxu0 %v9758
    %11116 = vmatprep.subr.bf16.mxu0 0
    %11117 = vmatpush1.bf16.msra.mxu0 %v9757
    %11118 = vmatprep.subr.bf16.mxu0 0
    %11119 = vmatpush1.bf16.msra.mxu0 %v9756
    %11120 = vmatprep.subr.bf16.mxu0 0
    %11121 = vmatpush1.bf16.msra.mxu0 %v9755
    %11122 = vmatprep.subr.bf16.mxu0 0
    %11123 = vmatpush1.bf16.msra.mxu0 %v9754
    %11124 = vmatprep.subr.bf16.mxu0 0
    %11125 = vmatpush1.bf16.msra.mxu0 %v9753
    %11126 = vmatprep.subr.bf16.mxu0 0
    %11127 = vmatpush1.bf16.msra.mxu0 %v9752
    %11128 = vmatprep.subr.bf16.mxu0 0
    %11129 = vmatpush2.bf16.msra.mxu0 %v9767
    %11130 = vmatprep.subr.bf16.mxu0 0
    %11131 = vmatpush2.bf16.msra.mxu0 %v9766
    %11132 = vmatprep.subr.bf16.mxu0 0
    %11133 = vmatpush2.bf16.msra.mxu0 %v9765
    %11134 = vmatprep.subr.bf16.mxu0 0
    %11135 = vmatpush2.bf16.msra.mxu0 %v9764
    %11136 = vmatprep.subr.bf16.mxu0 0
    %11137 = vmatpush2.bf16.msra.mxu0 %v9763
    %11138 = vmatprep.subr.bf16.mxu0 0
    %11139 = vmatpush2.bf16.msra.mxu0 %v9762
    %11140 = vmatprep.subr.bf16.mxu0 0
    %11141 = vmatpush2.bf16.msra.mxu0 %v9761
    %11142 = vmatprep.subr.bf16.mxu0 0
    %11143 = vmatpush2.bf16.msra.mxu0 %v9760
    %11144 = vmatprep.mubr.bf16.mxu0 %v6299
    %11145 = vmatmul.mubr.bf16.gmra.mxu0 %v6298
    %v11146 = vpop.f32.mrf.mxu0
    %v11147 = vadd.f32 %v11107, %v11146
    %v11148 = vpop.f32.mrf.mxu0
    %v11149 = vpop.f32.mrf.mxu0
    %v11150 = vpop.f32.mrf.mxu0
    %11151 = vdwg.mxu0
    %11152 = vmatprep.subr.bf16.mxu0 0
    %11153 = vmatpush1.bf16.msra.mxu0 %v9775
    %11154 = vmatprep.subr.bf16.mxu0 0
    %11155 = vmatpush1.bf16.msra.mxu0 %v9774
    %11156 = vmatprep.subr.bf16.mxu0 0
    %11157 = vmatpush1.bf16.msra.mxu0 %v9773
    %11158 = vmatprep.subr.bf16.mxu0 0
    %11159 = vmatpush1.bf16.msra.mxu0 %v9772
    %11160 = vmatprep.subr.bf16.mxu0 0
    %11161 = vmatpush1.bf16.msra.mxu0 %v9771
    %11162 = vmatprep.subr.bf16.mxu0 0
    %11163 = vmatpush1.bf16.msra.mxu0 %v9770
    %11164 = vmatprep.subr.bf16.mxu0 0
    %11165 = vmatpush1.bf16.msra.mxu0 %v9769
    %11166 = vmatprep.subr.bf16.mxu0 0
    %11167 = vmatpush1.bf16.msra.mxu0 %v9768
    %11168 = vmatprep.subr.bf16.mxu0 0
    %11169 = vmatpush2.bf16.msra.mxu0 %v9783
    %11170 = vmatprep.subr.bf16.mxu0 0
    %11171 = vmatpush2.bf16.msra.mxu0 %v9782
    %11172 = vmatprep.subr.bf16.mxu0 0
    %11173 = vmatpush2.bf16.msra.mxu0 %v9781
    %11174 = vmatprep.subr.bf16.mxu0 0
    %11175 = vmatpush2.bf16.msra.mxu0 %v9780
    %11176 = vmatprep.subr.bf16.mxu0 0
    %11177 = vmatpush2.bf16.msra.mxu0 %v9779
    %11178 = vmatprep.subr.bf16.mxu0 0
    %11179 = vmatpush2.bf16.msra.mxu0 %v9778
    %11180 = vmatprep.subr.bf16.mxu0 0
    %11181 = vmatpush2.bf16.msra.mxu0 %v9777
    %11182 = vmatprep.subr.bf16.mxu0 0
    %11183 = vmatpush2.bf16.msra.mxu0 %v9776
    %11184 = vmatprep.mubr.bf16.mxu0 %v6309
    %11185 = vmatmul.mubr.bf16.gmra.mxu0 %v6305
    %v11186 = vpop.f32.mrf.mxu0
    %v11187 = vadd.f32 %v11147, %v11186
    %v11188 = vpop.f32.mrf.mxu0
    %v11189 = vpop.f32.mrf.mxu0
    %v11190 = vpop.f32.mrf.mxu0
    %11191 = vdwg.mxu0
    %11192 = vmatprep.subr.bf16.mxu0 0
    %11193 = vmatpush1.bf16.msra.mxu0 %v9791
    %11194 = vmatprep.subr.bf16.mxu0 0
    %11195 = vmatpush1.bf16.msra.mxu0 %v9790
    %11196 = vmatprep.subr.bf16.mxu0 0
    %11197 = vmatpush1.bf16.msra.mxu0 %v9789
    %11198 = vmatprep.subr.bf16.mxu0 0
    %11199 = vmatpush1.bf16.msra.mxu0 %v9788
    %11200 = vmatprep.subr.bf16.mxu0 0
    %11201 = vmatpush1.bf16.msra.mxu0 %v9787
    %11202 = vmatprep.subr.bf16.mxu0 0
    %11203 = vmatpush1.bf16.msra.mxu0 %v9786
    %11204 = vmatprep.subr.bf16.mxu0 0
    %11205 = vmatpush1.bf16.msra.mxu0 %v9785
    %11206 = vmatprep.subr.bf16.mxu0 0
    %11207 = vmatpush1.bf16.msra.mxu0 %v9784
    %11208 = vmatprep.subr.bf16.mxu0 0
    %11209 = vmatpush2.bf16.msra.mxu0 %v9799
    %11210 = vmatprep.subr.bf16.mxu0 0
    %11211 = vmatpush2.bf16.msra.mxu0 %v9798
    %11212 = vmatprep.subr.bf16.mxu0 0
    %11213 = vmatpush2.bf16.msra.mxu0 %v9797
    %11214 = vmatprep.subr.bf16.mxu0 0
    %11215 = vmatpush2.bf16.msra.mxu0 %v9796
    %11216 = vmatprep.subr.bf16.mxu0 0
    %11217 = vmatpush2.bf16.msra.mxu0 %v9795
    %11218 = vmatprep.subr.bf16.mxu0 0
    %11219 = vmatpush2.bf16.msra.mxu0 %v9794
    %11220 = vmatprep.subr.bf16.mxu0 0
    %11221 = vmatpush2.bf16.msra.mxu0 %v9793
    %11222 = vmatprep.subr.bf16.mxu0 0
    %11223 = vmatpush2.bf16.msra.mxu0 %v9792
    %11224 = vmatprep.mubr.bf16.mxu0 %v6316
    %11225 = vmatmul.mubr.bf16.gmra.mxu0 %v6315
    %v11226 = vpop.f32.mrf.mxu0
    %v11227 = vadd.f32 %v11187, %v11226
    %v11228 = vpop.f32.mrf.mxu0
    %v11229 = vpop.f32.mrf.mxu0
    %v11230 = vpop.f32.mrf.mxu0
    %11231 = vdwg.mxu0
    %11232 = vmatprep.subr.bf16.mxu0 0
    %11233 = vmatpush1.bf16.msra.mxu0 %v9807
    %11234 = vmatprep.subr.bf16.mxu0 0
    %11235 = vmatpush1.bf16.msra.mxu0 %v9806
    %11236 = vmatprep.subr.bf16.mxu0 0
    %11237 = vmatpush1.bf16.msra.mxu0 %v9805
    %11238 = vmatprep.subr.bf16.mxu0 0
    %11239 = vmatpush1.bf16.msra.mxu0 %v9804
    %11240 = vmatprep.subr.bf16.mxu0 0
    %11241 = vmatpush1.bf16.msra.mxu0 %v9803
    %11242 = vmatprep.subr.bf16.mxu0 0
    %11243 = vmatpush1.bf16.msra.mxu0 %v9802
    %11244 = vmatprep.subr.bf16.mxu0 0
    %11245 = vmatpush1.bf16.msra.mxu0 %v9801
    %11246 = vmatprep.subr.bf16.mxu0 0
    %11247 = vmatpush1.bf16.msra.mxu0 %v9800
    %11248 = vmatprep.subr.bf16.mxu0 0
    %11249 = vmatpush2.bf16.msra.mxu0 %v9815
    %11250 = vmatprep.subr.bf16.mxu0 0
    %11251 = vmatpush2.bf16.msra.mxu0 %v9814
    %11252 = vmatprep.subr.bf16.mxu0 0
    %11253 = vmatpush2.bf16.msra.mxu0 %v9813
    %11254 = vmatprep.subr.bf16.mxu0 0
    %11255 = vmatpush2.bf16.msra.mxu0 %v9812
    %11256 = vmatprep.subr.bf16.mxu0 0
    %11257 = vmatpush2.bf16.msra.mxu0 %v9811
    %11258 = vmatprep.subr.bf16.mxu0 0
    %11259 = vmatpush2.bf16.msra.mxu0 %v9810
    %11260 = vmatprep.subr.bf16.mxu0 0
    %11261 = vmatpush2.bf16.msra.mxu0 %v9809
    %11262 = vmatprep.subr.bf16.mxu0 0
    %11263 = vmatpush2.bf16.msra.mxu0 %v9808
    %11264 = vmatprep.mubr.bf16.mxu0 %v6323
    %11265 = vmatmul.mubr.bf16.gmra.mxu0 %v6320
    %v11266 = vpop.f32.mrf.mxu0
    %v11267 = vadd.f32 %v11227, %v11266
    %v11268 = vpop.f32.mrf.mxu0
    %v11269 = vpop.f32.mrf.mxu0
    %v11270 = vpop.f32.mrf.mxu0
    %11271 = vdwg.mxu0
    %11272 = vmatprep.subr.bf16.mxu0 0
    %11273 = vmatpush1.bf16.msra.mxu0 %v9823
    %11274 = vmatprep.subr.bf16.mxu0 0
    %11275 = vmatpush1.bf16.msra.mxu0 %v9822
    %11276 = vmatprep.subr.bf16.mxu0 0
    %11277 = vmatpush1.bf16.msra.mxu0 %v9821
    %11278 = vmatprep.subr.bf16.mxu0 0
    %11279 = vmatpush1.bf16.msra.mxu0 %v9820
    %11280 = vmatprep.subr.bf16.mxu0 0
    %11281 = vmatpush1.bf16.msra.mxu0 %v9819
    %11282 = vmatprep.subr.bf16.mxu0 0
    %11283 = vmatpush1.bf16.msra.mxu0 %v9818
    %11284 = vmatprep.subr.bf16.mxu0 0
    %11285 = vmatpush1.bf16.msra.mxu0 %v9817
    %11286 = vmatprep.subr.bf16.mxu0 0
    %11287 = vmatpush1.bf16.msra.mxu0 %v9816
    %11288 = vmatprep.subr.bf16.mxu0 0
    %11289 = vmatpush2.bf16.msra.mxu0 %v9831
    %11290 = vmatprep.subr.bf16.mxu0 0
    %11291 = vmatpush2.bf16.msra.mxu0 %v9830
    %11292 = vmatprep.subr.bf16.mxu0 0
    %11293 = vmatpush2.bf16.msra.mxu0 %v9829
    %11294 = vmatprep.subr.bf16.mxu0 0
    %11295 = vmatpush2.bf16.msra.mxu0 %v9828
    %11296 = vmatprep.subr.bf16.mxu0 0
    %11297 = vmatpush2.bf16.msra.mxu0 %v9827
    %11298 = vmatprep.subr.bf16.mxu0 0
    %11299 = vmatpush2.bf16.msra.mxu0 %v9826
    %11300 = vmatprep.subr.bf16.mxu0 0
    %11301 = vmatpush2.bf16.msra.mxu0 %v9825
    %11302 = vmatprep.subr.bf16.mxu0 0
    %11303 = vmatpush2.bf16.msra.mxu0 %v9824
    %11304 = vmatprep.mubr.bf16.mxu0 %v6333
    %11305 = vmatmul.mubr.bf16.gmra.mxu0 %v6332
    %v11306 = vpop.f32.mrf.mxu0
    %v11307 = vadd.f32 %v11267, %v11306
    %v11308 = vpop.f32.mrf.mxu0
    %v11309 = vpop.f32.mrf.mxu0
    %v11310 = vpop.f32.mrf.mxu0
    %11311 = vdwg.mxu0
    %11312 = vmatprep.subr.bf16.mxu0 0
    %11313 = vmatpush1.bf16.msra.mxu0 %v9839
    %11314 = vmatprep.subr.bf16.mxu0 0
    %11315 = vmatpush1.bf16.msra.mxu0 %v9838
    %11316 = vmatprep.subr.bf16.mxu0 0
    %11317 = vmatpush1.bf16.msra.mxu0 %v9837
    %11318 = vmatprep.subr.bf16.mxu0 0
    %11319 = vmatpush1.bf16.msra.mxu0 %v9836
    %11320 = vmatprep.subr.bf16.mxu0 0
    %11321 = vmatpush1.bf16.msra.mxu0 %v9835
    %11322 = vmatprep.subr.bf16.mxu0 0
    %11323 = vmatpush1.bf16.msra.mxu0 %v9834
    %11324 = vmatprep.subr.bf16.mxu0 0
    %11325 = vmatpush1.bf16.msra.mxu0 %v9833
    %11326 = vmatprep.subr.bf16.mxu0 0
    %11327 = vmatpush1.bf16.msra.mxu0 %v9832
    %11328 = vmatprep.subr.bf16.mxu0 0
    %11329 = vmatpush2.bf16.msra.mxu0 %v9847
    %11330 = vmatprep.subr.bf16.mxu0 0
    %11331 = vmatpush2.bf16.msra.mxu0 %v9846
    %11332 = vmatprep.subr.bf16.mxu0 0
    %11333 = vmatpush2.bf16.msra.mxu0 %v9845
    %11334 = vmatprep.subr.bf16.mxu0 0
    %11335 = vmatpush2.bf16.msra.mxu0 %v9844
    %11336 = vmatprep.subr.bf16.mxu0 0
    %11337 = vmatpush2.bf16.msra.mxu0 %v9843
    %11338 = vmatprep.subr.bf16.mxu0 0
    %11339 = vmatpush2.bf16.msra.mxu0 %v9842
    %11340 = vmatprep.subr.bf16.mxu0 0
    %11341 = vmatpush2.bf16.msra.mxu0 %v9841
    %11342 = vmatprep.subr.bf16.mxu0 0
    %11343 = vmatpush2.bf16.msra.mxu0 %v9840
    %11344 = vmatprep.mubr.bf16.mxu0 %v6343
    %11345 = vmatmul.mubr.bf16.gmra.mxu0 %v6339
    %v11346 = vpop.f32.mrf.mxu0
    %v11347 = vadd.f32 %v11307, %v11346
    %v11348 = vpop.f32.mrf.mxu0
    %v11349 = vpop.f32.mrf.mxu0
    %v11350 = vpop.f32.mrf.mxu0
    %11351 = vdwg.mxu0
    %11352 = vmatprep.subr.bf16.mxu0 0
    %11353 = vmatpush1.bf16.msra.mxu0 %v9855
    %11354 = vmatprep.subr.bf16.mxu0 0
    %11355 = vmatpush1.bf16.msra.mxu0 %v9854
    %11356 = vmatprep.subr.bf16.mxu0 0
    %11357 = vmatpush1.bf16.msra.mxu0 %v9853
    %11358 = vmatprep.subr.bf16.mxu0 0
    %11359 = vmatpush1.bf16.msra.mxu0 %v9852
    %11360 = vmatprep.subr.bf16.mxu0 0
    %11361 = vmatpush1.bf16.msra.mxu0 %v9851
    %11362 = vmatprep.subr.bf16.mxu0 0
    %11363 = vmatpush1.bf16.msra.mxu0 %v9850
    %11364 = vmatprep.subr.bf16.mxu0 0
    %11365 = vmatpush1.bf16.msra.mxu0 %v9849
    %11366 = vmatprep.subr.bf16.mxu0 0
    %11367 = vmatpush1.bf16.msra.mxu0 %v9848
    %11368 = vmatprep.subr.bf16.mxu0 0
    %11369 = vmatpush2.bf16.msra.mxu0 %v9863
    %11370 = vmatprep.subr.bf16.mxu0 0
    %11371 = vmatpush2.bf16.msra.mxu0 %v9862
    %11372 = vmatprep.subr.bf16.mxu0 0
    %11373 = vmatpush2.bf16.msra.mxu0 %v9861
    %11374 = vmatprep.subr.bf16.mxu0 0
    %11375 = vmatpush2.bf16.msra.mxu0 %v9860
    %11376 = vmatprep.subr.bf16.mxu0 0
    %11377 = vmatpush2.bf16.msra.mxu0 %v9859
    %11378 = vmatprep.subr.bf16.mxu0 0
    %11379 = vmatpush2.bf16.msra.mxu0 %v9858
    %11380 = vmatprep.subr.bf16.mxu0 0
    %11381 = vmatpush2.bf16.msra.mxu0 %v9857
    %11382 = vmatprep.subr.bf16.mxu0 0
    %11383 = vmatpush2.bf16.msra.mxu0 %v9856
    %11384 = vmatprep.mubr.bf16.mxu0 %v6352
    %11385 = vmatmul.mubr.bf16.gmra.mxu0 %v6351
    %v11386 = vpop.f32.mrf.mxu0
    %v11387 = vadd.f32 %v11347, %v11386
    %v11388 = vpop.f32.mrf.mxu0
    %v11389 = vpop.f32.mrf.mxu0
    %v11390 = vpop.f32.mrf.mxu0
    %11391 = vdwg.mxu0
    %11392 = vmatprep.subr.bf16.mxu0 0
    %11393 = vmatpush1.bf16.msra.mxu0 %v9871
    %11394 = vmatprep.subr.bf16.mxu0 0
    %11395 = vmatpush1.bf16.msra.mxu0 %v9870
    %11396 = vmatprep.subr.bf16.mxu0 0
    %11397 = vmatpush1.bf16.msra.mxu0 %v9869
    %11398 = vmatprep.subr.bf16.mxu0 0
    %11399 = vmatpush1.bf16.msra.mxu0 %v9868
    %11400 = vmatprep.subr.bf16.mxu0 0
    %11401 = vmatpush1.bf16.msra.mxu0 %v9867
    %11402 = vmatprep.subr.bf16.mxu0 0
    %11403 = vmatpush1.bf16.msra.mxu0 %v9866
    %11404 = vmatprep.subr.bf16.mxu0 0
    %11405 = vmatpush1.bf16.msra.mxu0 %v9865
    %11406 = vmatprep.subr.bf16.mxu0 0
    %11407 = vmatpush1.bf16.msra.mxu0 %v9864
    %11408 = vmatprep.subr.bf16.mxu0 0
    %11409 = vmatpush2.bf16.msra.mxu0 %v9879
    %11410 = vmatprep.subr.bf16.mxu0 0
    %11411 = vmatpush2.bf16.msra.mxu0 %v9878
    %11412 = vmatprep.subr.bf16.mxu0 0
    %11413 = vmatpush2.bf16.msra.mxu0 %v9877
    %11414 = vmatprep.subr.bf16.mxu0 0
    %11415 = vmatpush2.bf16.msra.mxu0 %v9876
    %11416 = vmatprep.subr.bf16.mxu0 0
    %11417 = vmatpush2.bf16.msra.mxu0 %v9875
    %11418 = vmatprep.subr.bf16.mxu0 0
    %11419 = vmatpush2.bf16.msra.mxu0 %v9874
    %11420 = vmatprep.subr.bf16.mxu0 0
    %11421 = vmatpush2.bf16.msra.mxu0 %v9873
    %11422 = vmatprep.subr.bf16.mxu0 0
    %11423 = vmatpush2.bf16.msra.mxu0 %v9872
    %11424 = vmatprep.mubr.bf16.mxu0 %v6362
    %11425 = vmatmul.mubr.bf16.gmra.mxu0 %v6358
    %v11426 = vpop.f32.mrf.mxu0
    %v11427 = vadd.f32 %v11387, %v11426
    %v11428 = vpop.f32.mrf.mxu0
    %v11429 = vpop.f32.mrf.mxu0
    %v11430 = vpop.f32.mrf.mxu0
    %11431 = vdwg.mxu0
    %11432 = vmatprep.subr.bf16.mxu0 0
    %11433 = vmatpush1.bf16.msra.mxu0 %v9887
    %11434 = vmatprep.subr.bf16.mxu0 0
    %11435 = vmatpush1.bf16.msra.mxu0 %v9886
    %11436 = vmatprep.subr.bf16.mxu0 0
    %11437 = vmatpush1.bf16.msra.mxu0 %v9885
    %11438 = vmatprep.subr.bf16.mxu0 0
    %11439 = vmatpush1.bf16.msra.mxu0 %v9884
    %11440 = vmatprep.subr.bf16.mxu0 0
    %11441 = vmatpush1.bf16.msra.mxu0 %v9883
    %11442 = vmatprep.subr.bf16.mxu0 0
    %11443 = vmatpush1.bf16.msra.mxu0 %v9882
    %11444 = vmatprep.subr.bf16.mxu0 0
    %11445 = vmatpush1.bf16.msra.mxu0 %v9881
    %11446 = vmatprep.subr.bf16.mxu0 0
    %11447 = vmatpush1.bf16.msra.mxu0 %v9880
    %11448 = vmatprep.subr.bf16.mxu0 0
    %11449 = vmatpush2.bf16.msra.mxu0 %v9895
    %11450 = vmatprep.subr.bf16.mxu0 0
    %11451 = vmatpush2.bf16.msra.mxu0 %v9894
    %11452 = vmatprep.subr.bf16.mxu0 0
    %11453 = vmatpush2.bf16.msra.mxu0 %v9893
    %11454 = vmatprep.subr.bf16.mxu0 0
    %11455 = vmatpush2.bf16.msra.mxu0 %v9892
    %11456 = vmatprep.subr.bf16.mxu0 0
    %11457 = vmatpush2.bf16.msra.mxu0 %v9891
    %11458 = vmatprep.subr.bf16.mxu0 0
    %11459 = vmatpush2.bf16.msra.mxu0 %v9890
    %11460 = vmatprep.subr.bf16.mxu0 0
    %11461 = vmatpush2.bf16.msra.mxu0 %v9889
    %11462 = vmatprep.subr.bf16.mxu0 0
    %11463 = vmatpush2.bf16.msra.mxu0 %v9888
    %11464 = vmatprep.mubr.bf16.mxu0 %v6371
    %11465 = vmatmul.mubr.bf16.gmra.mxu0 %v6370
    %v11466 = vpop.f32.mrf.mxu0
    %v11467 = vadd.f32 %v11427, %v11466
    %v11468 = vpop.f32.mrf.mxu0
    %v11469 = vpop.f32.mrf.mxu0
    %v11470 = vpop.f32.mrf.mxu0
    %11471 = vdwg.mxu0
    %11472 = vmatprep.subr.bf16.mxu0 0
    %11473 = vmatpush1.bf16.msra.mxu0 %v9903
    %11474 = vmatprep.subr.bf16.mxu0 0
    %11475 = vmatpush1.bf16.msra.mxu0 %v9902
    %11476 = vmatprep.subr.bf16.mxu0 0
    %11477 = vmatpush1.bf16.msra.mxu0 %v9901
    %11478 = vmatprep.subr.bf16.mxu0 0
    %11479 = vmatpush1.bf16.msra.mxu0 %v9900
    %11480 = vmatprep.subr.bf16.mxu0 0
    %11481 = vmatpush1.bf16.msra.mxu0 %v9899
    %11482 = vmatprep.subr.bf16.mxu0 0
    %11483 = vmatpush1.bf16.msra.mxu0 %v9898
    %11484 = vmatprep.subr.bf16.mxu0 0
    %11485 = vmatpush1.bf16.msra.mxu0 %v9897
    %11486 = vmatprep.subr.bf16.mxu0 0
    %11487 = vmatpush1.bf16.msra.mxu0 %v9896
    %11488 = vmatprep.subr.bf16.mxu0 0
    %11489 = vmatpush2.bf16.msra.mxu0 %v9911
    %11490 = vmatprep.subr.bf16.mxu0 0
    %11491 = vmatpush2.bf16.msra.mxu0 %v9910
    %11492 = vmatprep.subr.bf16.mxu0 0
    %11493 = vmatpush2.bf16.msra.mxu0 %v9909
    %11494 = vmatprep.subr.bf16.mxu0 0
    %11495 = vmatpush2.bf16.msra.mxu0 %v9908
    %11496 = vmatprep.subr.bf16.mxu0 0
    %11497 = vmatpush2.bf16.msra.mxu0 %v9907
    %11498 = vmatprep.subr.bf16.mxu0 0
    %11499 = vmatpush2.bf16.msra.mxu0 %v9906
    %11500 = vmatprep.subr.bf16.mxu0 0
    %11501 = vmatpush2.bf16.msra.mxu0 %v9905
    %11502 = vmatprep.subr.bf16.mxu0 0
    %11503 = vmatpush2.bf16.msra.mxu0 %v9904
    %11504 = vmatprep.mubr.bf16.mxu0 %v6381
    %11505 = vmatmul.mubr.bf16.gmra.mxu0 %v6377
    %v11506 = vpop.f32.mrf.mxu0
    %v11507 = vadd.f32 %v11467, %v11506
    %v11508 = vpop.f32.mrf.mxu0
    %v11509 = vpop.f32.mrf.mxu0
    %v11510 = vpop.f32.mrf.mxu0
    %11511 = vdwg.mxu0
    %11512 = vmatprep.subr.bf16.mxu0 0
    %11513 = vmatpush1.bf16.msra.mxu0 %v9919
    %11514 = vmatprep.subr.bf16.mxu0 0
    %11515 = vmatpush1.bf16.msra.mxu0 %v9918
    %11516 = vmatprep.subr.bf16.mxu0 0
    %11517 = vmatpush1.bf16.msra.mxu0 %v9917
    %11518 = vmatprep.subr.bf16.mxu0 0
    %11519 = vmatpush1.bf16.msra.mxu0 %v9916
    %11520 = vmatprep.subr.bf16.mxu0 0
    %11521 = vmatpush1.bf16.msra.mxu0 %v9915
    %11522 = vmatprep.subr.bf16.mxu0 0
    %11523 = vmatpush1.bf16.msra.mxu0 %v9914
    %11524 = vmatprep.subr.bf16.mxu0 0
    %11525 = vmatpush1.bf16.msra.mxu0 %v9913
    %11526 = vmatprep.subr.bf16.mxu0 0
    %11527 = vmatpush1.bf16.msra.mxu0 %v9912
    %11528 = vmatprep.subr.bf16.mxu0 0
    %11529 = vmatpush2.bf16.msra.mxu0 %v9927
    %11530 = vmatprep.subr.bf16.mxu0 0
    %11531 = vmatpush2.bf16.msra.mxu0 %v9926
    %11532 = vmatprep.subr.bf16.mxu0 0
    %11533 = vmatpush2.bf16.msra.mxu0 %v9925
    %11534 = vmatprep.subr.bf16.mxu0 0
    %11535 = vmatpush2.bf16.msra.mxu0 %v9924
    %11536 = vmatprep.subr.bf16.mxu0 0
    %11537 = vmatpush2.bf16.msra.mxu0 %v9923
    %11538 = vmatprep.subr.bf16.mxu0 0
    %11539 = vmatpush2.bf16.msra.mxu0 %v9922
    %11540 = vmatprep.subr.bf16.mxu0 0
    %11541 = vmatpush2.bf16.msra.mxu0 %v9921
    %11542 = vmatprep.subr.bf16.mxu0 0
    %11543 = vmatpush2.bf16.msra.mxu0 %v9920
    %11544 = vmatprep.mubr.bf16.mxu0 %v6388
    %11545 = vmatmul.mubr.bf16.gmra.mxu0 %v6387
    %v11546 = vpop.f32.mrf.mxu0
    %v11547 = vadd.f32 %v11507, %v11546
    %v11548 = vpop.f32.mrf.mxu0
    %v11549 = vpop.f32.mrf.mxu0
    %v11550 = vpop.f32.mrf.mxu0
    %11551 = vdwg.mxu0
    %11552 = vmatprep.subr.bf16.mxu0 0
    %11553 = vmatpush1.bf16.msra.mxu0 %v9935
    %11554 = vmatprep.subr.bf16.mxu0 0
    %11555 = vmatpush1.bf16.msra.mxu0 %v9934
    %11556 = vmatprep.subr.bf16.mxu0 0
    %11557 = vmatpush1.bf16.msra.mxu0 %v9933
    %11558 = vmatprep.subr.bf16.mxu0 0
    %11559 = vmatpush1.bf16.msra.mxu0 %v9932
    %11560 = vmatprep.subr.bf16.mxu0 0
    %11561 = vmatpush1.bf16.msra.mxu0 %v9931
    %11562 = vmatprep.subr.bf16.mxu0 0
    %11563 = vmatpush1.bf16.msra.mxu0 %v9930
    %11564 = vmatprep.subr.bf16.mxu0 0
    %11565 = vmatpush1.bf16.msra.mxu0 %v9929
    %11566 = vmatprep.subr.bf16.mxu0 0
    %11567 = vmatpush1.bf16.msra.mxu0 %v9928
    %11568 = vmatprep.subr.bf16.mxu0 0
    %11569 = vmatpush2.bf16.msra.mxu0 %v9943
    %11570 = vmatprep.subr.bf16.mxu0 0
    %11571 = vmatpush2.bf16.msra.mxu0 %v9942
    %11572 = vmatprep.subr.bf16.mxu0 0
    %11573 = vmatpush2.bf16.msra.mxu0 %v9941
    %11574 = vmatprep.subr.bf16.mxu0 0
    %11575 = vmatpush2.bf16.msra.mxu0 %v9940
    %11576 = vmatprep.subr.bf16.mxu0 0
    %11577 = vmatpush2.bf16.msra.mxu0 %v9939
    %11578 = vmatprep.subr.bf16.mxu0 0
    %11579 = vmatpush2.bf16.msra.mxu0 %v9938
    %11580 = vmatprep.subr.bf16.mxu0 0
    %11581 = vmatpush2.bf16.msra.mxu0 %v9937
    %11582 = vmatprep.subr.bf16.mxu0 0
    %11583 = vmatpush2.bf16.msra.mxu0 %v9936
    %11584 = vmatprep.mubr.bf16.mxu0 %v6395
    %11585 = vmatmul.mubr.bf16.gmra.mxu0 %v6392
    %v11586 = vpop.f32.mrf.mxu0
    %v11587 = vadd.f32 %v11547, %v11586
    %v11588 = vpop.f32.mrf.mxu0
    %v11589 = vpop.f32.mrf.mxu0
    %v11590 = vpop.f32.mrf.mxu0
    %11591 = vdwg.mxu0
    %11592 = vmatprep.subr.bf16.mxu0 0
    %11593 = vmatpush1.bf16.msra.mxu0 %v9951
    %11594 = vmatprep.subr.bf16.mxu0 0
    %11595 = vmatpush1.bf16.msra.mxu0 %v9950
    %11596 = vmatprep.subr.bf16.mxu0 0
    %11597 = vmatpush1.bf16.msra.mxu0 %v9949
    %11598 = vmatprep.subr.bf16.mxu0 0
    %11599 = vmatpush1.bf16.msra.mxu0 %v9948
    %11600 = vmatprep.subr.bf16.mxu0 0
    %11601 = vmatpush1.bf16.msra.mxu0 %v9947
    %11602 = vmatprep.subr.bf16.mxu0 0
    %11603 = vmatpush1.bf16.msra.mxu0 %v9946
    %11604 = vmatprep.subr.bf16.mxu0 0
    %11605 = vmatpush1.bf16.msra.mxu0 %v9945
    %11606 = vmatprep.subr.bf16.mxu0 0
    %11607 = vmatpush1.bf16.msra.mxu0 %v9944
    %11608 = vmatprep.subr.bf16.mxu0 0
    %11609 = vmatpush2.bf16.msra.mxu0 %v9959
    %11610 = vmatprep.subr.bf16.mxu0 0
    %11611 = vmatpush2.bf16.msra.mxu0 %v9958
    %11612 = vmatprep.subr.bf16.mxu0 0
    %11613 = vmatpush2.bf16.msra.mxu0 %v9957
    %11614 = vmatprep.subr.bf16.mxu0 0
    %11615 = vmatpush2.bf16.msra.mxu0 %v9956
    %11616 = vmatprep.subr.bf16.mxu0 0
    %11617 = vmatpush2.bf16.msra.mxu0 %v9955
    %11618 = vmatprep.subr.bf16.mxu0 0
    %11619 = vmatpush2.bf16.msra.mxu0 %v9954
    %11620 = vmatprep.subr.bf16.mxu0 0
    %11621 = vmatpush2.bf16.msra.mxu0 %v9953
    %11622 = vmatprep.subr.bf16.mxu0 0
    %11623 = vmatpush2.bf16.msra.mxu0 %v9952
    %11624 = vmatprep.mubr.bf16.mxu0 %v6405
    %11625 = vmatmul.mubr.bf16.gmra.mxu0 %v6404
    %v11626 = vpop.f32.mrf.mxu0
    %v11627 = vadd.f32 %v11587, %v11626
    %v11628 = vpop.f32.mrf.mxu0
    %v11629 = vpop.f32.mrf.mxu0
    %v11630 = vpop.f32.mrf.mxu0
    %11631 = vdwg.mxu0
    %11632 = vmatprep.subr.bf16.mxu0 0
    %11633 = vmatpush1.bf16.msra.mxu0 %v9967
    %11634 = vmatprep.subr.bf16.mxu0 0
    %11635 = vmatpush1.bf16.msra.mxu0 %v9966
    %11636 = vmatprep.subr.bf16.mxu0 0
    %11637 = vmatpush1.bf16.msra.mxu0 %v9965
    %11638 = vmatprep.subr.bf16.mxu0 0
    %11639 = vmatpush1.bf16.msra.mxu0 %v9964
    %11640 = vmatprep.subr.bf16.mxu0 0
    %11641 = vmatpush1.bf16.msra.mxu0 %v9963
    %11642 = vmatprep.subr.bf16.mxu0 0
    %11643 = vmatpush1.bf16.msra.mxu0 %v9962
    %11644 = vmatprep.subr.bf16.mxu0 0
    %11645 = vmatpush1.bf16.msra.mxu0 %v9961
    %11646 = vmatprep.subr.bf16.mxu0 0
    %11647 = vmatpush1.bf16.msra.mxu0 %v9960
    %11648 = vmatprep.subr.bf16.mxu0 0
    %11649 = vmatpush2.bf16.msra.mxu0 %v9975
    %11650 = vmatprep.subr.bf16.mxu0 0
    %11651 = vmatpush2.bf16.msra.mxu0 %v9974
    %11652 = vmatprep.subr.bf16.mxu0 0
    %11653 = vmatpush2.bf16.msra.mxu0 %v9973
    %11654 = vmatprep.subr.bf16.mxu0 0
    %11655 = vmatpush2.bf16.msra.mxu0 %v9972
    %11656 = vmatprep.subr.bf16.mxu0 0
    %11657 = vmatpush2.bf16.msra.mxu0 %v9971
    %11658 = vmatprep.subr.bf16.mxu0 0
    %11659 = vmatpush2.bf16.msra.mxu0 %v9970
    %11660 = vmatprep.subr.bf16.mxu0 0
    %11661 = vmatpush2.bf16.msra.mxu0 %v9969
    %11662 = vmatprep.subr.bf16.mxu0 0
    %11663 = vmatpush2.bf16.msra.mxu0 %v9968
    %11664 = vmatprep.mubr.bf16.mxu0 %v6415
    %11665 = vmatmul.mubr.bf16.gmra.mxu0 %v6411
    %v11666 = vpop.f32.mrf.mxu0
    %v11667 = vadd.f32 %v11627, %v11666
    %v11668 = vpop.f32.mrf.mxu0
    %v11669 = vpop.f32.mrf.mxu0
    %v11670 = vpop.f32.mrf.mxu0
    %11671 = vdwg.mxu0
    %11672 = vmatprep.subr.bf16.mxu0 0
    %11673 = vmatpush1.bf16.msra.mxu0 %v9983
    %11674 = vmatprep.subr.bf16.mxu0 0
    %11675 = vmatpush1.bf16.msra.mxu0 %v9982
    %11676 = vmatprep.subr.bf16.mxu0 0
    %11677 = vmatpush1.bf16.msra.mxu0 %v9981
    %11678 = vmatprep.subr.bf16.mxu0 0
    %11679 = vmatpush1.bf16.msra.mxu0 %v9980
    %11680 = vmatprep.subr.bf16.mxu0 0
    %11681 = vmatpush1.bf16.msra.mxu0 %v9979
    %11682 = vmatprep.subr.bf16.mxu0 0
    %11683 = vmatpush1.bf16.msra.mxu0 %v9978
    %11684 = vmatprep.subr.bf16.mxu0 0
    %11685 = vmatpush1.bf16.msra.mxu0 %v9977
    %11686 = vmatprep.subr.bf16.mxu0 0
    %11687 = vmatpush1.bf16.msra.mxu0 %v9976
    %11688 = vmatprep.subr.bf16.mxu0 0
    %11689 = vmatpush2.bf16.msra.mxu0 %v9991
    %11690 = vmatprep.subr.bf16.mxu0 0
    %11691 = vmatpush2.bf16.msra.mxu0 %v9990
    %11692 = vmatprep.subr.bf16.mxu0 0
    %11693 = vmatpush2.bf16.msra.mxu0 %v9989
    %11694 = vmatprep.subr.bf16.mxu0 0
    %11695 = vmatpush2.bf16.msra.mxu0 %v9988
    %11696 = vmatprep.subr.bf16.mxu0 0
    %11697 = vmatpush2.bf16.msra.mxu0 %v9987
    %11698 = vmatprep.subr.bf16.mxu0 0
    %11699 = vmatpush2.bf16.msra.mxu0 %v9986
    %11700 = vmatprep.subr.bf16.mxu0 0
    %11701 = vmatpush2.bf16.msra.mxu0 %v9985
    %11702 = vmatprep.subr.bf16.mxu0 0
    %11703 = vmatpush2.bf16.msra.mxu0 %v9984
    %11704 = vmatprep.mubr.bf16.mxu0 %v6424
    %11705 = vmatmul.mubr.bf16.gmra.mxu0 %v6423
    %v11706 = vpop.f32.mrf.mxu0
    %v11707 = vadd.f32 %v11667, %v11706
    %v11708 = vpop.f32.mrf.mxu0
    %v11709 = vpop.f32.mrf.mxu0
    %v11710 = vpop.f32.mrf.mxu0
    %11711 = vdwg.mxu0
    %11712 = vmatprep.subr.bf16.mxu0 0
    %11713 = vmatpush1.bf16.msra.mxu0 %v9999
    %11714 = vmatprep.subr.bf16.mxu0 0
    %11715 = vmatpush1.bf16.msra.mxu0 %v9998
    %11716 = vmatprep.subr.bf16.mxu0 0
    %11717 = vmatpush1.bf16.msra.mxu0 %v9997
    %11718 = vmatprep.subr.bf16.mxu0 0
    %11719 = vmatpush1.bf16.msra.mxu0 %v9996
    %11720 = vmatprep.subr.bf16.mxu0 0
    %11721 = vmatpush1.bf16.msra.mxu0 %v9995
    %11722 = vmatprep.subr.bf16.mxu0 0
    %11723 = vmatpush1.bf16.msra.mxu0 %v9994
    %11724 = vmatprep.subr.bf16.mxu0 0
    %11725 = vmatpush1.bf16.msra.mxu0 %v9993
    %11726 = vmatprep.subr.bf16.mxu0 0
    %11727 = vmatpush1.bf16.msra.mxu0 %v9992
    %11728 = vmatprep.subr.bf16.mxu0 0
    %11729 = vmatpush2.bf16.msra.mxu0 %v10007
    %11730 = vmatprep.subr.bf16.mxu0 0
    %11731 = vmatpush2.bf16.msra.mxu0 %v10006
    %11732 = vmatprep.subr.bf16.mxu0 0
    %11733 = vmatpush2.bf16.msra.mxu0 %v10005
    %11734 = vmatprep.subr.bf16.mxu0 0
    %11735 = vmatpush2.bf16.msra.mxu0 %v10004
    %11736 = vmatprep.subr.bf16.mxu0 0
    %11737 = vmatpush2.bf16.msra.mxu0 %v10003
    %11738 = vmatprep.subr.bf16.mxu0 0
    %11739 = vmatpush2.bf16.msra.mxu0 %v10002
    %11740 = vmatprep.subr.bf16.mxu0 0
    %11741 = vmatpush2.bf16.msra.mxu0 %v10001
    %11742 = vmatprep.subr.bf16.mxu0 0
    %11743 = vmatpush2.bf16.msra.mxu0 %v10000
    %11744 = vmatprep.mubr.bf16.mxu0 %v6434
    %11745 = vmatmul.mubr.bf16.gmra.mxu0 %v6430
    %v11746 = vpop.f32.mrf.mxu0
    %v11747 = vadd.f32 %v11707, %v11746
    %v11748 = vpop.f32.mrf.mxu0
    %v11749 = vpop.f32.mrf.mxu0
    %v11750 = vpop.f32.mrf.mxu0
    %11751 = vdwg.mxu0
    %11752 = vmatprep.subr.bf16.mxu0 0
    %11753 = vmatpush1.bf16.msra.mxu0 %v10015
    %11754 = vmatprep.subr.bf16.mxu0 0
    %11755 = vmatpush1.bf16.msra.mxu0 %v10014
    %11756 = vmatprep.subr.bf16.mxu0 0
    %11757 = vmatpush1.bf16.msra.mxu0 %v10013
    %11758 = vmatprep.subr.bf16.mxu0 0
    %11759 = vmatpush1.bf16.msra.mxu0 %v10012
    %11760 = vmatprep.subr.bf16.mxu0 0
    %11761 = vmatpush1.bf16.msra.mxu0 %v10011
    %11762 = vmatprep.subr.bf16.mxu0 0
    %11763 = vmatpush1.bf16.msra.mxu0 %v10010
    %11764 = vmatprep.subr.bf16.mxu0 0
    %11765 = vmatpush1.bf16.msra.mxu0 %v10009
    %11766 = vmatprep.subr.bf16.mxu0 0
    %11767 = vmatpush1.bf16.msra.mxu0 %v10008
    %11768 = vmatprep.subr.bf16.mxu0 0
    %11769 = vmatpush2.bf16.msra.mxu0 %v10023
    %11770 = vmatprep.subr.bf16.mxu0 0
    %11771 = vmatpush2.bf16.msra.mxu0 %v10022
    %11772 = vmatprep.subr.bf16.mxu0 0
    %11773 = vmatpush2.bf16.msra.mxu0 %v10021
    %11774 = vmatprep.subr.bf16.mxu0 0
    %11775 = vmatpush2.bf16.msra.mxu0 %v10020
    %11776 = vmatprep.subr.bf16.mxu0 0
    %11777 = vmatpush2.bf16.msra.mxu0 %v10019
    %11778 = vmatprep.subr.bf16.mxu0 0
    %11779 = vmatpush2.bf16.msra.mxu0 %v10018
    %11780 = vmatprep.subr.bf16.mxu0 0
    %11781 = vmatpush2.bf16.msra.mxu0 %v10017
    %11782 = vmatprep.subr.bf16.mxu0 0
    %11783 = vmatpush2.bf16.msra.mxu0 %v10016
    %11784 = vmatprep.mubr.bf16.mxu0 %v6443
    %11785 = vmatmul.mubr.bf16.gmra.mxu0 %v6442
    %v11786 = vpop.f32.mrf.mxu0
    %v11787 = vadd.f32 %v11747, %v11786
    %v11788 = vpop.f32.mrf.mxu0
    %v11789 = vpop.f32.mrf.mxu0
    %v11790 = vpop.f32.mrf.mxu0
    %11791 = vdwg.mxu0
    %11792 = vmatprep.subr.bf16.mxu0 0
    %11793 = vmatpush1.bf16.msra.mxu0 %v10031
    %11794 = vmatprep.subr.bf16.mxu0 0
    %11795 = vmatpush1.bf16.msra.mxu0 %v10030
    %11796 = vmatprep.subr.bf16.mxu0 0
    %11797 = vmatpush1.bf16.msra.mxu0 %v10029
    %11798 = vmatprep.subr.bf16.mxu0 0
    %11799 = vmatpush1.bf16.msra.mxu0 %v10028
    %11800 = vmatprep.subr.bf16.mxu0 0
    %11801 = vmatpush1.bf16.msra.mxu0 %v10027
    %11802 = vmatprep.subr.bf16.mxu0 0
    %11803 = vmatpush1.bf16.msra.mxu0 %v10026
    %11804 = vmatprep.subr.bf16.mxu0 0
    %11805 = vmatpush1.bf16.msra.mxu0 %v10025
    %11806 = vmatprep.subr.bf16.mxu0 0
    %11807 = vmatpush1.bf16.msra.mxu0 %v10024
    %11808 = vmatprep.subr.bf16.mxu0 0
    %11809 = vmatpush2.bf16.msra.mxu0 %v10039
    %11810 = vmatprep.subr.bf16.mxu0 0
    %11811 = vmatpush2.bf16.msra.mxu0 %v10038
    %11812 = vmatprep.subr.bf16.mxu0 0
    %11813 = vmatpush2.bf16.msra.mxu0 %v10037
    %11814 = vmatprep.subr.bf16.mxu0 0
    %11815 = vmatpush2.bf16.msra.mxu0 %v10036
    %11816 = vmatprep.subr.bf16.mxu0 0
    %11817 = vmatpush2.bf16.msra.mxu0 %v10035
    %11818 = vmatprep.subr.bf16.mxu0 0
    %11819 = vmatpush2.bf16.msra.mxu0 %v10034
    %11820 = vmatprep.subr.bf16.mxu0 0
    %11821 = vmatpush2.bf16.msra.mxu0 %v10033
    %11822 = vmatprep.subr.bf16.mxu0 0
    %11823 = vmatpush2.bf16.msra.mxu0 %v10032
    %11824 = vmatprep.mubr.bf16.mxu0 %v6453
    %11825 = vmatmul.mubr.bf16.gmra.mxu0 %v6449
    %v11826 = vpop.f32.mrf.mxu0
    %v11827 = vadd.f32 %v11787, %v11826
    %v11828 = vpop.f32.mrf.mxu0
    %v11829 = vpop.f32.mrf.mxu0
    %v11830 = vpop.f32.mrf.mxu0
    %11831 = vdwg.mxu0
    %11832 = vst.msk [vmem:[#allocation3 + $0x1] sm:$0x1] %vm6150, %v11827
    // Predicated region
    $region26: #{cnn_forward.1} parent=1 // pred_check
      _
    $region27: #{cnn_forward.1} parent=1 // pred_check_branch
      %11834 = sbr.rel (0) target = $region29
    $region28: #{cnn_forward.1} parent=1 // pred_region
      %s11836 = ssub.s32 32, 32
      %11837 = vsyncadd [#allocation4], %s11836
      %s11839 = sshll.u32 [#allocation3], 4
      %s11840 = int_to_ptr.vmem [resolvable:$true] %s11839
      %11842 = dma.vmem_to_hbm [thread:$0]  %s11840, 32, %s6, [#allocation4]
    $region29: #{cnn_forward.1} parent=1 // pred_fallthru
      _
    // Predicated region
    $region30: #{cnn_forward.1} parent=1 // pred_check
      _
    $region31: #{cnn_forward.1} parent=1 // pred_check_branch
      %11844 = sbr.rel (0) target = $region33
    $region32: #{cnn_forward.1} parent=1 // pred_region
      %11845 = dma.done [#allocation4], 32
    $region33: #{cnn_forward.1} parent=1 // pred_fallthru
      _
    %11846 = vsyncpa [#allocation4], 1

</llo_original>
